<compile_context>
chip_gen: v6e
topology: v6e:2x2x1
jax: 0.10.0
libtpu: 0.0.40
codegen_flags: <defaults>
</compile_context>

<pallas_src>
import math

import jax
import jax.numpy as jnp
from jax.experimental import pallas as pl
from jax.experimental.pallas import tpu as pltpu


def _conv_pool_fc(xpad_ref, wconv_ref, bconv_ref, wfc_ref, bfc_ref):
    """Embedding math on an already zero-padded NHWC VMEM block.

    xpad_ref : (n_img, H+2, W+2, C)  zero-padded stacked inputs
    wconv_ref: (K*K, C, F1)          conv weights, tap-major
    bconv_ref: (1, F1)
    wfc_ref  : (F1, D)
    bfc_ref  : (1, D)
    returns  : (n_img, D) float32 embeddings
    """
    n_img, hp2, wp2, c = xpad_ref.shape
    h, w = hp2 - 2, wp2 - 2
    hw = h * w
    k2, _, f1 = wconv_ref.shape
    k = math.isqrt(k2)

    # Convolution as K*K shift-slice matmuls (in-kernel im2col; never hits HBM).
    acc = jnp.zeros((n_img * hw, f1), jnp.float32)
    for di in range(k):
        for dj in range(k):
            shifted = xpad_ref[:, di:di + h, dj:dj + w, :]       # (n_img, h, w, c)
            patches = shifted.reshape(n_img * hw, c)             # layout-preserving (w % 8 == 0)
            acc = acc + jnp.dot(patches, wconv_ref[di * k + dj],
                                preferred_element_type=jnp.float32)
    conv = jnp.maximum(acc + bconv_ref[...], 0.0)                # bias + ReLU
    # Global average pool: reduce HW on the sublane axis; F1 stays on lanes.
    pooled = jnp.sum(conv.reshape(n_img, hw, f1), axis=1) * (1.0 / hw)
    emb = jnp.dot(pooled, wfc_ref[...],
                  preferred_element_type=jnp.float32) + bfc_ref[...]
    return emb


def _siamese_kernel(x1_ref, x2_ref, wconv_ref, bconv_ref, wfc_ref, bfc_ref,
                    out1_ref, out2_ref, xpad_ref):
    b, h, w, _ = x1_ref.shape
    # Zero the padded scratch once, then write both branches into its interior
    # (the branch "concat" happens in VMEM, never in HBM).
    xpad_ref[...] = jnp.zeros_like(xpad_ref)
    xpad_ref[0:b, 1:h + 1, 1:w + 1, :] = x1_ref[...]
    xpad_ref[b:2 * b, 1:h + 1, 1:w + 1, :] = x2_ref[...]
    emb = _conv_pool_fc(xpad_ref, wconv_ref, bconv_ref, wfc_ref, bfc_ref)
    out1_ref[...] = emb[0:b].astype(out1_ref.dtype)
    out2_ref[...] = emb[b:2 * b].astype(out2_ref.dtype)


def _embed_kernel(x_ref, wconv_ref, bconv_ref, wfc_ref, bfc_ref,
                  out_ref, xpad_ref):
    b, h, w, _ = x_ref.shape
    xpad_ref[...] = jnp.zeros_like(xpad_ref)
    xpad_ref[:, 1:h + 1, 1:w + 1, :] = x_ref[...]
    emb = _conv_pool_fc(xpad_ref, wconv_ref, bconv_ref, wfc_ref, bfc_ref)
    out_ref[...] = emb.astype(out_ref.dtype)


def _vmem_spec():
    return pl.BlockSpec(memory_space=pltpu.MemorySpace.VMEM)


@jax.jit
def siamese_forward(x1, x2, params):
    """SiameseNet.forward(x1, x2) -> (embedding(x1), embedding(x2)).  NCHW in."""
    wconv, bconv, wfc, bfc = params
    B, C, H, W = x1.shape
    D = wfc.shape[1]
    x1n = jnp.transpose(x1, (0, 2, 3, 1))                        # NHWC
    x2n = jnp.transpose(x2, (0, 2, 3, 1))
    out1, out2 = pl.pallas_call(
        _siamese_kernel,
        out_shape=(jax.ShapeDtypeStruct((B, D), jnp.float32),
                   jax.ShapeDtypeStruct((B, D), jnp.float32)),
        in_specs=[_vmem_spec() for _ in range(6)],
        out_specs=(_vmem_spec(), _vmem_spec()),
        scratch_shapes=[pltpu.VMEM((2 * B, H + 2, W + 2, C), jnp.float32)],
    )(x1n, x2n, wconv, bconv, wfc, bfc)
    return out1, out2


@jax.jit
def get_embedding(x, params):
    """SiameseNet.get_embedding(x).  NCHW in."""
    wconv, bconv, wfc, bfc = params
    B, C, H, W = x.shape
    D = wfc.shape[1]
    xn = jnp.transpose(x, (0, 2, 3, 1))
    return pl.pallas_call(
        _embed_kernel,
        out_shape=jax.ShapeDtypeStruct((B, D), jnp.float32),
        in_specs=[_vmem_spec() for _ in range(5)],
        out_specs=_vmem_spec(),
        scratch_shapes=[pltpu.VMEM((B, H + 2, W + 2, C), jnp.float32)],
    )(xn, wconv, bconv, wfc, bfc)


def init_params(key, C=4, K=3, F1=8, D=32):
    k1, k2, k3, k4 = jax.random.split(key, 4)
    wconv = jax.random.normal(k1, (K * K, C, F1), jnp.float32) * 0.1
    bconv = jax.random.normal(k2, (1, F1), jnp.float32) * 0.1
    wfc = jax.random.normal(k3, (F1, D), jnp.float32) * 0.1
    bfc = jax.random.normal(k4, (1, D), jnp.float32) * 0.1
    return wconv, bconv, wfc, bfc


def _ref_embed(x_nchw, params):
    """Pure-JAX reference for the embedding net (same weight layout)."""
    wconv, bconv, wfc, bfc = params
    k = math.isqrt(wconv.shape[0])
    x = jnp.transpose(x_nchw, (0, 2, 3, 1))
    B, H, W, C = x.shape
    xp = jnp.pad(x, ((0, 0), (1, 1), (1, 1), (0, 0)))
    taps = [xp[:, di:di + H, dj:dj + W, :] for di in range(k) for dj in range(k)]
    patches = jnp.stack(taps, axis=3)                            # (B, H, W, K*K, C)
    conv = jnp.einsum('bhwkc,kcf->bhwf', patches, wconv) + bconv.reshape(1, 1, 1, -1)
    conv = jnp.maximum(conv, 0.0)
    pooled = conv.mean(axis=(1, 2))
    return pooled @ wfc + bfc


if __name__ == "__main__":
    key = jax.random.PRNGKey(0)
    kp, kx1, kx2 = jax.random.split(key, 3)

    B, C, H, W = 2, 4, 16, 16
    F1, D, K = 8, 32, 3
    params = init_params(kp, C=C, K=K, F1=F1, D=D)

    x1 = jax.random.normal(kx1, (B, C, H, W), jnp.float32)
    x2 = jax.random.normal(kx2, (B, C, H, W), jnp.float32)

    out1, out2 = siamese_forward(x1, x2, params)                 # forward(x1, x2)
    emb1 = get_embedding(x1, params)                             # get_embedding(x)
    jax.block_until_ready((out1, out2, emb1))

    assert out1.shape == (B, D) and out2.shape == (B, D) and emb1.shape == (B, D)

    # Check the shared-weight embedding path against a pure-JAX reference.
    r1 = _ref_embed(x1, params)
    r2 = _ref_embed(x2, params)
    assert jnp.allclose(out1, r1, atol=1e-4), float(jnp.max(jnp.abs(out1 - r1)))
    assert jnp.allclose(out2, r2, atol=1e-4), float(jnp.max(jnp.abs(out2 - r2)))
    assert jnp.allclose(emb1, r1, atol=1e-4), float(jnp.max(jnp.abs(emb1 - r1)))

    print("KERNEL_OK")
</pallas_src>

<mosaic_0001>
module attributes {stable_mosaic.version = 11 : i64} {
  func.func @_siamese_kernel(%arg0: memref<2x16x16x4xf32, #tpu.memory_space<vmem>>, %arg1: memref<2x16x16x4xf32, #tpu.memory_space<vmem>>, %arg2: memref<9x4x8xf32, #tpu.memory_space<vmem>>, %arg3: memref<1x8xf32, #tpu.memory_space<vmem>>, %arg4: memref<8x32xf32, #tpu.memory_space<vmem>>, %arg5: memref<1x32xf32, #tpu.memory_space<vmem>>, %arg6: memref<2x32xf32, #tpu.memory_space<vmem>>, %arg7: memref<2x32xf32, #tpu.memory_space<vmem>>, %arg8: memref<4x18x18x4xf32, #tpu.memory_space<vmem>>) attributes {dimension_semantics = [], scalar_prefetch = 0 : i64, scratch_operands = 1 : i64, tpu.core_type = #tpu.core_type<tc>} {
    %cst = arith.constant 0.000000e+00 : f32
    %0 = vector.broadcast %cst : f32 to vector<4x18x18x4xf32>
    %c0 = arith.constant 0 : index
    %c0_0 = arith.constant 0 : index
    %c0_1 = arith.constant 0 : index
    %c0_2 = arith.constant 0 : index
    %1 = vector.load %arg8[%c0, %c0_0, %c0_1, %c0_2] : memref<4x18x18x4xf32, #tpu.memory_space<vmem>>, vector<4x18x18x4xf32>
    tpu.vector_store %arg8[%c0, %c0_0, %c0_1, %c0_2], %0 {strides = array<i32>} : memref<4x18x18x4xf32, #tpu.memory_space<vmem>>, vector<4x18x18x4xf32>,
    %c0_3 = arith.constant 0 : index
    %c0_4 = arith.constant 0 : index
    %c0_5 = arith.constant 0 : index
    %c0_6 = arith.constant 0 : index
    %2 = vector.load %arg0[%c0_3, %c0_4, %c0_5, %c0_6] : memref<2x16x16x4xf32, #tpu.memory_space<vmem>>, vector<2x16x16x4xf32>
    %c0_7 = arith.constant 0 : index
    %c1 = arith.constant 1 : index
    %c1_8 = arith.constant 1 : index
    %c0_9 = arith.constant 0 : index
    %3 = vector.load %arg8[%c0_7, %c1, %c1_8, %c0_9] : memref<4x18x18x4xf32, #tpu.memory_space<vmem>>, vector<2x16x16x4xf32>
    tpu.vector_store %arg8[%c0_7, %c1, %c1_8, %c0_9], %2 {strides = array<i32>} : memref<4x18x18x4xf32, #tpu.memory_space<vmem>>, vector<2x16x16x4xf32>,
    %c0_10 = arith.constant 0 : index
    %c0_11 = arith.constant 0 : index
    %c0_12 = arith.constant 0 : index
    %c0_13 = arith.constant 0 : index
    %4 = vector.load %arg1[%c0_10, %c0_11, %c0_12, %c0_13] : memref<2x16x16x4xf32, #tpu.memory_space<vmem>>, vector<2x16x16x4xf32>
    %c2 = arith.constant 2 : index
    %c1_14 = arith.constant 1 : index
    %c1_15 = arith.constant 1 : index
    %c0_16 = arith.constant 0 : index
    %5 = vector.load %arg8[%c2, %c1_14, %c1_15, %c0_16] : memref<4x18x18x4xf32, #tpu.memory_space<vmem>>, vector<2x16x16x4xf32>
    tpu.vector_store %arg8[%c2, %c1_14, %c1_15, %c0_16], %4 {strides = array<i32>} : memref<4x18x18x4xf32, #tpu.memory_space<vmem>>, vector<2x16x16x4xf32>,
    %cst_17 = arith.constant 0.000000e+00 : f32
    %6 = vector.broadcast %cst_17 : f32 to vector<1024x8xf32>
    %c0_18 = arith.constant 0 : index
    %c0_19 = arith.constant 0 : index
    %c0_20 = arith.constant 0 : index
    %c0_21 = arith.constant 0 : index
    %7 = vector.load %arg8[%c0_18, %c0_19, %c0_20, %c0_21] : memref<4x18x18x4xf32, #tpu.memory_space<vmem>>, vector<4x16x16x4xf32>
    %8 = vector.shape_cast %7 : vector<4x16x16x4xf32> to vector<1024x4xf32>
    %c0_22 = arith.constant 0 : index
    %c0_23 = arith.constant 0 : index
    %c0_24 = arith.constant 0 : index
    %9 = vector.load %arg2[%c0_22, %c0_23, %c0_24] : memref<9x4x8xf32, #tpu.memory_space<vmem>>, vector<1x4x8xf32>
    %10 = vector.shape_cast %9 : vector<1x4x8xf32> to vector<4x8xf32>
    %cst_25 = arith.constant dense<0.000000e+00> : vector<1024x8xf32>
    %11 = tpu.matmul %8, %10, %cst_25 {dimension_numbers = #tpu.dot_dimension_numbers<[1], [0], [0], [1], [0, 0, 1, 1], [], []>} : vector<1024x4xf32>, vector<4x8xf32>, vector<1024x8xf32> -> vector<1024x8xf32>
    %12 = arith.addf %6, %11 : vector<1024x8xf32>
    %c0_26 = arith.constant 0 : index
    %c0_27 = arith.constant 0 : index
    %c1_28 = arith.constant 1 : index
    %c0_29 = arith.constant 0 : index
    %13 = vector.load %arg8[%c0_26, %c0_27, %c1_28, %c0_29] : memref<4x18x18x4xf32, #tpu.memory_space<vmem>>, vector<4x16x16x4xf32>
    %14 = vector.shape_cast %13 : vector<4x16x16x4xf32> to vector<1024x4xf32>
    %c1_30 = arith.constant 1 : index
    %c0_31 = arith.constant 0 : index
    %c0_32 = arith.constant 0 : index
    %15 = vector.load %arg2[%c1_30, %c0_31, %c0_32] : memref<9x4x8xf32, #tpu.memory_space<vmem>>, vector<1x4x8xf32>
    %16 = vector.shape_cast %15 : vector<1x4x8xf32> to vector<4x8xf32>
    %cst_33 = arith.constant dense<0.000000e+00> : vector<1024x8xf32>
    %17 = tpu.matmul %14, %16, %cst_33 {dimension_numbers = #tpu.dot_dimension_numbers<[1], [0], [0], [1], [0, 0, 1, 1], [], []>} : vector<1024x4xf32>, vector<4x8xf32>, vector<1024x8xf32> -> vector<1024x8xf32>
    %18 = arith.addf %12, %17 : vector<1024x8xf32>
    %c0_34 = arith.constant 0 : index
    %c0_35 = arith.constant 0 : index
    %c2_36 = arith.constant 2 : index
    %c0_37 = arith.constant 0 : index
    %19 = vector.load %arg8[%c0_34, %c0_35, %c2_36, %c0_37] : memref<4x18x18x4xf32, #tpu.memory_space<vmem>>, vector<4x16x16x4xf32>
    %20 = vector.shape_cast %19 : vector<4x16x16x4xf32> to vector<1024x4xf32>
    %c2_38 = arith.constant 2 : index
    %c0_39 = arith.constant 0 : index
    %c0_40 = arith.constant 0 : index
    %21 = vector.load %arg2[%c2_38, %c0_39, %c0_40] : memref<9x4x8xf32, #tpu.memory_space<vmem>>, vector<1x4x8xf32>
    %22 = vector.shape_cast %21 : vector<1x4x8xf32> to vector<4x8xf32>
    %cst_41 = arith.constant dense<0.000000e+00> : vector<1024x8xf32>
    %23 = tpu.matmul %20, %22, %cst_41 {dimension_numbers = #tpu.dot_dimension_numbers<[1], [0], [0], [1], [0, 0, 1, 1], [], []>} : vector<1024x4xf32>, vector<4x8xf32>, vector<1024x8xf32> -> vector<1024x8xf32>
    %24 = arith.addf %18, %23 : vector<1024x8xf32>
    %c0_42 = arith.constant 0 : index
    %c1_43 = arith.constant 1 : index
    %c0_44 = arith.constant 0 : index
    %c0_45 = arith.constant 0 : index
    %25 = vector.load %arg8[%c0_42, %c1_43, %c0_44, %c0_45] : memref<4x18x18x4xf32, #tpu.memory_space<vmem>>, vector<4x16x16x4xf32>
    %26 = vector.shape_cast %25 : vector<4x16x16x4xf32> to vector<1024x4xf32>
    %c3 = arith.constant 3 : index
    %c0_46 = arith.constant 0 : index
    %c0_47 = arith.constant 0 : index
    %27 = vector.load %arg2[%c3, %c0_46, %c0_47] : memref<9x4x8xf32, #tpu.memory_space<vmem>>, vector<1x4x8xf32>
    %28 = vector.shape_cast %27 : vector<1x4x8xf32> to vector<4x8xf32>
    %cst_48 = arith.constant dense<0.000000e+00> : vector<1024x8xf32>
    %29 = tpu.matmul %26, %28, %cst_48 {dimension_numbers = #tpu.dot_dimension_numbers<[1], [0], [0], [1], [0, 0, 1, 1], [], []>} : vector<1024x4xf32>, vector<4x8xf32>, vector<1024x8xf32> -> vector<1024x8xf32>
    %30 = arith.addf %24, %29 : vector<1024x8xf32>
    %c0_49 = arith.constant 0 : index
    %c1_50 = arith.constant 1 : index
    %c1_51 = arith.constant 1 : index
    %c0_52 = arith.constant 0 : index
    %31 = vector.load %arg8[%c0_49, %c1_50, %c1_51, %c0_52] : memref<4x18x18x4xf32, #tpu.memory_space<vmem>>, vector<4x16x16x4xf32>
    %32 = vector.shape_cast %31 : vector<4x16x16x4xf32> to vector<1024x4xf32>
    %c4 = arith.constant 4 : index
    %c0_53 = arith.constant 0 : index
    %c0_54 = arith.constant 0 : index
    %33 = vector.load %arg2[%c4, %c0_53, %c0_54] : memref<9x4x8xf32, #tpu.memory_space<vmem>>, vector<1x4x8xf32>
    %34 = vector.shape_cast %33 : vector<1x4x8xf32> to vector<4x8xf32>
    %cst_55 = arith.constant dense<0.000000e+00> : vector<1024x8xf32>
    %35 = tpu.matmul %32, %34, %cst_55 {dimension_numbers = #tpu.dot_dimension_numbers<[1], [0], [0], [1], [0, 0, 1, 1], [], []>} : vector<1024x4xf32>, vector<4x8xf32>, vector<1024x8xf32> -> vector<1024x8xf32>
    %36 = arith.addf %30, %35 : vector<1024x8xf32>
    %c0_56 = arith.constant 0 : index
    %c1_57 = arith.constant 1 : index
    %c2_58 = arith.constant 2 : index
    %c0_59 = arith.constant 0 : index
    %37 = vector.load %arg8[%c0_56, %c1_57, %c2_58, %c0_59] : memref<4x18x18x4xf32, #tpu.memory_space<vmem>>, vector<4x16x16x4xf32>
    %38 = vector.shape_cast %37 : vector<4x16x16x4xf32> to vector<1024x4xf32>
    %c5 = arith.constant 5 : index
    %c0_60 = arith.constant 0 : index
    %c0_61 = arith.constant 0 : index
    %39 = vector.load %arg2[%c5, %c0_60, %c0_61] : memref<9x4x8xf32, #tpu.memory_space<vmem>>, vector<1x4x8xf32>
    %40 = vector.shape_cast %39 : vector<1x4x8xf32> to vector<4x8xf32>
    %cst_62 = arith.constant dense<0.000000e+00> : vector<1024x8xf32>
    %41 = tpu.matmul %38, %40, %cst_62 {dimension_numbers = #tpu.dot_dimension_numbers<[1], [0], [0], [1], [0, 0, 1, 1], [], []>} : vector<1024x4xf32>, vector<4x8xf32>, vector<1024x8xf32> -> vector<1024x8xf32>
    %42 = arith.addf %36, %41 : vector<1024x8xf32>
    %c0_63 = arith.constant 0 : index
    %c2_64 = arith.constant 2 : index
    %c0_65 = arith.constant 0 : index
    %c0_66 = arith.constant 0 : index
    %43 = vector.load %arg8[%c0_63, %c2_64, %c0_65, %c0_66] : memref<4x18x18x4xf32, #tpu.memory_space<vmem>>, vector<4x16x16x4xf32>
    %44 = vector.shape_cast %43 : vector<4x16x16x4xf32> to vector<1024x4xf32>
    %c6 = arith.constant 6 : index
    %c0_67 = arith.constant 0 : index
    %c0_68 = arith.constant 0 : index
    %45 = vector.load %arg2[%c6, %c0_67, %c0_68] : memref<9x4x8xf32, #tpu.memory_space<vmem>>, vector<1x4x8xf32>
    %46 = vector.shape_cast %45 : vector<1x4x8xf32> to vector<4x8xf32>
    %cst_69 = arith.constant dense<0.000000e+00> : vector<1024x8xf32>
    %47 = tpu.matmul %44, %46, %cst_69 {dimension_numbers = #tpu.dot_dimension_numbers<[1], [0], [0], [1], [0, 0, 1, 1], [], []>} : vector<1024x4xf32>, vector<4x8xf32>, vector<1024x8xf32> -> vector<1024x8xf32>
    %48 = arith.addf %42, %47 : vector<1024x8xf32>
    %c0_70 = arith.constant 0 : index
    %c2_71 = arith.constant 2 : index
    %c1_72 = arith.constant 1 : index
    %c0_73 = arith.constant 0 : index
    %49 = vector.load %arg8[%c0_70, %c2_71, %c1_72, %c0_73] : memref<4x18x18x4xf32, #tpu.memory_space<vmem>>, vector<4x16x16x4xf32>
    %50 = vector.shape_cast %49 : vector<4x16x16x4xf32> to vector<1024x4xf32>
    %c7 = arith.constant 7 : index
    %c0_74 = arith.constant 0 : index
    %c0_75 = arith.constant 0 : index
    %51 = vector.load %arg2[%c7, %c0_74, %c0_75] : memref<9x4x8xf32, #tpu.memory_space<vmem>>, vector<1x4x8xf32>
    %52 = vector.shape_cast %51 : vector<1x4x8xf32> to vector<4x8xf32>
    %cst_76 = arith.constant dense<0.000000e+00> : vector<1024x8xf32>
    %53 = tpu.matmul %50, %52, %cst_76 {dimension_numbers = #tpu.dot_dimension_numbers<[1], [0], [0], [1], [0, 0, 1, 1], [], []>} : vector<1024x4xf32>, vector<4x8xf32>, vector<1024x8xf32> -> vector<1024x8xf32>
    %54 = arith.addf %48, %53 : vector<1024x8xf32>
    %c0_77 = arith.constant 0 : index
    %c2_78 = arith.constant 2 : index
    %c2_79 = arith.constant 2 : index
    %c0_80 = arith.constant 0 : index
    %55 = vector.load %arg8[%c0_77, %c2_78, %c2_79, %c0_80] : memref<4x18x18x4xf32, #tpu.memory_space<vmem>>, vector<4x16x16x4xf32>
    %56 = vector.shape_cast %55 : vector<4x16x16x4xf32> to vector<1024x4xf32>
    %c8 = arith.constant 8 : index
    %c0_81 = arith.constant 0 : index
    %c0_82 = arith.constant 0 : index
    %57 = vector.load %arg2[%c8, %c0_81, %c0_82] : memref<9x4x8xf32, #tpu.memory_space<vmem>>, vector<1x4x8xf32>
    %58 = vector.shape_cast %57 : vector<1x4x8xf32> to vector<4x8xf32>
    %cst_83 = arith.constant dense<0.000000e+00> : vector<1024x8xf32>
    %59 = tpu.matmul %56, %58, %cst_83 {dimension_numbers = #tpu.dot_dimension_numbers<[1], [0], [0], [1], [0, 0, 1, 1], [], []>} : vector<1024x4xf32>, vector<4x8xf32>, vector<1024x8xf32> -> vector<1024x8xf32>
    %60 = arith.addf %54, %59 : vector<1024x8xf32>
    %c0_84 = arith.constant 0 : index
    %c0_85 = arith.constant 0 : index
    %61 = vector.load %arg3[%c0_84, %c0_85] : memref<1x8xf32, #tpu.memory_space<vmem>>, vector<1x8xf32>
    %62 = vector.broadcast %61 : vector<1x8xf32> to vector<1024x8xf32>
    %63 = arith.addf %60, %62 : vector<1024x8xf32>
    %cst_86 = arith.constant 0.000000e+00 : f32
    %64 = vector.broadcast %cst_86 : f32 to vector<1024x8xf32>
    %65 = arith.maximumf %63, %64 : vector<1024x8xf32>
    %66 = vector.shape_cast %65 : vector<1024x8xf32> to vector<4x256x8xf32>
    %cst_87 = arith.constant dense<0.000000e+00> : vector<4x8xf32>
    %67 = vector.multi_reduction <add>, %66, %cst_87 [1] : vector<4x256x8xf32> to vector<4x8xf32>
    %cst_88 = arith.constant 3.906250e-03 : f32
    %68 = vector.broadcast %cst_88 : f32 to vector<4x8xf32>
    %69 = arith.mulf %67, %68 : vector<4x8xf32>
    %c0_89 = arith.constant 0 : index
    %c0_90 = arith.constant 0 : index
    %70 = vector.load %arg4[%c0_89, %c0_90] : memref<8x32xf32, #tpu.memory_space<vmem>>, vector<8x32xf32>
    %cst_91 = arith.constant dense<0.000000e+00> : vector<4x32xf32>
    %71 = tpu.matmul %69, %70, %cst_91 {dimension_numbers = #tpu.dot_dimension_numbers<[1], [0], [0], [1], [0, 0, 1, 1], [], []>} : vector<4x8xf32>, vector<8x32xf32>, vector<4x32xf32> -> vector<4x32xf32>
    %c0_92 = arith.constant 0 : index
    %c0_93 = arith.constant 0 : index
    %72 = vector.load %arg5[%c0_92, %c0_93] : memref<1x32xf32, #tpu.memory_space<vmem>>, vector<1x32xf32>
    %73 = vector.broadcast %72 : vector<1x32xf32> to vector<4x32xf32>
    %74 = arith.addf %71, %73 : vector<4x32xf32>
    %75 = vector.extract_strided_slice %74 {offsets = [0, 0], sizes = [2, 32], strides = [1, 1]} : vector<4x32xf32> to vector<2x32xf32>
    %c0_94 = arith.constant 0 : index
    %c0_95 = arith.constant 0 : index
    %76 = vector.load %arg6[%c0_94, %c0_95] : memref<2x32xf32, #tpu.memory_space<vmem>>, vector<2x32xf32>
    tpu.vector_store %arg6[%c0_94, %c0_95], %75 {strides = array<i32>} : memref<2x32xf32, #tpu.memory_space<vmem>>, vector<2x32xf32>,
    %77 = vector.extract_strided_slice %74 {offsets = [2, 0], sizes = [2, 32], strides = [1, 1]} : vector<4x32xf32> to vector<2x32xf32>
    %c0_96 = arith.constant 0 : index
    %c0_97 = arith.constant 0 : index
    %78 = vector.load %arg7[%c0_96, %c0_97] : memref<2x32xf32, #tpu.memory_space<vmem>>, vector<2x32xf32>
    tpu.vector_store %arg7[%c0_96, %c0_97], %77 {strides = array<i32>} : memref<2x32xf32, #tpu.memory_space<vmem>>, vector<2x32xf32>,
    return
  }
}

</mosaic_0001>

<llo_original>
// kernel: siamese_forward.1
$region0: #{siamese_forward.1}
  #allocation0 [shape = 'u32[]', space=smem, size = 0x4, offset = 0x4, fixed_abs, tag = 'smem constant byte address 0x4 - core index']
  #allocation1 [shape = 'u32[144,128]{1,0:T(1,128)}', space=vmem, size = 0x12000, scoped, tag = 'internal scratch']
  #allocation2 [shape = 'f32[4,18,18,4]{3,2,1,0:T(8,128)}', space=vmem, size = 0xd8000, scoped, tag = 'scratch operand']
  %s0 = inlined_call_operand.vmem [shape: f32[2,16,16,4], index: 0, kind: input, shape index: {}]
  %s1 = inlined_call_operand.vmem [shape: f32[2,16,16,4], index: 1, kind: input, shape index: {}]
  %s2 = inlined_call_operand.vmem [shape: f32[9,4,8], index: 2, kind: input, shape index: {}]
  %s3 = inlined_call_operand.vmem [shape: f32[1,8], index: 3, kind: input, shape index: {}]
  %s4 = inlined_call_operand.vmem [shape: f32[8,32], index: 4, kind: input, shape index: {}]
  %s5 = inlined_call_operand.vmem [shape: f32[1,32], index: 5, kind: input, shape index: {}]
  %s6 = inlined_call_operand.hbm [shape: f32[2,32], index: 6, kind: output, shape index: {0}]
  %s7 = inlined_call_operand.hbm [shape: f32[2,32], index: 7, kind: output, shape index: {1}]
  %8 = xla_tuple %s6, %s7
  %s9 = sld [smem:[#allocation0]]
  $region42: #{siamese_forward.1} parent=0
    _
  %s11 = ssub.s32 1, %s9
  %s12 = scalar_select 0, %s11, %s9
  $region1: #{siamese_forward.1} parent=0
    #allocation3 [shape = 'u8[1024]{0}', space=vmem, size = 0x400, scoped, tag = 'output window, operand 0, single buffered']
    #allocation4 [shape = 's32[1]{0}', space=sflag, size = 0x4, scoped, tag = 'scoped memory for siamese_forward.1']
    #allocation5 [shape = 'u8[1024]{0}', space=vmem, size = 0x400, scoped, tag = 'output window, operand 1, single buffered']
    #allocation6 [shape = 's32[1]{0}', space=sflag, size = 0x4, scoped, tag = 'scoped memory for siamese_forward.1']
    %13 = vsyncpa [#allocation4], 0
    %14 = vsyncpa [#allocation6], 0
    // Predicated region
    $region2: #{siamese_forward.1} parent=1 // pred_check
      _
    $region3: #{siamese_forward.1} parent=1 // pred_check_branch
      %16 = sbr.rel (0) target = $region5
    $region4: #{siamese_forward.1} parent=1 // pred_region
      _
    $region5: #{siamese_forward.1} parent=1 // pred_fallthru
      _
    // Predicated region
    $region6: #{siamese_forward.1} parent=1 // pred_check
      _
    $region7: #{siamese_forward.1} parent=1 // pred_check_branch
      %18 = sbr.rel (0) target = $region9
    $region8: #{siamese_forward.1} parent=1 // pred_region
      _
    $region9: #{siamese_forward.1} parent=1 // pred_fallthru
      _
    // Predicated region
    $region10: #{siamese_forward.1} parent=1 // pred_check
      _
    $region11: #{siamese_forward.1} parent=1 // pred_check_branch
      %20 = sbr.rel (0) target = $region13
    $region12: #{siamese_forward.1} parent=1 // pred_region
      _
    $region13: #{siamese_forward.1} parent=1 // pred_fallthru
      _
    // Predicated region
    $region14: #{siamese_forward.1} parent=1 // pred_check
      _
    $region15: #{siamese_forward.1} parent=1 // pred_check_branch
      %22 = sbr.rel (0) target = $region17
    $region16: #{siamese_forward.1} parent=1 // pred_region
      _
    $region17: #{siamese_forward.1} parent=1 // pred_fallthru
      _
    // Predicated region
    $region18: #{siamese_forward.1} parent=1 // pred_check
      _
    $region19: #{siamese_forward.1} parent=1 // pred_check_branch
      %24 = sbr.rel (0) target = $region21
    $region20: #{siamese_forward.1} parent=1 // pred_region
      _
    $region21: #{siamese_forward.1} parent=1 // pred_fallthru
      _
    // Predicated region
    $region22: #{siamese_forward.1} parent=1 // pred_check
      _
    $region23: #{siamese_forward.1} parent=1 // pred_check_branch
      %26 = sbr.rel (0) target = $region25
    $region24: #{siamese_forward.1} parent=1 // pred_region
      _
    $region25: #{siamese_forward.1} parent=1 // pred_fallthru
      _
    %vm27 = vcmask 31744
    %28 = vst.msk [vmem:[#allocation2] sm:$0xff] %vm27, 0.0
    %29 = vst.msk [vmem:[#allocation2 + $0x8] sm:$0xff] %vm27, 0.0
    %vm30 = vcmask 25600
    %31 = vst.msk [vmem:[#allocation2 + $0x10] sm:$0x3] %vm30, 0.0
    %32 = vst.msk [vmem:[#allocation2 + $0x18] sm:$0xff] %vm27, 0.0
    %33 = vst.msk [vmem:[#allocation2 + $0x20] sm:$0xff] %vm27, 0.0
    %34 = vst.msk [vmem:[#allocation2 + $0x28] sm:$0x3] %vm30, 0.0
    %35 = vst.msk [vmem:[#allocation2 + $0x30] sm:$0xff] %vm27, 0.0
    %36 = vst.msk [vmem:[#allocation2 + $0x38] sm:$0xff] %vm27, 0.0
    %37 = vst.msk [vmem:[#allocation2 + $0x40] sm:$0x3] %vm30, 0.0
    %38 = vst.msk [vmem:[#allocation2 + $0x48] sm:$0xff] %vm27, 0.0
    %39 = vst.msk [vmem:[#allocation2 + $0x50] sm:$0xff] %vm27, 0.0
    %40 = vst.msk [vmem:[#allocation2 + $0x58] sm:$0x3] %vm30, 0.0
    %41 = vst.msk [vmem:[#allocation2 + $0x60] sm:$0xff] %vm27, 0.0
    %42 = vst.msk [vmem:[#allocation2 + $0x68] sm:$0xff] %vm27, 0.0
    %43 = vst.msk [vmem:[#allocation2 + $0x70] sm:$0x3] %vm30, 0.0
    %44 = vst.msk [vmem:[#allocation2 + $0x78] sm:$0xff] %vm27, 0.0
    %45 = vst.msk [vmem:[#allocation2 + $0x80] sm:$0xff] %vm27, 0.0
    %46 = vst.msk [vmem:[#allocation2 + $0x88] sm:$0x3] %vm30, 0.0
    %47 = vst.msk [vmem:[#allocation2 + $0x90] sm:$0xff] %vm27, 0.0
    %48 = vst.msk [vmem:[#allocation2 + $0x98] sm:$0xff] %vm27, 0.0
    %49 = vst.msk [vmem:[#allocation2 + $0xa0] sm:$0x3] %vm30, 0.0
    %50 = vst.msk [vmem:[#allocation2 + $0xa8] sm:$0xff] %vm27, 0.0
    %51 = vst.msk [vmem:[#allocation2 + $0xb0] sm:$0xff] %vm27, 0.0
    %52 = vst.msk [vmem:[#allocation2 + $0xb8] sm:$0x3] %vm30, 0.0
    %53 = vst.msk [vmem:[#allocation2 + $0xc0] sm:$0xff] %vm27, 0.0
    %54 = vst.msk [vmem:[#allocation2 + $0xc8] sm:$0xff] %vm27, 0.0
    %55 = vst.msk [vmem:[#allocation2 + $0xd0] sm:$0x3] %vm30, 0.0
    %56 = vst.msk [vmem:[#allocation2 + $0xd8] sm:$0xff] %vm27, 0.0
    %57 = vst.msk [vmem:[#allocation2 + $0xe0] sm:$0xff] %vm27, 0.0
    %58 = vst.msk [vmem:[#allocation2 + $0xe8] sm:$0x3] %vm30, 0.0
    %59 = vst.msk [vmem:[#allocation2 + $0xf0] sm:$0xff] %vm27, 0.0
    %60 = vst.msk [vmem:[#allocation2 + $0xf8] sm:$0xff] %vm27, 0.0
    %61 = vst.msk [vmem:[#allocation2 + $0x100] sm:$0x3] %vm30, 0.0
    %62 = vst.msk [vmem:[#allocation2 + $0x108] sm:$0xff] %vm27, 0.0
    %63 = vst.msk [vmem:[#allocation2 + $0x110] sm:$0xff] %vm27, 0.0
    %64 = vst.msk [vmem:[#allocation2 + $0x118] sm:$0x3] %vm30, 0.0
    %65 = vst.msk [vmem:[#allocation2 + $0x120] sm:$0xff] %vm27, 0.0
    %66 = vst.msk [vmem:[#allocation2 + $0x128] sm:$0xff] %vm27, 0.0
    %67 = vst.msk [vmem:[#allocation2 + $0x130] sm:$0x3] %vm30, 0.0
    %68 = vst.msk [vmem:[#allocation2 + $0x138] sm:$0xff] %vm27, 0.0
    %69 = vst.msk [vmem:[#allocation2 + $0x140] sm:$0xff] %vm27, 0.0
    %70 = vst.msk [vmem:[#allocation2 + $0x148] sm:$0x3] %vm30, 0.0
    %71 = vst.msk [vmem:[#allocation2 + $0x150] sm:$0xff] %vm27, 0.0
    %72 = vst.msk [vmem:[#allocation2 + $0x158] sm:$0xff] %vm27, 0.0
    %73 = vst.msk [vmem:[#allocation2 + $0x160] sm:$0x3] %vm30, 0.0
    %74 = vst.msk [vmem:[#allocation2 + $0x168] sm:$0xff] %vm27, 0.0
    %75 = vst.msk [vmem:[#allocation2 + $0x170] sm:$0xff] %vm27, 0.0
    %76 = vst.msk [vmem:[#allocation2 + $0x178] sm:$0x3] %vm30, 0.0
    %77 = vst.msk [vmem:[#allocation2 + $0x180] sm:$0xff] %vm27, 0.0
    %78 = vst.msk [vmem:[#allocation2 + $0x188] sm:$0xff] %vm27, 0.0
    %79 = vst.msk [vmem:[#allocation2 + $0x190] sm:$0x3] %vm30, 0.0
    %80 = vst.msk [vmem:[#allocation2 + $0x198] sm:$0xff] %vm27, 0.0
    %81 = vst.msk [vmem:[#allocation2 + $0x1a0] sm:$0xff] %vm27, 0.0
    %82 = vst.msk [vmem:[#allocation2 + $0x1a8] sm:$0x3] %vm30, 0.0
    %83 = vst.msk [vmem:[#allocation2 + $0x1b0] sm:$0xff] %vm27, 0.0
    %84 = vst.msk [vmem:[#allocation2 + $0x1b8] sm:$0xff] %vm27, 0.0
    %85 = vst.msk [vmem:[#allocation2 + $0x1c0] sm:$0x3] %vm30, 0.0
    %86 = vst.msk [vmem:[#allocation2 + $0x1c8] sm:$0xff] %vm27, 0.0
    %87 = vst.msk [vmem:[#allocation2 + $0x1d0] sm:$0xff] %vm27, 0.0
    %88 = vst.msk [vmem:[#allocation2 + $0x1d8] sm:$0x3] %vm30, 0.0
    %89 = vst.msk [vmem:[#allocation2 + $0x1e0] sm:$0xff] %vm27, 0.0
    %90 = vst.msk [vmem:[#allocation2 + $0x1e8] sm:$0xff] %vm27, 0.0
    %91 = vst.msk [vmem:[#allocation2 + $0x1f0] sm:$0x3] %vm30, 0.0
    %92 = vst.msk [vmem:[#allocation2 + $0x1f8] sm:$0xff] %vm27, 0.0
    %93 = vst.msk [vmem:[#allocation2 + $0x200] sm:$0xff] %vm27, 0.0
    %94 = vst.msk [vmem:[#allocation2 + $0x208] sm:$0x3] %vm30, 0.0
    %95 = vst.msk [vmem:[#allocation2 + $0x210] sm:$0xff] %vm27, 0.0
    %96 = vst.msk [vmem:[#allocation2 + $0x218] sm:$0xff] %vm27, 0.0
    %97 = vst.msk [vmem:[#allocation2 + $0x220] sm:$0x3] %vm30, 0.0
    %98 = vst.msk [vmem:[#allocation2 + $0x228] sm:$0xff] %vm27, 0.0
    %99 = vst.msk [vmem:[#allocation2 + $0x230] sm:$0xff] %vm27, 0.0
    %100 = vst.msk [vmem:[#allocation2 + $0x238] sm:$0x3] %vm30, 0.0
    %101 = vst.msk [vmem:[#allocation2 + $0x240] sm:$0xff] %vm27, 0.0
    %102 = vst.msk [vmem:[#allocation2 + $0x248] sm:$0xff] %vm27, 0.0
    %103 = vst.msk [vmem:[#allocation2 + $0x250] sm:$0x3] %vm30, 0.0
    %104 = vst.msk [vmem:[#allocation2 + $0x258] sm:$0xff] %vm27, 0.0
    %105 = vst.msk [vmem:[#allocation2 + $0x260] sm:$0xff] %vm27, 0.0
    %106 = vst.msk [vmem:[#allocation2 + $0x268] sm:$0x3] %vm30, 0.0
    %107 = vst.msk [vmem:[#allocation2 + $0x270] sm:$0xff] %vm27, 0.0
    %108 = vst.msk [vmem:[#allocation2 + $0x278] sm:$0xff] %vm27, 0.0
    %109 = vst.msk [vmem:[#allocation2 + $0x280] sm:$0x3] %vm30, 0.0
    %110 = vst.msk [vmem:[#allocation2 + $0x288] sm:$0xff] %vm27, 0.0
    %111 = vst.msk [vmem:[#allocation2 + $0x290] sm:$0xff] %vm27, 0.0
    %112 = vst.msk [vmem:[#allocation2 + $0x298] sm:$0x3] %vm30, 0.0
    %113 = vst.msk [vmem:[#allocation2 + $0x2a0] sm:$0xff] %vm27, 0.0
    %114 = vst.msk [vmem:[#allocation2 + $0x2a8] sm:$0xff] %vm27, 0.0
    %115 = vst.msk [vmem:[#allocation2 + $0x2b0] sm:$0x3] %vm30, 0.0
    %116 = vst.msk [vmem:[#allocation2 + $0x2b8] sm:$0xff] %vm27, 0.0
    %117 = vst.msk [vmem:[#allocation2 + $0x2c0] sm:$0xff] %vm27, 0.0
    %118 = vst.msk [vmem:[#allocation2 + $0x2c8] sm:$0x3] %vm30, 0.0
    %119 = vst.msk [vmem:[#allocation2 + $0x2d0] sm:$0xff] %vm27, 0.0
    %120 = vst.msk [vmem:[#allocation2 + $0x2d8] sm:$0xff] %vm27, 0.0
    %121 = vst.msk [vmem:[#allocation2 + $0x2e0] sm:$0x3] %vm30, 0.0
    %122 = vst.msk [vmem:[#allocation2 + $0x2e8] sm:$0xff] %vm27, 0.0
    %123 = vst.msk [vmem:[#allocation2 + $0x2f0] sm:$0xff] %vm27, 0.0
    %124 = vst.msk [vmem:[#allocation2 + $0x2f8] sm:$0x3] %vm30, 0.0
    %125 = vst.msk [vmem:[#allocation2 + $0x300] sm:$0xff] %vm27, 0.0
    %126 = vst.msk [vmem:[#allocation2 + $0x308] sm:$0xff] %vm27, 0.0
    %127 = vst.msk [vmem:[#allocation2 + $0x310] sm:$0x3] %vm30, 0.0
    %128 = vst.msk [vmem:[#allocation2 + $0x318] sm:$0xff] %vm27, 0.0
    %129 = vst.msk [vmem:[#allocation2 + $0x320] sm:$0xff] %vm27, 0.0
    %130 = vst.msk [vmem:[#allocation2 + $0x328] sm:$0x3] %vm30, 0.0
    %131 = vst.msk [vmem:[#allocation2 + $0x330] sm:$0xff] %vm27, 0.0
    %132 = vst.msk [vmem:[#allocation2 + $0x338] sm:$0xff] %vm27, 0.0
    %133 = vst.msk [vmem:[#allocation2 + $0x340] sm:$0x3] %vm30, 0.0
    %134 = vst.msk [vmem:[#allocation2 + $0x348] sm:$0xff] %vm27, 0.0
    %135 = vst.msk [vmem:[#allocation2 + $0x350] sm:$0xff] %vm27, 0.0
    %136 = vst.msk [vmem:[#allocation2 + $0x358] sm:$0x3] %vm30, 0.0
    %137 = vst.msk [vmem:[#allocation2 + $0x360] sm:$0xff] %vm27, 0.0
    %138 = vst.msk [vmem:[#allocation2 + $0x368] sm:$0xff] %vm27, 0.0
    %139 = vst.msk [vmem:[#allocation2 + $0x370] sm:$0x3] %vm30, 0.0
    %140 = vst.msk [vmem:[#allocation2 + $0x378] sm:$0xff] %vm27, 0.0
    %141 = vst.msk [vmem:[#allocation2 + $0x380] sm:$0xff] %vm27, 0.0
    %142 = vst.msk [vmem:[#allocation2 + $0x388] sm:$0x3] %vm30, 0.0
    %143 = vst.msk [vmem:[#allocation2 + $0x390] sm:$0xff] %vm27, 0.0
    %144 = vst.msk [vmem:[#allocation2 + $0x398] sm:$0xff] %vm27, 0.0
    %145 = vst.msk [vmem:[#allocation2 + $0x3a0] sm:$0x3] %vm30, 0.0
    %146 = vst.msk [vmem:[#allocation2 + $0x3a8] sm:$0xff] %vm27, 0.0
    %147 = vst.msk [vmem:[#allocation2 + $0x3b0] sm:$0xff] %vm27, 0.0
    %148 = vst.msk [vmem:[#allocation2 + $0x3b8] sm:$0x3] %vm30, 0.0
    %149 = vst.msk [vmem:[#allocation2 + $0x3c0] sm:$0xff] %vm27, 0.0
    %150 = vst.msk [vmem:[#allocation2 + $0x3c8] sm:$0xff] %vm27, 0.0
    %151 = vst.msk [vmem:[#allocation2 + $0x3d0] sm:$0x3] %vm30, 0.0
    %152 = vst.msk [vmem:[#allocation2 + $0x3d8] sm:$0xff] %vm27, 0.0
    %153 = vst.msk [vmem:[#allocation2 + $0x3e0] sm:$0xff] %vm27, 0.0
    %154 = vst.msk [vmem:[#allocation2 + $0x3e8] sm:$0x3] %vm30, 0.0
    %155 = vst.msk [vmem:[#allocation2 + $0x3f0] sm:$0xff] %vm27, 0.0
    %156 = vst.msk [vmem:[#allocation2 + $0x3f8] sm:$0xff] %vm27, 0.0
    %157 = vst.msk [vmem:[#allocation2 + $0x400] sm:$0x3] %vm30, 0.0
    %158 = vst.msk [vmem:[#allocation2 + $0x408] sm:$0xff] %vm27, 0.0
    %159 = vst.msk [vmem:[#allocation2 + $0x410] sm:$0xff] %vm27, 0.0
    %160 = vst.msk [vmem:[#allocation2 + $0x418] sm:$0x3] %vm30, 0.0
    %161 = vst.msk [vmem:[#allocation2 + $0x420] sm:$0xff] %vm27, 0.0
    %162 = vst.msk [vmem:[#allocation2 + $0x428] sm:$0xff] %vm27, 0.0
    %163 = vst.msk [vmem:[#allocation2 + $0x430] sm:$0x3] %vm30, 0.0
    %164 = vst.msk [vmem:[#allocation2 + $0x438] sm:$0xff] %vm27, 0.0
    %165 = vst.msk [vmem:[#allocation2 + $0x440] sm:$0xff] %vm27, 0.0
    %166 = vst.msk [vmem:[#allocation2 + $0x448] sm:$0x3] %vm30, 0.0
    %167 = vst.msk [vmem:[#allocation2 + $0x450] sm:$0xff] %vm27, 0.0
    %168 = vst.msk [vmem:[#allocation2 + $0x458] sm:$0xff] %vm27, 0.0
    %169 = vst.msk [vmem:[#allocation2 + $0x460] sm:$0x3] %vm30, 0.0
    %170 = vst.msk [vmem:[#allocation2 + $0x468] sm:$0xff] %vm27, 0.0
    %171 = vst.msk [vmem:[#allocation2 + $0x470] sm:$0xff] %vm27, 0.0
    %172 = vst.msk [vmem:[#allocation2 + $0x478] sm:$0x3] %vm30, 0.0
    %173 = vst.msk [vmem:[#allocation2 + $0x480] sm:$0xff] %vm27, 0.0
    %174 = vst.msk [vmem:[#allocation2 + $0x488] sm:$0xff] %vm27, 0.0
    %175 = vst.msk [vmem:[#allocation2 + $0x490] sm:$0x3] %vm30, 0.0
    %176 = vst.msk [vmem:[#allocation2 + $0x498] sm:$0xff] %vm27, 0.0
    %177 = vst.msk [vmem:[#allocation2 + $0x4a0] sm:$0xff] %vm27, 0.0
    %178 = vst.msk [vmem:[#allocation2 + $0x4a8] sm:$0x3] %vm30, 0.0
    %179 = vst.msk [vmem:[#allocation2 + $0x4b0] sm:$0xff] %vm27, 0.0
    %180 = vst.msk [vmem:[#allocation2 + $0x4b8] sm:$0xff] %vm27, 0.0
    %181 = vst.msk [vmem:[#allocation2 + $0x4c0] sm:$0x3] %vm30, 0.0
    %182 = vst.msk [vmem:[#allocation2 + $0x4c8] sm:$0xff] %vm27, 0.0
    %183 = vst.msk [vmem:[#allocation2 + $0x4d0] sm:$0xff] %vm27, 0.0
    %184 = vst.msk [vmem:[#allocation2 + $0x4d8] sm:$0x3] %vm30, 0.0
    %185 = vst.msk [vmem:[#allocation2 + $0x4e0] sm:$0xff] %vm27, 0.0
    %186 = vst.msk [vmem:[#allocation2 + $0x4e8] sm:$0xff] %vm27, 0.0
    %187 = vst.msk [vmem:[#allocation2 + $0x4f0] sm:$0x3] %vm30, 0.0
    %188 = vst.msk [vmem:[#allocation2 + $0x4f8] sm:$0xff] %vm27, 0.0
    %189 = vst.msk [vmem:[#allocation2 + $0x500] sm:$0xff] %vm27, 0.0
    %190 = vst.msk [vmem:[#allocation2 + $0x508] sm:$0x3] %vm30, 0.0
    %191 = vst.msk [vmem:[#allocation2 + $0x510] sm:$0xff] %vm27, 0.0
    %192 = vst.msk [vmem:[#allocation2 + $0x518] sm:$0xff] %vm27, 0.0
    %193 = vst.msk [vmem:[#allocation2 + $0x520] sm:$0x3] %vm30, 0.0
    %194 = vst.msk [vmem:[#allocation2 + $0x528] sm:$0xff] %vm27, 0.0
    %195 = vst.msk [vmem:[#allocation2 + $0x530] sm:$0xff] %vm27, 0.0
    %196 = vst.msk [vmem:[#allocation2 + $0x538] sm:$0x3] %vm30, 0.0
    %197 = vst.msk [vmem:[#allocation2 + $0x540] sm:$0xff] %vm27, 0.0
    %198 = vst.msk [vmem:[#allocation2 + $0x548] sm:$0xff] %vm27, 0.0
    %199 = vst.msk [vmem:[#allocation2 + $0x550] sm:$0x3] %vm30, 0.0
    %200 = vst.msk [vmem:[#allocation2 + $0x558] sm:$0xff] %vm27, 0.0
    %201 = vst.msk [vmem:[#allocation2 + $0x560] sm:$0xff] %vm27, 0.0
    %202 = vst.msk [vmem:[#allocation2 + $0x568] sm:$0x3] %vm30, 0.0
    %203 = vst.msk [vmem:[#allocation2 + $0x570] sm:$0xff] %vm27, 0.0
    %204 = vst.msk [vmem:[#allocation2 + $0x578] sm:$0xff] %vm27, 0.0
    %205 = vst.msk [vmem:[#allocation2 + $0x580] sm:$0x3] %vm30, 0.0
    %206 = vst.msk [vmem:[#allocation2 + $0x588] sm:$0xff] %vm27, 0.0
    %207 = vst.msk [vmem:[#allocation2 + $0x590] sm:$0xff] %vm27, 0.0
    %208 = vst.msk [vmem:[#allocation2 + $0x598] sm:$0x3] %vm30, 0.0
    %209 = vst.msk [vmem:[#allocation2 + $0x5a0] sm:$0xff] %vm27, 0.0
    %210 = vst.msk [vmem:[#allocation2 + $0x5a8] sm:$0xff] %vm27, 0.0
    %211 = vst.msk [vmem:[#allocation2 + $0x5b0] sm:$0x3] %vm30, 0.0
    %212 = vst.msk [vmem:[#allocation2 + $0x5b8] sm:$0xff] %vm27, 0.0
    %213 = vst.msk [vmem:[#allocation2 + $0x5c0] sm:$0xff] %vm27, 0.0
    %214 = vst.msk [vmem:[#allocation2 + $0x5c8] sm:$0x3] %vm30, 0.0
    %215 = vst.msk [vmem:[#allocation2 + $0x5d0] sm:$0xff] %vm27, 0.0
    %216 = vst.msk [vmem:[#allocation2 + $0x5d8] sm:$0xff] %vm27, 0.0
    %217 = vst.msk [vmem:[#allocation2 + $0x5e0] sm:$0x3] %vm30, 0.0
    %218 = vst.msk [vmem:[#allocation2 + $0x5e8] sm:$0xff] %vm27, 0.0
    %219 = vst.msk [vmem:[#allocation2 + $0x5f0] sm:$0xff] %vm27, 0.0
    %220 = vst.msk [vmem:[#allocation2 + $0x5f8] sm:$0x3] %vm30, 0.0
    %221 = vst.msk [vmem:[#allocation2 + $0x600] sm:$0xff] %vm27, 0.0
    %222 = vst.msk [vmem:[#allocation2 + $0x608] sm:$0xff] %vm27, 0.0
    %223 = vst.msk [vmem:[#allocation2 + $0x610] sm:$0x3] %vm30, 0.0
    %224 = vst.msk [vmem:[#allocation2 + $0x618] sm:$0xff] %vm27, 0.0
    %225 = vst.msk [vmem:[#allocation2 + $0x620] sm:$0xff] %vm27, 0.0
    %226 = vst.msk [vmem:[#allocation2 + $0x628] sm:$0x3] %vm30, 0.0
    %227 = vst.msk [vmem:[#allocation2 + $0x630] sm:$0xff] %vm27, 0.0
    %228 = vst.msk [vmem:[#allocation2 + $0x638] sm:$0xff] %vm27, 0.0
    %229 = vst.msk [vmem:[#allocation2 + $0x640] sm:$0x3] %vm30, 0.0
    %230 = vst.msk [vmem:[#allocation2 + $0x648] sm:$0xff] %vm27, 0.0
    %231 = vst.msk [vmem:[#allocation2 + $0x650] sm:$0xff] %vm27, 0.0
    %232 = vst.msk [vmem:[#allocation2 + $0x658] sm:$0x3] %vm30, 0.0
    %233 = vst.msk [vmem:[#allocation2 + $0x660] sm:$0xff] %vm27, 0.0
    %234 = vst.msk [vmem:[#allocation2 + $0x668] sm:$0xff] %vm27, 0.0
    %235 = vst.msk [vmem:[#allocation2 + $0x670] sm:$0x3] %vm30, 0.0
    %236 = vst.msk [vmem:[#allocation2 + $0x678] sm:$0xff] %vm27, 0.0
    %237 = vst.msk [vmem:[#allocation2 + $0x680] sm:$0xff] %vm27, 0.0
    %238 = vst.msk [vmem:[#allocation2 + $0x688] sm:$0x3] %vm30, 0.0
    %239 = vst.msk [vmem:[#allocation2 + $0x690] sm:$0xff] %vm27, 0.0
    %240 = vst.msk [vmem:[#allocation2 + $0x698] sm:$0xff] %vm27, 0.0
    %241 = vst.msk [vmem:[#allocation2 + $0x6a0] sm:$0x3] %vm30, 0.0
    %242 = vst.msk [vmem:[#allocation2 + $0x6a8] sm:$0xff] %vm27, 0.0
    %243 = vst.msk [vmem:[#allocation2 + $0x6b0] sm:$0xff] %vm27, 0.0
    %244 = vst.msk [vmem:[#allocation2 + $0x6b8] sm:$0x3] %vm30, 0.0
    %v245 = vld [vmem:[%s0] sm:$0xff]
    %v246 = vld [vmem:[%s0 + $0x8] sm:$0xff]
    %v247 = vld [vmem:[%s0 + $0x10] sm:$0xff]
    %v248 = vld [vmem:[%s0 + $0x18] sm:$0xff]
    %v249 = vld [vmem:[%s0 + $0x20] sm:$0xff]
    %v250 = vld [vmem:[%s0 + $0x28] sm:$0xff]
    %v251 = vld [vmem:[%s0 + $0x30] sm:$0xff]
    %v252 = vld [vmem:[%s0 + $0x38] sm:$0xff]
    %v253 = vld [vmem:[%s0 + $0x40] sm:$0xff]
    %v254 = vld [vmem:[%s0 + $0x48] sm:$0xff]
    %v255 = vld [vmem:[%s0 + $0x50] sm:$0xff]
    %v256 = vld [vmem:[%s0 + $0x58] sm:$0xff]
    %v257 = vld [vmem:[%s0 + $0x60] sm:$0xff]
    %v258 = vld [vmem:[%s0 + $0x68] sm:$0xff]
    %v259 = vld [vmem:[%s0 + $0x70] sm:$0xff]
    %v260 = vld [vmem:[%s0 + $0x78] sm:$0xff]
    %v261 = vld [vmem:[%s0 + $0x80] sm:$0xff]
    %v262 = vld [vmem:[%s0 + $0x88] sm:$0xff]
    %v263 = vld [vmem:[%s0 + $0x90] sm:$0xff]
    %v264 = vld [vmem:[%s0 + $0x98] sm:$0xff]
    %v265 = vld [vmem:[%s0 + $0xa0] sm:$0xff]
    %v266 = vld [vmem:[%s0 + $0xa8] sm:$0xff]
    %v267 = vld [vmem:[%s0 + $0xb0] sm:$0xff]
    %v268 = vld [vmem:[%s0 + $0xb8] sm:$0xff]
    %v269 = vld [vmem:[%s0 + $0xc0] sm:$0xff]
    %v270 = vld [vmem:[%s0 + $0xc8] sm:$0xff]
    %v271 = vld [vmem:[%s0 + $0xd0] sm:$0xff]
    %v272 = vld [vmem:[%s0 + $0xd8] sm:$0xff]
    %v273 = vld [vmem:[%s0 + $0xe0] sm:$0xff]
    %v274 = vld [vmem:[%s0 + $0xe8] sm:$0xff]
    %v275 = vld [vmem:[%s0 + $0xf0] sm:$0xff]
    %v276 = vld [vmem:[%s0 + $0xf8] sm:$0xff]
    %v277 = vld [vmem:[%s0 + $0x100] sm:$0xff]
    %v278 = vld [vmem:[%s0 + $0x108] sm:$0xff]
    %v279 = vld [vmem:[%s0 + $0x110] sm:$0xff]
    %v280 = vld [vmem:[%s0 + $0x118] sm:$0xff]
    %v281 = vld [vmem:[%s0 + $0x120] sm:$0xff]
    %v282 = vld [vmem:[%s0 + $0x128] sm:$0xff]
    %v283 = vld [vmem:[%s0 + $0x130] sm:$0xff]
    %v284 = vld [vmem:[%s0 + $0x138] sm:$0xff]
    %v285 = vld [vmem:[%s0 + $0x140] sm:$0xff]
    %v286 = vld [vmem:[%s0 + $0x148] sm:$0xff]
    %v287 = vld [vmem:[%s0 + $0x150] sm:$0xff]
    %v288 = vld [vmem:[%s0 + $0x158] sm:$0xff]
    %v289 = vld [vmem:[%s0 + $0x160] sm:$0xff]
    %v290 = vld [vmem:[%s0 + $0x168] sm:$0xff]
    %v291 = vld [vmem:[%s0 + $0x170] sm:$0xff]
    %v292 = vld [vmem:[%s0 + $0x178] sm:$0xff]
    %v293 = vld [vmem:[%s0 + $0x180] sm:$0xff]
    %v294 = vld [vmem:[%s0 + $0x188] sm:$0xff]
    %v295 = vld [vmem:[%s0 + $0x190] sm:$0xff]
    %v296 = vld [vmem:[%s0 + $0x198] sm:$0xff]
    %v297 = vld [vmem:[%s0 + $0x1a0] sm:$0xff]
    %v298 = vld [vmem:[%s0 + $0x1a8] sm:$0xff]
    %v299 = vld [vmem:[%s0 + $0x1b0] sm:$0xff]
    %v300 = vld [vmem:[%s0 + $0x1b8] sm:$0xff]
    %v301 = vld [vmem:[%s0 + $0x1c0] sm:$0xff]
    %v302 = vld [vmem:[%s0 + $0x1c8] sm:$0xff]
    %v303 = vld [vmem:[%s0 + $0x1d0] sm:$0xff]
    %v304 = vld [vmem:[%s0 + $0x1d8] sm:$0xff]
    %v305 = vld [vmem:[%s0 + $0x1e0] sm:$0xff]
    %v306 = vld [vmem:[%s0 + $0x1e8] sm:$0xff]
    %v307 = vld [vmem:[%s0 + $0x1f0] sm:$0xff]
    %v308 = vld [vmem:[%s0 + $0x1f8] sm:$0xff]
    %s309 = scalar_lea.vmem [#allocation2], 24
    %310 = vst.msk [vmem:[%s309 + $0x1] sm:$0xff] %vm27, %v245
    %311 = vst.msk [vmem:[%s309 + $0x9] sm:$0xff] %vm27, %v246
    %312 = vst.msk [vmem:[%s309 + $0x19] sm:$0xff] %vm27, %v247
    %313 = vst.msk [vmem:[%s309 + $0x21] sm:$0xff] %vm27, %v248
    %314 = vst.msk [vmem:[%s309 + $0x31] sm:$0xff] %vm27, %v249
    %315 = vst.msk [vmem:[%s309 + $0x39] sm:$0xff] %vm27, %v250
    %316 = vst.msk [vmem:[%s309 + $0x49] sm:$0xff] %vm27, %v251
    %317 = vst.msk [vmem:[%s309 + $0x51] sm:$0xff] %vm27, %v252
    %318 = vst.msk [vmem:[%s309 + $0x61] sm:$0xff] %vm27, %v253
    %319 = vst.msk [vmem:[%s309 + $0x69] sm:$0xff] %vm27, %v254
    %320 = vst.msk [vmem:[%s309 + $0x79] sm:$0xff] %vm27, %v255
    %321 = vst.msk [vmem:[%s309 + $0x81] sm:$0xff] %vm27, %v256
    %322 = vst.msk [vmem:[%s309 + $0x91] sm:$0xff] %vm27, %v257
    %323 = vst.msk [vmem:[%s309 + $0x99] sm:$0xff] %vm27, %v258
    %324 = vst.msk [vmem:[%s309 + $0xa9] sm:$0xff] %vm27, %v259
    %325 = vst.msk [vmem:[%s309 + $0xb1] sm:$0xff] %vm27, %v260
    %326 = vst.msk [vmem:[%s309 + $0xc1] sm:$0xff] %vm27, %v261
    %327 = vst.msk [vmem:[%s309 + $0xc9] sm:$0xff] %vm27, %v262
    %328 = vst.msk [vmem:[%s309 + $0xd9] sm:$0xff] %vm27, %v263
    %329 = vst.msk [vmem:[%s309 + $0xe1] sm:$0xff] %vm27, %v264
    %330 = vst.msk [vmem:[%s309 + $0xf1] sm:$0xff] %vm27, %v265
    %331 = vst.msk [vmem:[%s309 + $0xf9] sm:$0xff] %vm27, %v266
    %332 = vst.msk [vmem:[%s309 + $0x109] sm:$0xff] %vm27, %v267
    %333 = vst.msk [vmem:[%s309 + $0x111] sm:$0xff] %vm27, %v268
    %334 = vst.msk [vmem:[%s309 + $0x121] sm:$0xff] %vm27, %v269
    %335 = vst.msk [vmem:[%s309 + $0x129] sm:$0xff] %vm27, %v270
    %336 = vst.msk [vmem:[%s309 + $0x139] sm:$0xff] %vm27, %v271
    %337 = vst.msk [vmem:[%s309 + $0x141] sm:$0xff] %vm27, %v272
    %338 = vst.msk [vmem:[%s309 + $0x151] sm:$0xff] %vm27, %v273
    %339 = vst.msk [vmem:[%s309 + $0x159] sm:$0xff] %vm27, %v274
    %340 = vst.msk [vmem:[%s309 + $0x169] sm:$0xff] %vm27, %v275
    %341 = vst.msk [vmem:[%s309 + $0x171] sm:$0xff] %vm27, %v276
    %342 = vst.msk [vmem:[%s309 + $0x1b1] sm:$0xff] %vm27, %v277
    %343 = vst.msk [vmem:[%s309 + $0x1b9] sm:$0xff] %vm27, %v278
    %344 = vst.msk [vmem:[%s309 + $0x1c9] sm:$0xff] %vm27, %v279
    %345 = vst.msk [vmem:[%s309 + $0x1d1] sm:$0xff] %vm27, %v280
    %346 = vst.msk [vmem:[%s309 + $0x1e1] sm:$0xff] %vm27, %v281
    %347 = vst.msk [vmem:[%s309 + $0x1e9] sm:$0xff] %vm27, %v282
    %348 = vst.msk [vmem:[%s309 + $0x1f9] sm:$0xff] %vm27, %v283
    %349 = vst.msk [vmem:[%s309 + $0x201] sm:$0xff] %vm27, %v284
    %350 = vst.msk [vmem:[%s309 + $0x211] sm:$0xff] %vm27, %v285
    %351 = vst.msk [vmem:[%s309 + $0x219] sm:$0xff] %vm27, %v286
    %352 = vst.msk [vmem:[%s309 + $0x229] sm:$0xff] %vm27, %v287
    %353 = vst.msk [vmem:[%s309 + $0x231] sm:$0xff] %vm27, %v288
    %354 = vst.msk [vmem:[%s309 + $0x241] sm:$0xff] %vm27, %v289
    %355 = vst.msk [vmem:[%s309 + $0x249] sm:$0xff] %vm27, %v290
    %356 = vst.msk [vmem:[%s309 + $0x259] sm:$0xff] %vm27, %v291
    %357 = vst.msk [vmem:[%s309 + $0x261] sm:$0xff] %vm27, %v292
    %358 = vst.msk [vmem:[%s309 + $0x271] sm:$0xff] %vm27, %v293
    %359 = vst.msk [vmem:[%s309 + $0x279] sm:$0xff] %vm27, %v294
    %360 = vst.msk [vmem:[%s309 + $0x289] sm:$0xff] %vm27, %v295
    %361 = vst.msk [vmem:[%s309 + $0x291] sm:$0xff] %vm27, %v296
    %362 = vst.msk [vmem:[%s309 + $0x2a1] sm:$0xff] %vm27, %v297
    %363 = vst.msk [vmem:[%s309 + $0x2a9] sm:$0xff] %vm27, %v298
    %364 = vst.msk [vmem:[%s309 + $0x2b9] sm:$0xff] %vm27, %v299
    %365 = vst.msk [vmem:[%s309 + $0x2c1] sm:$0xff] %vm27, %v300
    %366 = vst.msk [vmem:[%s309 + $0x2d1] sm:$0xff] %vm27, %v301
    %367 = vst.msk [vmem:[%s309 + $0x2d9] sm:$0xff] %vm27, %v302
    %368 = vst.msk [vmem:[%s309 + $0x2e9] sm:$0xff] %vm27, %v303
    %369 = vst.msk [vmem:[%s309 + $0x2f1] sm:$0xff] %vm27, %v304
    %370 = vst.msk [vmem:[%s309 + $0x301] sm:$0xff] %vm27, %v305
    %371 = vst.msk [vmem:[%s309 + $0x309] sm:$0xff] %vm27, %v306
    %372 = vst.msk [vmem:[%s309 + $0x319] sm:$0xff] %vm27, %v307
    %373 = vst.msk [vmem:[%s309 + $0x321] sm:$0xff] %vm27, %v308
    %v374 = vld [vmem:[%s1] sm:$0xff]
    %v375 = vld [vmem:[%s1 + $0x8] sm:$0xff]
    %v376 = vld [vmem:[%s1 + $0x10] sm:$0xff]
    %v377 = vld [vmem:[%s1 + $0x18] sm:$0xff]
    %v378 = vld [vmem:[%s1 + $0x20] sm:$0xff]
    %v379 = vld [vmem:[%s1 + $0x28] sm:$0xff]
    %v380 = vld [vmem:[%s1 + $0x30] sm:$0xff]
    %v381 = vld [vmem:[%s1 + $0x38] sm:$0xff]
    %v382 = vld [vmem:[%s1 + $0x40] sm:$0xff]
    %v383 = vld [vmem:[%s1 + $0x48] sm:$0xff]
    %v384 = vld [vmem:[%s1 + $0x50] sm:$0xff]
    %v385 = vld [vmem:[%s1 + $0x58] sm:$0xff]
    %v386 = vld [vmem:[%s1 + $0x60] sm:$0xff]
    %v387 = vld [vmem:[%s1 + $0x68] sm:$0xff]
    %v388 = vld [vmem:[%s1 + $0x70] sm:$0xff]
    %v389 = vld [vmem:[%s1 + $0x78] sm:$0xff]
    %v390 = vld [vmem:[%s1 + $0x80] sm:$0xff]
    %v391 = vld [vmem:[%s1 + $0x88] sm:$0xff]
    %v392 = vld [vmem:[%s1 + $0x90] sm:$0xff]
    %v393 = vld [vmem:[%s1 + $0x98] sm:$0xff]
    %v394 = vld [vmem:[%s1 + $0xa0] sm:$0xff]
    %v395 = vld [vmem:[%s1 + $0xa8] sm:$0xff]
    %v396 = vld [vmem:[%s1 + $0xb0] sm:$0xff]
    %v397 = vld [vmem:[%s1 + $0xb8] sm:$0xff]
    %v398 = vld [vmem:[%s1 + $0xc0] sm:$0xff]
    %v399 = vld [vmem:[%s1 + $0xc8] sm:$0xff]
    %v400 = vld [vmem:[%s1 + $0xd0] sm:$0xff]
    %v401 = vld [vmem:[%s1 + $0xd8] sm:$0xff]
    %v402 = vld [vmem:[%s1 + $0xe0] sm:$0xff]
    %v403 = vld [vmem:[%s1 + $0xe8] sm:$0xff]
    %v404 = vld [vmem:[%s1 + $0xf0] sm:$0xff]
    %v405 = vld [vmem:[%s1 + $0xf8] sm:$0xff]
    %v406 = vld [vmem:[%s1 + $0x100] sm:$0xff]
    %v407 = vld [vmem:[%s1 + $0x108] sm:$0xff]
    %v408 = vld [vmem:[%s1 + $0x110] sm:$0xff]
    %v409 = vld [vmem:[%s1 + $0x118] sm:$0xff]
    %v410 = vld [vmem:[%s1 + $0x120] sm:$0xff]
    %v411 = vld [vmem:[%s1 + $0x128] sm:$0xff]
    %v412 = vld [vmem:[%s1 + $0x130] sm:$0xff]
    %v413 = vld [vmem:[%s1 + $0x138] sm:$0xff]
    %v414 = vld [vmem:[%s1 + $0x140] sm:$0xff]
    %v415 = vld [vmem:[%s1 + $0x148] sm:$0xff]
    %v416 = vld [vmem:[%s1 + $0x150] sm:$0xff]
    %v417 = vld [vmem:[%s1 + $0x158] sm:$0xff]
    %v418 = vld [vmem:[%s1 + $0x160] sm:$0xff]
    %v419 = vld [vmem:[%s1 + $0x168] sm:$0xff]
    %v420 = vld [vmem:[%s1 + $0x170] sm:$0xff]
    %v421 = vld [vmem:[%s1 + $0x178] sm:$0xff]
    %v422 = vld [vmem:[%s1 + $0x180] sm:$0xff]
    %v423 = vld [vmem:[%s1 + $0x188] sm:$0xff]
    %v424 = vld [vmem:[%s1 + $0x190] sm:$0xff]
    %v425 = vld [vmem:[%s1 + $0x198] sm:$0xff]
    %v426 = vld [vmem:[%s1 + $0x1a0] sm:$0xff]
    %v427 = vld [vmem:[%s1 + $0x1a8] sm:$0xff]
    %v428 = vld [vmem:[%s1 + $0x1b0] sm:$0xff]
    %v429 = vld [vmem:[%s1 + $0x1b8] sm:$0xff]
    %v430 = vld [vmem:[%s1 + $0x1c0] sm:$0xff]
    %v431 = vld [vmem:[%s1 + $0x1c8] sm:$0xff]
    %v432 = vld [vmem:[%s1 + $0x1d0] sm:$0xff]
    %v433 = vld [vmem:[%s1 + $0x1d8] sm:$0xff]
    %v434 = vld [vmem:[%s1 + $0x1e0] sm:$0xff]
    %v435 = vld [vmem:[%s1 + $0x1e8] sm:$0xff]
    %v436 = vld [vmem:[%s1 + $0x1f0] sm:$0xff]
    %v437 = vld [vmem:[%s1 + $0x1f8] sm:$0xff]
    %s438 = scalar_lea.vmem [#allocation2], 888
    %439 = vst.msk [vmem:[%s438 + $0x1] sm:$0xff] %vm27, %v374
    %440 = vst.msk [vmem:[%s438 + $0x9] sm:$0xff] %vm27, %v375
    %441 = vst.msk [vmem:[%s438 + $0x19] sm:$0xff] %vm27, %v376
    %442 = vst.msk [vmem:[%s438 + $0x21] sm:$0xff] %vm27, %v377
    %443 = vst.msk [vmem:[%s438 + $0x31] sm:$0xff] %vm27, %v378
    %444 = vst.msk [vmem:[%s438 + $0x39] sm:$0xff] %vm27, %v379
    %445 = vst.msk [vmem:[%s438 + $0x49] sm:$0xff] %vm27, %v380
    %446 = vst.msk [vmem:[%s438 + $0x51] sm:$0xff] %vm27, %v381
    %447 = vst.msk [vmem:[%s438 + $0x61] sm:$0xff] %vm27, %v382
    %448 = vst.msk [vmem:[%s438 + $0x69] sm:$0xff] %vm27, %v383
    %449 = vst.msk [vmem:[%s438 + $0x79] sm:$0xff] %vm27, %v384
    %450 = vst.msk [vmem:[%s438 + $0x81] sm:$0xff] %vm27, %v385
    %451 = vst.msk [vmem:[%s438 + $0x91] sm:$0xff] %vm27, %v386
    %452 = vst.msk [vmem:[%s438 + $0x99] sm:$0xff] %vm27, %v387
    %453 = vst.msk [vmem:[%s438 + $0xa9] sm:$0xff] %vm27, %v388
    %454 = vst.msk [vmem:[%s438 + $0xb1] sm:$0xff] %vm27, %v389
    %455 = vst.msk [vmem:[%s438 + $0xc1] sm:$0xff] %vm27, %v390
    %456 = vst.msk [vmem:[%s438 + $0xc9] sm:$0xff] %vm27, %v391
    %457 = vst.msk [vmem:[%s438 + $0xd9] sm:$0xff] %vm27, %v392
    %458 = vst.msk [vmem:[%s438 + $0xe1] sm:$0xff] %vm27, %v393
    %459 = vst.msk [vmem:[%s438 + $0xf1] sm:$0xff] %vm27, %v394
    %460 = vst.msk [vmem:[%s438 + $0xf9] sm:$0xff] %vm27, %v395
    %461 = vst.msk [vmem:[%s438 + $0x109] sm:$0xff] %vm27, %v396
    %462 = vst.msk [vmem:[%s438 + $0x111] sm:$0xff] %vm27, %v397
    %463 = vst.msk [vmem:[%s438 + $0x121] sm:$0xff] %vm27, %v398
    %464 = vst.msk [vmem:[%s438 + $0x129] sm:$0xff] %vm27, %v399
    %465 = vst.msk [vmem:[%s438 + $0x139] sm:$0xff] %vm27, %v400
    %466 = vst.msk [vmem:[%s438 + $0x141] sm:$0xff] %vm27, %v401
    %467 = vst.msk [vmem:[%s438 + $0x151] sm:$0xff] %vm27, %v402
    %468 = vst.msk [vmem:[%s438 + $0x159] sm:$0xff] %vm27, %v403
    %469 = vst.msk [vmem:[%s438 + $0x169] sm:$0xff] %vm27, %v404
    %470 = vst.msk [vmem:[%s438 + $0x171] sm:$0xff] %vm27, %v405
    %471 = vst.msk [vmem:[%s438 + $0x1b1] sm:$0xff] %vm27, %v406
    %472 = vst.msk [vmem:[%s438 + $0x1b9] sm:$0xff] %vm27, %v407
    %473 = vst.msk [vmem:[%s438 + $0x1c9] sm:$0xff] %vm27, %v408
    %474 = vst.msk [vmem:[%s438 + $0x1d1] sm:$0xff] %vm27, %v409
    %475 = vst.msk [vmem:[%s438 + $0x1e1] sm:$0xff] %vm27, %v410
    %476 = vst.msk [vmem:[%s438 + $0x1e9] sm:$0xff] %vm27, %v411
    %477 = vst.msk [vmem:[%s438 + $0x1f9] sm:$0xff] %vm27, %v412
    %478 = vst.msk [vmem:[%s438 + $0x201] sm:$0xff] %vm27, %v413
    %479 = vst.msk [vmem:[%s438 + $0x211] sm:$0xff] %vm27, %v414
    %480 = vst.msk [vmem:[%s438 + $0x219] sm:$0xff] %vm27, %v415
    %481 = vst.msk [vmem:[%s438 + $0x229] sm:$0xff] %vm27, %v416
    %482 = vst.msk [vmem:[%s438 + $0x231] sm:$0xff] %vm27, %v417
    %483 = vst.msk [vmem:[%s438 + $0x241] sm:$0xff] %vm27, %v418
    %484 = vst.msk [vmem:[%s438 + $0x249] sm:$0xff] %vm27, %v419
    %485 = vst.msk [vmem:[%s438 + $0x259] sm:$0xff] %vm27, %v420
    %486 = vst.msk [vmem:[%s438 + $0x261] sm:$0xff] %vm27, %v421
    %487 = vst.msk [vmem:[%s438 + $0x271] sm:$0xff] %vm27, %v422
    %488 = vst.msk [vmem:[%s438 + $0x279] sm:$0xff] %vm27, %v423
    %489 = vst.msk [vmem:[%s438 + $0x289] sm:$0xff] %vm27, %v424
    %490 = vst.msk [vmem:[%s438 + $0x291] sm:$0xff] %vm27, %v425
    %491 = vst.msk [vmem:[%s438 + $0x2a1] sm:$0xff] %vm27, %v426
    %492 = vst.msk [vmem:[%s438 + $0x2a9] sm:$0xff] %vm27, %v427
    %493 = vst.msk [vmem:[%s438 + $0x2b9] sm:$0xff] %vm27, %v428
    %494 = vst.msk [vmem:[%s438 + $0x2c1] sm:$0xff] %vm27, %v429
    %495 = vst.msk [vmem:[%s438 + $0x2d1] sm:$0xff] %vm27, %v430
    %496 = vst.msk [vmem:[%s438 + $0x2d9] sm:$0xff] %vm27, %v431
    %497 = vst.msk [vmem:[%s438 + $0x2e9] sm:$0xff] %vm27, %v432
    %498 = vst.msk [vmem:[%s438 + $0x2f1] sm:$0xff] %vm27, %v433
    %499 = vst.msk [vmem:[%s438 + $0x301] sm:$0xff] %vm27, %v434
    %500 = vst.msk [vmem:[%s438 + $0x309] sm:$0xff] %vm27, %v435
    %501 = vst.msk [vmem:[%s438 + $0x319] sm:$0xff] %vm27, %v436
    %502 = vst.msk [vmem:[%s438 + $0x321] sm:$0xff] %vm27, %v437
    %v503 = vld [vmem:[#allocation2] sm:$0xff]
    %v504 = vld [vmem:[#allocation2 + $0x8] sm:$0xff]
    %v505 = vld [vmem:[#allocation2 + $0x18] sm:$0xff]
    %v506 = vld [vmem:[#allocation2 + $0x20] sm:$0xff]
    %v507 = vld [vmem:[#allocation2 + $0x30] sm:$0xff]
    %v508 = vld [vmem:[#allocation2 + $0x38] sm:$0xff]
    %v509 = vld [vmem:[#allocation2 + $0x48] sm:$0xff]
    %v510 = vld [vmem:[#allocation2 + $0x50] sm:$0xff]
    %v511 = vld [vmem:[#allocation2 + $0x60] sm:$0xff]
    %v512 = vld [vmem:[#allocation2 + $0x68] sm:$0xff]
    %v513 = vld [vmem:[#allocation2 + $0x78] sm:$0xff]
    %v514 = vld [vmem:[#allocation2 + $0x80] sm:$0xff]
    %v515 = vld [vmem:[#allocation2 + $0x90] sm:$0xff]
    %v516 = vld [vmem:[#allocation2 + $0x98] sm:$0xff]
    %v517 = vld [vmem:[#allocation2 + $0xa8] sm:$0xff]
    %v518 = vld [vmem:[#allocation2 + $0xb0] sm:$0xff]
    %v519 = vld [vmem:[#allocation2 + $0xc0] sm:$0xff]
    %v520 = vld [vmem:[#allocation2 + $0xc8] sm:$0xff]
    %v521 = vld [vmem:[#allocation2 + $0xd8] sm:$0xff]
    %v522 = vld [vmem:[#allocation2 + $0xe0] sm:$0xff]
    %v523 = vld [vmem:[#allocation2 + $0xf0] sm:$0xff]
    %v524 = vld [vmem:[#allocation2 + $0xf8] sm:$0xff]
    %v525 = vld [vmem:[#allocation2 + $0x108] sm:$0xff]
    %v526 = vld [vmem:[#allocation2 + $0x110] sm:$0xff]
    %v527 = vld [vmem:[#allocation2 + $0x120] sm:$0xff]
    %v528 = vld [vmem:[#allocation2 + $0x128] sm:$0xff]
    %v529 = vld [vmem:[#allocation2 + $0x138] sm:$0xff]
    %v530 = vld [vmem:[#allocation2 + $0x140] sm:$0xff]
    %v531 = vld [vmem:[#allocation2 + $0x150] sm:$0xff]
    %v532 = vld [vmem:[#allocation2 + $0x158] sm:$0xff]
    %v533 = vld [vmem:[#allocation2 + $0x168] sm:$0xff]
    %v534 = vld [vmem:[#allocation2 + $0x170] sm:$0xff]
    %v535 = vld [vmem:[#allocation2 + $0x1b0] sm:$0xff]
    %v536 = vld [vmem:[#allocation2 + $0x1b8] sm:$0xff]
    %v537 = vld [vmem:[#allocation2 + $0x1c8] sm:$0xff]
    %v538 = vld [vmem:[#allocation2 + $0x1d0] sm:$0xff]
    %v539 = vld [vmem:[#allocation2 + $0x1e0] sm:$0xff]
    %v540 = vld [vmem:[#allocation2 + $0x1e8] sm:$0xff]
    %v541 = vld [vmem:[#allocation2 + $0x1f8] sm:$0xff]
    %v542 = vld [vmem:[#allocation2 + $0x200] sm:$0xff]
    %v543 = vld [vmem:[#allocation2 + $0x210] sm:$0xff]
    %v544 = vld [vmem:[#allocation2 + $0x218] sm:$0xff]
    %v545 = vld [vmem:[#allocation2 + $0x228] sm:$0xff]
    %v546 = vld [vmem:[#allocation2 + $0x230] sm:$0xff]
    %v547 = vld [vmem:[#allocation2 + $0x240] sm:$0xff]
    %v548 = vld [vmem:[#allocation2 + $0x248] sm:$0xff]
    %v549 = vld [vmem:[#allocation2 + $0x258] sm:$0xff]
    %v550 = vld [vmem:[#allocation2 + $0x260] sm:$0xff]
    %v551 = vld [vmem:[#allocation2 + $0x270] sm:$0xff]
    %v552 = vld [vmem:[#allocation2 + $0x278] sm:$0xff]
    %v553 = vld [vmem:[#allocation2 + $0x288] sm:$0xff]
    %v554 = vld [vmem:[#allocation2 + $0x290] sm:$0xff]
    %v555 = vld [vmem:[#allocation2 + $0x2a0] sm:$0xff]
    %v556 = vld [vmem:[#allocation2 + $0x2a8] sm:$0xff]
    %v557 = vld [vmem:[#allocation2 + $0x2b8] sm:$0xff]
    %v558 = vld [vmem:[#allocation2 + $0x2c0] sm:$0xff]
    %v559 = vld [vmem:[#allocation2 + $0x2d0] sm:$0xff]
    %v560 = vld [vmem:[#allocation2 + $0x2d8] sm:$0xff]
    %v561 = vld [vmem:[#allocation2 + $0x2e8] sm:$0xff]
    %v562 = vld [vmem:[#allocation2 + $0x2f0] sm:$0xff]
    %v563 = vld [vmem:[#allocation2 + $0x300] sm:$0xff]
    %v564 = vld [vmem:[#allocation2 + $0x308] sm:$0xff]
    %v565 = vld [vmem:[#allocation2 + $0x318] sm:$0xff]
    %v566 = vld [vmem:[#allocation2 + $0x320] sm:$0xff]
    %v567 = vld [vmem:[#allocation2 + $0x360] sm:$0xff]
    %v568 = vld [vmem:[#allocation2 + $0x368] sm:$0xff]
    %v569 = vld [vmem:[#allocation2 + $0x378] sm:$0xff]
    %v570 = vld [vmem:[#allocation2 + $0x380] sm:$0xff]
    %v571 = vld [vmem:[#allocation2 + $0x390] sm:$0xff]
    %v572 = vld [vmem:[#allocation2 + $0x398] sm:$0xff]
    %v573 = vld [vmem:[#allocation2 + $0x3a8] sm:$0xff]
    %v574 = vld [vmem:[#allocation2 + $0x3b0] sm:$0xff]
    %v575 = vld [vmem:[#allocation2 + $0x3c0] sm:$0xff]
    %v576 = vld [vmem:[#allocation2 + $0x3c8] sm:$0xff]
    %v577 = vld [vmem:[#allocation2 + $0x3d8] sm:$0xff]
    %v578 = vld [vmem:[#allocation2 + $0x3e0] sm:$0xff]
    %v579 = vld [vmem:[#allocation2 + $0x3f0] sm:$0xff]
    %v580 = vld [vmem:[#allocation2 + $0x3f8] sm:$0xff]
    %v581 = vld [vmem:[#allocation2 + $0x408] sm:$0xff]
    %v582 = vld [vmem:[#allocation2 + $0x410] sm:$0xff]
    %v583 = vld [vmem:[#allocation2 + $0x420] sm:$0xff]
    %v584 = vld [vmem:[#allocation2 + $0x428] sm:$0xff]
    %v585 = vld [vmem:[#allocation2 + $0x438] sm:$0xff]
    %v586 = vld [vmem:[#allocation2 + $0x440] sm:$0xff]
    %v587 = vld [vmem:[#allocation2 + $0x450] sm:$0xff]
    %v588 = vld [vmem:[#allocation2 + $0x458] sm:$0xff]
    %v589 = vld [vmem:[#allocation2 + $0x468] sm:$0xff]
    %v590 = vld [vmem:[#allocation2 + $0x470] sm:$0xff]
    %v591 = vld [vmem:[#allocation2 + $0x480] sm:$0xff]
    %v592 = vld [vmem:[#allocation2 + $0x488] sm:$0xff]
    %v593 = vld [vmem:[#allocation2 + $0x498] sm:$0xff]
    %v594 = vld [vmem:[#allocation2 + $0x4a0] sm:$0xff]
    %v595 = vld [vmem:[#allocation2 + $0x4b0] sm:$0xff]
    %v596 = vld [vmem:[#allocation2 + $0x4b8] sm:$0xff]
    %v597 = vld [vmem:[#allocation2 + $0x4c8] sm:$0xff]
    %v598 = vld [vmem:[#allocation2 + $0x4d0] sm:$0xff]
    %v599 = vld [vmem:[#allocation2 + $0x510] sm:$0xff]
    %v600 = vld [vmem:[#allocation2 + $0x518] sm:$0xff]
    %v601 = vld [vmem:[#allocation2 + $0x528] sm:$0xff]
    %v602 = vld [vmem:[#allocation2 + $0x530] sm:$0xff]
    %v603 = vld [vmem:[#allocation2 + $0x540] sm:$0xff]
    %v604 = vld [vmem:[#allocation2 + $0x548] sm:$0xff]
    %v605 = vld [vmem:[#allocation2 + $0x558] sm:$0xff]
    %v606 = vld [vmem:[#allocation2 + $0x560] sm:$0xff]
    %v607 = vld [vmem:[#allocation2 + $0x570] sm:$0xff]
    %v608 = vld [vmem:[#allocation2 + $0x578] sm:$0xff]
    %v609 = vld [vmem:[#allocation2 + $0x588] sm:$0xff]
    %v610 = vld [vmem:[#allocation2 + $0x590] sm:$0xff]
    %v611 = vld [vmem:[#allocation2 + $0x5a0] sm:$0xff]
    %v612 = vld [vmem:[#allocation2 + $0x5a8] sm:$0xff]
    %v613 = vld [vmem:[#allocation2 + $0x5b8] sm:$0xff]
    %v614 = vld [vmem:[#allocation2 + $0x5c0] sm:$0xff]
    %v615 = vld [vmem:[#allocation2 + $0x5d0] sm:$0xff]
    %v616 = vld [vmem:[#allocation2 + $0x5d8] sm:$0xff]
    %v617 = vld [vmem:[#allocation2 + $0x5e8] sm:$0xff]
    %v618 = vld [vmem:[#allocation2 + $0x5f0] sm:$0xff]
    %v619 = vld [vmem:[#allocation2 + $0x600] sm:$0xff]
    %v620 = vld [vmem:[#allocation2 + $0x608] sm:$0xff]
    %v621 = vld [vmem:[#allocation2 + $0x618] sm:$0xff]
    %v622 = vld [vmem:[#allocation2 + $0x620] sm:$0xff]
    %v623 = vld [vmem:[#allocation2 + $0x630] sm:$0xff]
    %v624 = vld [vmem:[#allocation2 + $0x638] sm:$0xff]
    %v625 = vld [vmem:[#allocation2 + $0x648] sm:$0xff]
    %v626 = vld [vmem:[#allocation2 + $0x650] sm:$0xff]
    %v627 = vld [vmem:[#allocation2 + $0x660] sm:$0xff]
    %v628 = vld [vmem:[#allocation2 + $0x668] sm:$0xff]
    %v629 = vld [vmem:[#allocation2 + $0x678] sm:$0xff]
    %v630 = vld [vmem:[#allocation2 + $0x680] sm:$0xff]
    %v631 = vld [vmem:[%s2] sm:$0xf]
    %v632 = vld [vmem:[#allocation2 + $0x1] sm:$0xff]
    %v633 = vld [vmem:[#allocation2 + $0x9] sm:$0xff]
    %v634 = vld [vmem:[#allocation2 + $0x19] sm:$0xff]
    %v635 = vld [vmem:[#allocation2 + $0x21] sm:$0xff]
    %v636 = vld [vmem:[#allocation2 + $0x31] sm:$0xff]
    %v637 = vld [vmem:[#allocation2 + $0x39] sm:$0xff]
    %v638 = vld [vmem:[#allocation2 + $0x49] sm:$0xff]
    %v639 = vld [vmem:[#allocation2 + $0x51] sm:$0xff]
    %v640 = vld [vmem:[#allocation2 + $0x61] sm:$0xff]
    %v641 = vld [vmem:[#allocation2 + $0x69] sm:$0xff]
    %v642 = vld [vmem:[#allocation2 + $0x79] sm:$0xff]
    %v643 = vld [vmem:[#allocation2 + $0x81] sm:$0xff]
    %v644 = vld [vmem:[#allocation2 + $0x91] sm:$0xff]
    %v645 = vld [vmem:[#allocation2 + $0x99] sm:$0xff]
    %v646 = vld [vmem:[#allocation2 + $0xa9] sm:$0xff]
    %v647 = vld [vmem:[#allocation2 + $0xb1] sm:$0xff]
    %v648 = vld [vmem:[#allocation2 + $0xc1] sm:$0xff]
    %v649 = vld [vmem:[#allocation2 + $0xc9] sm:$0xff]
    %v650 = vld [vmem:[#allocation2 + $0xd9] sm:$0xff]
    %v651 = vld [vmem:[#allocation2 + $0xe1] sm:$0xff]
    %v652 = vld [vmem:[#allocation2 + $0xf1] sm:$0xff]
    %v653 = vld [vmem:[#allocation2 + $0xf9] sm:$0xff]
    %v654 = vld [vmem:[#allocation2 + $0x109] sm:$0xff]
    %v655 = vld [vmem:[#allocation2 + $0x111] sm:$0xff]
    %v656 = vld [vmem:[#allocation2 + $0x121] sm:$0xff]
    %v657 = vld [vmem:[#allocation2 + $0x129] sm:$0xff]
    %v658 = vld [vmem:[#allocation2 + $0x139] sm:$0xff]
    %v659 = vld [vmem:[#allocation2 + $0x141] sm:$0xff]
    %v660 = vld [vmem:[#allocation2 + $0x151] sm:$0xff]
    %v661 = vld [vmem:[#allocation2 + $0x159] sm:$0xff]
    %v662 = vld [vmem:[#allocation2 + $0x169] sm:$0xff]
    %v663 = vld [vmem:[#allocation2 + $0x171] sm:$0xff]
    %v664 = vld [vmem:[#allocation2 + $0x1b1] sm:$0xff]
    %v665 = vld [vmem:[#allocation2 + $0x1b9] sm:$0xff]
    %v666 = vld [vmem:[#allocation2 + $0x1c9] sm:$0xff]
    %v667 = vld [vmem:[#allocation2 + $0x1d1] sm:$0xff]
    %v668 = vld [vmem:[#allocation2 + $0x1e1] sm:$0xff]
    %v669 = vld [vmem:[#allocation2 + $0x1e9] sm:$0xff]
    %v670 = vld [vmem:[#allocation2 + $0x1f9] sm:$0xff]
    %v671 = vld [vmem:[#allocation2 + $0x201] sm:$0xff]
    %v672 = vld [vmem:[#allocation2 + $0x211] sm:$0xff]
    %v673 = vld [vmem:[#allocation2 + $0x219] sm:$0xff]
    %v674 = vld [vmem:[#allocation2 + $0x229] sm:$0xff]
    %v675 = vld [vmem:[#allocation2 + $0x231] sm:$0xff]
    %v676 = vld [vmem:[#allocation2 + $0x241] sm:$0xff]
    %v677 = vld [vmem:[#allocation2 + $0x249] sm:$0xff]
    %v678 = vld [vmem:[#allocation2 + $0x259] sm:$0xff]
    %v679 = vld [vmem:[#allocation2 + $0x261] sm:$0xff]
    %v680 = vld [vmem:[#allocation2 + $0x271] sm:$0xff]
    %v681 = vld [vmem:[#allocation2 + $0x279] sm:$0xff]
    %v682 = vld [vmem:[#allocation2 + $0x289] sm:$0xff]
    %v683 = vld [vmem:[#allocation2 + $0x291] sm:$0xff]
    %v684 = vld [vmem:[#allocation2 + $0x2a1] sm:$0xff]
    %v685 = vld [vmem:[#allocation2 + $0x2a9] sm:$0xff]
    %v686 = vld [vmem:[#allocation2 + $0x2b9] sm:$0xff]
    %v687 = vld [vmem:[#allocation2 + $0x2c1] sm:$0xff]
    %v688 = vld [vmem:[#allocation2 + $0x2d1] sm:$0xff]
    %v689 = vld [vmem:[#allocation2 + $0x2d9] sm:$0xff]
    %v690 = vld [vmem:[#allocation2 + $0x2e9] sm:$0xff]
    %v691 = vld [vmem:[#allocation2 + $0x2f1] sm:$0xff]
    %v692 = vld [vmem:[#allocation2 + $0x301] sm:$0xff]
    %v693 = vld [vmem:[#allocation2 + $0x309] sm:$0xff]
    %v694 = vld [vmem:[#allocation2 + $0x319] sm:$0xff]
    %v695 = vld [vmem:[#allocation2 + $0x321] sm:$0xff]
    %v696 = vld [vmem:[#allocation2 + $0x361] sm:$0xff]
    %v697 = vld [vmem:[#allocation2 + $0x369] sm:$0xff]
    %v698 = vld [vmem:[#allocation2 + $0x379] sm:$0xff]
    %v699 = vld [vmem:[#allocation2 + $0x381] sm:$0xff]
    %v700 = vld [vmem:[#allocation2 + $0x391] sm:$0xff]
    %v701 = vld [vmem:[#allocation2 + $0x399] sm:$0xff]
    %v702 = vld [vmem:[#allocation2 + $0x3a9] sm:$0xff]
    %v703 = vld [vmem:[#allocation2 + $0x3b1] sm:$0xff]
    %v704 = vld [vmem:[#allocation2 + $0x3c1] sm:$0xff]
    %v705 = vld [vmem:[#allocation2 + $0x3c9] sm:$0xff]
    %v706 = vld [vmem:[#allocation2 + $0x3d9] sm:$0xff]
    %v707 = vld [vmem:[#allocation2 + $0x3e1] sm:$0xff]
    %v708 = vld [vmem:[#allocation2 + $0x3f1] sm:$0xff]
    %v709 = vld [vmem:[#allocation2 + $0x3f9] sm:$0xff]
    %v710 = vld [vmem:[#allocation2 + $0x409] sm:$0xff]
    %v711 = vld [vmem:[#allocation2 + $0x411] sm:$0xff]
    %v712 = vld [vmem:[#allocation2 + $0x421] sm:$0xff]
    %v713 = vld [vmem:[#allocation2 + $0x429] sm:$0xff]
    %v714 = vld [vmem:[#allocation2 + $0x439] sm:$0xff]
    %v715 = vld [vmem:[#allocation2 + $0x441] sm:$0xff]
    %v716 = vld [vmem:[#allocation2 + $0x451] sm:$0xff]
    %v717 = vld [vmem:[#allocation2 + $0x459] sm:$0xff]
    %v718 = vld [vmem:[#allocation2 + $0x469] sm:$0xff]
    %v719 = vld [vmem:[#allocation2 + $0x471] sm:$0xff]
    %v720 = vld [vmem:[#allocation2 + $0x481] sm:$0xff]
    %v721 = vld [vmem:[#allocation2 + $0x489] sm:$0xff]
    %v722 = vld [vmem:[#allocation2 + $0x499] sm:$0xff]
    %v723 = vld [vmem:[#allocation2 + $0x4a1] sm:$0xff]
    %v724 = vld [vmem:[#allocation2 + $0x4b1] sm:$0xff]
    %v725 = vld [vmem:[#allocation2 + $0x4b9] sm:$0xff]
    %v726 = vld [vmem:[#allocation2 + $0x4c9] sm:$0xff]
    %v727 = vld [vmem:[#allocation2 + $0x4d1] sm:$0xff]
    %v728 = vld [vmem:[#allocation2 + $0x511] sm:$0xff]
    %v729 = vld [vmem:[#allocation2 + $0x519] sm:$0xff]
    %v730 = vld [vmem:[#allocation2 + $0x529] sm:$0xff]
    %v731 = vld [vmem:[#allocation2 + $0x531] sm:$0xff]
    %v732 = vld [vmem:[#allocation2 + $0x541] sm:$0xff]
    %v733 = vld [vmem:[#allocation2 + $0x549] sm:$0xff]
    %v734 = vld [vmem:[#allocation2 + $0x559] sm:$0xff]
    %v735 = vld [vmem:[#allocation2 + $0x561] sm:$0xff]
    %v736 = vld [vmem:[#allocation2 + $0x571] sm:$0xff]
    %v737 = vld [vmem:[#allocation2 + $0x579] sm:$0xff]
    %v738 = vld [vmem:[#allocation2 + $0x589] sm:$0xff]
    %v739 = vld [vmem:[#allocation2 + $0x591] sm:$0xff]
    %v740 = vld [vmem:[#allocation2 + $0x5a1] sm:$0xff]
    %v741 = vld [vmem:[#allocation2 + $0x5a9] sm:$0xff]
    %v742 = vld [vmem:[#allocation2 + $0x5b9] sm:$0xff]
    %v743 = vld [vmem:[#allocation2 + $0x5c1] sm:$0xff]
    %v744 = vld [vmem:[#allocation2 + $0x5d1] sm:$0xff]
    %v745 = vld [vmem:[#allocation2 + $0x5d9] sm:$0xff]
    %v746 = vld [vmem:[#allocation2 + $0x5e9] sm:$0xff]
    %v747 = vld [vmem:[#allocation2 + $0x5f1] sm:$0xff]
    %v748 = vld [vmem:[#allocation2 + $0x601] sm:$0xff]
    %v749 = vld [vmem:[#allocation2 + $0x609] sm:$0xff]
    %v750 = vld [vmem:[#allocation2 + $0x619] sm:$0xff]
    %v751 = vld [vmem:[#allocation2 + $0x621] sm:$0xff]
    %v752 = vld [vmem:[#allocation2 + $0x631] sm:$0xff]
    %v753 = vld [vmem:[#allocation2 + $0x639] sm:$0xff]
    %v754 = vld [vmem:[#allocation2 + $0x649] sm:$0xff]
    %v755 = vld [vmem:[#allocation2 + $0x651] sm:$0xff]
    %v756 = vld [vmem:[#allocation2 + $0x661] sm:$0xff]
    %v757 = vld [vmem:[#allocation2 + $0x669] sm:$0xff]
    %v758 = vld [vmem:[#allocation2 + $0x679] sm:$0xff]
    %v759 = vld [vmem:[#allocation2 + $0x681] sm:$0xff]
    %s760 = scalar_lea.vmem %s2, 4
    %v761 = vld [vmem:[%s760] sm:$0xf]
    %v763 = vsel %vm27, %v632, 0
    %v766 = vsel %vm27, %v633, 0
    %v769 = vsel %vm27, %v634, 0
    %v772 = vsel %vm27, %v635, 0
    %v775 = vsel %vm27, %v636, 0
    %v778 = vsel %vm27, %v637, 0
    %v781 = vsel %vm27, %v638, 0
    %v784 = vsel %vm27, %v639, 0
    %v787 = vsel %vm27, %v640, 0
    %v790 = vsel %vm27, %v641, 0
    %v793 = vsel %vm27, %v642, 0
    %v796 = vsel %vm27, %v643, 0
    %v799 = vsel %vm27, %v644, 0
    %v802 = vsel %vm27, %v645, 0
    %v805 = vsel %vm27, %v646, 0
    %v808 = vsel %vm27, %v647, 0
    %v811 = vsel %vm27, %v648, 0
    %v814 = vsel %vm27, %v649, 0
    %v817 = vsel %vm27, %v650, 0
    %v820 = vsel %vm27, %v651, 0
    %v823 = vsel %vm27, %v652, 0
    %v826 = vsel %vm27, %v653, 0
    %v829 = vsel %vm27, %v654, 0
    %v832 = vsel %vm27, %v655, 0
    %v835 = vsel %vm27, %v656, 0
    %v838 = vsel %vm27, %v657, 0
    %v841 = vsel %vm27, %v658, 0
    %v844 = vsel %vm27, %v659, 0
    %v847 = vsel %vm27, %v660, 0
    %v850 = vsel %vm27, %v661, 0
    %v853 = vsel %vm27, %v662, 0
    %v856 = vsel %vm27, %v663, 0
    %v859 = vsel %vm27, %v664, 0
    %v862 = vsel %vm27, %v665, 0
    %v865 = vsel %vm27, %v666, 0
    %v868 = vsel %vm27, %v667, 0
    %v871 = vsel %vm27, %v668, 0
    %v874 = vsel %vm27, %v669, 0
    %v877 = vsel %vm27, %v670, 0
    %v880 = vsel %vm27, %v671, 0
    %v883 = vsel %vm27, %v672, 0
    %v886 = vsel %vm27, %v673, 0
    %v889 = vsel %vm27, %v674, 0
    %v892 = vsel %vm27, %v675, 0
    %v895 = vsel %vm27, %v676, 0
    %v898 = vsel %vm27, %v677, 0
    %v901 = vsel %vm27, %v678, 0
    %v904 = vsel %vm27, %v679, 0
    %v907 = vsel %vm27, %v680, 0
    %v910 = vsel %vm27, %v681, 0
    %v913 = vsel %vm27, %v682, 0
    %v916 = vsel %vm27, %v683, 0
    %v919 = vsel %vm27, %v684, 0
    %v922 = vsel %vm27, %v685, 0
    %v925 = vsel %vm27, %v686, 0
    %v928 = vsel %vm27, %v687, 0
    %v931 = vsel %vm27, %v688, 0
    %v934 = vsel %vm27, %v689, 0
    %v937 = vsel %vm27, %v690, 0
    %v940 = vsel %vm27, %v691, 0
    %v943 = vsel %vm27, %v692, 0
    %v946 = vsel %vm27, %v693, 0
    %v949 = vsel %vm27, %v694, 0
    %v952 = vsel %vm27, %v695, 0
    %v955 = vsel %vm27, %v696, 0
    %v958 = vsel %vm27, %v697, 0
    %v961 = vsel %vm27, %v698, 0
    %v964 = vsel %vm27, %v699, 0
    %v967 = vsel %vm27, %v700, 0
    %v970 = vsel %vm27, %v701, 0
    %v973 = vsel %vm27, %v702, 0
    %v976 = vsel %vm27, %v703, 0
    %v979 = vsel %vm27, %v704, 0
    %v982 = vsel %vm27, %v705, 0
    %v985 = vsel %vm27, %v706, 0
    %v988 = vsel %vm27, %v707, 0
    %v991 = vsel %vm27, %v708, 0
    %v994 = vsel %vm27, %v709, 0
    %v997 = vsel %vm27, %v710, 0
    %v1000 = vsel %vm27, %v711, 0
    %v1003 = vsel %vm27, %v712, 0
    %v1006 = vsel %vm27, %v713, 0
    %v1009 = vsel %vm27, %v714, 0
    %v1012 = vsel %vm27, %v715, 0
    %v1015 = vsel %vm27, %v716, 0
    %v1018 = vsel %vm27, %v717, 0
    %v1021 = vsel %vm27, %v718, 0
    %v1024 = vsel %vm27, %v719, 0
    %v1027 = vsel %vm27, %v720, 0
    %v1030 = vsel %vm27, %v721, 0
    %v1033 = vsel %vm27, %v722, 0
    %v1036 = vsel %vm27, %v723, 0
    %v1039 = vsel %vm27, %v724, 0
    %v1042 = vsel %vm27, %v725, 0
    %v1045 = vsel %vm27, %v726, 0
    %v1048 = vsel %vm27, %v727, 0
    %v1051 = vsel %vm27, %v728, 0
    %v1054 = vsel %vm27, %v729, 0
    %v1057 = vsel %vm27, %v730, 0
    %v1060 = vsel %vm27, %v731, 0
    %v1063 = vsel %vm27, %v732, 0
    %v1066 = vsel %vm27, %v733, 0
    %v1069 = vsel %vm27, %v734, 0
    %v1072 = vsel %vm27, %v735, 0
    %v1075 = vsel %vm27, %v736, 0
    %v1078 = vsel %vm27, %v737, 0
    %v1081 = vsel %vm27, %v738, 0
    %v1084 = vsel %vm27, %v739, 0
    %v1087 = vsel %vm27, %v740, 0
    %v1090 = vsel %vm27, %v741, 0
    %v1093 = vsel %vm27, %v742, 0
    %v1096 = vsel %vm27, %v743, 0
    %v1099 = vsel %vm27, %v744, 0
    %v1102 = vsel %vm27, %v745, 0
    %v1105 = vsel %vm27, %v746, 0
    %v1108 = vsel %vm27, %v747, 0
    %v1111 = vsel %vm27, %v748, 0
    %v1114 = vsel %vm27, %v749, 0
    %v1117 = vsel %vm27, %v750, 0
    %v1120 = vsel %vm27, %v751, 0
    %v1123 = vsel %vm27, %v752, 0
    %v1126 = vsel %vm27, %v753, 0
    %v1129 = vsel %vm27, %v754, 0
    %v1132 = vsel %vm27, %v755, 0
    %v1135 = vsel %vm27, %v756, 0
    %v1138 = vsel %vm27, %v757, 0
    %v1141 = vsel %vm27, %v758, 0
    %v1144 = vsel %vm27, %v759, 0
    %vm1146 = vcmask 1043456
    %v1148 = vsel %vm1146, %v761, 0
    %1150 = vmatprep.subr.mxu0 0.0
    %1151 = vmatpush1.msra.mxu0 0.0
    %1152 = vmatprep.subr.mxu0 0.0
    %1153 = vmatpush1.msra.mxu0 0.0
    %1154 = vmatprep.subr.mxu0 0.0
    %1155 = vmatpush1.msra.mxu0 0.0
    %1156 = vmatprep.subr.mxu0 0.0
    %1157 = vmatpush1.msra.mxu0 0.0
    %1158 = vmatprep.subr.mxu0 0.0
    %1159 = vmatpush1.msra.mxu0 0.0
    %1160 = vmatprep.subr.mxu0 0.0
    %1161 = vmatpush1.msra.mxu0 0.0
    %1162 = vmatprep.subr.mxu0 0.0
    %1163 = vmatpush1.msra.mxu0 0.0
    %1164 = vmatprep.subr.mxu0 0.0
    %1165 = vmatpush1.msra.mxu0 0.0
    %1166 = vmatprep.subr.mxu0 0.0
    %1167 = vmatpush1.msra.mxu0 0.0
    %1168 = vmatprep.subr.mxu0 0.0
    %1169 = vmatpush1.msra.mxu0 0.0
    %1170 = vmatprep.subr.mxu0 0.0
    %1171 = vmatpush1.msra.mxu0 0.0
    %1172 = vmatprep.subr.mxu0 0.0
    %1173 = vmatpush1.msra.mxu0 0.0
    %1174 = vmatprep.subr.mxu0 0.0
    %1175 = vmatpush1.msra.mxu0 0.0
    %1176 = vmatprep.subr.mxu0 0.0
    %1177 = vmatpush1.msra.mxu0 0.0
    %1178 = vmatprep.subr.mxu0 0.0
    %1179 = vmatpush1.msra.mxu0 0.0
    %1180 = vmatprep.subr.mxu0 0.0
    %1181 = vmatpush1.msra.mxu0 %v1148
    %1182 = vmatprep.subr.mxu0 0.0
    %1183 = vmatpush2.msra.mxu0 0.0
    %1184 = vmatprep.subr.mxu0 0.0
    %1185 = vmatpush2.msra.mxu0 0.0
    %1186 = vmatprep.subr.mxu0 0.0
    %1187 = vmatpush2.msra.mxu0 0.0
    %1188 = vmatprep.subr.mxu0 0.0
    %1189 = vmatpush2.msra.mxu0 0.0
    %1190 = vmatprep.subr.mxu0 0.0
    %1191 = vmatpush2.msra.mxu0 0.0
    %1192 = vmatprep.subr.mxu0 0.0
    %1193 = vmatpush2.msra.mxu0 0.0
    %1194 = vmatprep.subr.mxu0 0.0
    %1195 = vmatpush2.msra.mxu0 0.0
    %1196 = vmatprep.subr.mxu0 0.0
    %1197 = vmatpush2.msra.mxu0 0.0
    %1198 = vmatprep.subr.mxu0 0.0
    %1199 = vmatpush2.msra.mxu0 0.0
    %1200 = vmatprep.subr.mxu0 0.0
    %1201 = vmatpush2.msra.mxu0 0.0
    %1202 = vmatprep.subr.mxu0 0.0
    %1203 = vmatpush2.msra.mxu0 0.0
    %1204 = vmatprep.subr.mxu0 0.0
    %1205 = vmatpush2.msra.mxu0 0.0
    %1206 = vmatprep.subr.mxu0 0.0
    %1207 = vmatpush2.msra.mxu0 0.0
    %1208 = vmatprep.subr.mxu0 0.0
    %1209 = vmatpush2.msra.mxu0 0.0
    %1210 = vmatprep.subr.mxu0 0.0
    %1211 = vmatpush2.msra.mxu0 0.0
    %1212 = vmatprep.subr.mxu0 0.0
    %1213 = vmatpush2.msra.mxu0 0.0
    %1214 = vmatprep.mubr.f32.mxu0 0.0
    %1215 = vmatmul.mubr.f32.gmra.mxu0 %v763
    %v1216 = vpop.f32.mrf.mxu0
    %v1217 = vadd.f32 0.0, %v1216
    %v1218 = vpop.f32.mrf.mxu0
    %1219 = vmatprep.mubr.f32.mxu0 0.0
    %1220 = vmatmul.mubr.f32.gmra.mxu0 %v766
    %v1221 = vpop.f32.mrf.mxu0
    %v1222 = vadd.f32 0.0, %v1221
    %v1223 = vpop.f32.mrf.mxu0
    %1224 = vmatprep.mubr.f32.mxu0 0.0
    %1225 = vmatmul.mubr.f32.gmra.mxu0 %v769
    %v1226 = vpop.f32.mrf.mxu0
    %v1227 = vadd.f32 0.0, %v1226
    %v1228 = vpop.f32.mrf.mxu0
    %1229 = vmatprep.mubr.f32.mxu0 0.0
    %1230 = vmatmul.mubr.f32.gmra.mxu0 %v772
    %v1231 = vpop.f32.mrf.mxu0
    %v1232 = vadd.f32 0.0, %v1231
    %v1233 = vpop.f32.mrf.mxu0
    %1234 = vmatprep.mubr.f32.mxu0 0.0
    %1235 = vmatmul.mubr.f32.gmra.mxu0 %v775
    %v1236 = vpop.f32.mrf.mxu0
    %v1237 = vadd.f32 0.0, %v1236
    %v1238 = vpop.f32.mrf.mxu0
    %1239 = vmatprep.mubr.f32.mxu0 0.0
    %1240 = vmatmul.mubr.f32.gmra.mxu0 %v778
    %v1241 = vpop.f32.mrf.mxu0
    %v1242 = vadd.f32 0.0, %v1241
    %v1243 = vpop.f32.mrf.mxu0
    %1244 = vmatprep.mubr.f32.mxu0 0.0
    %1245 = vmatmul.mubr.f32.gmra.mxu0 %v781
    %v1246 = vpop.f32.mrf.mxu0
    %v1247 = vadd.f32 0.0, %v1246
    %v1248 = vpop.f32.mrf.mxu0
    %1249 = vmatprep.mubr.f32.mxu0 0.0
    %1250 = vmatmul.mubr.f32.gmra.mxu0 %v784
    %v1251 = vpop.f32.mrf.mxu0
    %v1252 = vadd.f32 0.0, %v1251
    %v1253 = vpop.f32.mrf.mxu0
    %1254 = vmatprep.mubr.f32.mxu0 0.0
    %1255 = vmatmul.mubr.f32.gmra.mxu0 %v787
    %v1256 = vpop.f32.mrf.mxu0
    %v1257 = vadd.f32 0.0, %v1256
    %v1258 = vpop.f32.mrf.mxu0
    %1259 = vmatprep.mubr.f32.mxu0 0.0
    %1260 = vmatmul.mubr.f32.gmra.mxu0 %v790
    %v1261 = vpop.f32.mrf.mxu0
    %v1262 = vadd.f32 0.0, %v1261
    %v1263 = vpop.f32.mrf.mxu0
    %1264 = vmatprep.mubr.f32.mxu0 0.0
    %1265 = vmatmul.mubr.f32.gmra.mxu0 %v793
    %v1266 = vpop.f32.mrf.mxu0
    %v1267 = vadd.f32 0.0, %v1266
    %v1268 = vpop.f32.mrf.mxu0
    %1269 = vmatprep.mubr.f32.mxu0 0.0
    %1270 = vmatmul.mubr.f32.gmra.mxu0 %v796
    %v1271 = vpop.f32.mrf.mxu0
    %v1272 = vadd.f32 0.0, %v1271
    %v1273 = vpop.f32.mrf.mxu0
    %1274 = vmatprep.mubr.f32.mxu0 0.0
    %1275 = vmatmul.mubr.f32.gmra.mxu0 %v799
    %v1276 = vpop.f32.mrf.mxu0
    %v1277 = vadd.f32 0.0, %v1276
    %v1278 = vpop.f32.mrf.mxu0
    %1279 = vmatprep.mubr.f32.mxu0 0.0
    %1280 = vmatmul.mubr.f32.gmra.mxu0 %v802
    %v1281 = vpop.f32.mrf.mxu0
    %v1282 = vadd.f32 0.0, %v1281
    %v1283 = vpop.f32.mrf.mxu0
    %1284 = vmatprep.mubr.f32.mxu0 0.0
    %1285 = vmatmul.mubr.f32.gmra.mxu0 %v805
    %v1286 = vpop.f32.mrf.mxu0
    %v1287 = vadd.f32 0.0, %v1286
    %v1288 = vpop.f32.mrf.mxu0
    %1289 = vmatprep.mubr.f32.mxu0 0.0
    %1290 = vmatmul.mubr.f32.gmra.mxu0 %v808
    %v1291 = vpop.f32.mrf.mxu0
    %v1292 = vadd.f32 0.0, %v1291
    %v1293 = vpop.f32.mrf.mxu0
    %1294 = vmatprep.mubr.f32.mxu0 0.0
    %1295 = vmatmul.mubr.f32.gmra.mxu0 %v811
    %v1296 = vpop.f32.mrf.mxu0
    %v1297 = vadd.f32 0.0, %v1296
    %v1298 = vpop.f32.mrf.mxu0
    %1299 = vmatprep.mubr.f32.mxu0 0.0
    %1300 = vmatmul.mubr.f32.gmra.mxu0 %v814
    %v1301 = vpop.f32.mrf.mxu0
    %v1302 = vadd.f32 0.0, %v1301
    %v1303 = vpop.f32.mrf.mxu0
    %1304 = vmatprep.mubr.f32.mxu0 0.0
    %1305 = vmatmul.mubr.f32.gmra.mxu0 %v817
    %v1306 = vpop.f32.mrf.mxu0
    %v1307 = vadd.f32 0.0, %v1306
    %v1308 = vpop.f32.mrf.mxu0
    %1309 = vmatprep.mubr.f32.mxu0 0.0
    %1310 = vmatmul.mubr.f32.gmra.mxu0 %v820
    %v1311 = vpop.f32.mrf.mxu0
    %v1312 = vadd.f32 0.0, %v1311
    %v1313 = vpop.f32.mrf.mxu0
    %1314 = vmatprep.mubr.f32.mxu0 0.0
    %1315 = vmatmul.mubr.f32.gmra.mxu0 %v823
    %v1316 = vpop.f32.mrf.mxu0
    %v1317 = vadd.f32 0.0, %v1316
    %v1318 = vpop.f32.mrf.mxu0
    %1319 = vmatprep.mubr.f32.mxu0 0.0
    %1320 = vmatmul.mubr.f32.gmra.mxu0 %v826
    %v1321 = vpop.f32.mrf.mxu0
    %v1322 = vadd.f32 0.0, %v1321
    %v1323 = vpop.f32.mrf.mxu0
    %1324 = vmatprep.mubr.f32.mxu0 0.0
    %1325 = vmatmul.mubr.f32.gmra.mxu0 %v829
    %v1326 = vpop.f32.mrf.mxu0
    %v1327 = vadd.f32 0.0, %v1326
    %v1328 = vpop.f32.mrf.mxu0
    %1329 = vmatprep.mubr.f32.mxu0 0.0
    %1330 = vmatmul.mubr.f32.gmra.mxu0 %v832
    %v1331 = vpop.f32.mrf.mxu0
    %v1332 = vadd.f32 0.0, %v1331
    %v1333 = vpop.f32.mrf.mxu0
    %1334 = vmatprep.mubr.f32.mxu0 0.0
    %1335 = vmatmul.mubr.f32.gmra.mxu0 %v835
    %v1336 = vpop.f32.mrf.mxu0
    %v1337 = vadd.f32 0.0, %v1336
    %v1338 = vpop.f32.mrf.mxu0
    %1339 = vmatprep.mubr.f32.mxu0 0.0
    %1340 = vmatmul.mubr.f32.gmra.mxu0 %v838
    %v1341 = vpop.f32.mrf.mxu0
    %v1342 = vadd.f32 0.0, %v1341
    %v1343 = vpop.f32.mrf.mxu0
    %1344 = vmatprep.mubr.f32.mxu0 0.0
    %1345 = vmatmul.mubr.f32.gmra.mxu0 %v841
    %v1346 = vpop.f32.mrf.mxu0
    %v1347 = vadd.f32 0.0, %v1346
    %v1348 = vpop.f32.mrf.mxu0
    %1349 = vmatprep.mubr.f32.mxu0 0.0
    %1350 = vmatmul.mubr.f32.gmra.mxu0 %v844
    %v1351 = vpop.f32.mrf.mxu0
    %v1352 = vadd.f32 0.0, %v1351
    %v1353 = vpop.f32.mrf.mxu0
    %1354 = vmatprep.mubr.f32.mxu0 0.0
    %1355 = vmatmul.mubr.f32.gmra.mxu0 %v847
    %v1356 = vpop.f32.mrf.mxu0
    %v1357 = vadd.f32 0.0, %v1356
    %v1358 = vpop.f32.mrf.mxu0
    %1359 = vmatprep.mubr.f32.mxu0 0.0
    %1360 = vmatmul.mubr.f32.gmra.mxu0 %v850
    %v1361 = vpop.f32.mrf.mxu0
    %v1362 = vadd.f32 0.0, %v1361
    %v1363 = vpop.f32.mrf.mxu0
    %1364 = vmatprep.mubr.f32.mxu0 0.0
    %1365 = vmatmul.mubr.f32.gmra.mxu0 %v853
    %v1366 = vpop.f32.mrf.mxu0
    %v1367 = vadd.f32 0.0, %v1366
    %v1368 = vpop.f32.mrf.mxu0
    %1369 = vmatprep.mubr.f32.mxu0 0.0
    %1370 = vmatmul.mubr.f32.gmra.mxu0 %v856
    %v1371 = vpop.f32.mrf.mxu0
    %v1372 = vadd.f32 0.0, %v1371
    %v1373 = vpop.f32.mrf.mxu0
    %1374 = vmatprep.mubr.f32.mxu0 0.0
    %1375 = vmatmul.mubr.f32.gmra.mxu0 %v859
    %v1376 = vpop.f32.mrf.mxu0
    %v1377 = vadd.f32 0.0, %v1376
    %v1378 = vpop.f32.mrf.mxu0
    %1379 = vmatprep.mubr.f32.mxu0 0.0
    %1380 = vmatmul.mubr.f32.gmra.mxu0 %v862
    %v1381 = vpop.f32.mrf.mxu0
    %v1382 = vadd.f32 0.0, %v1381
    %v1383 = vpop.f32.mrf.mxu0
    %1384 = vmatprep.mubr.f32.mxu0 0.0
    %1385 = vmatmul.mubr.f32.gmra.mxu0 %v865
    %v1386 = vpop.f32.mrf.mxu0
    %v1387 = vadd.f32 0.0, %v1386
    %v1388 = vpop.f32.mrf.mxu0
    %1389 = vmatprep.mubr.f32.mxu0 0.0
    %1390 = vmatmul.mubr.f32.gmra.mxu0 %v868
    %v1391 = vpop.f32.mrf.mxu0
    %v1392 = vadd.f32 0.0, %v1391
    %v1393 = vpop.f32.mrf.mxu0
    %1394 = vmatprep.mubr.f32.mxu0 0.0
    %1395 = vmatmul.mubr.f32.gmra.mxu0 %v871
    %v1396 = vpop.f32.mrf.mxu0
    %v1397 = vadd.f32 0.0, %v1396
    %v1398 = vpop.f32.mrf.mxu0
    %1399 = vmatprep.mubr.f32.mxu0 0.0
    %1400 = vmatmul.mubr.f32.gmra.mxu0 %v874
    %v1401 = vpop.f32.mrf.mxu0
    %v1402 = vadd.f32 0.0, %v1401
    %v1403 = vpop.f32.mrf.mxu0
    %1404 = vmatprep.mubr.f32.mxu0 0.0
    %1405 = vmatmul.mubr.f32.gmra.mxu0 %v877
    %v1406 = vpop.f32.mrf.mxu0
    %v1407 = vadd.f32 0.0, %v1406
    %v1408 = vpop.f32.mrf.mxu0
    %1409 = vmatprep.mubr.f32.mxu0 0.0
    %1410 = vmatmul.mubr.f32.gmra.mxu0 %v880
    %v1411 = vpop.f32.mrf.mxu0
    %v1412 = vadd.f32 0.0, %v1411
    %v1413 = vpop.f32.mrf.mxu0
    %1414 = vmatprep.mubr.f32.mxu0 0.0
    %1415 = vmatmul.mubr.f32.gmra.mxu0 %v883
    %v1416 = vpop.f32.mrf.mxu0
    %v1417 = vadd.f32 0.0, %v1416
    %v1418 = vpop.f32.mrf.mxu0
    %1419 = vmatprep.mubr.f32.mxu0 0.0
    %1420 = vmatmul.mubr.f32.gmra.mxu0 %v886
    %v1421 = vpop.f32.mrf.mxu0
    %v1422 = vadd.f32 0.0, %v1421
    %v1423 = vpop.f32.mrf.mxu0
    %1424 = vmatprep.mubr.f32.mxu0 0.0
    %1425 = vmatmul.mubr.f32.gmra.mxu0 %v889
    %v1426 = vpop.f32.mrf.mxu0
    %v1427 = vadd.f32 0.0, %v1426
    %v1428 = vpop.f32.mrf.mxu0
    %1429 = vmatprep.mubr.f32.mxu0 0.0
    %1430 = vmatmul.mubr.f32.gmra.mxu0 %v892
    %v1431 = vpop.f32.mrf.mxu0
    %v1432 = vadd.f32 0.0, %v1431
    %v1433 = vpop.f32.mrf.mxu0
    %1434 = vmatprep.mubr.f32.mxu0 0.0
    %1435 = vmatmul.mubr.f32.gmra.mxu0 %v895
    %v1436 = vpop.f32.mrf.mxu0
    %v1437 = vadd.f32 0.0, %v1436
    %v1438 = vpop.f32.mrf.mxu0
    %1439 = vmatprep.mubr.f32.mxu0 0.0
    %1440 = vmatmul.mubr.f32.gmra.mxu0 %v898
    %v1441 = vpop.f32.mrf.mxu0
    %v1442 = vadd.f32 0.0, %v1441
    %v1443 = vpop.f32.mrf.mxu0
    %1444 = vmatprep.mubr.f32.mxu0 0.0
    %1445 = vmatmul.mubr.f32.gmra.mxu0 %v901
    %v1446 = vpop.f32.mrf.mxu0
    %v1447 = vadd.f32 0.0, %v1446
    %v1448 = vpop.f32.mrf.mxu0
    %1449 = vmatprep.mubr.f32.mxu0 0.0
    %1450 = vmatmul.mubr.f32.gmra.mxu0 %v904
    %v1451 = vpop.f32.mrf.mxu0
    %v1452 = vadd.f32 0.0, %v1451
    %v1453 = vpop.f32.mrf.mxu0
    %1454 = vmatprep.mubr.f32.mxu0 0.0
    %1455 = vmatmul.mubr.f32.gmra.mxu0 %v907
    %v1456 = vpop.f32.mrf.mxu0
    %v1457 = vadd.f32 0.0, %v1456
    %v1458 = vpop.f32.mrf.mxu0
    %1459 = vmatprep.mubr.f32.mxu0 0.0
    %1460 = vmatmul.mubr.f32.gmra.mxu0 %v910
    %v1461 = vpop.f32.mrf.mxu0
    %v1462 = vadd.f32 0.0, %v1461
    %v1463 = vpop.f32.mrf.mxu0
    %1464 = vmatprep.mubr.f32.mxu0 0.0
    %1465 = vmatmul.mubr.f32.gmra.mxu0 %v913
    %v1466 = vpop.f32.mrf.mxu0
    %v1467 = vadd.f32 0.0, %v1466
    %v1468 = vpop.f32.mrf.mxu0
    %1469 = vmatprep.mubr.f32.mxu0 0.0
    %1470 = vmatmul.mubr.f32.gmra.mxu0 %v916
    %v1471 = vpop.f32.mrf.mxu0
    %v1472 = vadd.f32 0.0, %v1471
    %v1473 = vpop.f32.mrf.mxu0
    %1474 = vmatprep.mubr.f32.mxu0 0.0
    %1475 = vmatmul.mubr.f32.gmra.mxu0 %v919
    %v1476 = vpop.f32.mrf.mxu0
    %v1477 = vadd.f32 0.0, %v1476
    %v1478 = vpop.f32.mrf.mxu0
    %1479 = vmatprep.mubr.f32.mxu0 0.0
    %1480 = vmatmul.mubr.f32.gmra.mxu0 %v922
    %v1481 = vpop.f32.mrf.mxu0
    %v1482 = vadd.f32 0.0, %v1481
    %v1483 = vpop.f32.mrf.mxu0
    %1484 = vmatprep.mubr.f32.mxu0 0.0
    %1485 = vmatmul.mubr.f32.gmra.mxu0 %v925
    %v1486 = vpop.f32.mrf.mxu0
    %v1487 = vadd.f32 0.0, %v1486
    %v1488 = vpop.f32.mrf.mxu0
    %1489 = vmatprep.mubr.f32.mxu0 0.0
    %1490 = vmatmul.mubr.f32.gmra.mxu0 %v928
    %v1491 = vpop.f32.mrf.mxu0
    %v1492 = vadd.f32 0.0, %v1491
    %v1493 = vpop.f32.mrf.mxu0
    %1494 = vmatprep.mubr.f32.mxu0 0.0
    %1495 = vmatmul.mubr.f32.gmra.mxu0 %v931
    %v1496 = vpop.f32.mrf.mxu0
    %v1497 = vadd.f32 0.0, %v1496
    %v1498 = vpop.f32.mrf.mxu0
    %1499 = vmatprep.mubr.f32.mxu0 0.0
    %1500 = vmatmul.mubr.f32.gmra.mxu0 %v934
    %v1501 = vpop.f32.mrf.mxu0
    %v1502 = vadd.f32 0.0, %v1501
    %v1503 = vpop.f32.mrf.mxu0
    %1504 = vmatprep.mubr.f32.mxu0 0.0
    %1505 = vmatmul.mubr.f32.gmra.mxu0 %v937
    %v1506 = vpop.f32.mrf.mxu0
    %v1507 = vadd.f32 0.0, %v1506
    %v1508 = vpop.f32.mrf.mxu0
    %1509 = vmatprep.mubr.f32.mxu0 0.0
    %1510 = vmatmul.mubr.f32.gmra.mxu0 %v940
    %v1511 = vpop.f32.mrf.mxu0
    %v1512 = vadd.f32 0.0, %v1511
    %v1513 = vpop.f32.mrf.mxu0
    %1514 = vmatprep.mubr.f32.mxu0 0.0
    %1515 = vmatmul.mubr.f32.gmra.mxu0 %v943
    %v1516 = vpop.f32.mrf.mxu0
    %v1517 = vadd.f32 0.0, %v1516
    %v1518 = vpop.f32.mrf.mxu0
    %1519 = vmatprep.mubr.f32.mxu0 0.0
    %1520 = vmatmul.mubr.f32.gmra.mxu0 %v946
    %v1521 = vpop.f32.mrf.mxu0
    %v1522 = vadd.f32 0.0, %v1521
    %v1523 = vpop.f32.mrf.mxu0
    %1524 = vmatprep.mubr.f32.mxu0 0.0
    %1525 = vmatmul.mubr.f32.gmra.mxu0 %v949
    %v1526 = vpop.f32.mrf.mxu0
    %v1527 = vadd.f32 0.0, %v1526
    %v1528 = vpop.f32.mrf.mxu0
    %1529 = vmatprep.mubr.f32.mxu0 0.0
    %1530 = vmatmul.mubr.f32.gmra.mxu0 %v952
    %v1531 = vpop.f32.mrf.mxu0
    %v1532 = vadd.f32 0.0, %v1531
    %v1533 = vpop.f32.mrf.mxu0
    %1534 = vmatprep.mubr.f32.mxu0 0.0
    %1535 = vmatmul.mubr.f32.gmra.mxu0 %v955
    %v1536 = vpop.f32.mrf.mxu0
    %v1537 = vadd.f32 0.0, %v1536
    %v1538 = vpop.f32.mrf.mxu0
    %1539 = vmatprep.mubr.f32.mxu0 0.0
    %1540 = vmatmul.mubr.f32.gmra.mxu0 %v958
    %v1541 = vpop.f32.mrf.mxu0
    %v1542 = vadd.f32 0.0, %v1541
    %v1543 = vpop.f32.mrf.mxu0
    %1544 = vmatprep.mubr.f32.mxu0 0.0
    %1545 = vmatmul.mubr.f32.gmra.mxu0 %v961
    %v1546 = vpop.f32.mrf.mxu0
    %v1547 = vadd.f32 0.0, %v1546
    %v1548 = vpop.f32.mrf.mxu0
    %1549 = vmatprep.mubr.f32.mxu0 0.0
    %1550 = vmatmul.mubr.f32.gmra.mxu0 %v964
    %v1551 = vpop.f32.mrf.mxu0
    %v1552 = vadd.f32 0.0, %v1551
    %v1553 = vpop.f32.mrf.mxu0
    %1554 = vmatprep.mubr.f32.mxu0 0.0
    %1555 = vmatmul.mubr.f32.gmra.mxu0 %v967
    %v1556 = vpop.f32.mrf.mxu0
    %v1557 = vadd.f32 0.0, %v1556
    %v1558 = vpop.f32.mrf.mxu0
    %1559 = vmatprep.mubr.f32.mxu0 0.0
    %1560 = vmatmul.mubr.f32.gmra.mxu0 %v970
    %v1561 = vpop.f32.mrf.mxu0
    %v1562 = vadd.f32 0.0, %v1561
    %v1563 = vpop.f32.mrf.mxu0
    %1564 = vmatprep.mubr.f32.mxu0 0.0
    %1565 = vmatmul.mubr.f32.gmra.mxu0 %v973
    %v1566 = vpop.f32.mrf.mxu0
    %v1567 = vadd.f32 0.0, %v1566
    %v1568 = vpop.f32.mrf.mxu0
    %1569 = vmatprep.mubr.f32.mxu0 0.0
    %1570 = vmatmul.mubr.f32.gmra.mxu0 %v976
    %v1571 = vpop.f32.mrf.mxu0
    %v1572 = vadd.f32 0.0, %v1571
    %v1573 = vpop.f32.mrf.mxu0
    %1574 = vmatprep.mubr.f32.mxu0 0.0
    %1575 = vmatmul.mubr.f32.gmra.mxu0 %v979
    %v1576 = vpop.f32.mrf.mxu0
    %v1577 = vadd.f32 0.0, %v1576
    %v1578 = vpop.f32.mrf.mxu0
    %1579 = vmatprep.mubr.f32.mxu0 0.0
    %1580 = vmatmul.mubr.f32.gmra.mxu0 %v982
    %v1581 = vpop.f32.mrf.mxu0
    %v1582 = vadd.f32 0.0, %v1581
    %v1583 = vpop.f32.mrf.mxu0
    %1584 = vmatprep.mubr.f32.mxu0 0.0
    %1585 = vmatmul.mubr.f32.gmra.mxu0 %v985
    %v1586 = vpop.f32.mrf.mxu0
    %v1587 = vadd.f32 0.0, %v1586
    %v1588 = vpop.f32.mrf.mxu0
    %1589 = vmatprep.mubr.f32.mxu0 0.0
    %1590 = vmatmul.mubr.f32.gmra.mxu0 %v988
    %v1591 = vpop.f32.mrf.mxu0
    %v1592 = vadd.f32 0.0, %v1591
    %v1593 = vpop.f32.mrf.mxu0
    %1594 = vmatprep.mubr.f32.mxu0 0.0
    %1595 = vmatmul.mubr.f32.gmra.mxu0 %v991
    %v1596 = vpop.f32.mrf.mxu0
    %v1597 = vadd.f32 0.0, %v1596
    %v1598 = vpop.f32.mrf.mxu0
    %1599 = vmatprep.mubr.f32.mxu0 0.0
    %1600 = vmatmul.mubr.f32.gmra.mxu0 %v994
    %v1601 = vpop.f32.mrf.mxu0
    %v1602 = vadd.f32 0.0, %v1601
    %v1603 = vpop.f32.mrf.mxu0
    %1604 = vmatprep.mubr.f32.mxu0 0.0
    %1605 = vmatmul.mubr.f32.gmra.mxu0 %v997
    %v1606 = vpop.f32.mrf.mxu0
    %v1607 = vadd.f32 0.0, %v1606
    %v1608 = vpop.f32.mrf.mxu0
    %1609 = vmatprep.mubr.f32.mxu0 0.0
    %1610 = vmatmul.mubr.f32.gmra.mxu0 %v1000
    %v1611 = vpop.f32.mrf.mxu0
    %v1612 = vadd.f32 0.0, %v1611
    %v1613 = vpop.f32.mrf.mxu0
    %1614 = vmatprep.mubr.f32.mxu0 0.0
    %1615 = vmatmul.mubr.f32.gmra.mxu0 %v1003
    %v1616 = vpop.f32.mrf.mxu0
    %v1617 = vadd.f32 0.0, %v1616
    %v1618 = vpop.f32.mrf.mxu0
    %1619 = vmatprep.mubr.f32.mxu0 0.0
    %1620 = vmatmul.mubr.f32.gmra.mxu0 %v1006
    %v1621 = vpop.f32.mrf.mxu0
    %v1622 = vadd.f32 0.0, %v1621
    %v1623 = vpop.f32.mrf.mxu0
    %1624 = vmatprep.mubr.f32.mxu0 0.0
    %1625 = vmatmul.mubr.f32.gmra.mxu0 %v1009
    %v1626 = vpop.f32.mrf.mxu0
    %v1627 = vadd.f32 0.0, %v1626
    %v1628 = vpop.f32.mrf.mxu0
    %1629 = vmatprep.mubr.f32.mxu0 0.0
    %1630 = vmatmul.mubr.f32.gmra.mxu0 %v1012
    %v1631 = vpop.f32.mrf.mxu0
    %v1632 = vadd.f32 0.0, %v1631
    %v1633 = vpop.f32.mrf.mxu0
    %1634 = vmatprep.mubr.f32.mxu0 0.0
    %1635 = vmatmul.mubr.f32.gmra.mxu0 %v1015
    %v1636 = vpop.f32.mrf.mxu0
    %v1637 = vadd.f32 0.0, %v1636
    %v1638 = vpop.f32.mrf.mxu0
    %1639 = vmatprep.mubr.f32.mxu0 0.0
    %1640 = vmatmul.mubr.f32.gmra.mxu0 %v1018
    %v1641 = vpop.f32.mrf.mxu0
    %v1642 = vadd.f32 0.0, %v1641
    %v1643 = vpop.f32.mrf.mxu0
    %1644 = vmatprep.mubr.f32.mxu0 0.0
    %1645 = vmatmul.mubr.f32.gmra.mxu0 %v1021
    %v1646 = vpop.f32.mrf.mxu0
    %v1647 = vadd.f32 0.0, %v1646
    %v1648 = vpop.f32.mrf.mxu0
    %1649 = vmatprep.mubr.f32.mxu0 0.0
    %1650 = vmatmul.mubr.f32.gmra.mxu0 %v1024
    %v1651 = vpop.f32.mrf.mxu0
    %v1652 = vadd.f32 0.0, %v1651
    %v1653 = vpop.f32.mrf.mxu0
    %1654 = vmatprep.mubr.f32.mxu0 0.0
    %1655 = vmatmul.mubr.f32.gmra.mxu0 %v1027
    %v1656 = vpop.f32.mrf.mxu0
    %v1657 = vadd.f32 0.0, %v1656
    %v1658 = vpop.f32.mrf.mxu0
    %1659 = vmatprep.mubr.f32.mxu0 0.0
    %1660 = vmatmul.mubr.f32.gmra.mxu0 %v1030
    %v1661 = vpop.f32.mrf.mxu0
    %v1662 = vadd.f32 0.0, %v1661
    %v1663 = vpop.f32.mrf.mxu0
    %1664 = vmatprep.mubr.f32.mxu0 0.0
    %1665 = vmatmul.mubr.f32.gmra.mxu0 %v1033
    %v1666 = vpop.f32.mrf.mxu0
    %v1667 = vadd.f32 0.0, %v1666
    %v1668 = vpop.f32.mrf.mxu0
    %1669 = vmatprep.mubr.f32.mxu0 0.0
    %1670 = vmatmul.mubr.f32.gmra.mxu0 %v1036
    %v1671 = vpop.f32.mrf.mxu0
    %v1672 = vadd.f32 0.0, %v1671
    %v1673 = vpop.f32.mrf.mxu0
    %1674 = vmatprep.mubr.f32.mxu0 0.0
    %1675 = vmatmul.mubr.f32.gmra.mxu0 %v1039
    %v1676 = vpop.f32.mrf.mxu0
    %v1677 = vadd.f32 0.0, %v1676
    %v1678 = vpop.f32.mrf.mxu0
    %1679 = vmatprep.mubr.f32.mxu0 0.0
    %1680 = vmatmul.mubr.f32.gmra.mxu0 %v1042
    %v1681 = vpop.f32.mrf.mxu0
    %v1682 = vadd.f32 0.0, %v1681
    %v1683 = vpop.f32.mrf.mxu0
    %1684 = vmatprep.mubr.f32.mxu0 0.0
    %1685 = vmatmul.mubr.f32.gmra.mxu0 %v1045
    %v1686 = vpop.f32.mrf.mxu0
    %v1687 = vadd.f32 0.0, %v1686
    %v1688 = vpop.f32.mrf.mxu0
    %1689 = vmatprep.mubr.f32.mxu0 0.0
    %1690 = vmatmul.mubr.f32.gmra.mxu0 %v1048
    %v1691 = vpop.f32.mrf.mxu0
    %v1692 = vadd.f32 0.0, %v1691
    %v1693 = vpop.f32.mrf.mxu0
    %1694 = vmatprep.mubr.f32.mxu0 0.0
    %1695 = vmatmul.mubr.f32.gmra.mxu0 %v1051
    %v1696 = vpop.f32.mrf.mxu0
    %v1697 = vadd.f32 0.0, %v1696
    %v1698 = vpop.f32.mrf.mxu0
    %1699 = vmatprep.mubr.f32.mxu0 0.0
    %1700 = vmatmul.mubr.f32.gmra.mxu0 %v1054
    %v1701 = vpop.f32.mrf.mxu0
    %v1702 = vadd.f32 0.0, %v1701
    %v1703 = vpop.f32.mrf.mxu0
    %1704 = vmatprep.mubr.f32.mxu0 0.0
    %1705 = vmatmul.mubr.f32.gmra.mxu0 %v1057
    %v1706 = vpop.f32.mrf.mxu0
    %v1707 = vadd.f32 0.0, %v1706
    %v1708 = vpop.f32.mrf.mxu0
    %1709 = vmatprep.mubr.f32.mxu0 0.0
    %1710 = vmatmul.mubr.f32.gmra.mxu0 %v1060
    %v1711 = vpop.f32.mrf.mxu0
    %v1712 = vadd.f32 0.0, %v1711
    %v1713 = vpop.f32.mrf.mxu0
    %1714 = vmatprep.mubr.f32.mxu0 0.0
    %1715 = vmatmul.mubr.f32.gmra.mxu0 %v1063
    %v1716 = vpop.f32.mrf.mxu0
    %v1717 = vadd.f32 0.0, %v1716
    %v1718 = vpop.f32.mrf.mxu0
    %1719 = vmatprep.mubr.f32.mxu0 0.0
    %1720 = vmatmul.mubr.f32.gmra.mxu0 %v1066
    %v1721 = vpop.f32.mrf.mxu0
    %v1722 = vadd.f32 0.0, %v1721
    %v1723 = vpop.f32.mrf.mxu0
    %1724 = vmatprep.mubr.f32.mxu0 0.0
    %1725 = vmatmul.mubr.f32.gmra.mxu0 %v1069
    %v1726 = vpop.f32.mrf.mxu0
    %v1727 = vadd.f32 0.0, %v1726
    %v1728 = vpop.f32.mrf.mxu0
    %1729 = vmatprep.mubr.f32.mxu0 0.0
    %1730 = vmatmul.mubr.f32.gmra.mxu0 %v1072
    %v1731 = vpop.f32.mrf.mxu0
    %v1732 = vadd.f32 0.0, %v1731
    %v1733 = vpop.f32.mrf.mxu0
    %1734 = vmatprep.mubr.f32.mxu0 0.0
    %1735 = vmatmul.mubr.f32.gmra.mxu0 %v1075
    %v1736 = vpop.f32.mrf.mxu0
    %v1737 = vadd.f32 0.0, %v1736
    %v1738 = vpop.f32.mrf.mxu0
    %1739 = vmatprep.mubr.f32.mxu0 0.0
    %1740 = vmatmul.mubr.f32.gmra.mxu0 %v1078
    %v1741 = vpop.f32.mrf.mxu0
    %v1742 = vadd.f32 0.0, %v1741
    %v1743 = vpop.f32.mrf.mxu0
    %1744 = vmatprep.mubr.f32.mxu0 0.0
    %1745 = vmatmul.mubr.f32.gmra.mxu0 %v1081
    %v1746 = vpop.f32.mrf.mxu0
    %v1747 = vadd.f32 0.0, %v1746
    %v1748 = vpop.f32.mrf.mxu0
    %1749 = vmatprep.mubr.f32.mxu0 0.0
    %1750 = vmatmul.mubr.f32.gmra.mxu0 %v1084
    %v1751 = vpop.f32.mrf.mxu0
    %v1752 = vadd.f32 0.0, %v1751
    %v1753 = vpop.f32.mrf.mxu0
    %1754 = vmatprep.mubr.f32.mxu0 0.0
    %1755 = vmatmul.mubr.f32.gmra.mxu0 %v1087
    %v1756 = vpop.f32.mrf.mxu0
    %v1757 = vadd.f32 0.0, %v1756
    %v1758 = vpop.f32.mrf.mxu0
    %1759 = vmatprep.mubr.f32.mxu0 0.0
    %1760 = vmatmul.mubr.f32.gmra.mxu0 %v1090
    %v1761 = vpop.f32.mrf.mxu0
    %v1762 = vadd.f32 0.0, %v1761
    %v1763 = vpop.f32.mrf.mxu0
    %1764 = vmatprep.mubr.f32.mxu0 0.0
    %1765 = vmatmul.mubr.f32.gmra.mxu0 %v1093
    %v1766 = vpop.f32.mrf.mxu0
    %v1767 = vadd.f32 0.0, %v1766
    %v1768 = vpop.f32.mrf.mxu0
    %1769 = vmatprep.mubr.f32.mxu0 0.0
    %1770 = vmatmul.mubr.f32.gmra.mxu0 %v1096
    %v1771 = vpop.f32.mrf.mxu0
    %v1772 = vadd.f32 0.0, %v1771
    %v1773 = vpop.f32.mrf.mxu0
    %1774 = vmatprep.mubr.f32.mxu0 0.0
    %1775 = vmatmul.mubr.f32.gmra.mxu0 %v1099
    %v1776 = vpop.f32.mrf.mxu0
    %v1777 = vadd.f32 0.0, %v1776
    %v1778 = vpop.f32.mrf.mxu0
    %1779 = vmatprep.mubr.f32.mxu0 0.0
    %1780 = vmatmul.mubr.f32.gmra.mxu0 %v1102
    %v1781 = vpop.f32.mrf.mxu0
    %v1782 = vadd.f32 0.0, %v1781
    %v1783 = vpop.f32.mrf.mxu0
    %1784 = vmatprep.mubr.f32.mxu0 0.0
    %1785 = vmatmul.mubr.f32.gmra.mxu0 %v1105
    %v1786 = vpop.f32.mrf.mxu0
    %v1787 = vadd.f32 0.0, %v1786
    %v1788 = vpop.f32.mrf.mxu0
    %1789 = vmatprep.mubr.f32.mxu0 0.0
    %1790 = vmatmul.mubr.f32.gmra.mxu0 %v1108
    %v1791 = vpop.f32.mrf.mxu0
    %v1792 = vadd.f32 0.0, %v1791
    %v1793 = vpop.f32.mrf.mxu0
    %1794 = vmatprep.mubr.f32.mxu0 0.0
    %1795 = vmatmul.mubr.f32.gmra.mxu0 %v1111
    %v1796 = vpop.f32.mrf.mxu0
    %v1797 = vadd.f32 0.0, %v1796
    %v1798 = vpop.f32.mrf.mxu0
    %1799 = vmatprep.mubr.f32.mxu0 0.0
    %1800 = vmatmul.mubr.f32.gmra.mxu0 %v1114
    %v1801 = vpop.f32.mrf.mxu0
    %v1802 = vadd.f32 0.0, %v1801
    %v1803 = vpop.f32.mrf.mxu0
    %1804 = vmatprep.mubr.f32.mxu0 0.0
    %1805 = vmatmul.mubr.f32.gmra.mxu0 %v1117
    %v1806 = vpop.f32.mrf.mxu0
    %v1807 = vadd.f32 0.0, %v1806
    %v1808 = vpop.f32.mrf.mxu0
    %1809 = vmatprep.mubr.f32.mxu0 0.0
    %1810 = vmatmul.mubr.f32.gmra.mxu0 %v1120
    %v1811 = vpop.f32.mrf.mxu0
    %v1812 = vadd.f32 0.0, %v1811
    %v1813 = vpop.f32.mrf.mxu0
    %1814 = vmatprep.mubr.f32.mxu0 0.0
    %1815 = vmatmul.mubr.f32.gmra.mxu0 %v1123
    %v1816 = vpop.f32.mrf.mxu0
    %v1817 = vadd.f32 0.0, %v1816
    %v1818 = vpop.f32.mrf.mxu0
    %1819 = vmatprep.mubr.f32.mxu0 0.0
    %1820 = vmatmul.mubr.f32.gmra.mxu0 %v1126
    %v1821 = vpop.f32.mrf.mxu0
    %v1822 = vadd.f32 0.0, %v1821
    %v1823 = vpop.f32.mrf.mxu0
    %1824 = vmatprep.mubr.f32.mxu0 0.0
    %1825 = vmatmul.mubr.f32.gmra.mxu0 %v1129
    %v1826 = vpop.f32.mrf.mxu0
    %v1827 = vadd.f32 0.0, %v1826
    %v1828 = vpop.f32.mrf.mxu0
    %1829 = vmatprep.mubr.f32.mxu0 0.0
    %1830 = vmatmul.mubr.f32.gmra.mxu0 %v1132
    %v1831 = vpop.f32.mrf.mxu0
    %v1832 = vadd.f32 0.0, %v1831
    %v1833 = vpop.f32.mrf.mxu0
    %1834 = vmatprep.mubr.f32.mxu0 0.0
    %1835 = vmatmul.mubr.f32.gmra.mxu0 %v1135
    %v1836 = vpop.f32.mrf.mxu0
    %v1837 = vadd.f32 0.0, %v1836
    %v1838 = vpop.f32.mrf.mxu0
    %1839 = vmatprep.mubr.f32.mxu0 0.0
    %1840 = vmatmul.mubr.f32.gmra.mxu0 %v1138
    %v1841 = vpop.f32.mrf.mxu0
    %v1842 = vadd.f32 0.0, %v1841
    %v1843 = vpop.f32.mrf.mxu0
    %1844 = vmatprep.mubr.f32.mxu0 0.0
    %1845 = vmatmul.mubr.f32.gmra.mxu0 %v1141
    %v1846 = vpop.f32.mrf.mxu0
    %v1847 = vadd.f32 0.0, %v1846
    %v1848 = vpop.f32.mrf.mxu0
    %1849 = vmatprep.mubr.f32.mxu0 0.0
    %1850 = vmatmul.mubr.f32.gmra.mxu0 %v1144
    %v1851 = vpop.f32.mrf.mxu0
    %v1852 = vadd.f32 0.0, %v1851
    %v1853 = vpop.f32.mrf.mxu0
    %1854 = vdwg.mxu0
    %v1856 = vsel %vm27, %v503, 0
    %v1859 = vsel %vm27, %v504, 0
    %v1862 = vsel %vm27, %v505, 0
    %v1865 = vsel %vm27, %v506, 0
    %v1868 = vsel %vm27, %v507, 0
    %v1871 = vsel %vm27, %v508, 0
    %v1874 = vsel %vm27, %v509, 0
    %v1877 = vsel %vm27, %v510, 0
    %v1880 = vsel %vm27, %v511, 0
    %v1883 = vsel %vm27, %v512, 0
    %v1886 = vsel %vm27, %v513, 0
    %v1889 = vsel %vm27, %v514, 0
    %v1892 = vsel %vm27, %v515, 0
    %v1895 = vsel %vm27, %v516, 0
    %v1898 = vsel %vm27, %v517, 0
    %v1901 = vsel %vm27, %v518, 0
    %v1904 = vsel %vm27, %v519, 0
    %v1907 = vsel %vm27, %v520, 0
    %v1910 = vsel %vm27, %v521, 0
    %v1913 = vsel %vm27, %v522, 0
    %v1916 = vsel %vm27, %v523, 0
    %v1919 = vsel %vm27, %v524, 0
    %v1922 = vsel %vm27, %v525, 0
    %v1925 = vsel %vm27, %v526, 0
    %v1928 = vsel %vm27, %v527, 0
    %v1931 = vsel %vm27, %v528, 0
    %v1934 = vsel %vm27, %v529, 0
    %v1937 = vsel %vm27, %v530, 0
    %v1940 = vsel %vm27, %v531, 0
    %v1943 = vsel %vm27, %v532, 0
    %v1946 = vsel %vm27, %v533, 0
    %v1949 = vsel %vm27, %v534, 0
    %v1952 = vsel %vm27, %v535, 0
    %v1955 = vsel %vm27, %v536, 0
    %v1958 = vsel %vm27, %v537, 0
    %v1961 = vsel %vm27, %v538, 0
    %v1964 = vsel %vm27, %v539, 0
    %v1967 = vsel %vm27, %v540, 0
    %v1970 = vsel %vm27, %v541, 0
    %v1973 = vsel %vm27, %v542, 0
    %v1976 = vsel %vm27, %v543, 0
    %v1979 = vsel %vm27, %v544, 0
    %v1982 = vsel %vm27, %v545, 0
    %v1985 = vsel %vm27, %v546, 0
    %v1988 = vsel %vm27, %v547, 0
    %v1991 = vsel %vm27, %v548, 0
    %v1994 = vsel %vm27, %v549, 0
    %v1997 = vsel %vm27, %v550, 0
    %v2000 = vsel %vm27, %v551, 0
    %v2003 = vsel %vm27, %v552, 0
    %v2006 = vsel %vm27, %v553, 0
    %v2009 = vsel %vm27, %v554, 0
    %v2012 = vsel %vm27, %v555, 0
    %v2015 = vsel %vm27, %v556, 0
    %v2018 = vsel %vm27, %v557, 0
    %v2021 = vsel %vm27, %v558, 0
    %v2024 = vsel %vm27, %v559, 0
    %v2027 = vsel %vm27, %v560, 0
    %v2030 = vsel %vm27, %v561, 0
    %v2033 = vsel %vm27, %v562, 0
    %v2036 = vsel %vm27, %v563, 0
    %v2039 = vsel %vm27, %v564, 0
    %v2042 = vsel %vm27, %v565, 0
    %v2045 = vsel %vm27, %v566, 0
    %v2048 = vsel %vm27, %v567, 0
    %v2051 = vsel %vm27, %v568, 0
    %v2054 = vsel %vm27, %v569, 0
    %v2057 = vsel %vm27, %v570, 0
    %v2060 = vsel %vm27, %v571, 0
    %v2063 = vsel %vm27, %v572, 0
    %v2066 = vsel %vm27, %v573, 0
    %v2069 = vsel %vm27, %v574, 0
    %v2072 = vsel %vm27, %v575, 0
    %v2075 = vsel %vm27, %v576, 0
    %v2078 = vsel %vm27, %v577, 0
    %v2081 = vsel %vm27, %v578, 0
    %v2084 = vsel %vm27, %v579, 0
    %v2087 = vsel %vm27, %v580, 0
    %v2090 = vsel %vm27, %v581, 0
    %v2093 = vsel %vm27, %v582, 0
    %v2096 = vsel %vm27, %v583, 0
    %v2099 = vsel %vm27, %v584, 0
    %v2102 = vsel %vm27, %v585, 0
    %v2105 = vsel %vm27, %v586, 0
    %v2108 = vsel %vm27, %v587, 0
    %v2111 = vsel %vm27, %v588, 0
    %v2114 = vsel %vm27, %v589, 0
    %v2117 = vsel %vm27, %v590, 0
    %v2120 = vsel %vm27, %v591, 0
    %v2123 = vsel %vm27, %v592, 0
    %v2126 = vsel %vm27, %v593, 0
    %v2129 = vsel %vm27, %v594, 0
    %v2132 = vsel %vm27, %v595, 0
    %v2135 = vsel %vm27, %v596, 0
    %v2138 = vsel %vm27, %v597, 0
    %v2141 = vsel %vm27, %v598, 0
    %v2144 = vsel %vm27, %v599, 0
    %v2147 = vsel %vm27, %v600, 0
    %v2150 = vsel %vm27, %v601, 0
    %v2153 = vsel %vm27, %v602, 0
    %v2156 = vsel %vm27, %v603, 0
    %v2159 = vsel %vm27, %v604, 0
    %v2162 = vsel %vm27, %v605, 0
    %v2165 = vsel %vm27, %v606, 0
    %v2168 = vsel %vm27, %v607, 0
    %v2171 = vsel %vm27, %v608, 0
    %v2174 = vsel %vm27, %v609, 0
    %v2177 = vsel %vm27, %v610, 0
    %v2180 = vsel %vm27, %v611, 0
    %v2183 = vsel %vm27, %v612, 0
    %v2186 = vsel %vm27, %v613, 0
    %v2189 = vsel %vm27, %v614, 0
    %v2192 = vsel %vm27, %v615, 0
    %v2195 = vsel %vm27, %v616, 0
    %v2198 = vsel %vm27, %v617, 0
    %v2201 = vsel %vm27, %v618, 0
    %v2204 = vsel %vm27, %v619, 0
    %v2207 = vsel %vm27, %v620, 0
    %v2210 = vsel %vm27, %v621, 0
    %v2213 = vsel %vm27, %v622, 0
    %v2216 = vsel %vm27, %v623, 0
    %v2219 = vsel %vm27, %v624, 0
    %v2222 = vsel %vm27, %v625, 0
    %v2225 = vsel %vm27, %v626, 0
    %v2228 = vsel %vm27, %v627, 0
    %v2231 = vsel %vm27, %v628, 0
    %v2234 = vsel %vm27, %v629, 0
    %v2237 = vsel %vm27, %v630, 0
    %v2240 = vsel %vm1146, %v631, 0
    %2242 = vmatprep.subr.mxu0 0.0
    %2243 = vmatpush1.msra.mxu0 0.0
    %2244 = vmatprep.subr.mxu0 0.0
    %2245 = vmatpush1.msra.mxu0 0.0
    %2246 = vmatprep.subr.mxu0 0.0
    %2247 = vmatpush1.msra.mxu0 0.0
    %2248 = vmatprep.subr.mxu0 0.0
    %2249 = vmatpush1.msra.mxu0 0.0
    %2250 = vmatprep.subr.mxu0 0.0
    %2251 = vmatpush1.msra.mxu0 0.0
    %2252 = vmatprep.subr.mxu0 0.0
    %2253 = vmatpush1.msra.mxu0 0.0
    %2254 = vmatprep.subr.mxu0 0.0
    %2255 = vmatpush1.msra.mxu0 0.0
    %2256 = vmatprep.subr.mxu0 0.0
    %2257 = vmatpush1.msra.mxu0 0.0
    %2258 = vmatprep.subr.mxu0 0.0
    %2259 = vmatpush1.msra.mxu0 0.0
    %2260 = vmatprep.subr.mxu0 0.0
    %2261 = vmatpush1.msra.mxu0 0.0
    %2262 = vmatprep.subr.mxu0 0.0
    %2263 = vmatpush1.msra.mxu0 0.0
    %2264 = vmatprep.subr.mxu0 0.0
    %2265 = vmatpush1.msra.mxu0 0.0
    %2266 = vmatprep.subr.mxu0 0.0
    %2267 = vmatpush1.msra.mxu0 0.0
    %2268 = vmatprep.subr.mxu0 0.0
    %2269 = vmatpush1.msra.mxu0 0.0
    %2270 = vmatprep.subr.mxu0 0.0
    %2271 = vmatpush1.msra.mxu0 0.0
    %2272 = vmatprep.subr.mxu0 0.0
    %2273 = vmatpush1.msra.mxu0 %v2240
    %2274 = vmatprep.subr.mxu0 0.0
    %2275 = vmatpush2.msra.mxu0 0.0
    %2276 = vmatprep.subr.mxu0 0.0
    %2277 = vmatpush2.msra.mxu0 0.0
    %2278 = vmatprep.subr.mxu0 0.0
    %2279 = vmatpush2.msra.mxu0 0.0
    %2280 = vmatprep.subr.mxu0 0.0
    %2281 = vmatpush2.msra.mxu0 0.0
    %2282 = vmatprep.subr.mxu0 0.0
    %2283 = vmatpush2.msra.mxu0 0.0
    %2284 = vmatprep.subr.mxu0 0.0
    %2285 = vmatpush2.msra.mxu0 0.0
    %2286 = vmatprep.subr.mxu0 0.0
    %2287 = vmatpush2.msra.mxu0 0.0
    %2288 = vmatprep.subr.mxu0 0.0
    %2289 = vmatpush2.msra.mxu0 0.0
    %2290 = vmatprep.subr.mxu0 0.0
    %2291 = vmatpush2.msra.mxu0 0.0
    %2292 = vmatprep.subr.mxu0 0.0
    %2293 = vmatpush2.msra.mxu0 0.0
    %2294 = vmatprep.subr.mxu0 0.0
    %2295 = vmatpush2.msra.mxu0 0.0
    %2296 = vmatprep.subr.mxu0 0.0
    %2297 = vmatpush2.msra.mxu0 0.0
    %2298 = vmatprep.subr.mxu0 0.0
    %2299 = vmatpush2.msra.mxu0 0.0
    %2300 = vmatprep.subr.mxu0 0.0
    %2301 = vmatpush2.msra.mxu0 0.0
    %2302 = vmatprep.subr.mxu0 0.0
    %2303 = vmatpush2.msra.mxu0 0.0
    %2304 = vmatprep.subr.mxu0 0.0
    %2305 = vmatpush2.msra.mxu0 0.0
    %2306 = vmatprep.mubr.f32.mxu0 0.0
    %2307 = vmatmul.mubr.f32.gmra.mxu0 %v1856
    %v2308 = vpop.f32.mrf.mxu0
    %v2309 = vadd.f32 %v1217, %v2308
    %v2310 = vpop.f32.mrf.mxu0
    %2311 = vmatprep.mubr.f32.mxu0 0.0
    %2312 = vmatmul.mubr.f32.gmra.mxu0 %v1859
    %v2313 = vpop.f32.mrf.mxu0
    %v2314 = vadd.f32 %v1222, %v2313
    %v2315 = vpop.f32.mrf.mxu0
    %2316 = vmatprep.mubr.f32.mxu0 0.0
    %2317 = vmatmul.mubr.f32.gmra.mxu0 %v1862
    %v2318 = vpop.f32.mrf.mxu0
    %v2319 = vadd.f32 %v1227, %v2318
    %v2320 = vpop.f32.mrf.mxu0
    %2321 = vmatprep.mubr.f32.mxu0 0.0
    %2322 = vmatmul.mubr.f32.gmra.mxu0 %v1865
    %v2323 = vpop.f32.mrf.mxu0
    %v2324 = vadd.f32 %v1232, %v2323
    %v2325 = vpop.f32.mrf.mxu0
    %2326 = vmatprep.mubr.f32.mxu0 0.0
    %2327 = vmatmul.mubr.f32.gmra.mxu0 %v1868
    %v2328 = vpop.f32.mrf.mxu0
    %v2329 = vadd.f32 %v1237, %v2328
    %v2330 = vpop.f32.mrf.mxu0
    %2331 = vmatprep.mubr.f32.mxu0 0.0
    %2332 = vmatmul.mubr.f32.gmra.mxu0 %v1871
    %v2333 = vpop.f32.mrf.mxu0
    %v2334 = vadd.f32 %v1242, %v2333
    %v2335 = vpop.f32.mrf.mxu0
    %2336 = vmatprep.mubr.f32.mxu0 0.0
    %2337 = vmatmul.mubr.f32.gmra.mxu0 %v1874
    %v2338 = vpop.f32.mrf.mxu0
    %v2339 = vadd.f32 %v1247, %v2338
    %v2340 = vpop.f32.mrf.mxu0
    %2341 = vmatprep.mubr.f32.mxu0 0.0
    %2342 = vmatmul.mubr.f32.gmra.mxu0 %v1877
    %v2343 = vpop.f32.mrf.mxu0
    %v2344 = vadd.f32 %v1252, %v2343
    %v2345 = vpop.f32.mrf.mxu0
    %2346 = vmatprep.mubr.f32.mxu0 0.0
    %2347 = vmatmul.mubr.f32.gmra.mxu0 %v1880
    %v2348 = vpop.f32.mrf.mxu0
    %v2349 = vadd.f32 %v1257, %v2348
    %v2350 = vpop.f32.mrf.mxu0
    %2351 = vmatprep.mubr.f32.mxu0 0.0
    %2352 = vmatmul.mubr.f32.gmra.mxu0 %v1883
    %v2353 = vpop.f32.mrf.mxu0
    %v2354 = vadd.f32 %v1262, %v2353
    %v2355 = vpop.f32.mrf.mxu0
    %2356 = vmatprep.mubr.f32.mxu0 0.0
    %2357 = vmatmul.mubr.f32.gmra.mxu0 %v1886
    %v2358 = vpop.f32.mrf.mxu0
    %v2359 = vadd.f32 %v1267, %v2358
    %v2360 = vpop.f32.mrf.mxu0
    %2361 = vmatprep.mubr.f32.mxu0 0.0
    %2362 = vmatmul.mubr.f32.gmra.mxu0 %v1889
    %v2363 = vpop.f32.mrf.mxu0
    %v2364 = vadd.f32 %v1272, %v2363
    %v2365 = vpop.f32.mrf.mxu0
    %2366 = vmatprep.mubr.f32.mxu0 0.0
    %2367 = vmatmul.mubr.f32.gmra.mxu0 %v1892
    %v2368 = vpop.f32.mrf.mxu0
    %v2369 = vadd.f32 %v1277, %v2368
    %v2370 = vpop.f32.mrf.mxu0
    %2371 = vmatprep.mubr.f32.mxu0 0.0
    %2372 = vmatmul.mubr.f32.gmra.mxu0 %v1895
    %v2373 = vpop.f32.mrf.mxu0
    %v2374 = vadd.f32 %v1282, %v2373
    %v2375 = vpop.f32.mrf.mxu0
    %2376 = vmatprep.mubr.f32.mxu0 0.0
    %2377 = vmatmul.mubr.f32.gmra.mxu0 %v1898
    %v2378 = vpop.f32.mrf.mxu0
    %v2379 = vadd.f32 %v1287, %v2378
    %v2380 = vpop.f32.mrf.mxu0
    %2381 = vmatprep.mubr.f32.mxu0 0.0
    %2382 = vmatmul.mubr.f32.gmra.mxu0 %v1901
    %v2383 = vpop.f32.mrf.mxu0
    %v2384 = vadd.f32 %v1292, %v2383
    %v2385 = vpop.f32.mrf.mxu0
    %2386 = vmatprep.mubr.f32.mxu0 0.0
    %2387 = vmatmul.mubr.f32.gmra.mxu0 %v1904
    %v2388 = vpop.f32.mrf.mxu0
    %v2389 = vadd.f32 %v1297, %v2388
    %v2390 = vpop.f32.mrf.mxu0
    %2391 = vmatprep.mubr.f32.mxu0 0.0
    %2392 = vmatmul.mubr.f32.gmra.mxu0 %v1907
    %v2393 = vpop.f32.mrf.mxu0
    %v2394 = vadd.f32 %v1302, %v2393
    %v2395 = vpop.f32.mrf.mxu0
    %2396 = vmatprep.mubr.f32.mxu0 0.0
    %2397 = vmatmul.mubr.f32.gmra.mxu0 %v1910
    %v2398 = vpop.f32.mrf.mxu0
    %v2399 = vadd.f32 %v1307, %v2398
    %v2400 = vpop.f32.mrf.mxu0
    %2401 = vmatprep.mubr.f32.mxu0 0.0
    %2402 = vmatmul.mubr.f32.gmra.mxu0 %v1913
    %v2403 = vpop.f32.mrf.mxu0
    %v2404 = vadd.f32 %v1312, %v2403
    %v2405 = vpop.f32.mrf.mxu0
    %2406 = vmatprep.mubr.f32.mxu0 0.0
    %2407 = vmatmul.mubr.f32.gmra.mxu0 %v1916
    %v2408 = vpop.f32.mrf.mxu0
    %v2409 = vadd.f32 %v1317, %v2408
    %v2410 = vpop.f32.mrf.mxu0
    %2411 = vmatprep.mubr.f32.mxu0 0.0
    %2412 = vmatmul.mubr.f32.gmra.mxu0 %v1919
    %v2413 = vpop.f32.mrf.mxu0
    %v2414 = vadd.f32 %v1322, %v2413
    %v2415 = vpop.f32.mrf.mxu0
    %2416 = vmatprep.mubr.f32.mxu0 0.0
    %2417 = vmatmul.mubr.f32.gmra.mxu0 %v1922
    %v2418 = vpop.f32.mrf.mxu0
    %v2419 = vadd.f32 %v1327, %v2418
    %v2420 = vpop.f32.mrf.mxu0
    %2421 = vmatprep.mubr.f32.mxu0 0.0
    %2422 = vmatmul.mubr.f32.gmra.mxu0 %v1925
    %v2423 = vpop.f32.mrf.mxu0
    %v2424 = vadd.f32 %v1332, %v2423
    %v2425 = vpop.f32.mrf.mxu0
    %2426 = vmatprep.mubr.f32.mxu0 0.0
    %2427 = vmatmul.mubr.f32.gmra.mxu0 %v1928
    %v2428 = vpop.f32.mrf.mxu0
    %v2429 = vadd.f32 %v1337, %v2428
    %v2430 = vpop.f32.mrf.mxu0
    %2431 = vmatprep.mubr.f32.mxu0 0.0
    %2432 = vmatmul.mubr.f32.gmra.mxu0 %v1931
    %v2433 = vpop.f32.mrf.mxu0
    %v2434 = vadd.f32 %v1342, %v2433
    %v2435 = vpop.f32.mrf.mxu0
    %2436 = vmatprep.mubr.f32.mxu0 0.0
    %2437 = vmatmul.mubr.f32.gmra.mxu0 %v1934
    %v2438 = vpop.f32.mrf.mxu0
    %v2439 = vadd.f32 %v1347, %v2438
    %v2440 = vpop.f32.mrf.mxu0
    %2441 = vmatprep.mubr.f32.mxu0 0.0
    %2442 = vmatmul.mubr.f32.gmra.mxu0 %v1937
    %v2443 = vpop.f32.mrf.mxu0
    %v2444 = vadd.f32 %v1352, %v2443
    %v2445 = vpop.f32.mrf.mxu0
    %2446 = vmatprep.mubr.f32.mxu0 0.0
    %2447 = vmatmul.mubr.f32.gmra.mxu0 %v1940
    %v2448 = vpop.f32.mrf.mxu0
    %v2449 = vadd.f32 %v1357, %v2448
    %v2450 = vpop.f32.mrf.mxu0
    %2451 = vmatprep.mubr.f32.mxu0 0.0
    %2452 = vmatmul.mubr.f32.gmra.mxu0 %v1943
    %v2453 = vpop.f32.mrf.mxu0
    %v2454 = vadd.f32 %v1362, %v2453
    %v2455 = vpop.f32.mrf.mxu0
    %2456 = vmatprep.mubr.f32.mxu0 0.0
    %2457 = vmatmul.mubr.f32.gmra.mxu0 %v1946
    %v2458 = vpop.f32.mrf.mxu0
    %v2459 = vadd.f32 %v1367, %v2458
    %v2460 = vpop.f32.mrf.mxu0
    %2461 = vmatprep.mubr.f32.mxu0 0.0
    %2462 = vmatmul.mubr.f32.gmra.mxu0 %v1949
    %v2463 = vpop.f32.mrf.mxu0
    %v2464 = vadd.f32 %v1372, %v2463
    %v2465 = vpop.f32.mrf.mxu0
    %2466 = vmatprep.mubr.f32.mxu0 0.0
    %2467 = vmatmul.mubr.f32.gmra.mxu0 %v1952
    %v2468 = vpop.f32.mrf.mxu0
    %v2469 = vadd.f32 %v1377, %v2468
    %v2470 = vpop.f32.mrf.mxu0
    %2471 = vmatprep.mubr.f32.mxu0 0.0
    %2472 = vmatmul.mubr.f32.gmra.mxu0 %v1955
    %v2473 = vpop.f32.mrf.mxu0
    %v2474 = vadd.f32 %v1382, %v2473
    %v2475 = vpop.f32.mrf.mxu0
    %2476 = vmatprep.mubr.f32.mxu0 0.0
    %2477 = vmatmul.mubr.f32.gmra.mxu0 %v1958
    %v2478 = vpop.f32.mrf.mxu0
    %v2479 = vadd.f32 %v1387, %v2478
    %v2480 = vpop.f32.mrf.mxu0
    %2481 = vmatprep.mubr.f32.mxu0 0.0
    %2482 = vmatmul.mubr.f32.gmra.mxu0 %v1961
    %v2483 = vpop.f32.mrf.mxu0
    %v2484 = vadd.f32 %v1392, %v2483
    %v2485 = vpop.f32.mrf.mxu0
    %2486 = vmatprep.mubr.f32.mxu0 0.0
    %2487 = vmatmul.mubr.f32.gmra.mxu0 %v1964
    %v2488 = vpop.f32.mrf.mxu0
    %v2489 = vadd.f32 %v1397, %v2488
    %v2490 = vpop.f32.mrf.mxu0
    %2491 = vmatprep.mubr.f32.mxu0 0.0
    %2492 = vmatmul.mubr.f32.gmra.mxu0 %v1967
    %v2493 = vpop.f32.mrf.mxu0
    %v2494 = vadd.f32 %v1402, %v2493
    %v2495 = vpop.f32.mrf.mxu0
    %2496 = vmatprep.mubr.f32.mxu0 0.0
    %2497 = vmatmul.mubr.f32.gmra.mxu0 %v1970
    %v2498 = vpop.f32.mrf.mxu0
    %v2499 = vadd.f32 %v1407, %v2498
    %v2500 = vpop.f32.mrf.mxu0
    %2501 = vmatprep.mubr.f32.mxu0 0.0
    %2502 = vmatmul.mubr.f32.gmra.mxu0 %v1973
    %v2503 = vpop.f32.mrf.mxu0
    %v2504 = vadd.f32 %v1412, %v2503
    %v2505 = vpop.f32.mrf.mxu0
    %2506 = vmatprep.mubr.f32.mxu0 0.0
    %2507 = vmatmul.mubr.f32.gmra.mxu0 %v1976
    %v2508 = vpop.f32.mrf.mxu0
    %v2509 = vadd.f32 %v1417, %v2508
    %v2510 = vpop.f32.mrf.mxu0
    %2511 = vmatprep.mubr.f32.mxu0 0.0
    %2512 = vmatmul.mubr.f32.gmra.mxu0 %v1979
    %v2513 = vpop.f32.mrf.mxu0
    %v2514 = vadd.f32 %v1422, %v2513
    %v2515 = vpop.f32.mrf.mxu0
    %2516 = vmatprep.mubr.f32.mxu0 0.0
    %2517 = vmatmul.mubr.f32.gmra.mxu0 %v1982
    %v2518 = vpop.f32.mrf.mxu0
    %v2519 = vadd.f32 %v1427, %v2518
    %v2520 = vpop.f32.mrf.mxu0
    %2521 = vmatprep.mubr.f32.mxu0 0.0
    %2522 = vmatmul.mubr.f32.gmra.mxu0 %v1985
    %v2523 = vpop.f32.mrf.mxu0
    %v2524 = vadd.f32 %v1432, %v2523
    %v2525 = vpop.f32.mrf.mxu0
    %2526 = vmatprep.mubr.f32.mxu0 0.0
    %2527 = vmatmul.mubr.f32.gmra.mxu0 %v1988
    %v2528 = vpop.f32.mrf.mxu0
    %v2529 = vadd.f32 %v1437, %v2528
    %v2530 = vpop.f32.mrf.mxu0
    %2531 = vmatprep.mubr.f32.mxu0 0.0
    %2532 = vmatmul.mubr.f32.gmra.mxu0 %v1991
    %v2533 = vpop.f32.mrf.mxu0
    %v2534 = vadd.f32 %v1442, %v2533
    %v2535 = vpop.f32.mrf.mxu0
    %2536 = vmatprep.mubr.f32.mxu0 0.0
    %2537 = vmatmul.mubr.f32.gmra.mxu0 %v1994
    %v2538 = vpop.f32.mrf.mxu0
    %v2539 = vadd.f32 %v1447, %v2538
    %v2540 = vpop.f32.mrf.mxu0
    %2541 = vmatprep.mubr.f32.mxu0 0.0
    %2542 = vmatmul.mubr.f32.gmra.mxu0 %v1997
    %v2543 = vpop.f32.mrf.mxu0
    %v2544 = vadd.f32 %v1452, %v2543
    %v2545 = vpop.f32.mrf.mxu0
    %2546 = vmatprep.mubr.f32.mxu0 0.0
    %2547 = vmatmul.mubr.f32.gmra.mxu0 %v2000
    %v2548 = vpop.f32.mrf.mxu0
    %v2549 = vadd.f32 %v1457, %v2548
    %v2550 = vpop.f32.mrf.mxu0
    %2551 = vmatprep.mubr.f32.mxu0 0.0
    %2552 = vmatmul.mubr.f32.gmra.mxu0 %v2003
    %v2553 = vpop.f32.mrf.mxu0
    %v2554 = vadd.f32 %v1462, %v2553
    %v2555 = vpop.f32.mrf.mxu0
    %2556 = vmatprep.mubr.f32.mxu0 0.0
    %2557 = vmatmul.mubr.f32.gmra.mxu0 %v2006
    %v2558 = vpop.f32.mrf.mxu0
    %v2559 = vadd.f32 %v1467, %v2558
    %v2560 = vpop.f32.mrf.mxu0
    %2561 = vmatprep.mubr.f32.mxu0 0.0
    %2562 = vmatmul.mubr.f32.gmra.mxu0 %v2009
    %v2563 = vpop.f32.mrf.mxu0
    %v2564 = vadd.f32 %v1472, %v2563
    %v2565 = vpop.f32.mrf.mxu0
    %2566 = vmatprep.mubr.f32.mxu0 0.0
    %2567 = vmatmul.mubr.f32.gmra.mxu0 %v2012
    %v2568 = vpop.f32.mrf.mxu0
    %v2569 = vadd.f32 %v1477, %v2568
    %v2570 = vpop.f32.mrf.mxu0
    %2571 = vmatprep.mubr.f32.mxu0 0.0
    %2572 = vmatmul.mubr.f32.gmra.mxu0 %v2015
    %v2573 = vpop.f32.mrf.mxu0
    %v2574 = vadd.f32 %v1482, %v2573
    %v2575 = vpop.f32.mrf.mxu0
    %2576 = vmatprep.mubr.f32.mxu0 0.0
    %2577 = vmatmul.mubr.f32.gmra.mxu0 %v2018
    %v2578 = vpop.f32.mrf.mxu0
    %v2579 = vadd.f32 %v1487, %v2578
    %v2580 = vpop.f32.mrf.mxu0
    %2581 = vmatprep.mubr.f32.mxu0 0.0
    %2582 = vmatmul.mubr.f32.gmra.mxu0 %v2021
    %v2583 = vpop.f32.mrf.mxu0
    %v2584 = vadd.f32 %v1492, %v2583
    %v2585 = vpop.f32.mrf.mxu0
    %2586 = vmatprep.mubr.f32.mxu0 0.0
    %2587 = vmatmul.mubr.f32.gmra.mxu0 %v2024
    %v2588 = vpop.f32.mrf.mxu0
    %v2589 = vadd.f32 %v1497, %v2588
    %v2590 = vpop.f32.mrf.mxu0
    %2591 = vmatprep.mubr.f32.mxu0 0.0
    %2592 = vmatmul.mubr.f32.gmra.mxu0 %v2027
    %v2593 = vpop.f32.mrf.mxu0
    %v2594 = vadd.f32 %v1502, %v2593
    %v2595 = vpop.f32.mrf.mxu0
    %2596 = vmatprep.mubr.f32.mxu0 0.0
    %2597 = vmatmul.mubr.f32.gmra.mxu0 %v2030
    %v2598 = vpop.f32.mrf.mxu0
    %v2599 = vadd.f32 %v1507, %v2598
    %v2600 = vpop.f32.mrf.mxu0
    %2601 = vmatprep.mubr.f32.mxu0 0.0
    %2602 = vmatmul.mubr.f32.gmra.mxu0 %v2033
    %v2603 = vpop.f32.mrf.mxu0
    %v2604 = vadd.f32 %v1512, %v2603
    %v2605 = vpop.f32.mrf.mxu0
    %2606 = vmatprep.mubr.f32.mxu0 0.0
    %2607 = vmatmul.mubr.f32.gmra.mxu0 %v2036
    %v2608 = vpop.f32.mrf.mxu0
    %v2609 = vadd.f32 %v1517, %v2608
    %v2610 = vpop.f32.mrf.mxu0
    %2611 = vmatprep.mubr.f32.mxu0 0.0
    %2612 = vmatmul.mubr.f32.gmra.mxu0 %v2039
    %v2613 = vpop.f32.mrf.mxu0
    %v2614 = vadd.f32 %v1522, %v2613
    %v2615 = vpop.f32.mrf.mxu0
    %2616 = vmatprep.mubr.f32.mxu0 0.0
    %2617 = vmatmul.mubr.f32.gmra.mxu0 %v2042
    %v2618 = vpop.f32.mrf.mxu0
    %v2619 = vadd.f32 %v1527, %v2618
    %v2620 = vpop.f32.mrf.mxu0
    %2621 = vmatprep.mubr.f32.mxu0 0.0
    %2622 = vmatmul.mubr.f32.gmra.mxu0 %v2045
    %v2623 = vpop.f32.mrf.mxu0
    %v2624 = vadd.f32 %v1532, %v2623
    %v2625 = vpop.f32.mrf.mxu0
    %2626 = vmatprep.mubr.f32.mxu0 0.0
    %2627 = vmatmul.mubr.f32.gmra.mxu0 %v2048
    %v2628 = vpop.f32.mrf.mxu0
    %v2629 = vadd.f32 %v1537, %v2628
    %v2630 = vpop.f32.mrf.mxu0
    %2631 = vmatprep.mubr.f32.mxu0 0.0
    %2632 = vmatmul.mubr.f32.gmra.mxu0 %v2051
    %v2633 = vpop.f32.mrf.mxu0
    %v2634 = vadd.f32 %v1542, %v2633
    %v2635 = vpop.f32.mrf.mxu0
    %2636 = vmatprep.mubr.f32.mxu0 0.0
    %2637 = vmatmul.mubr.f32.gmra.mxu0 %v2054
    %v2638 = vpop.f32.mrf.mxu0
    %v2639 = vadd.f32 %v1547, %v2638
    %v2640 = vpop.f32.mrf.mxu0
    %2641 = vmatprep.mubr.f32.mxu0 0.0
    %2642 = vmatmul.mubr.f32.gmra.mxu0 %v2057
    %v2643 = vpop.f32.mrf.mxu0
    %v2644 = vadd.f32 %v1552, %v2643
    %v2645 = vpop.f32.mrf.mxu0
    %2646 = vmatprep.mubr.f32.mxu0 0.0
    %2647 = vmatmul.mubr.f32.gmra.mxu0 %v2060
    %v2648 = vpop.f32.mrf.mxu0
    %v2649 = vadd.f32 %v1557, %v2648
    %v2650 = vpop.f32.mrf.mxu0
    %2651 = vmatprep.mubr.f32.mxu0 0.0
    %2652 = vmatmul.mubr.f32.gmra.mxu0 %v2063
    %v2653 = vpop.f32.mrf.mxu0
    %v2654 = vadd.f32 %v1562, %v2653
    %v2655 = vpop.f32.mrf.mxu0
    %2656 = vmatprep.mubr.f32.mxu0 0.0
    %2657 = vmatmul.mubr.f32.gmra.mxu0 %v2066
    %v2658 = vpop.f32.mrf.mxu0
    %v2659 = vadd.f32 %v1567, %v2658
    %v2660 = vpop.f32.mrf.mxu0
    %2661 = vmatprep.mubr.f32.mxu0 0.0
    %2662 = vmatmul.mubr.f32.gmra.mxu0 %v2069
    %v2663 = vpop.f32.mrf.mxu0
    %v2664 = vadd.f32 %v1572, %v2663
    %v2665 = vpop.f32.mrf.mxu0
    %2666 = vmatprep.mubr.f32.mxu0 0.0
    %2667 = vmatmul.mubr.f32.gmra.mxu0 %v2072
    %v2668 = vpop.f32.mrf.mxu0
    %v2669 = vadd.f32 %v1577, %v2668
    %v2670 = vpop.f32.mrf.mxu0
    %2671 = vmatprep.mubr.f32.mxu0 0.0
    %2672 = vmatmul.mubr.f32.gmra.mxu0 %v2075
    %v2673 = vpop.f32.mrf.mxu0
    %v2674 = vadd.f32 %v1582, %v2673
    %v2675 = vpop.f32.mrf.mxu0
    %2676 = vmatprep.mubr.f32.mxu0 0.0
    %2677 = vmatmul.mubr.f32.gmra.mxu0 %v2078
    %v2678 = vpop.f32.mrf.mxu0
    %v2679 = vadd.f32 %v1587, %v2678
    %v2680 = vpop.f32.mrf.mxu0
    %2681 = vmatprep.mubr.f32.mxu0 0.0
    %2682 = vmatmul.mubr.f32.gmra.mxu0 %v2081
    %v2683 = vpop.f32.mrf.mxu0
    %v2684 = vadd.f32 %v1592, %v2683
    %v2685 = vpop.f32.mrf.mxu0
    %2686 = vmatprep.mubr.f32.mxu0 0.0
    %2687 = vmatmul.mubr.f32.gmra.mxu0 %v2084
    %v2688 = vpop.f32.mrf.mxu0
    %v2689 = vadd.f32 %v1597, %v2688
    %v2690 = vpop.f32.mrf.mxu0
    %2691 = vmatprep.mubr.f32.mxu0 0.0
    %2692 = vmatmul.mubr.f32.gmra.mxu0 %v2087
    %v2693 = vpop.f32.mrf.mxu0
    %v2694 = vadd.f32 %v1602, %v2693
    %v2695 = vpop.f32.mrf.mxu0
    %2696 = vmatprep.mubr.f32.mxu0 0.0
    %2697 = vmatmul.mubr.f32.gmra.mxu0 %v2090
    %v2698 = vpop.f32.mrf.mxu0
    %v2699 = vadd.f32 %v1607, %v2698
    %v2700 = vpop.f32.mrf.mxu0
    %2701 = vmatprep.mubr.f32.mxu0 0.0
    %2702 = vmatmul.mubr.f32.gmra.mxu0 %v2093
    %v2703 = vpop.f32.mrf.mxu0
    %v2704 = vadd.f32 %v1612, %v2703
    %v2705 = vpop.f32.mrf.mxu0
    %2706 = vmatprep.mubr.f32.mxu0 0.0
    %2707 = vmatmul.mubr.f32.gmra.mxu0 %v2096
    %v2708 = vpop.f32.mrf.mxu0
    %v2709 = vadd.f32 %v1617, %v2708
    %v2710 = vpop.f32.mrf.mxu0
    %2711 = vmatprep.mubr.f32.mxu0 0.0
    %2712 = vmatmul.mubr.f32.gmra.mxu0 %v2099
    %v2713 = vpop.f32.mrf.mxu0
    %v2714 = vadd.f32 %v1622, %v2713
    %v2715 = vpop.f32.mrf.mxu0
    %2716 = vmatprep.mubr.f32.mxu0 0.0
    %2717 = vmatmul.mubr.f32.gmra.mxu0 %v2102
    %v2718 = vpop.f32.mrf.mxu0
    %v2719 = vadd.f32 %v1627, %v2718
    %v2720 = vpop.f32.mrf.mxu0
    %2721 = vmatprep.mubr.f32.mxu0 0.0
    %2722 = vmatmul.mubr.f32.gmra.mxu0 %v2105
    %v2723 = vpop.f32.mrf.mxu0
    %v2724 = vadd.f32 %v1632, %v2723
    %v2725 = vpop.f32.mrf.mxu0
    %2726 = vmatprep.mubr.f32.mxu0 0.0
    %2727 = vmatmul.mubr.f32.gmra.mxu0 %v2108
    %v2728 = vpop.f32.mrf.mxu0
    %v2729 = vadd.f32 %v1637, %v2728
    %v2730 = vpop.f32.mrf.mxu0
    %2731 = vmatprep.mubr.f32.mxu0 0.0
    %2732 = vmatmul.mubr.f32.gmra.mxu0 %v2111
    %v2733 = vpop.f32.mrf.mxu0
    %v2734 = vadd.f32 %v1642, %v2733
    %v2735 = vpop.f32.mrf.mxu0
    %2736 = vmatprep.mubr.f32.mxu0 0.0
    %2737 = vmatmul.mubr.f32.gmra.mxu0 %v2114
    %v2738 = vpop.f32.mrf.mxu0
    %v2739 = vadd.f32 %v1647, %v2738
    %v2740 = vpop.f32.mrf.mxu0
    %2741 = vmatprep.mubr.f32.mxu0 0.0
    %2742 = vmatmul.mubr.f32.gmra.mxu0 %v2117
    %v2743 = vpop.f32.mrf.mxu0
    %v2744 = vadd.f32 %v1652, %v2743
    %v2745 = vpop.f32.mrf.mxu0
    %2746 = vmatprep.mubr.f32.mxu0 0.0
    %2747 = vmatmul.mubr.f32.gmra.mxu0 %v2120
    %v2748 = vpop.f32.mrf.mxu0
    %v2749 = vadd.f32 %v1657, %v2748
    %v2750 = vpop.f32.mrf.mxu0
    %2751 = vmatprep.mubr.f32.mxu0 0.0
    %2752 = vmatmul.mubr.f32.gmra.mxu0 %v2123
    %v2753 = vpop.f32.mrf.mxu0
    %v2754 = vadd.f32 %v1662, %v2753
    %v2755 = vpop.f32.mrf.mxu0
    %2756 = vmatprep.mubr.f32.mxu0 0.0
    %2757 = vmatmul.mubr.f32.gmra.mxu0 %v2126
    %v2758 = vpop.f32.mrf.mxu0
    %v2759 = vadd.f32 %v1667, %v2758
    %v2760 = vpop.f32.mrf.mxu0
    %2761 = vmatprep.mubr.f32.mxu0 0.0
    %2762 = vmatmul.mubr.f32.gmra.mxu0 %v2129
    %v2763 = vpop.f32.mrf.mxu0
    %v2764 = vadd.f32 %v1672, %v2763
    %v2765 = vpop.f32.mrf.mxu0
    %2766 = vmatprep.mubr.f32.mxu0 0.0
    %2767 = vmatmul.mubr.f32.gmra.mxu0 %v2132
    %v2768 = vpop.f32.mrf.mxu0
    %v2769 = vadd.f32 %v1677, %v2768
    %v2770 = vpop.f32.mrf.mxu0
    %2771 = vmatprep.mubr.f32.mxu0 0.0
    %2772 = vmatmul.mubr.f32.gmra.mxu0 %v2135
    %v2773 = vpop.f32.mrf.mxu0
    %v2774 = vadd.f32 %v1682, %v2773
    %v2775 = vpop.f32.mrf.mxu0
    %2776 = vmatprep.mubr.f32.mxu0 0.0
    %2777 = vmatmul.mubr.f32.gmra.mxu0 %v2138
    %v2778 = vpop.f32.mrf.mxu0
    %v2779 = vadd.f32 %v1687, %v2778
    %v2780 = vpop.f32.mrf.mxu0
    %2781 = vmatprep.mubr.f32.mxu0 0.0
    %2782 = vmatmul.mubr.f32.gmra.mxu0 %v2141
    %v2783 = vpop.f32.mrf.mxu0
    %v2784 = vadd.f32 %v1692, %v2783
    %v2785 = vpop.f32.mrf.mxu0
    %2786 = vmatprep.mubr.f32.mxu0 0.0
    %2787 = vmatmul.mubr.f32.gmra.mxu0 %v2144
    %v2788 = vpop.f32.mrf.mxu0
    %v2789 = vadd.f32 %v1697, %v2788
    %v2790 = vpop.f32.mrf.mxu0
    %2791 = vmatprep.mubr.f32.mxu0 0.0
    %2792 = vmatmul.mubr.f32.gmra.mxu0 %v2147
    %v2793 = vpop.f32.mrf.mxu0
    %v2794 = vadd.f32 %v1702, %v2793
    %v2795 = vpop.f32.mrf.mxu0
    %2796 = vmatprep.mubr.f32.mxu0 0.0
    %2797 = vmatmul.mubr.f32.gmra.mxu0 %v2150
    %v2798 = vpop.f32.mrf.mxu0
    %v2799 = vadd.f32 %v1707, %v2798
    %v2800 = vpop.f32.mrf.mxu0
    %2801 = vmatprep.mubr.f32.mxu0 0.0
    %2802 = vmatmul.mubr.f32.gmra.mxu0 %v2153
    %v2803 = vpop.f32.mrf.mxu0
    %v2804 = vadd.f32 %v1712, %v2803
    %v2805 = vpop.f32.mrf.mxu0
    %2806 = vmatprep.mubr.f32.mxu0 0.0
    %2807 = vmatmul.mubr.f32.gmra.mxu0 %v2156
    %v2808 = vpop.f32.mrf.mxu0
    %v2809 = vadd.f32 %v1717, %v2808
    %v2810 = vpop.f32.mrf.mxu0
    %2811 = vmatprep.mubr.f32.mxu0 0.0
    %2812 = vmatmul.mubr.f32.gmra.mxu0 %v2159
    %v2813 = vpop.f32.mrf.mxu0
    %v2814 = vadd.f32 %v1722, %v2813
    %v2815 = vpop.f32.mrf.mxu0
    %2816 = vmatprep.mubr.f32.mxu0 0.0
    %2817 = vmatmul.mubr.f32.gmra.mxu0 %v2162
    %v2818 = vpop.f32.mrf.mxu0
    %v2819 = vadd.f32 %v1727, %v2818
    %v2820 = vpop.f32.mrf.mxu0
    %2821 = vmatprep.mubr.f32.mxu0 0.0
    %2822 = vmatmul.mubr.f32.gmra.mxu0 %v2165
    %v2823 = vpop.f32.mrf.mxu0
    %v2824 = vadd.f32 %v1732, %v2823
    %v2825 = vpop.f32.mrf.mxu0
    %2826 = vmatprep.mubr.f32.mxu0 0.0
    %2827 = vmatmul.mubr.f32.gmra.mxu0 %v2168
    %v2828 = vpop.f32.mrf.mxu0
    %v2829 = vadd.f32 %v1737, %v2828
    %v2830 = vpop.f32.mrf.mxu0
    %2831 = vmatprep.mubr.f32.mxu0 0.0
    %2832 = vmatmul.mubr.f32.gmra.mxu0 %v2171
    %v2833 = vpop.f32.mrf.mxu0
    %v2834 = vadd.f32 %v1742, %v2833
    %v2835 = vpop.f32.mrf.mxu0
    %2836 = vmatprep.mubr.f32.mxu0 0.0
    %2837 = vmatmul.mubr.f32.gmra.mxu0 %v2174
    %v2838 = vpop.f32.mrf.mxu0
    %v2839 = vadd.f32 %v1747, %v2838
    %v2840 = vpop.f32.mrf.mxu0
    %2841 = vmatprep.mubr.f32.mxu0 0.0
    %2842 = vmatmul.mubr.f32.gmra.mxu0 %v2177
    %v2843 = vpop.f32.mrf.mxu0
    %v2844 = vadd.f32 %v1752, %v2843
    %v2845 = vpop.f32.mrf.mxu0
    %2846 = vmatprep.mubr.f32.mxu0 0.0
    %2847 = vmatmul.mubr.f32.gmra.mxu0 %v2180
    %v2848 = vpop.f32.mrf.mxu0
    %v2849 = vadd.f32 %v1757, %v2848
    %v2850 = vpop.f32.mrf.mxu0
    %2851 = vmatprep.mubr.f32.mxu0 0.0
    %2852 = vmatmul.mubr.f32.gmra.mxu0 %v2183
    %v2853 = vpop.f32.mrf.mxu0
    %v2854 = vadd.f32 %v1762, %v2853
    %v2855 = vpop.f32.mrf.mxu0
    %2856 = vmatprep.mubr.f32.mxu0 0.0
    %2857 = vmatmul.mubr.f32.gmra.mxu0 %v2186
    %v2858 = vpop.f32.mrf.mxu0
    %v2859 = vadd.f32 %v1767, %v2858
    %v2860 = vpop.f32.mrf.mxu0
    %2861 = vmatprep.mubr.f32.mxu0 0.0
    %2862 = vmatmul.mubr.f32.gmra.mxu0 %v2189
    %v2863 = vpop.f32.mrf.mxu0
    %v2864 = vadd.f32 %v1772, %v2863
    %v2865 = vpop.f32.mrf.mxu0
    %2866 = vmatprep.mubr.f32.mxu0 0.0
    %2867 = vmatmul.mubr.f32.gmra.mxu0 %v2192
    %v2868 = vpop.f32.mrf.mxu0
    %v2869 = vadd.f32 %v1777, %v2868
    %v2870 = vpop.f32.mrf.mxu0
    %2871 = vmatprep.mubr.f32.mxu0 0.0
    %2872 = vmatmul.mubr.f32.gmra.mxu0 %v2195
    %v2873 = vpop.f32.mrf.mxu0
    %v2874 = vadd.f32 %v1782, %v2873
    %v2875 = vpop.f32.mrf.mxu0
    %2876 = vmatprep.mubr.f32.mxu0 0.0
    %2877 = vmatmul.mubr.f32.gmra.mxu0 %v2198
    %v2878 = vpop.f32.mrf.mxu0
    %v2879 = vadd.f32 %v1787, %v2878
    %v2880 = vpop.f32.mrf.mxu0
    %2881 = vmatprep.mubr.f32.mxu0 0.0
    %2882 = vmatmul.mubr.f32.gmra.mxu0 %v2201
    %v2883 = vpop.f32.mrf.mxu0
    %v2884 = vadd.f32 %v1792, %v2883
    %v2885 = vpop.f32.mrf.mxu0
    %2886 = vmatprep.mubr.f32.mxu0 0.0
    %2887 = vmatmul.mubr.f32.gmra.mxu0 %v2204
    %v2888 = vpop.f32.mrf.mxu0
    %v2889 = vadd.f32 %v1797, %v2888
    %v2890 = vpop.f32.mrf.mxu0
    %2891 = vmatprep.mubr.f32.mxu0 0.0
    %2892 = vmatmul.mubr.f32.gmra.mxu0 %v2207
    %v2893 = vpop.f32.mrf.mxu0
    %v2894 = vadd.f32 %v1802, %v2893
    %v2895 = vpop.f32.mrf.mxu0
    %2896 = vmatprep.mubr.f32.mxu0 0.0
    %2897 = vmatmul.mubr.f32.gmra.mxu0 %v2210
    %v2898 = vpop.f32.mrf.mxu0
    %v2899 = vadd.f32 %v1807, %v2898
    %v2900 = vpop.f32.mrf.mxu0
    %2901 = vmatprep.mubr.f32.mxu0 0.0
    %2902 = vmatmul.mubr.f32.gmra.mxu0 %v2213
    %v2903 = vpop.f32.mrf.mxu0
    %v2904 = vadd.f32 %v1812, %v2903
    %v2905 = vpop.f32.mrf.mxu0
    %2906 = vmatprep.mubr.f32.mxu0 0.0
    %2907 = vmatmul.mubr.f32.gmra.mxu0 %v2216
    %v2908 = vpop.f32.mrf.mxu0
    %v2909 = vadd.f32 %v1817, %v2908
    %v2910 = vpop.f32.mrf.mxu0
    %2911 = vmatprep.mubr.f32.mxu0 0.0
    %2912 = vmatmul.mubr.f32.gmra.mxu0 %v2219
    %v2913 = vpop.f32.mrf.mxu0
    %v2914 = vadd.f32 %v1822, %v2913
    %v2915 = vpop.f32.mrf.mxu0
    %2916 = vmatprep.mubr.f32.mxu0 0.0
    %2917 = vmatmul.mubr.f32.gmra.mxu0 %v2222
    %v2918 = vpop.f32.mrf.mxu0
    %v2919 = vadd.f32 %v1827, %v2918
    %v2920 = vpop.f32.mrf.mxu0
    %2921 = vmatprep.mubr.f32.mxu0 0.0
    %2922 = vmatmul.mubr.f32.gmra.mxu0 %v2225
    %v2923 = vpop.f32.mrf.mxu0
    %v2924 = vadd.f32 %v1832, %v2923
    %v2925 = vpop.f32.mrf.mxu0
    %2926 = vmatprep.mubr.f32.mxu0 0.0
    %2927 = vmatmul.mubr.f32.gmra.mxu0 %v2228
    %v2928 = vpop.f32.mrf.mxu0
    %v2929 = vadd.f32 %v1837, %v2928
    %v2930 = vpop.f32.mrf.mxu0
    %2931 = vmatprep.mubr.f32.mxu0 0.0
    %2932 = vmatmul.mubr.f32.gmra.mxu0 %v2231
    %v2933 = vpop.f32.mrf.mxu0
    %v2934 = vadd.f32 %v1842, %v2933
    %v2935 = vpop.f32.mrf.mxu0
    %2936 = vmatprep.mubr.f32.mxu0 0.0
    %2937 = vmatmul.mubr.f32.gmra.mxu0 %v2234
    %v2938 = vpop.f32.mrf.mxu0
    %v2939 = vadd.f32 %v1847, %v2938
    %v2940 = vpop.f32.mrf.mxu0
    %2941 = vmatprep.mubr.f32.mxu0 0.0
    %2942 = vmatmul.mubr.f32.gmra.mxu0 %v2237
    %v2943 = vpop.f32.mrf.mxu0
    %v2944 = vadd.f32 %v1852, %v2943
    %v2945 = vpop.f32.mrf.mxu0
    %2946 = vdwg.mxu0
    %v2947 = vld [vmem:[#allocation2 + $0x2] sm:$0xff]
    %v2948 = vld [vmem:[#allocation2 + $0xa] sm:$0xff]
    %v2949 = vld [vmem:[#allocation2 + $0x1a] sm:$0xff]
    %v2950 = vld [vmem:[#allocation2 + $0x22] sm:$0xff]
    %v2951 = vld [vmem:[#allocation2 + $0x32] sm:$0xff]
    %v2952 = vld [vmem:[#allocation2 + $0x3a] sm:$0xff]
    %v2953 = vld [vmem:[#allocation2 + $0x4a] sm:$0xff]
    %v2954 = vld [vmem:[#allocation2 + $0x52] sm:$0xff]
    %v2955 = vld [vmem:[#allocation2 + $0x62] sm:$0xff]
    %v2956 = vld [vmem:[#allocation2 + $0x6a] sm:$0xff]
    %v2957 = vld [vmem:[#allocation2 + $0x7a] sm:$0xff]
    %v2958 = vld [vmem:[#allocation2 + $0x82] sm:$0xff]
    %v2959 = vld [vmem:[#allocation2 + $0x92] sm:$0xff]
    %v2960 = vld [vmem:[#allocation2 + $0x9a] sm:$0xff]
    %v2961 = vld [vmem:[#allocation2 + $0xaa] sm:$0xff]
    %v2962 = vld [vmem:[#allocation2 + $0xb2] sm:$0xff]
    %v2963 = vld [vmem:[#allocation2 + $0xc2] sm:$0xff]
    %v2964 = vld [vmem:[#allocation2 + $0xca] sm:$0xff]
    %v2965 = vld [vmem:[#allocation2 + $0xda] sm:$0xff]
    %v2966 = vld [vmem:[#allocation2 + $0xe2] sm:$0xff]
    %v2967 = vld [vmem:[#allocation2 + $0xf2] sm:$0xff]
    %v2968 = vld [vmem:[#allocation2 + $0xfa] sm:$0xff]
    %v2969 = vld [vmem:[#allocation2 + $0x10a] sm:$0xff]
    %v2970 = vld [vmem:[#allocation2 + $0x112] sm:$0xff]
    %v2971 = vld [vmem:[#allocation2 + $0x122] sm:$0xff]
    %v2972 = vld [vmem:[#allocation2 + $0x12a] sm:$0xff]
    %v2973 = vld [vmem:[#allocation2 + $0x13a] sm:$0xff]
    %v2974 = vld [vmem:[#allocation2 + $0x142] sm:$0xff]
    %v2975 = vld [vmem:[#allocation2 + $0x152] sm:$0xff]
    %v2976 = vld [vmem:[#allocation2 + $0x15a] sm:$0xff]
    %v2977 = vld [vmem:[#allocation2 + $0x16a] sm:$0xff]
    %v2978 = vld [vmem:[#allocation2 + $0x172] sm:$0xff]
    %v2979 = vld [vmem:[#allocation2 + $0x1b2] sm:$0xff]
    %v2980 = vld [vmem:[#allocation2 + $0x1ba] sm:$0xff]
    %v2981 = vld [vmem:[#allocation2 + $0x1ca] sm:$0xff]
    %v2982 = vld [vmem:[#allocation2 + $0x1d2] sm:$0xff]
    %v2983 = vld [vmem:[#allocation2 + $0x1e2] sm:$0xff]
    %v2984 = vld [vmem:[#allocation2 + $0x1ea] sm:$0xff]
    %v2985 = vld [vmem:[#allocation2 + $0x1fa] sm:$0xff]
    %v2986 = vld [vmem:[#allocation2 + $0x202] sm:$0xff]
    %v2987 = vld [vmem:[#allocation2 + $0x212] sm:$0xff]
    %v2988 = vld [vmem:[#allocation2 + $0x21a] sm:$0xff]
    %v2989 = vld [vmem:[#allocation2 + $0x22a] sm:$0xff]
    %v2990 = vld [vmem:[#allocation2 + $0x232] sm:$0xff]
    %v2991 = vld [vmem:[#allocation2 + $0x242] sm:$0xff]
    %v2992 = vld [vmem:[#allocation2 + $0x24a] sm:$0xff]
    %v2993 = vld [vmem:[#allocation2 + $0x25a] sm:$0xff]
    %v2994 = vld [vmem:[#allocation2 + $0x262] sm:$0xff]
    %v2995 = vld [vmem:[#allocation2 + $0x272] sm:$0xff]
    %v2996 = vld [vmem:[#allocation2 + $0x27a] sm:$0xff]
    %v2997 = vld [vmem:[#allocation2 + $0x28a] sm:$0xff]
    %v2998 = vld [vmem:[#allocation2 + $0x292] sm:$0xff]
    %v2999 = vld [vmem:[#allocation2 + $0x2a2] sm:$0xff]
    %v3000 = vld [vmem:[#allocation2 + $0x2aa] sm:$0xff]
    %v3001 = vld [vmem:[#allocation2 + $0x2ba] sm:$0xff]
    %v3002 = vld [vmem:[#allocation2 + $0x2c2] sm:$0xff]
    %v3003 = vld [vmem:[#allocation2 + $0x2d2] sm:$0xff]
    %v3004 = vld [vmem:[#allocation2 + $0x2da] sm:$0xff]
    %v3005 = vld [vmem:[#allocation2 + $0x2ea] sm:$0xff]
    %v3006 = vld [vmem:[#allocation2 + $0x2f2] sm:$0xff]
    %v3007 = vld [vmem:[#allocation2 + $0x302] sm:$0xff]
    %v3008 = vld [vmem:[#allocation2 + $0x30a] sm:$0xff]
    %v3009 = vld [vmem:[#allocation2 + $0x31a] sm:$0xff]
    %v3010 = vld [vmem:[#allocation2 + $0x322] sm:$0xff]
    %v3011 = vld [vmem:[#allocation2 + $0x362] sm:$0xff]
    %v3012 = vld [vmem:[#allocation2 + $0x36a] sm:$0xff]
    %v3013 = vld [vmem:[#allocation2 + $0x37a] sm:$0xff]
    %v3014 = vld [vmem:[#allocation2 + $0x382] sm:$0xff]
    %v3015 = vld [vmem:[#allocation2 + $0x392] sm:$0xff]
    %v3016 = vld [vmem:[#allocation2 + $0x39a] sm:$0xff]
    %v3017 = vld [vmem:[#allocation2 + $0x3aa] sm:$0xff]
    %v3018 = vld [vmem:[#allocation2 + $0x3b2] sm:$0xff]
    %v3019 = vld [vmem:[#allocation2 + $0x3c2] sm:$0xff]
    %v3020 = vld [vmem:[#allocation2 + $0x3ca] sm:$0xff]
    %v3021 = vld [vmem:[#allocation2 + $0x3da] sm:$0xff]
    %v3022 = vld [vmem:[#allocation2 + $0x3e2] sm:$0xff]
    %v3023 = vld [vmem:[#allocation2 + $0x3f2] sm:$0xff]
    %v3024 = vld [vmem:[#allocation2 + $0x3fa] sm:$0xff]
    %v3025 = vld [vmem:[#allocation2 + $0x40a] sm:$0xff]
    %v3026 = vld [vmem:[#allocation2 + $0x412] sm:$0xff]
    %v3027 = vld [vmem:[#allocation2 + $0x422] sm:$0xff]
    %v3028 = vld [vmem:[#allocation2 + $0x42a] sm:$0xff]
    %v3029 = vld [vmem:[#allocation2 + $0x43a] sm:$0xff]
    %v3030 = vld [vmem:[#allocation2 + $0x442] sm:$0xff]
    %v3031 = vld [vmem:[#allocation2 + $0x452] sm:$0xff]
    %v3032 = vld [vmem:[#allocation2 + $0x45a] sm:$0xff]
    %v3033 = vld [vmem:[#allocation2 + $0x46a] sm:$0xff]
    %v3034 = vld [vmem:[#allocation2 + $0x472] sm:$0xff]
    %v3035 = vld [vmem:[#allocation2 + $0x482] sm:$0xff]
    %v3036 = vld [vmem:[#allocation2 + $0x48a] sm:$0xff]
    %v3037 = vld [vmem:[#allocation2 + $0x49a] sm:$0xff]
    %v3038 = vld [vmem:[#allocation2 + $0x4a2] sm:$0xff]
    %v3039 = vld [vmem:[#allocation2 + $0x4b2] sm:$0xff]
    %v3040 = vld [vmem:[#allocation2 + $0x4ba] sm:$0xff]
    %v3041 = vld [vmem:[#allocation2 + $0x4ca] sm:$0xff]
    %v3042 = vld [vmem:[#allocation2 + $0x4d2] sm:$0xff]
    %v3043 = vld [vmem:[#allocation2 + $0x512] sm:$0xff]
    %v3044 = vld [vmem:[#allocation2 + $0x51a] sm:$0xff]
    %v3045 = vld [vmem:[#allocation2 + $0x52a] sm:$0xff]
    %v3046 = vld [vmem:[#allocation2 + $0x532] sm:$0xff]
    %v3047 = vld [vmem:[#allocation2 + $0x542] sm:$0xff]
    %v3048 = vld [vmem:[#allocation2 + $0x54a] sm:$0xff]
    %v3049 = vld [vmem:[#allocation2 + $0x55a] sm:$0xff]
    %v3050 = vld [vmem:[#allocation2 + $0x562] sm:$0xff]
    %v3051 = vld [vmem:[#allocation2 + $0x572] sm:$0xff]
    %v3052 = vld [vmem:[#allocation2 + $0x57a] sm:$0xff]
    %v3053 = vld [vmem:[#allocation2 + $0x58a] sm:$0xff]
    %v3054 = vld [vmem:[#allocation2 + $0x592] sm:$0xff]
    %v3055 = vld [vmem:[#allocation2 + $0x5a2] sm:$0xff]
    %v3056 = vld [vmem:[#allocation2 + $0x5aa] sm:$0xff]
    %v3057 = vld [vmem:[#allocation2 + $0x5ba] sm:$0xff]
    %v3058 = vld [vmem:[#allocation2 + $0x5c2] sm:$0xff]
    %v3059 = vld [vmem:[#allocation2 + $0x5d2] sm:$0xff]
    %v3060 = vld [vmem:[#allocation2 + $0x5da] sm:$0xff]
    %v3061 = vld [vmem:[#allocation2 + $0x5ea] sm:$0xff]
    %v3062 = vld [vmem:[#allocation2 + $0x5f2] sm:$0xff]
    %v3063 = vld [vmem:[#allocation2 + $0x602] sm:$0xff]
    %v3064 = vld [vmem:[#allocation2 + $0x60a] sm:$0xff]
    %v3065 = vld [vmem:[#allocation2 + $0x61a] sm:$0xff]
    %v3066 = vld [vmem:[#allocation2 + $0x622] sm:$0xff]
    %v3067 = vld [vmem:[#allocation2 + $0x632] sm:$0xff]
    %v3068 = vld [vmem:[#allocation2 + $0x63a] sm:$0xff]
    %v3069 = vld [vmem:[#allocation2 + $0x64a] sm:$0xff]
    %v3070 = vld [vmem:[#allocation2 + $0x652] sm:$0xff]
    %v3071 = vld [vmem:[#allocation2 + $0x662] sm:$0xff]
    %v3072 = vld [vmem:[#allocation2 + $0x66a] sm:$0xff]
    %v3073 = vld [vmem:[#allocation2 + $0x67a] sm:$0xff]
    %v3074 = vld [vmem:[#allocation2 + $0x682] sm:$0xff]
    %s3075 = scalar_lea.vmem %s2, 8
    %v3076 = vld [vmem:[%s3075] sm:$0xf]
    %v3078 = vsel %vm27, %v2947, 0
    %v3081 = vsel %vm27, %v2948, 0
    %v3084 = vsel %vm27, %v2949, 0
    %v3087 = vsel %vm27, %v2950, 0
    %v3090 = vsel %vm27, %v2951, 0
    %v3093 = vsel %vm27, %v2952, 0
    %v3096 = vsel %vm27, %v2953, 0
    %v3099 = vsel %vm27, %v2954, 0
    %v3102 = vsel %vm27, %v2955, 0
    %v3105 = vsel %vm27, %v2956, 0
    %v3108 = vsel %vm27, %v2957, 0
    %v3111 = vsel %vm27, %v2958, 0
    %v3114 = vsel %vm27, %v2959, 0
    %v3117 = vsel %vm27, %v2960, 0
    %v3120 = vsel %vm27, %v2961, 0
    %v3123 = vsel %vm27, %v2962, 0
    %v3126 = vsel %vm27, %v2963, 0
    %v3129 = vsel %vm27, %v2964, 0
    %v3132 = vsel %vm27, %v2965, 0
    %v3135 = vsel %vm27, %v2966, 0
    %v3138 = vsel %vm27, %v2967, 0
    %v3141 = vsel %vm27, %v2968, 0
    %v3144 = vsel %vm27, %v2969, 0
    %v3147 = vsel %vm27, %v2970, 0
    %v3150 = vsel %vm27, %v2971, 0
    %v3153 = vsel %vm27, %v2972, 0
    %v3156 = vsel %vm27, %v2973, 0
    %v3159 = vsel %vm27, %v2974, 0
    %v3162 = vsel %vm27, %v2975, 0
    %v3165 = vsel %vm27, %v2976, 0
    %v3168 = vsel %vm27, %v2977, 0
    %v3171 = vsel %vm27, %v2978, 0
    %v3174 = vsel %vm27, %v2979, 0
    %v3177 = vsel %vm27, %v2980, 0
    %v3180 = vsel %vm27, %v2981, 0
    %v3183 = vsel %vm27, %v2982, 0
    %v3186 = vsel %vm27, %v2983, 0
    %v3189 = vsel %vm27, %v2984, 0
    %v3192 = vsel %vm27, %v2985, 0
    %v3195 = vsel %vm27, %v2986, 0
    %v3198 = vsel %vm27, %v2987, 0
    %v3201 = vsel %vm27, %v2988, 0
    %v3204 = vsel %vm27, %v2989, 0
    %v3207 = vsel %vm27, %v2990, 0
    %v3210 = vsel %vm27, %v2991, 0
    %v3213 = vsel %vm27, %v2992, 0
    %v3216 = vsel %vm27, %v2993, 0
    %v3219 = vsel %vm27, %v2994, 0
    %v3222 = vsel %vm27, %v2995, 0
    %v3225 = vsel %vm27, %v2996, 0
    %v3228 = vsel %vm27, %v2997, 0
    %v3231 = vsel %vm27, %v2998, 0
    %v3234 = vsel %vm27, %v2999, 0
    %v3237 = vsel %vm27, %v3000, 0
    %v3240 = vsel %vm27, %v3001, 0
    %v3243 = vsel %vm27, %v3002, 0
    %v3246 = vsel %vm27, %v3003, 0
    %v3249 = vsel %vm27, %v3004, 0
    %v3252 = vsel %vm27, %v3005, 0
    %v3255 = vsel %vm27, %v3006, 0
    %v3258 = vsel %vm27, %v3007, 0
    %v3261 = vsel %vm27, %v3008, 0
    %v3264 = vsel %vm27, %v3009, 0
    %v3267 = vsel %vm27, %v3010, 0
    %v3270 = vsel %vm27, %v3011, 0
    %v3273 = vsel %vm27, %v3012, 0
    %v3276 = vsel %vm27, %v3013, 0
    %v3279 = vsel %vm27, %v3014, 0
    %v3282 = vsel %vm27, %v3015, 0
    %v3285 = vsel %vm27, %v3016, 0
    %v3288 = vsel %vm27, %v3017, 0
    %v3291 = vsel %vm27, %v3018, 0
    %v3294 = vsel %vm27, %v3019, 0
    %v3297 = vsel %vm27, %v3020, 0
    %v3300 = vsel %vm27, %v3021, 0
    %v3303 = vsel %vm27, %v3022, 0
    %v3306 = vsel %vm27, %v3023, 0
    %v3309 = vsel %vm27, %v3024, 0
    %v3312 = vsel %vm27, %v3025, 0
    %v3315 = vsel %vm27, %v3026, 0
    %v3318 = vsel %vm27, %v3027, 0
    %v3321 = vsel %vm27, %v3028, 0
    %v3324 = vsel %vm27, %v3029, 0
    %v3327 = vsel %vm27, %v3030, 0
    %v3330 = vsel %vm27, %v3031, 0
    %v3333 = vsel %vm27, %v3032, 0
    %v3336 = vsel %vm27, %v3033, 0
    %v3339 = vsel %vm27, %v3034, 0
    %v3342 = vsel %vm27, %v3035, 0
    %v3345 = vsel %vm27, %v3036, 0
    %v3348 = vsel %vm27, %v3037, 0
    %v3351 = vsel %vm27, %v3038, 0
    %v3354 = vsel %vm27, %v3039, 0
    %v3357 = vsel %vm27, %v3040, 0
    %v3360 = vsel %vm27, %v3041, 0
    %v3363 = vsel %vm27, %v3042, 0
    %v3366 = vsel %vm27, %v3043, 0
    %v3369 = vsel %vm27, %v3044, 0
    %v3372 = vsel %vm27, %v3045, 0
    %v3375 = vsel %vm27, %v3046, 0
    %v3378 = vsel %vm27, %v3047, 0
    %v3381 = vsel %vm27, %v3048, 0
    %v3384 = vsel %vm27, %v3049, 0
    %v3387 = vsel %vm27, %v3050, 0
    %v3390 = vsel %vm27, %v3051, 0
    %v3393 = vsel %vm27, %v3052, 0
    %v3396 = vsel %vm27, %v3053, 0
    %v3399 = vsel %vm27, %v3054, 0
    %v3402 = vsel %vm27, %v3055, 0
    %v3405 = vsel %vm27, %v3056, 0
    %v3408 = vsel %vm27, %v3057, 0
    %v3411 = vsel %vm27, %v3058, 0
    %v3414 = vsel %vm27, %v3059, 0
    %v3417 = vsel %vm27, %v3060, 0
    %v3420 = vsel %vm27, %v3061, 0
    %v3423 = vsel %vm27, %v3062, 0
    %v3426 = vsel %vm27, %v3063, 0
    %v3429 = vsel %vm27, %v3064, 0
    %v3432 = vsel %vm27, %v3065, 0
    %v3435 = vsel %vm27, %v3066, 0
    %v3438 = vsel %vm27, %v3067, 0
    %v3441 = vsel %vm27, %v3068, 0
    %v3444 = vsel %vm27, %v3069, 0
    %v3447 = vsel %vm27, %v3070, 0
    %v3450 = vsel %vm27, %v3071, 0
    %v3453 = vsel %vm27, %v3072, 0
    %v3456 = vsel %vm27, %v3073, 0
    %v3459 = vsel %vm27, %v3074, 0
    %v3462 = vsel %vm1146, %v3076, 0
    %3464 = vmatprep.subr.mxu0 0.0
    %3465 = vmatpush1.msra.mxu0 0.0
    %3466 = vmatprep.subr.mxu0 0.0
    %3467 = vmatpush1.msra.mxu0 0.0
    %3468 = vmatprep.subr.mxu0 0.0
    %3469 = vmatpush1.msra.mxu0 0.0
    %3470 = vmatprep.subr.mxu0 0.0
    %3471 = vmatpush1.msra.mxu0 0.0
    %3472 = vmatprep.subr.mxu0 0.0
    %3473 = vmatpush1.msra.mxu0 0.0
    %3474 = vmatprep.subr.mxu0 0.0
    %3475 = vmatpush1.msra.mxu0 0.0
    %3476 = vmatprep.subr.mxu0 0.0
    %3477 = vmatpush1.msra.mxu0 0.0
    %3478 = vmatprep.subr.mxu0 0.0
    %3479 = vmatpush1.msra.mxu0 0.0
    %3480 = vmatprep.subr.mxu0 0.0
    %3481 = vmatpush1.msra.mxu0 0.0
    %3482 = vmatprep.subr.mxu0 0.0
    %3483 = vmatpush1.msra.mxu0 0.0
    %3484 = vmatprep.subr.mxu0 0.0
    %3485 = vmatpush1.msra.mxu0 0.0
    %3486 = vmatprep.subr.mxu0 0.0
    %3487 = vmatpush1.msra.mxu0 0.0
    %3488 = vmatprep.subr.mxu0 0.0
    %3489 = vmatpush1.msra.mxu0 0.0
    %3490 = vmatprep.subr.mxu0 0.0
    %3491 = vmatpush1.msra.mxu0 0.0
    %3492 = vmatprep.subr.mxu0 0.0
    %3493 = vmatpush1.msra.mxu0 0.0
    %3494 = vmatprep.subr.mxu0 0.0
    %3495 = vmatpush1.msra.mxu0 %v3462
    %3496 = vmatprep.subr.mxu0 0.0
    %3497 = vmatpush2.msra.mxu0 0.0
    %3498 = vmatprep.subr.mxu0 0.0
    %3499 = vmatpush2.msra.mxu0 0.0
    %3500 = vmatprep.subr.mxu0 0.0
    %3501 = vmatpush2.msra.mxu0 0.0
    %3502 = vmatprep.subr.mxu0 0.0
    %3503 = vmatpush2.msra.mxu0 0.0
    %3504 = vmatprep.subr.mxu0 0.0
    %3505 = vmatpush2.msra.mxu0 0.0
    %3506 = vmatprep.subr.mxu0 0.0
    %3507 = vmatpush2.msra.mxu0 0.0
    %3508 = vmatprep.subr.mxu0 0.0
    %3509 = vmatpush2.msra.mxu0 0.0
    %3510 = vmatprep.subr.mxu0 0.0
    %3511 = vmatpush2.msra.mxu0 0.0
    %3512 = vmatprep.subr.mxu0 0.0
    %3513 = vmatpush2.msra.mxu0 0.0
    %3514 = vmatprep.subr.mxu0 0.0
    %3515 = vmatpush2.msra.mxu0 0.0
    %3516 = vmatprep.subr.mxu0 0.0
    %3517 = vmatpush2.msra.mxu0 0.0
    %3518 = vmatprep.subr.mxu0 0.0
    %3519 = vmatpush2.msra.mxu0 0.0
    %3520 = vmatprep.subr.mxu0 0.0
    %3521 = vmatpush2.msra.mxu0 0.0
    %3522 = vmatprep.subr.mxu0 0.0
    %3523 = vmatpush2.msra.mxu0 0.0
    %3524 = vmatprep.subr.mxu0 0.0
    %3525 = vmatpush2.msra.mxu0 0.0
    %3526 = vmatprep.subr.mxu0 0.0
    %3527 = vmatpush2.msra.mxu0 0.0
    %3528 = vmatprep.mubr.f32.mxu0 0.0
    %3529 = vmatmul.mubr.f32.gmra.mxu0 %v3078
    %v3530 = vpop.f32.mrf.mxu0
    %v3531 = vadd.f32 0.0, %v3530
    %v3532 = vpop.f32.mrf.mxu0
    %3533 = vmatprep.mubr.f32.mxu0 0.0
    %3534 = vmatmul.mubr.f32.gmra.mxu0 %v3081
    %v3535 = vpop.f32.mrf.mxu0
    %v3536 = vadd.f32 0.0, %v3535
    %v3537 = vpop.f32.mrf.mxu0
    %3538 = vmatprep.mubr.f32.mxu0 0.0
    %3539 = vmatmul.mubr.f32.gmra.mxu0 %v3084
    %v3540 = vpop.f32.mrf.mxu0
    %v3541 = vadd.f32 0.0, %v3540
    %v3542 = vpop.f32.mrf.mxu0
    %3543 = vmatprep.mubr.f32.mxu0 0.0
    %3544 = vmatmul.mubr.f32.gmra.mxu0 %v3087
    %v3545 = vpop.f32.mrf.mxu0
    %v3546 = vadd.f32 0.0, %v3545
    %v3547 = vpop.f32.mrf.mxu0
    %3548 = vmatprep.mubr.f32.mxu0 0.0
    %3549 = vmatmul.mubr.f32.gmra.mxu0 %v3090
    %v3550 = vpop.f32.mrf.mxu0
    %v3551 = vadd.f32 0.0, %v3550
    %v3552 = vpop.f32.mrf.mxu0
    %3553 = vmatprep.mubr.f32.mxu0 0.0
    %3554 = vmatmul.mubr.f32.gmra.mxu0 %v3093
    %v3555 = vpop.f32.mrf.mxu0
    %v3556 = vadd.f32 0.0, %v3555
    %v3557 = vpop.f32.mrf.mxu0
    %3558 = vmatprep.mubr.f32.mxu0 0.0
    %3559 = vmatmul.mubr.f32.gmra.mxu0 %v3096
    %v3560 = vpop.f32.mrf.mxu0
    %v3561 = vadd.f32 0.0, %v3560
    %v3562 = vpop.f32.mrf.mxu0
    %3563 = vmatprep.mubr.f32.mxu0 0.0
    %3564 = vmatmul.mubr.f32.gmra.mxu0 %v3099
    %v3565 = vpop.f32.mrf.mxu0
    %v3566 = vadd.f32 0.0, %v3565
    %v3567 = vpop.f32.mrf.mxu0
    %3568 = vmatprep.mubr.f32.mxu0 0.0
    %3569 = vmatmul.mubr.f32.gmra.mxu0 %v3102
    %v3570 = vpop.f32.mrf.mxu0
    %v3571 = vadd.f32 0.0, %v3570
    %v3572 = vpop.f32.mrf.mxu0
    %3573 = vmatprep.mubr.f32.mxu0 0.0
    %3574 = vmatmul.mubr.f32.gmra.mxu0 %v3105
    %v3575 = vpop.f32.mrf.mxu0
    %v3576 = vadd.f32 0.0, %v3575
    %v3577 = vpop.f32.mrf.mxu0
    %3578 = vmatprep.mubr.f32.mxu0 0.0
    %3579 = vmatmul.mubr.f32.gmra.mxu0 %v3108
    %v3580 = vpop.f32.mrf.mxu0
    %v3581 = vadd.f32 0.0, %v3580
    %v3582 = vpop.f32.mrf.mxu0
    %3583 = vmatprep.mubr.f32.mxu0 0.0
    %3584 = vmatmul.mubr.f32.gmra.mxu0 %v3111
    %v3585 = vpop.f32.mrf.mxu0
    %v3586 = vadd.f32 0.0, %v3585
    %v3587 = vpop.f32.mrf.mxu0
    %3588 = vmatprep.mubr.f32.mxu0 0.0
    %3589 = vmatmul.mubr.f32.gmra.mxu0 %v3114
    %v3590 = vpop.f32.mrf.mxu0
    %v3591 = vadd.f32 0.0, %v3590
    %v3592 = vpop.f32.mrf.mxu0
    %3593 = vmatprep.mubr.f32.mxu0 0.0
    %3594 = vmatmul.mubr.f32.gmra.mxu0 %v3117
    %v3595 = vpop.f32.mrf.mxu0
    %v3596 = vadd.f32 0.0, %v3595
    %v3597 = vpop.f32.mrf.mxu0
    %3598 = vmatprep.mubr.f32.mxu0 0.0
    %3599 = vmatmul.mubr.f32.gmra.mxu0 %v3120
    %v3600 = vpop.f32.mrf.mxu0
    %v3601 = vadd.f32 0.0, %v3600
    %v3602 = vpop.f32.mrf.mxu0
    %3603 = vmatprep.mubr.f32.mxu0 0.0
    %3604 = vmatmul.mubr.f32.gmra.mxu0 %v3123
    %v3605 = vpop.f32.mrf.mxu0
    %v3606 = vadd.f32 0.0, %v3605
    %v3607 = vpop.f32.mrf.mxu0
    %3608 = vmatprep.mubr.f32.mxu0 0.0
    %3609 = vmatmul.mubr.f32.gmra.mxu0 %v3126
    %v3610 = vpop.f32.mrf.mxu0
    %v3611 = vadd.f32 0.0, %v3610
    %v3612 = vpop.f32.mrf.mxu0
    %3613 = vmatprep.mubr.f32.mxu0 0.0
    %3614 = vmatmul.mubr.f32.gmra.mxu0 %v3129
    %v3615 = vpop.f32.mrf.mxu0
    %v3616 = vadd.f32 0.0, %v3615
    %v3617 = vpop.f32.mrf.mxu0
    %3618 = vmatprep.mubr.f32.mxu0 0.0
    %3619 = vmatmul.mubr.f32.gmra.mxu0 %v3132
    %v3620 = vpop.f32.mrf.mxu0
    %v3621 = vadd.f32 0.0, %v3620
    %v3622 = vpop.f32.mrf.mxu0
    %3623 = vmatprep.mubr.f32.mxu0 0.0
    %3624 = vmatmul.mubr.f32.gmra.mxu0 %v3135
    %v3625 = vpop.f32.mrf.mxu0
    %v3626 = vadd.f32 0.0, %v3625
    %v3627 = vpop.f32.mrf.mxu0
    %3628 = vmatprep.mubr.f32.mxu0 0.0
    %3629 = vmatmul.mubr.f32.gmra.mxu0 %v3138
    %v3630 = vpop.f32.mrf.mxu0
    %v3631 = vadd.f32 0.0, %v3630
    %v3632 = vpop.f32.mrf.mxu0
    %3633 = vmatprep.mubr.f32.mxu0 0.0
    %3634 = vmatmul.mubr.f32.gmra.mxu0 %v3141
    %v3635 = vpop.f32.mrf.mxu0
    %v3636 = vadd.f32 0.0, %v3635
    %v3637 = vpop.f32.mrf.mxu0
    %3638 = vmatprep.mubr.f32.mxu0 0.0
    %3639 = vmatmul.mubr.f32.gmra.mxu0 %v3144
    %v3640 = vpop.f32.mrf.mxu0
    %v3641 = vadd.f32 0.0, %v3640
    %v3642 = vpop.f32.mrf.mxu0
    %3643 = vmatprep.mubr.f32.mxu0 0.0
    %3644 = vmatmul.mubr.f32.gmra.mxu0 %v3147
    %v3645 = vpop.f32.mrf.mxu0
    %v3646 = vadd.f32 0.0, %v3645
    %v3647 = vpop.f32.mrf.mxu0
    %3648 = vmatprep.mubr.f32.mxu0 0.0
    %3649 = vmatmul.mubr.f32.gmra.mxu0 %v3150
    %v3650 = vpop.f32.mrf.mxu0
    %v3651 = vadd.f32 0.0, %v3650
    %v3652 = vpop.f32.mrf.mxu0
    %3653 = vmatprep.mubr.f32.mxu0 0.0
    %3654 = vmatmul.mubr.f32.gmra.mxu0 %v3153
    %v3655 = vpop.f32.mrf.mxu0
    %v3656 = vadd.f32 0.0, %v3655
    %v3657 = vpop.f32.mrf.mxu0
    %3658 = vmatprep.mubr.f32.mxu0 0.0
    %3659 = vmatmul.mubr.f32.gmra.mxu0 %v3156
    %v3660 = vpop.f32.mrf.mxu0
    %v3661 = vadd.f32 0.0, %v3660
    %v3662 = vpop.f32.mrf.mxu0
    %3663 = vmatprep.mubr.f32.mxu0 0.0
    %3664 = vmatmul.mubr.f32.gmra.mxu0 %v3159
    %v3665 = vpop.f32.mrf.mxu0
    %v3666 = vadd.f32 0.0, %v3665
    %v3667 = vpop.f32.mrf.mxu0
    %3668 = vmatprep.mubr.f32.mxu0 0.0
    %3669 = vmatmul.mubr.f32.gmra.mxu0 %v3162
    %v3670 = vpop.f32.mrf.mxu0
    %v3671 = vadd.f32 0.0, %v3670
    %v3672 = vpop.f32.mrf.mxu0
    %3673 = vmatprep.mubr.f32.mxu0 0.0
    %3674 = vmatmul.mubr.f32.gmra.mxu0 %v3165
    %v3675 = vpop.f32.mrf.mxu0
    %v3676 = vadd.f32 0.0, %v3675
    %v3677 = vpop.f32.mrf.mxu0
    %3678 = vmatprep.mubr.f32.mxu0 0.0
    %3679 = vmatmul.mubr.f32.gmra.mxu0 %v3168
    %v3680 = vpop.f32.mrf.mxu0
    %v3681 = vadd.f32 0.0, %v3680
    %v3682 = vpop.f32.mrf.mxu0
    %3683 = vmatprep.mubr.f32.mxu0 0.0
    %3684 = vmatmul.mubr.f32.gmra.mxu0 %v3171
    %v3685 = vpop.f32.mrf.mxu0
    %v3686 = vadd.f32 0.0, %v3685
    %v3687 = vpop.f32.mrf.mxu0
    %3688 = vmatprep.mubr.f32.mxu0 0.0
    %3689 = vmatmul.mubr.f32.gmra.mxu0 %v3174
    %v3690 = vpop.f32.mrf.mxu0
    %v3691 = vadd.f32 0.0, %v3690
    %v3692 = vpop.f32.mrf.mxu0
    %3693 = vmatprep.mubr.f32.mxu0 0.0
    %3694 = vmatmul.mubr.f32.gmra.mxu0 %v3177
    %v3695 = vpop.f32.mrf.mxu0
    %v3696 = vadd.f32 0.0, %v3695
    %v3697 = vpop.f32.mrf.mxu0
    %3698 = vmatprep.mubr.f32.mxu0 0.0
    %3699 = vmatmul.mubr.f32.gmra.mxu0 %v3180
    %v3700 = vpop.f32.mrf.mxu0
    %v3701 = vadd.f32 0.0, %v3700
    %v3702 = vpop.f32.mrf.mxu0
    %3703 = vmatprep.mubr.f32.mxu0 0.0
    %3704 = vmatmul.mubr.f32.gmra.mxu0 %v3183
    %v3705 = vpop.f32.mrf.mxu0
    %v3706 = vadd.f32 0.0, %v3705
    %v3707 = vpop.f32.mrf.mxu0
    %3708 = vmatprep.mubr.f32.mxu0 0.0
    %3709 = vmatmul.mubr.f32.gmra.mxu0 %v3186
    %v3710 = vpop.f32.mrf.mxu0
    %v3711 = vadd.f32 0.0, %v3710
    %v3712 = vpop.f32.mrf.mxu0
    %3713 = vmatprep.mubr.f32.mxu0 0.0
    %3714 = vmatmul.mubr.f32.gmra.mxu0 %v3189
    %v3715 = vpop.f32.mrf.mxu0
    %v3716 = vadd.f32 0.0, %v3715
    %v3717 = vpop.f32.mrf.mxu0
    %3718 = vmatprep.mubr.f32.mxu0 0.0
    %3719 = vmatmul.mubr.f32.gmra.mxu0 %v3192
    %v3720 = vpop.f32.mrf.mxu0
    %v3721 = vadd.f32 0.0, %v3720
    %v3722 = vpop.f32.mrf.mxu0
    %3723 = vmatprep.mubr.f32.mxu0 0.0
    %3724 = vmatmul.mubr.f32.gmra.mxu0 %v3195
    %v3725 = vpop.f32.mrf.mxu0
    %v3726 = vadd.f32 0.0, %v3725
    %v3727 = vpop.f32.mrf.mxu0
    %3728 = vmatprep.mubr.f32.mxu0 0.0
    %3729 = vmatmul.mubr.f32.gmra.mxu0 %v3198
    %v3730 = vpop.f32.mrf.mxu0
    %v3731 = vadd.f32 0.0, %v3730
    %v3732 = vpop.f32.mrf.mxu0
    %3733 = vmatprep.mubr.f32.mxu0 0.0
    %3734 = vmatmul.mubr.f32.gmra.mxu0 %v3201
    %v3735 = vpop.f32.mrf.mxu0
    %v3736 = vadd.f32 0.0, %v3735
    %v3737 = vpop.f32.mrf.mxu0
    %3738 = vmatprep.mubr.f32.mxu0 0.0
    %3739 = vmatmul.mubr.f32.gmra.mxu0 %v3204
    %v3740 = vpop.f32.mrf.mxu0
    %v3741 = vadd.f32 0.0, %v3740
    %v3742 = vpop.f32.mrf.mxu0
    %3743 = vmatprep.mubr.f32.mxu0 0.0
    %3744 = vmatmul.mubr.f32.gmra.mxu0 %v3207
    %v3745 = vpop.f32.mrf.mxu0
    %v3746 = vadd.f32 0.0, %v3745
    %v3747 = vpop.f32.mrf.mxu0
    %3748 = vmatprep.mubr.f32.mxu0 0.0
    %3749 = vmatmul.mubr.f32.gmra.mxu0 %v3210
    %v3750 = vpop.f32.mrf.mxu0
    %v3751 = vadd.f32 0.0, %v3750
    %v3752 = vpop.f32.mrf.mxu0
    %3753 = vmatprep.mubr.f32.mxu0 0.0
    %3754 = vmatmul.mubr.f32.gmra.mxu0 %v3213
    %v3755 = vpop.f32.mrf.mxu0
    %v3756 = vadd.f32 0.0, %v3755
    %v3757 = vpop.f32.mrf.mxu0
    %3758 = vmatprep.mubr.f32.mxu0 0.0
    %3759 = vmatmul.mubr.f32.gmra.mxu0 %v3216
    %v3760 = vpop.f32.mrf.mxu0
    %v3761 = vadd.f32 0.0, %v3760
    %v3762 = vpop.f32.mrf.mxu0
    %3763 = vmatprep.mubr.f32.mxu0 0.0
    %3764 = vmatmul.mubr.f32.gmra.mxu0 %v3219
    %v3765 = vpop.f32.mrf.mxu0
    %v3766 = vadd.f32 0.0, %v3765
    %v3767 = vpop.f32.mrf.mxu0
    %3768 = vmatprep.mubr.f32.mxu0 0.0
    %3769 = vmatmul.mubr.f32.gmra.mxu0 %v3222
    %v3770 = vpop.f32.mrf.mxu0
    %v3771 = vadd.f32 0.0, %v3770
    %v3772 = vpop.f32.mrf.mxu0
    %3773 = vmatprep.mubr.f32.mxu0 0.0
    %3774 = vmatmul.mubr.f32.gmra.mxu0 %v3225
    %v3775 = vpop.f32.mrf.mxu0
    %v3776 = vadd.f32 0.0, %v3775
    %v3777 = vpop.f32.mrf.mxu0
    %3778 = vmatprep.mubr.f32.mxu0 0.0
    %3779 = vmatmul.mubr.f32.gmra.mxu0 %v3228
    %v3780 = vpop.f32.mrf.mxu0
    %v3781 = vadd.f32 0.0, %v3780
    %v3782 = vpop.f32.mrf.mxu0
    %3783 = vmatprep.mubr.f32.mxu0 0.0
    %3784 = vmatmul.mubr.f32.gmra.mxu0 %v3231
    %v3785 = vpop.f32.mrf.mxu0
    %v3786 = vadd.f32 0.0, %v3785
    %v3787 = vpop.f32.mrf.mxu0
    %3788 = vmatprep.mubr.f32.mxu0 0.0
    %3789 = vmatmul.mubr.f32.gmra.mxu0 %v3234
    %v3790 = vpop.f32.mrf.mxu0
    %v3791 = vadd.f32 0.0, %v3790
    %v3792 = vpop.f32.mrf.mxu0
    %3793 = vmatprep.mubr.f32.mxu0 0.0
    %3794 = vmatmul.mubr.f32.gmra.mxu0 %v3237
    %v3795 = vpop.f32.mrf.mxu0
    %v3796 = vadd.f32 0.0, %v3795
    %v3797 = vpop.f32.mrf.mxu0
    %3798 = vmatprep.mubr.f32.mxu0 0.0
    %3799 = vmatmul.mubr.f32.gmra.mxu0 %v3240
    %v3800 = vpop.f32.mrf.mxu0
    %v3801 = vadd.f32 0.0, %v3800
    %v3802 = vpop.f32.mrf.mxu0
    %3803 = vmatprep.mubr.f32.mxu0 0.0
    %3804 = vmatmul.mubr.f32.gmra.mxu0 %v3243
    %v3805 = vpop.f32.mrf.mxu0
    %v3806 = vadd.f32 0.0, %v3805
    %v3807 = vpop.f32.mrf.mxu0
    %3808 = vmatprep.mubr.f32.mxu0 0.0
    %3809 = vmatmul.mubr.f32.gmra.mxu0 %v3246
    %v3810 = vpop.f32.mrf.mxu0
    %v3811 = vadd.f32 0.0, %v3810
    %v3812 = vpop.f32.mrf.mxu0
    %3813 = vmatprep.mubr.f32.mxu0 0.0
    %3814 = vmatmul.mubr.f32.gmra.mxu0 %v3249
    %v3815 = vpop.f32.mrf.mxu0
    %v3816 = vadd.f32 0.0, %v3815
    %v3817 = vpop.f32.mrf.mxu0
    %3818 = vmatprep.mubr.f32.mxu0 0.0
    %3819 = vmatmul.mubr.f32.gmra.mxu0 %v3252
    %v3820 = vpop.f32.mrf.mxu0
    %v3821 = vadd.f32 0.0, %v3820
    %v3822 = vpop.f32.mrf.mxu0
    %3823 = vmatprep.mubr.f32.mxu0 0.0
    %3824 = vmatmul.mubr.f32.gmra.mxu0 %v3255
    %v3825 = vpop.f32.mrf.mxu0
    %v3826 = vadd.f32 0.0, %v3825
    %v3827 = vpop.f32.mrf.mxu0
    %3828 = vmatprep.mubr.f32.mxu0 0.0
    %3829 = vmatmul.mubr.f32.gmra.mxu0 %v3258
    %v3830 = vpop.f32.mrf.mxu0
    %v3831 = vadd.f32 0.0, %v3830
    %v3832 = vpop.f32.mrf.mxu0
    %3833 = vmatprep.mubr.f32.mxu0 0.0
    %3834 = vmatmul.mubr.f32.gmra.mxu0 %v3261
    %v3835 = vpop.f32.mrf.mxu0
    %v3836 = vadd.f32 0.0, %v3835
    %v3837 = vpop.f32.mrf.mxu0
    %3838 = vmatprep.mubr.f32.mxu0 0.0
    %3839 = vmatmul.mubr.f32.gmra.mxu0 %v3264
    %v3840 = vpop.f32.mrf.mxu0
    %v3841 = vadd.f32 0.0, %v3840
    %v3842 = vpop.f32.mrf.mxu0
    %3843 = vmatprep.mubr.f32.mxu0 0.0
    %3844 = vmatmul.mubr.f32.gmra.mxu0 %v3267
    %v3845 = vpop.f32.mrf.mxu0
    %v3846 = vadd.f32 0.0, %v3845
    %v3847 = vpop.f32.mrf.mxu0
    %3848 = vmatprep.mubr.f32.mxu0 0.0
    %3849 = vmatmul.mubr.f32.gmra.mxu0 %v3270
    %v3850 = vpop.f32.mrf.mxu0
    %v3851 = vadd.f32 0.0, %v3850
    %v3852 = vpop.f32.mrf.mxu0
    %3853 = vmatprep.mubr.f32.mxu0 0.0
    %3854 = vmatmul.mubr.f32.gmra.mxu0 %v3273
    %v3855 = vpop.f32.mrf.mxu0
    %v3856 = vadd.f32 0.0, %v3855
    %v3857 = vpop.f32.mrf.mxu0
    %3858 = vmatprep.mubr.f32.mxu0 0.0
    %3859 = vmatmul.mubr.f32.gmra.mxu0 %v3276
    %v3860 = vpop.f32.mrf.mxu0
    %v3861 = vadd.f32 0.0, %v3860
    %v3862 = vpop.f32.mrf.mxu0
    %3863 = vmatprep.mubr.f32.mxu0 0.0
    %3864 = vmatmul.mubr.f32.gmra.mxu0 %v3279
    %v3865 = vpop.f32.mrf.mxu0
    %v3866 = vadd.f32 0.0, %v3865
    %v3867 = vpop.f32.mrf.mxu0
    %3868 = vmatprep.mubr.f32.mxu0 0.0
    %3869 = vmatmul.mubr.f32.gmra.mxu0 %v3282
    %v3870 = vpop.f32.mrf.mxu0
    %v3871 = vadd.f32 0.0, %v3870
    %v3872 = vpop.f32.mrf.mxu0
    %3873 = vmatprep.mubr.f32.mxu0 0.0
    %3874 = vmatmul.mubr.f32.gmra.mxu0 %v3285
    %v3875 = vpop.f32.mrf.mxu0
    %v3876 = vadd.f32 0.0, %v3875
    %v3877 = vpop.f32.mrf.mxu0
    %3878 = vmatprep.mubr.f32.mxu0 0.0
    %3879 = vmatmul.mubr.f32.gmra.mxu0 %v3288
    %v3880 = vpop.f32.mrf.mxu0
    %v3881 = vadd.f32 0.0, %v3880
    %v3882 = vpop.f32.mrf.mxu0
    %3883 = vmatprep.mubr.f32.mxu0 0.0
    %3884 = vmatmul.mubr.f32.gmra.mxu0 %v3291
    %v3885 = vpop.f32.mrf.mxu0
    %v3886 = vadd.f32 0.0, %v3885
    %v3887 = vpop.f32.mrf.mxu0
    %3888 = vmatprep.mubr.f32.mxu0 0.0
    %3889 = vmatmul.mubr.f32.gmra.mxu0 %v3294
    %v3890 = vpop.f32.mrf.mxu0
    %v3891 = vadd.f32 0.0, %v3890
    %v3892 = vpop.f32.mrf.mxu0
    %3893 = vmatprep.mubr.f32.mxu0 0.0
    %3894 = vmatmul.mubr.f32.gmra.mxu0 %v3297
    %v3895 = vpop.f32.mrf.mxu0
    %v3896 = vadd.f32 0.0, %v3895
    %v3897 = vpop.f32.mrf.mxu0
    %3898 = vmatprep.mubr.f32.mxu0 0.0
    %3899 = vmatmul.mubr.f32.gmra.mxu0 %v3300
    %v3900 = vpop.f32.mrf.mxu0
    %v3901 = vadd.f32 0.0, %v3900
    %v3902 = vpop.f32.mrf.mxu0
    %3903 = vmatprep.mubr.f32.mxu0 0.0
    %3904 = vmatmul.mubr.f32.gmra.mxu0 %v3303
    %v3905 = vpop.f32.mrf.mxu0
    %v3906 = vadd.f32 0.0, %v3905
    %v3907 = vpop.f32.mrf.mxu0
    %3908 = vmatprep.mubr.f32.mxu0 0.0
    %3909 = vmatmul.mubr.f32.gmra.mxu0 %v3306
    %v3910 = vpop.f32.mrf.mxu0
    %v3911 = vadd.f32 0.0, %v3910
    %v3912 = vpop.f32.mrf.mxu0
    %3913 = vmatprep.mubr.f32.mxu0 0.0
    %3914 = vmatmul.mubr.f32.gmra.mxu0 %v3309
    %v3915 = vpop.f32.mrf.mxu0
    %v3916 = vadd.f32 0.0, %v3915
    %v3917 = vpop.f32.mrf.mxu0
    %3918 = vmatprep.mubr.f32.mxu0 0.0
    %3919 = vmatmul.mubr.f32.gmra.mxu0 %v3312
    %v3920 = vpop.f32.mrf.mxu0
    %v3921 = vadd.f32 0.0, %v3920
    %v3922 = vpop.f32.mrf.mxu0
    %3923 = vmatprep.mubr.f32.mxu0 0.0
    %3924 = vmatmul.mubr.f32.gmra.mxu0 %v3315
    %v3925 = vpop.f32.mrf.mxu0
    %v3926 = vadd.f32 0.0, %v3925
    %v3927 = vpop.f32.mrf.mxu0
    %3928 = vmatprep.mubr.f32.mxu0 0.0
    %3929 = vmatmul.mubr.f32.gmra.mxu0 %v3318
    %v3930 = vpop.f32.mrf.mxu0
    %v3931 = vadd.f32 0.0, %v3930
    %v3932 = vpop.f32.mrf.mxu0
    %3933 = vmatprep.mubr.f32.mxu0 0.0
    %3934 = vmatmul.mubr.f32.gmra.mxu0 %v3321
    %v3935 = vpop.f32.mrf.mxu0
    %v3936 = vadd.f32 0.0, %v3935
    %v3937 = vpop.f32.mrf.mxu0
    %3938 = vmatprep.mubr.f32.mxu0 0.0
    %3939 = vmatmul.mubr.f32.gmra.mxu0 %v3324
    %v3940 = vpop.f32.mrf.mxu0
    %v3941 = vadd.f32 0.0, %v3940
    %v3942 = vpop.f32.mrf.mxu0
    %3943 = vmatprep.mubr.f32.mxu0 0.0
    %3944 = vmatmul.mubr.f32.gmra.mxu0 %v3327
    %v3945 = vpop.f32.mrf.mxu0
    %v3946 = vadd.f32 0.0, %v3945
    %v3947 = vpop.f32.mrf.mxu0
    %3948 = vmatprep.mubr.f32.mxu0 0.0
    %3949 = vmatmul.mubr.f32.gmra.mxu0 %v3330
    %v3950 = vpop.f32.mrf.mxu0
    %v3951 = vadd.f32 0.0, %v3950
    %v3952 = vpop.f32.mrf.mxu0
    %3953 = vmatprep.mubr.f32.mxu0 0.0
    %3954 = vmatmul.mubr.f32.gmra.mxu0 %v3333
    %v3955 = vpop.f32.mrf.mxu0
    %v3956 = vadd.f32 0.0, %v3955
    %v3957 = vpop.f32.mrf.mxu0
    %3958 = vmatprep.mubr.f32.mxu0 0.0
    %3959 = vmatmul.mubr.f32.gmra.mxu0 %v3336
    %v3960 = vpop.f32.mrf.mxu0
    %v3961 = vadd.f32 0.0, %v3960
    %v3962 = vpop.f32.mrf.mxu0
    %3963 = vmatprep.mubr.f32.mxu0 0.0
    %3964 = vmatmul.mubr.f32.gmra.mxu0 %v3339
    %v3965 = vpop.f32.mrf.mxu0
    %v3966 = vadd.f32 0.0, %v3965
    %v3967 = vpop.f32.mrf.mxu0
    %3968 = vmatprep.mubr.f32.mxu0 0.0
    %3969 = vmatmul.mubr.f32.gmra.mxu0 %v3342
    %v3970 = vpop.f32.mrf.mxu0
    %v3971 = vadd.f32 0.0, %v3970
    %v3972 = vpop.f32.mrf.mxu0
    %3973 = vmatprep.mubr.f32.mxu0 0.0
    %3974 = vmatmul.mubr.f32.gmra.mxu0 %v3345
    %v3975 = vpop.f32.mrf.mxu0
    %v3976 = vadd.f32 0.0, %v3975
    %v3977 = vpop.f32.mrf.mxu0
    %3978 = vmatprep.mubr.f32.mxu0 0.0
    %3979 = vmatmul.mubr.f32.gmra.mxu0 %v3348
    %v3980 = vpop.f32.mrf.mxu0
    %v3981 = vadd.f32 0.0, %v3980
    %v3982 = vpop.f32.mrf.mxu0
    %3983 = vmatprep.mubr.f32.mxu0 0.0
    %3984 = vmatmul.mubr.f32.gmra.mxu0 %v3351
    %v3985 = vpop.f32.mrf.mxu0
    %v3986 = vadd.f32 0.0, %v3985
    %v3987 = vpop.f32.mrf.mxu0
    %3988 = vmatprep.mubr.f32.mxu0 0.0
    %3989 = vmatmul.mubr.f32.gmra.mxu0 %v3354
    %v3990 = vpop.f32.mrf.mxu0
    %v3991 = vadd.f32 0.0, %v3990
    %v3992 = vpop.f32.mrf.mxu0
    %3993 = vmatprep.mubr.f32.mxu0 0.0
    %3994 = vmatmul.mubr.f32.gmra.mxu0 %v3357
    %v3995 = vpop.f32.mrf.mxu0
    %v3996 = vadd.f32 0.0, %v3995
    %v3997 = vpop.f32.mrf.mxu0
    %3998 = vmatprep.mubr.f32.mxu0 0.0
    %3999 = vmatmul.mubr.f32.gmra.mxu0 %v3360
    %v4000 = vpop.f32.mrf.mxu0
    %v4001 = vadd.f32 0.0, %v4000
    %v4002 = vpop.f32.mrf.mxu0
    %4003 = vmatprep.mubr.f32.mxu0 0.0
    %4004 = vmatmul.mubr.f32.gmra.mxu0 %v3363
    %v4005 = vpop.f32.mrf.mxu0
    %v4006 = vadd.f32 0.0, %v4005
    %v4007 = vpop.f32.mrf.mxu0
    %4008 = vmatprep.mubr.f32.mxu0 0.0
    %4009 = vmatmul.mubr.f32.gmra.mxu0 %v3366
    %v4010 = vpop.f32.mrf.mxu0
    %v4011 = vadd.f32 0.0, %v4010
    %v4012 = vpop.f32.mrf.mxu0
    %4013 = vmatprep.mubr.f32.mxu0 0.0
    %4014 = vmatmul.mubr.f32.gmra.mxu0 %v3369
    %v4015 = vpop.f32.mrf.mxu0
    %v4016 = vadd.f32 0.0, %v4015
    %v4017 = vpop.f32.mrf.mxu0
    %4018 = vmatprep.mubr.f32.mxu0 0.0
    %4019 = vmatmul.mubr.f32.gmra.mxu0 %v3372
    %v4020 = vpop.f32.mrf.mxu0
    %v4021 = vadd.f32 0.0, %v4020
    %v4022 = vpop.f32.mrf.mxu0
    %4023 = vmatprep.mubr.f32.mxu0 0.0
    %4024 = vmatmul.mubr.f32.gmra.mxu0 %v3375
    %v4025 = vpop.f32.mrf.mxu0
    %v4026 = vadd.f32 0.0, %v4025
    %v4027 = vpop.f32.mrf.mxu0
    %4028 = vmatprep.mubr.f32.mxu0 0.0
    %4029 = vmatmul.mubr.f32.gmra.mxu0 %v3378
    %v4030 = vpop.f32.mrf.mxu0
    %v4031 = vadd.f32 0.0, %v4030
    %v4032 = vpop.f32.mrf.mxu0
    %4033 = vmatprep.mubr.f32.mxu0 0.0
    %4034 = vmatmul.mubr.f32.gmra.mxu0 %v3381
    %v4035 = vpop.f32.mrf.mxu0
    %v4036 = vadd.f32 0.0, %v4035
    %v4037 = vpop.f32.mrf.mxu0
    %4038 = vmatprep.mubr.f32.mxu0 0.0
    %4039 = vmatmul.mubr.f32.gmra.mxu0 %v3384
    %v4040 = vpop.f32.mrf.mxu0
    %v4041 = vadd.f32 0.0, %v4040
    %v4042 = vpop.f32.mrf.mxu0
    %4043 = vmatprep.mubr.f32.mxu0 0.0
    %4044 = vmatmul.mubr.f32.gmra.mxu0 %v3387
    %v4045 = vpop.f32.mrf.mxu0
    %v4046 = vadd.f32 0.0, %v4045
    %v4047 = vpop.f32.mrf.mxu0
    %4048 = vmatprep.mubr.f32.mxu0 0.0
    %4049 = vmatmul.mubr.f32.gmra.mxu0 %v3390
    %v4050 = vpop.f32.mrf.mxu0
    %v4051 = vadd.f32 0.0, %v4050
    %v4052 = vpop.f32.mrf.mxu0
    %4053 = vmatprep.mubr.f32.mxu0 0.0
    %4054 = vmatmul.mubr.f32.gmra.mxu0 %v3393
    %v4055 = vpop.f32.mrf.mxu0
    %v4056 = vadd.f32 0.0, %v4055
    %v4057 = vpop.f32.mrf.mxu0
    %4058 = vmatprep.mubr.f32.mxu0 0.0
    %4059 = vmatmul.mubr.f32.gmra.mxu0 %v3396
    %v4060 = vpop.f32.mrf.mxu0
    %v4061 = vadd.f32 0.0, %v4060
    %v4062 = vpop.f32.mrf.mxu0
    %4063 = vmatprep.mubr.f32.mxu0 0.0
    %4064 = vmatmul.mubr.f32.gmra.mxu0 %v3399
    %v4065 = vpop.f32.mrf.mxu0
    %v4066 = vadd.f32 0.0, %v4065
    %v4067 = vpop.f32.mrf.mxu0
    %4068 = vmatprep.mubr.f32.mxu0 0.0
    %4069 = vmatmul.mubr.f32.gmra.mxu0 %v3402
    %v4070 = vpop.f32.mrf.mxu0
    %v4071 = vadd.f32 0.0, %v4070
    %v4072 = vpop.f32.mrf.mxu0
    %4073 = vmatprep.mubr.f32.mxu0 0.0
    %4074 = vmatmul.mubr.f32.gmra.mxu0 %v3405
    %v4075 = vpop.f32.mrf.mxu0
    %v4076 = vadd.f32 0.0, %v4075
    %v4077 = vpop.f32.mrf.mxu0
    %4078 = vmatprep.mubr.f32.mxu0 0.0
    %4079 = vmatmul.mubr.f32.gmra.mxu0 %v3408
    %v4080 = vpop.f32.mrf.mxu0
    %v4081 = vadd.f32 0.0, %v4080
    %v4082 = vpop.f32.mrf.mxu0
    %4083 = vmatprep.mubr.f32.mxu0 0.0
    %4084 = vmatmul.mubr.f32.gmra.mxu0 %v3411
    %v4085 = vpop.f32.mrf.mxu0
    %v4086 = vadd.f32 0.0, %v4085
    %v4087 = vpop.f32.mrf.mxu0
    %4088 = vmatprep.mubr.f32.mxu0 0.0
    %4089 = vmatmul.mubr.f32.gmra.mxu0 %v3414
    %v4090 = vpop.f32.mrf.mxu0
    %v4091 = vadd.f32 0.0, %v4090
    %v4092 = vpop.f32.mrf.mxu0
    %4093 = vmatprep.mubr.f32.mxu0 0.0
    %4094 = vmatmul.mubr.f32.gmra.mxu0 %v3417
    %v4095 = vpop.f32.mrf.mxu0
    %v4096 = vadd.f32 0.0, %v4095
    %v4097 = vpop.f32.mrf.mxu0
    %4098 = vmatprep.mubr.f32.mxu0 0.0
    %4099 = vmatmul.mubr.f32.gmra.mxu0 %v3420
    %v4100 = vpop.f32.mrf.mxu0
    %v4101 = vadd.f32 0.0, %v4100
    %v4102 = vpop.f32.mrf.mxu0
    %4103 = vmatprep.mubr.f32.mxu0 0.0
    %4104 = vmatmul.mubr.f32.gmra.mxu0 %v3423
    %v4105 = vpop.f32.mrf.mxu0
    %v4106 = vadd.f32 0.0, %v4105
    %v4107 = vpop.f32.mrf.mxu0
    %4108 = vmatprep.mubr.f32.mxu0 0.0
    %4109 = vmatmul.mubr.f32.gmra.mxu0 %v3426
    %v4110 = vpop.f32.mrf.mxu0
    %v4111 = vadd.f32 0.0, %v4110
    %v4112 = vpop.f32.mrf.mxu0
    %4113 = vmatprep.mubr.f32.mxu0 0.0
    %4114 = vmatmul.mubr.f32.gmra.mxu0 %v3429
    %v4115 = vpop.f32.mrf.mxu0
    %v4116 = vadd.f32 0.0, %v4115
    %v4117 = vpop.f32.mrf.mxu0
    %4118 = vmatprep.mubr.f32.mxu0 0.0
    %4119 = vmatmul.mubr.f32.gmra.mxu0 %v3432
    %v4120 = vpop.f32.mrf.mxu0
    %v4121 = vadd.f32 0.0, %v4120
    %v4122 = vpop.f32.mrf.mxu0
    %4123 = vmatprep.mubr.f32.mxu0 0.0
    %4124 = vmatmul.mubr.f32.gmra.mxu0 %v3435
    %v4125 = vpop.f32.mrf.mxu0
    %v4126 = vadd.f32 0.0, %v4125
    %v4127 = vpop.f32.mrf.mxu0
    %4128 = vmatprep.mubr.f32.mxu0 0.0
    %4129 = vmatmul.mubr.f32.gmra.mxu0 %v3438
    %v4130 = vpop.f32.mrf.mxu0
    %v4131 = vadd.f32 0.0, %v4130
    %v4132 = vpop.f32.mrf.mxu0
    %4133 = vmatprep.mubr.f32.mxu0 0.0
    %4134 = vmatmul.mubr.f32.gmra.mxu0 %v3441
    %v4135 = vpop.f32.mrf.mxu0
    %v4136 = vadd.f32 0.0, %v4135
    %v4137 = vpop.f32.mrf.mxu0
    %4138 = vmatprep.mubr.f32.mxu0 0.0
    %4139 = vmatmul.mubr.f32.gmra.mxu0 %v3444
    %v4140 = vpop.f32.mrf.mxu0
    %v4141 = vadd.f32 0.0, %v4140
    %v4142 = vpop.f32.mrf.mxu0
    %4143 = vmatprep.mubr.f32.mxu0 0.0
    %4144 = vmatmul.mubr.f32.gmra.mxu0 %v3447
    %v4145 = vpop.f32.mrf.mxu0
    %v4146 = vadd.f32 0.0, %v4145
    %v4147 = vpop.f32.mrf.mxu0
    %4148 = vmatprep.mubr.f32.mxu0 0.0
    %4149 = vmatmul.mubr.f32.gmra.mxu0 %v3450
    %v4150 = vpop.f32.mrf.mxu0
    %v4151 = vadd.f32 0.0, %v4150
    %v4152 = vpop.f32.mrf.mxu0
    %4153 = vmatprep.mubr.f32.mxu0 0.0
    %4154 = vmatmul.mubr.f32.gmra.mxu0 %v3453
    %v4155 = vpop.f32.mrf.mxu0
    %v4156 = vadd.f32 0.0, %v4155
    %v4157 = vpop.f32.mrf.mxu0
    %4158 = vmatprep.mubr.f32.mxu0 0.0
    %4159 = vmatmul.mubr.f32.gmra.mxu0 %v3456
    %v4160 = vpop.f32.mrf.mxu0
    %v4161 = vadd.f32 0.0, %v4160
    %v4162 = vpop.f32.mrf.mxu0
    %4163 = vmatprep.mubr.f32.mxu0 0.0
    %4164 = vmatmul.mubr.f32.gmra.mxu0 %v3459
    %v4165 = vpop.f32.mrf.mxu0
    %v4166 = vadd.f32 0.0, %v4165
    %v4167 = vpop.f32.mrf.mxu0
    %4168 = vdwg.mxu0
    %v4169 = vadd.f32 %v2309, %v3531
    %v4170 = vadd.f32 %v2314, %v3536
    %v4171 = vadd.f32 %v2319, %v3541
    %v4172 = vadd.f32 %v2324, %v3546
    %v4173 = vadd.f32 %v2329, %v3551
    %v4174 = vadd.f32 %v2334, %v3556
    %v4175 = vadd.f32 %v2339, %v3561
    %v4176 = vadd.f32 %v2344, %v3566
    %v4177 = vadd.f32 %v2349, %v3571
    %v4178 = vadd.f32 %v2354, %v3576
    %v4179 = vadd.f32 %v2359, %v3581
    %v4180 = vadd.f32 %v2364, %v3586
    %v4181 = vadd.f32 %v2369, %v3591
    %v4182 = vadd.f32 %v2374, %v3596
    %v4183 = vadd.f32 %v2379, %v3601
    %v4184 = vadd.f32 %v2384, %v3606
    %v4185 = vadd.f32 %v2389, %v3611
    %v4186 = vadd.f32 %v2394, %v3616
    %v4187 = vadd.f32 %v2399, %v3621
    %v4188 = vadd.f32 %v2404, %v3626
    %v4189 = vadd.f32 %v2409, %v3631
    %v4190 = vadd.f32 %v2414, %v3636
    %v4191 = vadd.f32 %v2419, %v3641
    %v4192 = vadd.f32 %v2424, %v3646
    %v4193 = vadd.f32 %v2429, %v3651
    %v4194 = vadd.f32 %v2434, %v3656
    %v4195 = vadd.f32 %v2439, %v3661
    %v4196 = vadd.f32 %v2444, %v3666
    %v4197 = vadd.f32 %v2449, %v3671
    %v4198 = vadd.f32 %v2454, %v3676
    %v4199 = vadd.f32 %v2459, %v3681
    %v4200 = vadd.f32 %v2464, %v3686
    %v4201 = vadd.f32 %v2469, %v3691
    %v4202 = vadd.f32 %v2474, %v3696
    %v4203 = vadd.f32 %v2479, %v3701
    %v4204 = vadd.f32 %v2484, %v3706
    %v4205 = vadd.f32 %v2489, %v3711
    %v4206 = vadd.f32 %v2494, %v3716
    %v4207 = vadd.f32 %v2499, %v3721
    %v4208 = vadd.f32 %v2504, %v3726
    %v4209 = vadd.f32 %v2509, %v3731
    %v4210 = vadd.f32 %v2514, %v3736
    %v4211 = vadd.f32 %v2519, %v3741
    %v4212 = vadd.f32 %v2524, %v3746
    %v4213 = vadd.f32 %v2529, %v3751
    %v4214 = vadd.f32 %v2534, %v3756
    %v4215 = vadd.f32 %v2539, %v3761
    %v4216 = vadd.f32 %v2544, %v3766
    %v4217 = vadd.f32 %v2549, %v3771
    %v4218 = vadd.f32 %v2554, %v3776
    %v4219 = vadd.f32 %v2559, %v3781
    %v4220 = vadd.f32 %v2564, %v3786
    %v4221 = vadd.f32 %v2569, %v3791
    %v4222 = vadd.f32 %v2574, %v3796
    %v4223 = vadd.f32 %v2579, %v3801
    %v4224 = vadd.f32 %v2584, %v3806
    %v4225 = vadd.f32 %v2589, %v3811
    %v4226 = vadd.f32 %v2594, %v3816
    %v4227 = vadd.f32 %v2599, %v3821
    %v4228 = vadd.f32 %v2604, %v3826
    %v4229 = vadd.f32 %v2609, %v3831
    %v4230 = vadd.f32 %v2614, %v3836
    %v4231 = vadd.f32 %v2619, %v3841
    %v4232 = vadd.f32 %v2624, %v3846
    %v4233 = vadd.f32 %v2629, %v3851
    %v4234 = vadd.f32 %v2634, %v3856
    %v4235 = vadd.f32 %v2639, %v3861
    %v4236 = vadd.f32 %v2644, %v3866
    %v4237 = vadd.f32 %v2649, %v3871
    %v4238 = vadd.f32 %v2654, %v3876
    %v4239 = vadd.f32 %v2659, %v3881
    %v4240 = vadd.f32 %v2664, %v3886
    %v4241 = vadd.f32 %v2669, %v3891
    %v4242 = vadd.f32 %v2674, %v3896
    %v4243 = vadd.f32 %v2679, %v3901
    %v4244 = vadd.f32 %v2684, %v3906
    %v4245 = vadd.f32 %v2689, %v3911
    %v4246 = vadd.f32 %v2694, %v3916
    %v4247 = vadd.f32 %v2699, %v3921
    %v4248 = vadd.f32 %v2704, %v3926
    %v4249 = vadd.f32 %v2709, %v3931
    %v4250 = vadd.f32 %v2714, %v3936
    %v4251 = vadd.f32 %v2719, %v3941
    %v4252 = vadd.f32 %v2724, %v3946
    %v4253 = vadd.f32 %v2729, %v3951
    %v4254 = vadd.f32 %v2734, %v3956
    %v4255 = vadd.f32 %v2739, %v3961
    %v4256 = vadd.f32 %v2744, %v3966
    %v4257 = vadd.f32 %v2749, %v3971
    %v4258 = vadd.f32 %v2754, %v3976
    %v4259 = vadd.f32 %v2759, %v3981
    %v4260 = vadd.f32 %v2764, %v3986
    %v4261 = vadd.f32 %v2769, %v3991
    %v4262 = vadd.f32 %v2774, %v3996
    %v4263 = vadd.f32 %v2779, %v4001
    %v4264 = vadd.f32 %v2784, %v4006
    %v4265 = vadd.f32 %v2789, %v4011
    %v4266 = vadd.f32 %v2794, %v4016
    %v4267 = vadd.f32 %v2799, %v4021
    %v4268 = vadd.f32 %v2804, %v4026
    %v4269 = vadd.f32 %v2809, %v4031
    %v4270 = vadd.f32 %v2814, %v4036
    %v4271 = vadd.f32 %v2819, %v4041
    %v4272 = vadd.f32 %v2824, %v4046
    %v4273 = vadd.f32 %v2829, %v4051
    %v4274 = vadd.f32 %v2834, %v4056
    %v4275 = vadd.f32 %v2839, %v4061
    %v4276 = vadd.f32 %v2844, %v4066
    %v4277 = vadd.f32 %v2849, %v4071
    %v4278 = vadd.f32 %v2854, %v4076
    %v4279 = vadd.f32 %v2859, %v4081
    %v4280 = vadd.f32 %v2864, %v4086
    %v4281 = vadd.f32 %v2869, %v4091
    %v4282 = vadd.f32 %v2874, %v4096
    %v4283 = vadd.f32 %v2879, %v4101
    %v4284 = vadd.f32 %v2884, %v4106
    %v4285 = vadd.f32 %v2889, %v4111
    %v4286 = vadd.f32 %v2894, %v4116
    %v4287 = vadd.f32 %v2899, %v4121
    %v4288 = vadd.f32 %v2904, %v4126
    %v4289 = vadd.f32 %v2909, %v4131
    %v4290 = vadd.f32 %v2914, %v4136
    %v4291 = vadd.f32 %v2919, %v4141
    %v4292 = vadd.f32 %v2924, %v4146
    %v4293 = vadd.f32 %v2929, %v4151
    %v4294 = vadd.f32 %v2934, %v4156
    %v4295 = vadd.f32 %v2939, %v4161
    %v4296 = vadd.f32 %v2944, %v4166
    %v4297 = vld [vmem:[%s309] sm:$0xff]
    %v4298 = vld [vmem:[%s309 + $0x8] sm:$0xff]
    %v4299 = vld [vmem:[%s309 + $0x18] sm:$0xff]
    %v4300 = vld [vmem:[%s309 + $0x20] sm:$0xff]
    %v4301 = vld [vmem:[%s309 + $0x30] sm:$0xff]
    %v4302 = vld [vmem:[%s309 + $0x38] sm:$0xff]
    %v4303 = vld [vmem:[%s309 + $0x48] sm:$0xff]
    %v4304 = vld [vmem:[%s309 + $0x50] sm:$0xff]
    %v4305 = vld [vmem:[%s309 + $0x60] sm:$0xff]
    %v4306 = vld [vmem:[%s309 + $0x68] sm:$0xff]
    %v4307 = vld [vmem:[%s309 + $0x78] sm:$0xff]
    %v4308 = vld [vmem:[%s309 + $0x80] sm:$0xff]
    %v4309 = vld [vmem:[%s309 + $0x90] sm:$0xff]
    %v4310 = vld [vmem:[%s309 + $0x98] sm:$0xff]
    %v4311 = vld [vmem:[%s309 + $0xa8] sm:$0xff]
    %v4312 = vld [vmem:[%s309 + $0xb0] sm:$0xff]
    %v4313 = vld [vmem:[%s309 + $0xc0] sm:$0xff]
    %v4314 = vld [vmem:[%s309 + $0xc8] sm:$0xff]
    %v4315 = vld [vmem:[%s309 + $0xd8] sm:$0xff]
    %v4316 = vld [vmem:[%s309 + $0xe0] sm:$0xff]
    %v4317 = vld [vmem:[%s309 + $0xf0] sm:$0xff]
    %v4318 = vld [vmem:[%s309 + $0xf8] sm:$0xff]
    %v4319 = vld [vmem:[%s309 + $0x108] sm:$0xff]
    %v4320 = vld [vmem:[%s309 + $0x110] sm:$0xff]
    %v4321 = vld [vmem:[%s309 + $0x120] sm:$0xff]
    %v4322 = vld [vmem:[%s309 + $0x128] sm:$0xff]
    %v4323 = vld [vmem:[%s309 + $0x138] sm:$0xff]
    %v4324 = vld [vmem:[%s309 + $0x140] sm:$0xff]
    %v4325 = vld [vmem:[%s309 + $0x150] sm:$0xff]
    %v4326 = vld [vmem:[%s309 + $0x158] sm:$0xff]
    %v4327 = vld [vmem:[%s309 + $0x168] sm:$0xff]
    %v4328 = vld [vmem:[%s309 + $0x170] sm:$0xff]
    %v4329 = vld [vmem:[%s309 + $0x1b0] sm:$0xff]
    %v4330 = vld [vmem:[%s309 + $0x1b8] sm:$0xff]
    %v4331 = vld [vmem:[%s309 + $0x1c8] sm:$0xff]
    %v4332 = vld [vmem:[%s309 + $0x1d0] sm:$0xff]
    %v4333 = vld [vmem:[%s309 + $0x1e0] sm:$0xff]
    %v4334 = vld [vmem:[%s309 + $0x1e8] sm:$0xff]
    %v4335 = vld [vmem:[%s309 + $0x1f8] sm:$0xff]
    %v4336 = vld [vmem:[%s309 + $0x200] sm:$0xff]
    %v4337 = vld [vmem:[%s309 + $0x210] sm:$0xff]
    %v4338 = vld [vmem:[%s309 + $0x218] sm:$0xff]
    %v4339 = vld [vmem:[%s309 + $0x228] sm:$0xff]
    %v4340 = vld [vmem:[%s309 + $0x230] sm:$0xff]
    %v4341 = vld [vmem:[%s309 + $0x240] sm:$0xff]
    %v4342 = vld [vmem:[%s309 + $0x248] sm:$0xff]
    %v4343 = vld [vmem:[%s309 + $0x258] sm:$0xff]
    %v4344 = vld [vmem:[%s309 + $0x260] sm:$0xff]
    %v4345 = vld [vmem:[%s309 + $0x270] sm:$0xff]
    %v4346 = vld [vmem:[%s309 + $0x278] sm:$0xff]
    %v4347 = vld [vmem:[%s309 + $0x288] sm:$0xff]
    %v4348 = vld [vmem:[%s309 + $0x290] sm:$0xff]
    %v4349 = vld [vmem:[%s309 + $0x2a0] sm:$0xff]
    %v4350 = vld [vmem:[%s309 + $0x2a8] sm:$0xff]
    %v4351 = vld [vmem:[%s309 + $0x2b8] sm:$0xff]
    %v4352 = vld [vmem:[%s309 + $0x2c0] sm:$0xff]
    %v4353 = vld [vmem:[%s309 + $0x2d0] sm:$0xff]
    %v4354 = vld [vmem:[%s309 + $0x2d8] sm:$0xff]
    %v4355 = vld [vmem:[%s309 + $0x2e8] sm:$0xff]
    %v4356 = vld [vmem:[%s309 + $0x2f0] sm:$0xff]
    %v4357 = vld [vmem:[%s309 + $0x300] sm:$0xff]
    %v4358 = vld [vmem:[%s309 + $0x308] sm:$0xff]
    %v4359 = vld [vmem:[%s309 + $0x318] sm:$0xff]
    %v4360 = vld [vmem:[%s309 + $0x320] sm:$0xff]
    %v4361 = vld [vmem:[%s309 + $0x360] sm:$0xff]
    %v4362 = vld [vmem:[%s309 + $0x368] sm:$0xff]
    %v4363 = vld [vmem:[%s309 + $0x378] sm:$0xff]
    %v4364 = vld [vmem:[%s309 + $0x380] sm:$0xff]
    %v4365 = vld [vmem:[%s309 + $0x390] sm:$0xff]
    %v4366 = vld [vmem:[%s309 + $0x398] sm:$0xff]
    %v4367 = vld [vmem:[%s309 + $0x3a8] sm:$0xff]
    %v4368 = vld [vmem:[%s309 + $0x3b0] sm:$0xff]
    %v4369 = vld [vmem:[%s309 + $0x3c0] sm:$0xff]
    %v4370 = vld [vmem:[%s309 + $0x3c8] sm:$0xff]
    %v4371 = vld [vmem:[%s309 + $0x3d8] sm:$0xff]
    %v4372 = vld [vmem:[%s309 + $0x3e0] sm:$0xff]
    %v4373 = vld [vmem:[%s309 + $0x3f0] sm:$0xff]
    %v4374 = vld [vmem:[%s309 + $0x3f8] sm:$0xff]
    %v4375 = vld [vmem:[%s309 + $0x408] sm:$0xff]
    %v4376 = vld [vmem:[%s309 + $0x410] sm:$0xff]
    %v4377 = vld [vmem:[%s309 + $0x420] sm:$0xff]
    %v4378 = vld [vmem:[%s309 + $0x428] sm:$0xff]
    %v4379 = vld [vmem:[%s309 + $0x438] sm:$0xff]
    %v4380 = vld [vmem:[%s309 + $0x440] sm:$0xff]
    %v4381 = vld [vmem:[%s309 + $0x450] sm:$0xff]
    %v4382 = vld [vmem:[%s309 + $0x458] sm:$0xff]
    %v4383 = vld [vmem:[%s309 + $0x468] sm:$0xff]
    %v4384 = vld [vmem:[%s309 + $0x470] sm:$0xff]
    %v4385 = vld [vmem:[%s309 + $0x480] sm:$0xff]
    %v4386 = vld [vmem:[%s309 + $0x488] sm:$0xff]
    %v4387 = vld [vmem:[%s309 + $0x498] sm:$0xff]
    %v4388 = vld [vmem:[%s309 + $0x4a0] sm:$0xff]
    %v4389 = vld [vmem:[%s309 + $0x4b0] sm:$0xff]
    %v4390 = vld [vmem:[%s309 + $0x4b8] sm:$0xff]
    %v4391 = vld [vmem:[%s309 + $0x4c8] sm:$0xff]
    %v4392 = vld [vmem:[%s309 + $0x4d0] sm:$0xff]
    %v4393 = vld [vmem:[%s309 + $0x510] sm:$0xff]
    %v4394 = vld [vmem:[%s309 + $0x518] sm:$0xff]
    %v4395 = vld [vmem:[%s309 + $0x528] sm:$0xff]
    %v4396 = vld [vmem:[%s309 + $0x530] sm:$0xff]
    %v4397 = vld [vmem:[%s309 + $0x540] sm:$0xff]
    %v4398 = vld [vmem:[%s309 + $0x548] sm:$0xff]
    %v4399 = vld [vmem:[%s309 + $0x558] sm:$0xff]
    %v4400 = vld [vmem:[%s309 + $0x560] sm:$0xff]
    %v4401 = vld [vmem:[%s309 + $0x570] sm:$0xff]
    %v4402 = vld [vmem:[%s309 + $0x578] sm:$0xff]
    %v4403 = vld [vmem:[%s309 + $0x588] sm:$0xff]
    %v4404 = vld [vmem:[%s309 + $0x590] sm:$0xff]
    %v4405 = vld [vmem:[%s309 + $0x5a0] sm:$0xff]
    %v4406 = vld [vmem:[%s309 + $0x5a8] sm:$0xff]
    %v4407 = vld [vmem:[%s309 + $0x5b8] sm:$0xff]
    %v4408 = vld [vmem:[%s309 + $0x5c0] sm:$0xff]
    %v4409 = vld [vmem:[%s309 + $0x5d0] sm:$0xff]
    %v4410 = vld [vmem:[%s309 + $0x5d8] sm:$0xff]
    %v4411 = vld [vmem:[%s309 + $0x5e8] sm:$0xff]
    %v4412 = vld [vmem:[%s309 + $0x5f0] sm:$0xff]
    %v4413 = vld [vmem:[%s309 + $0x600] sm:$0xff]
    %v4414 = vld [vmem:[%s309 + $0x608] sm:$0xff]
    %v4415 = vld [vmem:[%s309 + $0x618] sm:$0xff]
    %v4416 = vld [vmem:[%s309 + $0x620] sm:$0xff]
    %v4417 = vld [vmem:[%s309 + $0x630] sm:$0xff]
    %v4418 = vld [vmem:[%s309 + $0x638] sm:$0xff]
    %v4419 = vld [vmem:[%s309 + $0x648] sm:$0xff]
    %v4420 = vld [vmem:[%s309 + $0x650] sm:$0xff]
    %v4421 = vld [vmem:[%s309 + $0x660] sm:$0xff]
    %v4422 = vld [vmem:[%s309 + $0x668] sm:$0xff]
    %v4423 = vld [vmem:[%s309 + $0x678] sm:$0xff]
    %v4424 = vld [vmem:[%s309 + $0x680] sm:$0xff]
    %s4425 = scalar_lea.vmem %s2, 12
    %v4426 = vld [vmem:[%s4425] sm:$0xf]
    %v4428 = vsel %vm27, %v4297, 0
    %v4431 = vsel %vm27, %v4298, 0
    %v4434 = vsel %vm27, %v4299, 0
    %v4437 = vsel %vm27, %v4300, 0
    %v4440 = vsel %vm27, %v4301, 0
    %v4443 = vsel %vm27, %v4302, 0
    %v4446 = vsel %vm27, %v4303, 0
    %v4449 = vsel %vm27, %v4304, 0
    %v4452 = vsel %vm27, %v4305, 0
    %v4455 = vsel %vm27, %v4306, 0
    %v4458 = vsel %vm27, %v4307, 0
    %v4461 = vsel %vm27, %v4308, 0
    %v4464 = vsel %vm27, %v4309, 0
    %v4467 = vsel %vm27, %v4310, 0
    %v4470 = vsel %vm27, %v4311, 0
    %v4473 = vsel %vm27, %v4312, 0
    %v4476 = vsel %vm27, %v4313, 0
    %v4479 = vsel %vm27, %v4314, 0
    %v4482 = vsel %vm27, %v4315, 0
    %v4485 = vsel %vm27, %v4316, 0
    %v4488 = vsel %vm27, %v4317, 0
    %v4491 = vsel %vm27, %v4318, 0
    %v4494 = vsel %vm27, %v4319, 0
    %v4497 = vsel %vm27, %v4320, 0
    %v4500 = vsel %vm27, %v4321, 0
    %v4503 = vsel %vm27, %v4322, 0
    %v4506 = vsel %vm27, %v4323, 0
    %v4509 = vsel %vm27, %v4324, 0
    %v4512 = vsel %vm27, %v4325, 0
    %v4515 = vsel %vm27, %v4326, 0
    %v4518 = vsel %vm27, %v4327, 0
    %v4521 = vsel %vm27, %v4328, 0
    %v4524 = vsel %vm27, %v4329, 0
    %v4527 = vsel %vm27, %v4330, 0
    %v4530 = vsel %vm27, %v4331, 0
    %v4533 = vsel %vm27, %v4332, 0
    %v4536 = vsel %vm27, %v4333, 0
    %v4539 = vsel %vm27, %v4334, 0
    %v4542 = vsel %vm27, %v4335, 0
    %v4545 = vsel %vm27, %v4336, 0
    %v4548 = vsel %vm27, %v4337, 0
    %v4551 = vsel %vm27, %v4338, 0
    %v4554 = vsel %vm27, %v4339, 0
    %v4557 = vsel %vm27, %v4340, 0
    %v4560 = vsel %vm27, %v4341, 0
    %v4563 = vsel %vm27, %v4342, 0
    %v4566 = vsel %vm27, %v4343, 0
    %v4569 = vsel %vm27, %v4344, 0
    %v4572 = vsel %vm27, %v4345, 0
    %v4575 = vsel %vm27, %v4346, 0
    %v4578 = vsel %vm27, %v4347, 0
    %v4581 = vsel %vm27, %v4348, 0
    %v4584 = vsel %vm27, %v4349, 0
    %v4587 = vsel %vm27, %v4350, 0
    %v4590 = vsel %vm27, %v4351, 0
    %v4593 = vsel %vm27, %v4352, 0
    %v4596 = vsel %vm27, %v4353, 0
    %v4599 = vsel %vm27, %v4354, 0
    %v4602 = vsel %vm27, %v4355, 0
    %v4605 = vsel %vm27, %v4356, 0
    %v4608 = vsel %vm27, %v4357, 0
    %v4611 = vsel %vm27, %v4358, 0
    %v4614 = vsel %vm27, %v4359, 0
    %v4617 = vsel %vm27, %v4360, 0
    %v4620 = vsel %vm27, %v4361, 0
    %v4623 = vsel %vm27, %v4362, 0
    %v4626 = vsel %vm27, %v4363, 0
    %v4629 = vsel %vm27, %v4364, 0
    %v4632 = vsel %vm27, %v4365, 0
    %v4635 = vsel %vm27, %v4366, 0
    %v4638 = vsel %vm27, %v4367, 0
    %v4641 = vsel %vm27, %v4368, 0
    %v4644 = vsel %vm27, %v4369, 0
    %v4647 = vsel %vm27, %v4370, 0
    %v4650 = vsel %vm27, %v4371, 0
    %v4653 = vsel %vm27, %v4372, 0
    %v4656 = vsel %vm27, %v4373, 0
    %v4659 = vsel %vm27, %v4374, 0
    %v4662 = vsel %vm27, %v4375, 0
    %v4665 = vsel %vm27, %v4376, 0
    %v4668 = vsel %vm27, %v4377, 0
    %v4671 = vsel %vm27, %v4378, 0
    %v4674 = vsel %vm27, %v4379, 0
    %v4677 = vsel %vm27, %v4380, 0
    %v4680 = vsel %vm27, %v4381, 0
    %v4683 = vsel %vm27, %v4382, 0
    %v4686 = vsel %vm27, %v4383, 0
    %v4689 = vsel %vm27, %v4384, 0
    %v4692 = vsel %vm27, %v4385, 0
    %v4695 = vsel %vm27, %v4386, 0
    %v4698 = vsel %vm27, %v4387, 0
    %v4701 = vsel %vm27, %v4388, 0
    %v4704 = vsel %vm27, %v4389, 0
    %v4707 = vsel %vm27, %v4390, 0
    %v4710 = vsel %vm27, %v4391, 0
    %v4713 = vsel %vm27, %v4392, 0
    %v4716 = vsel %vm27, %v4393, 0
    %v4719 = vsel %vm27, %v4394, 0
    %v4722 = vsel %vm27, %v4395, 0
    %v4725 = vsel %vm27, %v4396, 0
    %v4728 = vsel %vm27, %v4397, 0
    %v4731 = vsel %vm27, %v4398, 0
    %v4734 = vsel %vm27, %v4399, 0
    %v4737 = vsel %vm27, %v4400, 0
    %v4740 = vsel %vm27, %v4401, 0
    %v4743 = vsel %vm27, %v4402, 0
    %v4746 = vsel %vm27, %v4403, 0
    %v4749 = vsel %vm27, %v4404, 0
    %v4752 = vsel %vm27, %v4405, 0
    %v4755 = vsel %vm27, %v4406, 0
    %v4758 = vsel %vm27, %v4407, 0
    %v4761 = vsel %vm27, %v4408, 0
    %v4764 = vsel %vm27, %v4409, 0
    %v4767 = vsel %vm27, %v4410, 0
    %v4770 = vsel %vm27, %v4411, 0
    %v4773 = vsel %vm27, %v4412, 0
    %v4776 = vsel %vm27, %v4413, 0
    %v4779 = vsel %vm27, %v4414, 0
    %v4782 = vsel %vm27, %v4415, 0
    %v4785 = vsel %vm27, %v4416, 0
    %v4788 = vsel %vm27, %v4417, 0
    %v4791 = vsel %vm27, %v4418, 0
    %v4794 = vsel %vm27, %v4419, 0
    %v4797 = vsel %vm27, %v4420, 0
    %v4800 = vsel %vm27, %v4421, 0
    %v4803 = vsel %vm27, %v4422, 0
    %v4806 = vsel %vm27, %v4423, 0
    %v4809 = vsel %vm27, %v4424, 0
    %v4812 = vsel %vm1146, %v4426, 0
    %4814 = vmatprep.subr.mxu0 0.0
    %4815 = vmatpush1.msra.mxu0 0.0
    %4816 = vmatprep.subr.mxu0 0.0
    %4817 = vmatpush1.msra.mxu0 0.0
    %4818 = vmatprep.subr.mxu0 0.0
    %4819 = vmatpush1.msra.mxu0 0.0
    %4820 = vmatprep.subr.mxu0 0.0
    %4821 = vmatpush1.msra.mxu0 0.0
    %4822 = vmatprep.subr.mxu0 0.0
    %4823 = vmatpush1.msra.mxu0 0.0
    %4824 = vmatprep.subr.mxu0 0.0
    %4825 = vmatpush1.msra.mxu0 0.0
    %4826 = vmatprep.subr.mxu0 0.0
    %4827 = vmatpush1.msra.mxu0 0.0
    %4828 = vmatprep.subr.mxu0 0.0
    %4829 = vmatpush1.msra.mxu0 0.0
    %4830 = vmatprep.subr.mxu0 0.0
    %4831 = vmatpush1.msra.mxu0 0.0
    %4832 = vmatprep.subr.mxu0 0.0
    %4833 = vmatpush1.msra.mxu0 0.0
    %4834 = vmatprep.subr.mxu0 0.0
    %4835 = vmatpush1.msra.mxu0 0.0
    %4836 = vmatprep.subr.mxu0 0.0
    %4837 = vmatpush1.msra.mxu0 0.0
    %4838 = vmatprep.subr.mxu0 0.0
    %4839 = vmatpush1.msra.mxu0 0.0
    %4840 = vmatprep.subr.mxu0 0.0
    %4841 = vmatpush1.msra.mxu0 0.0
    %4842 = vmatprep.subr.mxu0 0.0
    %4843 = vmatpush1.msra.mxu0 0.0
    %4844 = vmatprep.subr.mxu0 0.0
    %4845 = vmatpush1.msra.mxu0 %v4812
    %4846 = vmatprep.subr.mxu0 0.0
    %4847 = vmatpush2.msra.mxu0 0.0
    %4848 = vmatprep.subr.mxu0 0.0
    %4849 = vmatpush2.msra.mxu0 0.0
    %4850 = vmatprep.subr.mxu0 0.0
    %4851 = vmatpush2.msra.mxu0 0.0
    %4852 = vmatprep.subr.mxu0 0.0
    %4853 = vmatpush2.msra.mxu0 0.0
    %4854 = vmatprep.subr.mxu0 0.0
    %4855 = vmatpush2.msra.mxu0 0.0
    %4856 = vmatprep.subr.mxu0 0.0
    %4857 = vmatpush2.msra.mxu0 0.0
    %4858 = vmatprep.subr.mxu0 0.0
    %4859 = vmatpush2.msra.mxu0 0.0
    %4860 = vmatprep.subr.mxu0 0.0
    %4861 = vmatpush2.msra.mxu0 0.0
    %4862 = vmatprep.subr.mxu0 0.0
    %4863 = vmatpush2.msra.mxu0 0.0
    %4864 = vmatprep.subr.mxu0 0.0
    %4865 = vmatpush2.msra.mxu0 0.0
    %4866 = vmatprep.subr.mxu0 0.0
    %4867 = vmatpush2.msra.mxu0 0.0
    %4868 = vmatprep.subr.mxu0 0.0
    %4869 = vmatpush2.msra.mxu0 0.0
    %4870 = vmatprep.subr.mxu0 0.0
    %4871 = vmatpush2.msra.mxu0 0.0
    %4872 = vmatprep.subr.mxu0 0.0
    %4873 = vmatpush2.msra.mxu0 0.0
    %4874 = vmatprep.subr.mxu0 0.0
    %4875 = vmatpush2.msra.mxu0 0.0
    %4876 = vmatprep.subr.mxu0 0.0
    %4877 = vmatpush2.msra.mxu0 0.0
    %4878 = vmatprep.mubr.f32.mxu0 0.0
    %4879 = vmatmul.mubr.f32.gmra.mxu0 %v4428
    %v4880 = vpop.f32.mrf.mxu0
    %v4881 = vadd.f32 0.0, %v4880
    %v4882 = vpop.f32.mrf.mxu0
    %4883 = vmatprep.mubr.f32.mxu0 0.0
    %4884 = vmatmul.mubr.f32.gmra.mxu0 %v4431
    %v4885 = vpop.f32.mrf.mxu0
    %v4886 = vadd.f32 0.0, %v4885
    %v4887 = vpop.f32.mrf.mxu0
    %4888 = vmatprep.mubr.f32.mxu0 0.0
    %4889 = vmatmul.mubr.f32.gmra.mxu0 %v4434
    %v4890 = vpop.f32.mrf.mxu0
    %v4891 = vadd.f32 0.0, %v4890
    %v4892 = vpop.f32.mrf.mxu0
    %4893 = vmatprep.mubr.f32.mxu0 0.0
    %4894 = vmatmul.mubr.f32.gmra.mxu0 %v4437
    %v4895 = vpop.f32.mrf.mxu0
    %v4896 = vadd.f32 0.0, %v4895
    %v4897 = vpop.f32.mrf.mxu0
    %4898 = vmatprep.mubr.f32.mxu0 0.0
    %4899 = vmatmul.mubr.f32.gmra.mxu0 %v4440
    %v4900 = vpop.f32.mrf.mxu0
    %v4901 = vadd.f32 0.0, %v4900
    %v4902 = vpop.f32.mrf.mxu0
    %4903 = vmatprep.mubr.f32.mxu0 0.0
    %4904 = vmatmul.mubr.f32.gmra.mxu0 %v4443
    %v4905 = vpop.f32.mrf.mxu0
    %v4906 = vadd.f32 0.0, %v4905
    %v4907 = vpop.f32.mrf.mxu0
    %4908 = vmatprep.mubr.f32.mxu0 0.0
    %4909 = vmatmul.mubr.f32.gmra.mxu0 %v4446
    %v4910 = vpop.f32.mrf.mxu0
    %v4911 = vadd.f32 0.0, %v4910
    %v4912 = vpop.f32.mrf.mxu0
    %4913 = vmatprep.mubr.f32.mxu0 0.0
    %4914 = vmatmul.mubr.f32.gmra.mxu0 %v4449
    %v4915 = vpop.f32.mrf.mxu0
    %v4916 = vadd.f32 0.0, %v4915
    %v4917 = vpop.f32.mrf.mxu0
    %4918 = vmatprep.mubr.f32.mxu0 0.0
    %4919 = vmatmul.mubr.f32.gmra.mxu0 %v4452
    %v4920 = vpop.f32.mrf.mxu0
    %v4921 = vadd.f32 0.0, %v4920
    %v4922 = vpop.f32.mrf.mxu0
    %4923 = vmatprep.mubr.f32.mxu0 0.0
    %4924 = vmatmul.mubr.f32.gmra.mxu0 %v4455
    %v4925 = vpop.f32.mrf.mxu0
    %v4926 = vadd.f32 0.0, %v4925
    %v4927 = vpop.f32.mrf.mxu0
    %4928 = vmatprep.mubr.f32.mxu0 0.0
    %4929 = vmatmul.mubr.f32.gmra.mxu0 %v4458
    %v4930 = vpop.f32.mrf.mxu0
    %v4931 = vadd.f32 0.0, %v4930
    %v4932 = vpop.f32.mrf.mxu0
    %4933 = vmatprep.mubr.f32.mxu0 0.0
    %4934 = vmatmul.mubr.f32.gmra.mxu0 %v4461
    %v4935 = vpop.f32.mrf.mxu0
    %v4936 = vadd.f32 0.0, %v4935
    %v4937 = vpop.f32.mrf.mxu0
    %4938 = vmatprep.mubr.f32.mxu0 0.0
    %4939 = vmatmul.mubr.f32.gmra.mxu0 %v4464
    %v4940 = vpop.f32.mrf.mxu0
    %v4941 = vadd.f32 0.0, %v4940
    %v4942 = vpop.f32.mrf.mxu0
    %4943 = vmatprep.mubr.f32.mxu0 0.0
    %4944 = vmatmul.mubr.f32.gmra.mxu0 %v4467
    %v4945 = vpop.f32.mrf.mxu0
    %v4946 = vadd.f32 0.0, %v4945
    %v4947 = vpop.f32.mrf.mxu0
    %4948 = vmatprep.mubr.f32.mxu0 0.0
    %4949 = vmatmul.mubr.f32.gmra.mxu0 %v4470
    %v4950 = vpop.f32.mrf.mxu0
    %v4951 = vadd.f32 0.0, %v4950
    %v4952 = vpop.f32.mrf.mxu0
    %4953 = vmatprep.mubr.f32.mxu0 0.0
    %4954 = vmatmul.mubr.f32.gmra.mxu0 %v4473
    %v4955 = vpop.f32.mrf.mxu0
    %v4956 = vadd.f32 0.0, %v4955
    %v4957 = vpop.f32.mrf.mxu0
    %4958 = vmatprep.mubr.f32.mxu0 0.0
    %4959 = vmatmul.mubr.f32.gmra.mxu0 %v4476
    %v4960 = vpop.f32.mrf.mxu0
    %v4961 = vadd.f32 0.0, %v4960
    %v4962 = vpop.f32.mrf.mxu0
    %4963 = vmatprep.mubr.f32.mxu0 0.0
    %4964 = vmatmul.mubr.f32.gmra.mxu0 %v4479
    %v4965 = vpop.f32.mrf.mxu0
    %v4966 = vadd.f32 0.0, %v4965
    %v4967 = vpop.f32.mrf.mxu0
    %4968 = vmatprep.mubr.f32.mxu0 0.0
    %4969 = vmatmul.mubr.f32.gmra.mxu0 %v4482
    %v4970 = vpop.f32.mrf.mxu0
    %v4971 = vadd.f32 0.0, %v4970
    %v4972 = vpop.f32.mrf.mxu0
    %4973 = vmatprep.mubr.f32.mxu0 0.0
    %4974 = vmatmul.mubr.f32.gmra.mxu0 %v4485
    %v4975 = vpop.f32.mrf.mxu0
    %v4976 = vadd.f32 0.0, %v4975
    %v4977 = vpop.f32.mrf.mxu0
    %4978 = vmatprep.mubr.f32.mxu0 0.0
    %4979 = vmatmul.mubr.f32.gmra.mxu0 %v4488
    %v4980 = vpop.f32.mrf.mxu0
    %v4981 = vadd.f32 0.0, %v4980
    %v4982 = vpop.f32.mrf.mxu0
    %4983 = vmatprep.mubr.f32.mxu0 0.0
    %4984 = vmatmul.mubr.f32.gmra.mxu0 %v4491
    %v4985 = vpop.f32.mrf.mxu0
    %v4986 = vadd.f32 0.0, %v4985
    %v4987 = vpop.f32.mrf.mxu0
    %4988 = vmatprep.mubr.f32.mxu0 0.0
    %4989 = vmatmul.mubr.f32.gmra.mxu0 %v4494
    %v4990 = vpop.f32.mrf.mxu0
    %v4991 = vadd.f32 0.0, %v4990
    %v4992 = vpop.f32.mrf.mxu0
    %4993 = vmatprep.mubr.f32.mxu0 0.0
    %4994 = vmatmul.mubr.f32.gmra.mxu0 %v4497
    %v4995 = vpop.f32.mrf.mxu0
    %v4996 = vadd.f32 0.0, %v4995
    %v4997 = vpop.f32.mrf.mxu0
    %4998 = vmatprep.mubr.f32.mxu0 0.0
    %4999 = vmatmul.mubr.f32.gmra.mxu0 %v4500
    %v5000 = vpop.f32.mrf.mxu0
    %v5001 = vadd.f32 0.0, %v5000
    %v5002 = vpop.f32.mrf.mxu0
    %5003 = vmatprep.mubr.f32.mxu0 0.0
    %5004 = vmatmul.mubr.f32.gmra.mxu0 %v4503
    %v5005 = vpop.f32.mrf.mxu0
    %v5006 = vadd.f32 0.0, %v5005
    %v5007 = vpop.f32.mrf.mxu0
    %5008 = vmatprep.mubr.f32.mxu0 0.0
    %5009 = vmatmul.mubr.f32.gmra.mxu0 %v4506
    %v5010 = vpop.f32.mrf.mxu0
    %v5011 = vadd.f32 0.0, %v5010
    %v5012 = vpop.f32.mrf.mxu0
    %5013 = vmatprep.mubr.f32.mxu0 0.0
    %5014 = vmatmul.mubr.f32.gmra.mxu0 %v4509
    %v5015 = vpop.f32.mrf.mxu0
    %v5016 = vadd.f32 0.0, %v5015
    %v5017 = vpop.f32.mrf.mxu0
    %5018 = vmatprep.mubr.f32.mxu0 0.0
    %5019 = vmatmul.mubr.f32.gmra.mxu0 %v4512
    %v5020 = vpop.f32.mrf.mxu0
    %v5021 = vadd.f32 0.0, %v5020
    %v5022 = vpop.f32.mrf.mxu0
    %5023 = vmatprep.mubr.f32.mxu0 0.0
    %5024 = vmatmul.mubr.f32.gmra.mxu0 %v4515
    %v5025 = vpop.f32.mrf.mxu0
    %v5026 = vadd.f32 0.0, %v5025
    %v5027 = vpop.f32.mrf.mxu0
    %5028 = vmatprep.mubr.f32.mxu0 0.0
    %5029 = vmatmul.mubr.f32.gmra.mxu0 %v4518
    %v5030 = vpop.f32.mrf.mxu0
    %v5031 = vadd.f32 0.0, %v5030
    %v5032 = vpop.f32.mrf.mxu0
    %5033 = vmatprep.mubr.f32.mxu0 0.0
    %5034 = vmatmul.mubr.f32.gmra.mxu0 %v4521
    %v5035 = vpop.f32.mrf.mxu0
    %v5036 = vadd.f32 0.0, %v5035
    %v5037 = vpop.f32.mrf.mxu0
    %5038 = vmatprep.mubr.f32.mxu0 0.0
    %5039 = vmatmul.mubr.f32.gmra.mxu0 %v4524
    %v5040 = vpop.f32.mrf.mxu0
    %v5041 = vadd.f32 0.0, %v5040
    %v5042 = vpop.f32.mrf.mxu0
    %5043 = vmatprep.mubr.f32.mxu0 0.0
    %5044 = vmatmul.mubr.f32.gmra.mxu0 %v4527
    %v5045 = vpop.f32.mrf.mxu0
    %v5046 = vadd.f32 0.0, %v5045
    %v5047 = vpop.f32.mrf.mxu0
    %5048 = vmatprep.mubr.f32.mxu0 0.0
    %5049 = vmatmul.mubr.f32.gmra.mxu0 %v4530
    %v5050 = vpop.f32.mrf.mxu0
    %v5051 = vadd.f32 0.0, %v5050
    %v5052 = vpop.f32.mrf.mxu0
    %5053 = vmatprep.mubr.f32.mxu0 0.0
    %5054 = vmatmul.mubr.f32.gmra.mxu0 %v4533
    %v5055 = vpop.f32.mrf.mxu0
    %v5056 = vadd.f32 0.0, %v5055
    %v5057 = vpop.f32.mrf.mxu0
    %5058 = vmatprep.mubr.f32.mxu0 0.0
    %5059 = vmatmul.mubr.f32.gmra.mxu0 %v4536
    %v5060 = vpop.f32.mrf.mxu0
    %v5061 = vadd.f32 0.0, %v5060
    %v5062 = vpop.f32.mrf.mxu0
    %5063 = vmatprep.mubr.f32.mxu0 0.0
    %5064 = vmatmul.mubr.f32.gmra.mxu0 %v4539
    %v5065 = vpop.f32.mrf.mxu0
    %v5066 = vadd.f32 0.0, %v5065
    %v5067 = vpop.f32.mrf.mxu0
    %5068 = vmatprep.mubr.f32.mxu0 0.0
    %5069 = vmatmul.mubr.f32.gmra.mxu0 %v4542
    %v5070 = vpop.f32.mrf.mxu0
    %v5071 = vadd.f32 0.0, %v5070
    %v5072 = vpop.f32.mrf.mxu0
    %5073 = vmatprep.mubr.f32.mxu0 0.0
    %5074 = vmatmul.mubr.f32.gmra.mxu0 %v4545
    %v5075 = vpop.f32.mrf.mxu0
    %v5076 = vadd.f32 0.0, %v5075
    %v5077 = vpop.f32.mrf.mxu0
    %5078 = vmatprep.mubr.f32.mxu0 0.0
    %5079 = vmatmul.mubr.f32.gmra.mxu0 %v4548
    %v5080 = vpop.f32.mrf.mxu0
    %v5081 = vadd.f32 0.0, %v5080
    %v5082 = vpop.f32.mrf.mxu0
    %5083 = vmatprep.mubr.f32.mxu0 0.0
    %5084 = vmatmul.mubr.f32.gmra.mxu0 %v4551
    %v5085 = vpop.f32.mrf.mxu0
    %v5086 = vadd.f32 0.0, %v5085
    %v5087 = vpop.f32.mrf.mxu0
    %5088 = vmatprep.mubr.f32.mxu0 0.0
    %5089 = vmatmul.mubr.f32.gmra.mxu0 %v4554
    %v5090 = vpop.f32.mrf.mxu0
    %v5091 = vadd.f32 0.0, %v5090
    %v5092 = vpop.f32.mrf.mxu0
    %5093 = vmatprep.mubr.f32.mxu0 0.0
    %5094 = vmatmul.mubr.f32.gmra.mxu0 %v4557
    %v5095 = vpop.f32.mrf.mxu0
    %v5096 = vadd.f32 0.0, %v5095
    %v5097 = vpop.f32.mrf.mxu0
    %5098 = vmatprep.mubr.f32.mxu0 0.0
    %5099 = vmatmul.mubr.f32.gmra.mxu0 %v4560
    %v5100 = vpop.f32.mrf.mxu0
    %v5101 = vadd.f32 0.0, %v5100
    %v5102 = vpop.f32.mrf.mxu0
    %5103 = vmatprep.mubr.f32.mxu0 0.0
    %5104 = vmatmul.mubr.f32.gmra.mxu0 %v4563
    %v5105 = vpop.f32.mrf.mxu0
    %v5106 = vadd.f32 0.0, %v5105
    %v5107 = vpop.f32.mrf.mxu0
    %5108 = vmatprep.mubr.f32.mxu0 0.0
    %5109 = vmatmul.mubr.f32.gmra.mxu0 %v4566
    %v5110 = vpop.f32.mrf.mxu0
    %v5111 = vadd.f32 0.0, %v5110
    %v5112 = vpop.f32.mrf.mxu0
    %5113 = vmatprep.mubr.f32.mxu0 0.0
    %5114 = vmatmul.mubr.f32.gmra.mxu0 %v4569
    %v5115 = vpop.f32.mrf.mxu0
    %v5116 = vadd.f32 0.0, %v5115
    %v5117 = vpop.f32.mrf.mxu0
    %5118 = vmatprep.mubr.f32.mxu0 0.0
    %5119 = vmatmul.mubr.f32.gmra.mxu0 %v4572
    %v5120 = vpop.f32.mrf.mxu0
    %v5121 = vadd.f32 0.0, %v5120
    %v5122 = vpop.f32.mrf.mxu0
    %5123 = vmatprep.mubr.f32.mxu0 0.0
    %5124 = vmatmul.mubr.f32.gmra.mxu0 %v4575
    %v5125 = vpop.f32.mrf.mxu0
    %v5126 = vadd.f32 0.0, %v5125
    %v5127 = vpop.f32.mrf.mxu0
    %5128 = vmatprep.mubr.f32.mxu0 0.0
    %5129 = vmatmul.mubr.f32.gmra.mxu0 %v4578
    %v5130 = vpop.f32.mrf.mxu0
    %v5131 = vadd.f32 0.0, %v5130
    %v5132 = vpop.f32.mrf.mxu0
    %5133 = vmatprep.mubr.f32.mxu0 0.0
    %5134 = vmatmul.mubr.f32.gmra.mxu0 %v4581
    %v5135 = vpop.f32.mrf.mxu0
    %v5136 = vadd.f32 0.0, %v5135
    %v5137 = vpop.f32.mrf.mxu0
    %5138 = vmatprep.mubr.f32.mxu0 0.0
    %5139 = vmatmul.mubr.f32.gmra.mxu0 %v4584
    %v5140 = vpop.f32.mrf.mxu0
    %v5141 = vadd.f32 0.0, %v5140
    %v5142 = vpop.f32.mrf.mxu0
    %5143 = vmatprep.mubr.f32.mxu0 0.0
    %5144 = vmatmul.mubr.f32.gmra.mxu0 %v4587
    %v5145 = vpop.f32.mrf.mxu0
    %v5146 = vadd.f32 0.0, %v5145
    %v5147 = vpop.f32.mrf.mxu0
    %5148 = vmatprep.mubr.f32.mxu0 0.0
    %5149 = vmatmul.mubr.f32.gmra.mxu0 %v4590
    %v5150 = vpop.f32.mrf.mxu0
    %v5151 = vadd.f32 0.0, %v5150
    %v5152 = vpop.f32.mrf.mxu0
    %5153 = vmatprep.mubr.f32.mxu0 0.0
    %5154 = vmatmul.mubr.f32.gmra.mxu0 %v4593
    %v5155 = vpop.f32.mrf.mxu0
    %v5156 = vadd.f32 0.0, %v5155
    %v5157 = vpop.f32.mrf.mxu0
    %5158 = vmatprep.mubr.f32.mxu0 0.0
    %5159 = vmatmul.mubr.f32.gmra.mxu0 %v4596
    %v5160 = vpop.f32.mrf.mxu0
    %v5161 = vadd.f32 0.0, %v5160
    %v5162 = vpop.f32.mrf.mxu0
    %5163 = vmatprep.mubr.f32.mxu0 0.0
    %5164 = vmatmul.mubr.f32.gmra.mxu0 %v4599
    %v5165 = vpop.f32.mrf.mxu0
    %v5166 = vadd.f32 0.0, %v5165
    %v5167 = vpop.f32.mrf.mxu0
    %5168 = vmatprep.mubr.f32.mxu0 0.0
    %5169 = vmatmul.mubr.f32.gmra.mxu0 %v4602
    %v5170 = vpop.f32.mrf.mxu0
    %v5171 = vadd.f32 0.0, %v5170
    %v5172 = vpop.f32.mrf.mxu0
    %5173 = vmatprep.mubr.f32.mxu0 0.0
    %5174 = vmatmul.mubr.f32.gmra.mxu0 %v4605
    %v5175 = vpop.f32.mrf.mxu0
    %v5176 = vadd.f32 0.0, %v5175
    %v5177 = vpop.f32.mrf.mxu0
    %5178 = vmatprep.mubr.f32.mxu0 0.0
    %5179 = vmatmul.mubr.f32.gmra.mxu0 %v4608
    %v5180 = vpop.f32.mrf.mxu0
    %v5181 = vadd.f32 0.0, %v5180
    %v5182 = vpop.f32.mrf.mxu0
    %5183 = vmatprep.mubr.f32.mxu0 0.0
    %5184 = vmatmul.mubr.f32.gmra.mxu0 %v4611
    %v5185 = vpop.f32.mrf.mxu0
    %v5186 = vadd.f32 0.0, %v5185
    %v5187 = vpop.f32.mrf.mxu0
    %5188 = vmatprep.mubr.f32.mxu0 0.0
    %5189 = vmatmul.mubr.f32.gmra.mxu0 %v4614
    %v5190 = vpop.f32.mrf.mxu0
    %v5191 = vadd.f32 0.0, %v5190
    %v5192 = vpop.f32.mrf.mxu0
    %5193 = vmatprep.mubr.f32.mxu0 0.0
    %5194 = vmatmul.mubr.f32.gmra.mxu0 %v4617
    %v5195 = vpop.f32.mrf.mxu0
    %v5196 = vadd.f32 0.0, %v5195
    %v5197 = vpop.f32.mrf.mxu0
    %5198 = vmatprep.mubr.f32.mxu0 0.0
    %5199 = vmatmul.mubr.f32.gmra.mxu0 %v4620
    %v5200 = vpop.f32.mrf.mxu0
    %v5201 = vadd.f32 0.0, %v5200
    %v5202 = vpop.f32.mrf.mxu0
    %5203 = vmatprep.mubr.f32.mxu0 0.0
    %5204 = vmatmul.mubr.f32.gmra.mxu0 %v4623
    %v5205 = vpop.f32.mrf.mxu0
    %v5206 = vadd.f32 0.0, %v5205
    %v5207 = vpop.f32.mrf.mxu0
    %5208 = vmatprep.mubr.f32.mxu0 0.0
    %5209 = vmatmul.mubr.f32.gmra.mxu0 %v4626
    %v5210 = vpop.f32.mrf.mxu0
    %v5211 = vadd.f32 0.0, %v5210
    %v5212 = vpop.f32.mrf.mxu0
    %5213 = vmatprep.mubr.f32.mxu0 0.0
    %5214 = vmatmul.mubr.f32.gmra.mxu0 %v4629
    %v5215 = vpop.f32.mrf.mxu0
    %v5216 = vadd.f32 0.0, %v5215
    %v5217 = vpop.f32.mrf.mxu0
    %5218 = vmatprep.mubr.f32.mxu0 0.0
    %5219 = vmatmul.mubr.f32.gmra.mxu0 %v4632
    %v5220 = vpop.f32.mrf.mxu0
    %v5221 = vadd.f32 0.0, %v5220
    %v5222 = vpop.f32.mrf.mxu0
    %5223 = vmatprep.mubr.f32.mxu0 0.0
    %5224 = vmatmul.mubr.f32.gmra.mxu0 %v4635
    %v5225 = vpop.f32.mrf.mxu0
    %v5226 = vadd.f32 0.0, %v5225
    %v5227 = vpop.f32.mrf.mxu0
    %5228 = vmatprep.mubr.f32.mxu0 0.0
    %5229 = vmatmul.mubr.f32.gmra.mxu0 %v4638
    %v5230 = vpop.f32.mrf.mxu0
    %v5231 = vadd.f32 0.0, %v5230
    %v5232 = vpop.f32.mrf.mxu0
    %5233 = vmatprep.mubr.f32.mxu0 0.0
    %5234 = vmatmul.mubr.f32.gmra.mxu0 %v4641
    %v5235 = vpop.f32.mrf.mxu0
    %v5236 = vadd.f32 0.0, %v5235
    %v5237 = vpop.f32.mrf.mxu0
    %5238 = vmatprep.mubr.f32.mxu0 0.0
    %5239 = vmatmul.mubr.f32.gmra.mxu0 %v4644
    %v5240 = vpop.f32.mrf.mxu0
    %v5241 = vadd.f32 0.0, %v5240
    %v5242 = vpop.f32.mrf.mxu0
    %5243 = vmatprep.mubr.f32.mxu0 0.0
    %5244 = vmatmul.mubr.f32.gmra.mxu0 %v4647
    %v5245 = vpop.f32.mrf.mxu0
    %v5246 = vadd.f32 0.0, %v5245
    %v5247 = vpop.f32.mrf.mxu0
    %5248 = vmatprep.mubr.f32.mxu0 0.0
    %5249 = vmatmul.mubr.f32.gmra.mxu0 %v4650
    %v5250 = vpop.f32.mrf.mxu0
    %v5251 = vadd.f32 0.0, %v5250
    %v5252 = vpop.f32.mrf.mxu0
    %5253 = vmatprep.mubr.f32.mxu0 0.0
    %5254 = vmatmul.mubr.f32.gmra.mxu0 %v4653
    %v5255 = vpop.f32.mrf.mxu0
    %v5256 = vadd.f32 0.0, %v5255
    %v5257 = vpop.f32.mrf.mxu0
    %5258 = vmatprep.mubr.f32.mxu0 0.0
    %5259 = vmatmul.mubr.f32.gmra.mxu0 %v4656
    %v5260 = vpop.f32.mrf.mxu0
    %v5261 = vadd.f32 0.0, %v5260
    %v5262 = vpop.f32.mrf.mxu0
    %5263 = vmatprep.mubr.f32.mxu0 0.0
    %5264 = vmatmul.mubr.f32.gmra.mxu0 %v4659
    %v5265 = vpop.f32.mrf.mxu0
    %v5266 = vadd.f32 0.0, %v5265
    %v5267 = vpop.f32.mrf.mxu0
    %5268 = vmatprep.mubr.f32.mxu0 0.0
    %5269 = vmatmul.mubr.f32.gmra.mxu0 %v4662
    %v5270 = vpop.f32.mrf.mxu0
    %v5271 = vadd.f32 0.0, %v5270
    %v5272 = vpop.f32.mrf.mxu0
    %5273 = vmatprep.mubr.f32.mxu0 0.0
    %5274 = vmatmul.mubr.f32.gmra.mxu0 %v4665
    %v5275 = vpop.f32.mrf.mxu0
    %v5276 = vadd.f32 0.0, %v5275
    %v5277 = vpop.f32.mrf.mxu0
    %5278 = vmatprep.mubr.f32.mxu0 0.0
    %5279 = vmatmul.mubr.f32.gmra.mxu0 %v4668
    %v5280 = vpop.f32.mrf.mxu0
    %v5281 = vadd.f32 0.0, %v5280
    %v5282 = vpop.f32.mrf.mxu0
    %5283 = vmatprep.mubr.f32.mxu0 0.0
    %5284 = vmatmul.mubr.f32.gmra.mxu0 %v4671
    %v5285 = vpop.f32.mrf.mxu0
    %v5286 = vadd.f32 0.0, %v5285
    %v5287 = vpop.f32.mrf.mxu0
    %5288 = vmatprep.mubr.f32.mxu0 0.0
    %5289 = vmatmul.mubr.f32.gmra.mxu0 %v4674
    %v5290 = vpop.f32.mrf.mxu0
    %v5291 = vadd.f32 0.0, %v5290
    %v5292 = vpop.f32.mrf.mxu0
    %5293 = vmatprep.mubr.f32.mxu0 0.0
    %5294 = vmatmul.mubr.f32.gmra.mxu0 %v4677
    %v5295 = vpop.f32.mrf.mxu0
    %v5296 = vadd.f32 0.0, %v5295
    %v5297 = vpop.f32.mrf.mxu0
    %5298 = vmatprep.mubr.f32.mxu0 0.0
    %5299 = vmatmul.mubr.f32.gmra.mxu0 %v4680
    %v5300 = vpop.f32.mrf.mxu0
    %v5301 = vadd.f32 0.0, %v5300
    %v5302 = vpop.f32.mrf.mxu0
    %5303 = vmatprep.mubr.f32.mxu0 0.0
    %5304 = vmatmul.mubr.f32.gmra.mxu0 %v4683
    %v5305 = vpop.f32.mrf.mxu0
    %v5306 = vadd.f32 0.0, %v5305
    %v5307 = vpop.f32.mrf.mxu0
    %5308 = vmatprep.mubr.f32.mxu0 0.0
    %5309 = vmatmul.mubr.f32.gmra.mxu0 %v4686
    %v5310 = vpop.f32.mrf.mxu0
    %v5311 = vadd.f32 0.0, %v5310
    %v5312 = vpop.f32.mrf.mxu0
    %5313 = vmatprep.mubr.f32.mxu0 0.0
    %5314 = vmatmul.mubr.f32.gmra.mxu0 %v4689
    %v5315 = vpop.f32.mrf.mxu0
    %v5316 = vadd.f32 0.0, %v5315
    %v5317 = vpop.f32.mrf.mxu0
    %5318 = vmatprep.mubr.f32.mxu0 0.0
    %5319 = vmatmul.mubr.f32.gmra.mxu0 %v4692
    %v5320 = vpop.f32.mrf.mxu0
    %v5321 = vadd.f32 0.0, %v5320
    %v5322 = vpop.f32.mrf.mxu0
    %5323 = vmatprep.mubr.f32.mxu0 0.0
    %5324 = vmatmul.mubr.f32.gmra.mxu0 %v4695
    %v5325 = vpop.f32.mrf.mxu0
    %v5326 = vadd.f32 0.0, %v5325
    %v5327 = vpop.f32.mrf.mxu0
    %5328 = vmatprep.mubr.f32.mxu0 0.0
    %5329 = vmatmul.mubr.f32.gmra.mxu0 %v4698
    %v5330 = vpop.f32.mrf.mxu0
    %v5331 = vadd.f32 0.0, %v5330
    %v5332 = vpop.f32.mrf.mxu0
    %5333 = vmatprep.mubr.f32.mxu0 0.0
    %5334 = vmatmul.mubr.f32.gmra.mxu0 %v4701
    %v5335 = vpop.f32.mrf.mxu0
    %v5336 = vadd.f32 0.0, %v5335
    %v5337 = vpop.f32.mrf.mxu0
    %5338 = vmatprep.mubr.f32.mxu0 0.0
    %5339 = vmatmul.mubr.f32.gmra.mxu0 %v4704
    %v5340 = vpop.f32.mrf.mxu0
    %v5341 = vadd.f32 0.0, %v5340
    %v5342 = vpop.f32.mrf.mxu0
    %5343 = vmatprep.mubr.f32.mxu0 0.0
    %5344 = vmatmul.mubr.f32.gmra.mxu0 %v4707
    %v5345 = vpop.f32.mrf.mxu0
    %v5346 = vadd.f32 0.0, %v5345
    %v5347 = vpop.f32.mrf.mxu0
    %5348 = vmatprep.mubr.f32.mxu0 0.0
    %5349 = vmatmul.mubr.f32.gmra.mxu0 %v4710
    %v5350 = vpop.f32.mrf.mxu0
    %v5351 = vadd.f32 0.0, %v5350
    %v5352 = vpop.f32.mrf.mxu0
    %5353 = vmatprep.mubr.f32.mxu0 0.0
    %5354 = vmatmul.mubr.f32.gmra.mxu0 %v4713
    %v5355 = vpop.f32.mrf.mxu0
    %v5356 = vadd.f32 0.0, %v5355
    %v5357 = vpop.f32.mrf.mxu0
    %5358 = vmatprep.mubr.f32.mxu0 0.0
    %5359 = vmatmul.mubr.f32.gmra.mxu0 %v4716
    %v5360 = vpop.f32.mrf.mxu0
    %v5361 = vadd.f32 0.0, %v5360
    %v5362 = vpop.f32.mrf.mxu0
    %5363 = vmatprep.mubr.f32.mxu0 0.0
    %5364 = vmatmul.mubr.f32.gmra.mxu0 %v4719
    %v5365 = vpop.f32.mrf.mxu0
    %v5366 = vadd.f32 0.0, %v5365
    %v5367 = vpop.f32.mrf.mxu0
    %5368 = vmatprep.mubr.f32.mxu0 0.0
    %5369 = vmatmul.mubr.f32.gmra.mxu0 %v4722
    %v5370 = vpop.f32.mrf.mxu0
    %v5371 = vadd.f32 0.0, %v5370
    %v5372 = vpop.f32.mrf.mxu0
    %5373 = vmatprep.mubr.f32.mxu0 0.0
    %5374 = vmatmul.mubr.f32.gmra.mxu0 %v4725
    %v5375 = vpop.f32.mrf.mxu0
    %v5376 = vadd.f32 0.0, %v5375
    %v5377 = vpop.f32.mrf.mxu0
    %5378 = vmatprep.mubr.f32.mxu0 0.0
    %5379 = vmatmul.mubr.f32.gmra.mxu0 %v4728
    %v5380 = vpop.f32.mrf.mxu0
    %v5381 = vadd.f32 0.0, %v5380
    %v5382 = vpop.f32.mrf.mxu0
    %5383 = vmatprep.mubr.f32.mxu0 0.0
    %5384 = vmatmul.mubr.f32.gmra.mxu0 %v4731
    %v5385 = vpop.f32.mrf.mxu0
    %v5386 = vadd.f32 0.0, %v5385
    %v5387 = vpop.f32.mrf.mxu0
    %5388 = vmatprep.mubr.f32.mxu0 0.0
    %5389 = vmatmul.mubr.f32.gmra.mxu0 %v4734
    %v5390 = vpop.f32.mrf.mxu0
    %v5391 = vadd.f32 0.0, %v5390
    %v5392 = vpop.f32.mrf.mxu0
    %5393 = vmatprep.mubr.f32.mxu0 0.0
    %5394 = vmatmul.mubr.f32.gmra.mxu0 %v4737
    %v5395 = vpop.f32.mrf.mxu0
    %v5396 = vadd.f32 0.0, %v5395
    %v5397 = vpop.f32.mrf.mxu0
    %5398 = vmatprep.mubr.f32.mxu0 0.0
    %5399 = vmatmul.mubr.f32.gmra.mxu0 %v4740
    %v5400 = vpop.f32.mrf.mxu0
    %v5401 = vadd.f32 0.0, %v5400
    %v5402 = vpop.f32.mrf.mxu0
    %5403 = vmatprep.mubr.f32.mxu0 0.0
    %5404 = vmatmul.mubr.f32.gmra.mxu0 %v4743
    %v5405 = vpop.f32.mrf.mxu0
    %v5406 = vadd.f32 0.0, %v5405
    %v5407 = vpop.f32.mrf.mxu0
    %5408 = vmatprep.mubr.f32.mxu0 0.0
    %5409 = vmatmul.mubr.f32.gmra.mxu0 %v4746
    %v5410 = vpop.f32.mrf.mxu0
    %v5411 = vadd.f32 0.0, %v5410
    %v5412 = vpop.f32.mrf.mxu0
    %5413 = vmatprep.mubr.f32.mxu0 0.0
    %5414 = vmatmul.mubr.f32.gmra.mxu0 %v4749
    %v5415 = vpop.f32.mrf.mxu0
    %v5416 = vadd.f32 0.0, %v5415
    %v5417 = vpop.f32.mrf.mxu0
    %5418 = vmatprep.mubr.f32.mxu0 0.0
    %5419 = vmatmul.mubr.f32.gmra.mxu0 %v4752
    %v5420 = vpop.f32.mrf.mxu0
    %v5421 = vadd.f32 0.0, %v5420
    %v5422 = vpop.f32.mrf.mxu0
    %5423 = vmatprep.mubr.f32.mxu0 0.0
    %5424 = vmatmul.mubr.f32.gmra.mxu0 %v4755
    %v5425 = vpop.f32.mrf.mxu0
    %v5426 = vadd.f32 0.0, %v5425
    %v5427 = vpop.f32.mrf.mxu0
    %5428 = vmatprep.mubr.f32.mxu0 0.0
    %5429 = vmatmul.mubr.f32.gmra.mxu0 %v4758
    %v5430 = vpop.f32.mrf.mxu0
    %v5431 = vadd.f32 0.0, %v5430
    %v5432 = vpop.f32.mrf.mxu0
    %5433 = vmatprep.mubr.f32.mxu0 0.0
    %5434 = vmatmul.mubr.f32.gmra.mxu0 %v4761
    %v5435 = vpop.f32.mrf.mxu0
    %v5436 = vadd.f32 0.0, %v5435
    %v5437 = vpop.f32.mrf.mxu0
    %5438 = vmatprep.mubr.f32.mxu0 0.0
    %5439 = vmatmul.mubr.f32.gmra.mxu0 %v4764
    %v5440 = vpop.f32.mrf.mxu0
    %v5441 = vadd.f32 0.0, %v5440
    %v5442 = vpop.f32.mrf.mxu0
    %5443 = vmatprep.mubr.f32.mxu0 0.0
    %5444 = vmatmul.mubr.f32.gmra.mxu0 %v4767
    %v5445 = vpop.f32.mrf.mxu0
    %v5446 = vadd.f32 0.0, %v5445
    %v5447 = vpop.f32.mrf.mxu0
    %5448 = vmatprep.mubr.f32.mxu0 0.0
    %5449 = vmatmul.mubr.f32.gmra.mxu0 %v4770
    %v5450 = vpop.f32.mrf.mxu0
    %v5451 = vadd.f32 0.0, %v5450
    %v5452 = vpop.f32.mrf.mxu0
    %5453 = vmatprep.mubr.f32.mxu0 0.0
    %5454 = vmatmul.mubr.f32.gmra.mxu0 %v4773
    %v5455 = vpop.f32.mrf.mxu0
    %v5456 = vadd.f32 0.0, %v5455
    %v5457 = vpop.f32.mrf.mxu0
    %5458 = vmatprep.mubr.f32.mxu0 0.0
    %5459 = vmatmul.mubr.f32.gmra.mxu0 %v4776
    %v5460 = vpop.f32.mrf.mxu0
    %v5461 = vadd.f32 0.0, %v5460
    %v5462 = vpop.f32.mrf.mxu0
    %5463 = vmatprep.mubr.f32.mxu0 0.0
    %5464 = vmatmul.mubr.f32.gmra.mxu0 %v4779
    %v5465 = vpop.f32.mrf.mxu0
    %v5466 = vadd.f32 0.0, %v5465
    %v5467 = vpop.f32.mrf.mxu0
    %5468 = vmatprep.mubr.f32.mxu0 0.0
    %5469 = vmatmul.mubr.f32.gmra.mxu0 %v4782
    %v5470 = vpop.f32.mrf.mxu0
    %v5471 = vadd.f32 0.0, %v5470
    %v5472 = vpop.f32.mrf.mxu0
    %5473 = vmatprep.mubr.f32.mxu0 0.0
    %5474 = vmatmul.mubr.f32.gmra.mxu0 %v4785
    %v5475 = vpop.f32.mrf.mxu0
    %v5476 = vadd.f32 0.0, %v5475
    %v5477 = vpop.f32.mrf.mxu0
    %5478 = vmatprep.mubr.f32.mxu0 0.0
    %5479 = vmatmul.mubr.f32.gmra.mxu0 %v4788
    %v5480 = vpop.f32.mrf.mxu0
    %v5481 = vadd.f32 0.0, %v5480
    %v5482 = vpop.f32.mrf.mxu0
    %5483 = vmatprep.mubr.f32.mxu0 0.0
    %5484 = vmatmul.mubr.f32.gmra.mxu0 %v4791
    %v5485 = vpop.f32.mrf.mxu0
    %v5486 = vadd.f32 0.0, %v5485
    %v5487 = vpop.f32.mrf.mxu0
    %5488 = vmatprep.mubr.f32.mxu0 0.0
    %5489 = vmatmul.mubr.f32.gmra.mxu0 %v4794
    %v5490 = vpop.f32.mrf.mxu0
    %v5491 = vadd.f32 0.0, %v5490
    %v5492 = vpop.f32.mrf.mxu0
    %5493 = vmatprep.mubr.f32.mxu0 0.0
    %5494 = vmatmul.mubr.f32.gmra.mxu0 %v4797
    %v5495 = vpop.f32.mrf.mxu0
    %v5496 = vadd.f32 0.0, %v5495
    %v5497 = vpop.f32.mrf.mxu0
    %5498 = vmatprep.mubr.f32.mxu0 0.0
    %5499 = vmatmul.mubr.f32.gmra.mxu0 %v4800
    %v5500 = vpop.f32.mrf.mxu0
    %v5501 = vadd.f32 0.0, %v5500
    %v5502 = vpop.f32.mrf.mxu0
    %5503 = vmatprep.mubr.f32.mxu0 0.0
    %5504 = vmatmul.mubr.f32.gmra.mxu0 %v4803
    %v5505 = vpop.f32.mrf.mxu0
    %v5506 = vadd.f32 0.0, %v5505
    %v5507 = vpop.f32.mrf.mxu0
    %5508 = vmatprep.mubr.f32.mxu0 0.0
    %5509 = vmatmul.mubr.f32.gmra.mxu0 %v4806
    %v5510 = vpop.f32.mrf.mxu0
    %v5511 = vadd.f32 0.0, %v5510
    %v5512 = vpop.f32.mrf.mxu0
    %5513 = vmatprep.mubr.f32.mxu0 0.0
    %5514 = vmatmul.mubr.f32.gmra.mxu0 %v4809
    %v5515 = vpop.f32.mrf.mxu0
    %v5516 = vadd.f32 0.0, %v5515
    %v5517 = vpop.f32.mrf.mxu0
    %5518 = vdwg.mxu0
    %v5519 = vadd.f32 %v4169, %v4881
    %v5520 = vadd.f32 %v4170, %v4886
    %v5521 = vadd.f32 %v4171, %v4891
    %v5522 = vadd.f32 %v4172, %v4896
    %v5523 = vadd.f32 %v4173, %v4901
    %v5524 = vadd.f32 %v4174, %v4906
    %v5525 = vadd.f32 %v4175, %v4911
    %v5526 = vadd.f32 %v4176, %v4916
    %v5527 = vadd.f32 %v4177, %v4921
    %v5528 = vadd.f32 %v4178, %v4926
    %v5529 = vadd.f32 %v4179, %v4931
    %v5530 = vadd.f32 %v4180, %v4936
    %v5531 = vadd.f32 %v4181, %v4941
    %v5532 = vadd.f32 %v4182, %v4946
    %v5533 = vadd.f32 %v4183, %v4951
    %v5534 = vadd.f32 %v4184, %v4956
    %v5535 = vadd.f32 %v4185, %v4961
    %v5536 = vadd.f32 %v4186, %v4966
    %v5537 = vadd.f32 %v4187, %v4971
    %v5538 = vadd.f32 %v4188, %v4976
    %v5539 = vadd.f32 %v4189, %v4981
    %v5540 = vadd.f32 %v4190, %v4986
    %v5541 = vadd.f32 %v4191, %v4991
    %v5542 = vadd.f32 %v4192, %v4996
    %v5543 = vadd.f32 %v4193, %v5001
    %v5544 = vadd.f32 %v4194, %v5006
    %v5545 = vadd.f32 %v4195, %v5011
    %v5546 = vadd.f32 %v4196, %v5016
    %v5547 = vadd.f32 %v4197, %v5021
    %v5548 = vadd.f32 %v4198, %v5026
    %v5549 = vadd.f32 %v4199, %v5031
    %v5550 = vadd.f32 %v4200, %v5036
    %v5551 = vadd.f32 %v4201, %v5041
    %v5552 = vadd.f32 %v4202, %v5046
    %v5553 = vadd.f32 %v4203, %v5051
    %v5554 = vadd.f32 %v4204, %v5056
    %v5555 = vadd.f32 %v4205, %v5061
    %v5556 = vadd.f32 %v4206, %v5066
    %v5557 = vadd.f32 %v4207, %v5071
    %v5558 = vadd.f32 %v4208, %v5076
    %v5559 = vadd.f32 %v4209, %v5081
    %v5560 = vadd.f32 %v4210, %v5086
    %v5561 = vadd.f32 %v4211, %v5091
    %v5562 = vadd.f32 %v4212, %v5096
    %v5563 = vadd.f32 %v4213, %v5101
    %v5564 = vadd.f32 %v4214, %v5106
    %v5565 = vadd.f32 %v4215, %v5111
    %v5566 = vadd.f32 %v4216, %v5116
    %v5567 = vadd.f32 %v4217, %v5121
    %v5568 = vadd.f32 %v4218, %v5126
    %v5569 = vadd.f32 %v4219, %v5131
    %v5570 = vadd.f32 %v4220, %v5136
    %v5571 = vadd.f32 %v4221, %v5141
    %v5572 = vadd.f32 %v4222, %v5146
    %v5573 = vadd.f32 %v4223, %v5151
    %v5574 = vadd.f32 %v4224, %v5156
    %v5575 = vadd.f32 %v4225, %v5161
    %v5576 = vadd.f32 %v4226, %v5166
    %v5577 = vadd.f32 %v4227, %v5171
    %v5578 = vadd.f32 %v4228, %v5176
    %v5579 = vadd.f32 %v4229, %v5181
    %v5580 = vadd.f32 %v4230, %v5186
    %v5581 = vadd.f32 %v4231, %v5191
    %v5582 = vadd.f32 %v4232, %v5196
    %v5583 = vadd.f32 %v4233, %v5201
    %v5584 = vadd.f32 %v4234, %v5206
    %v5585 = vadd.f32 %v4235, %v5211
    %v5586 = vadd.f32 %v4236, %v5216
    %v5587 = vadd.f32 %v4237, %v5221
    %v5588 = vadd.f32 %v4238, %v5226
    %v5589 = vadd.f32 %v4239, %v5231
    %v5590 = vadd.f32 %v4240, %v5236
    %v5591 = vadd.f32 %v4241, %v5241
    %v5592 = vadd.f32 %v4242, %v5246
    %v5593 = vadd.f32 %v4243, %v5251
    %v5594 = vadd.f32 %v4244, %v5256
    %v5595 = vadd.f32 %v4245, %v5261
    %v5596 = vadd.f32 %v4246, %v5266
    %v5597 = vadd.f32 %v4247, %v5271
    %v5598 = vadd.f32 %v4248, %v5276
    %v5599 = vadd.f32 %v4249, %v5281
    %v5600 = vadd.f32 %v4250, %v5286
    %v5601 = vadd.f32 %v4251, %v5291
    %v5602 = vadd.f32 %v4252, %v5296
    %v5603 = vadd.f32 %v4253, %v5301
    %v5604 = vadd.f32 %v4254, %v5306
    %v5605 = vadd.f32 %v4255, %v5311
    %v5606 = vadd.f32 %v4256, %v5316
    %v5607 = vadd.f32 %v4257, %v5321
    %v5608 = vadd.f32 %v4258, %v5326
    %v5609 = vadd.f32 %v4259, %v5331
    %v5610 = vadd.f32 %v4260, %v5336
    %v5611 = vadd.f32 %v4261, %v5341
    %v5612 = vadd.f32 %v4262, %v5346
    %v5613 = vadd.f32 %v4263, %v5351
    %v5614 = vadd.f32 %v4264, %v5356
    %v5615 = vadd.f32 %v4265, %v5361
    %v5616 = vadd.f32 %v4266, %v5366
    %v5617 = vadd.f32 %v4267, %v5371
    %v5618 = vadd.f32 %v4268, %v5376
    %v5619 = vadd.f32 %v4269, %v5381
    %v5620 = vadd.f32 %v4270, %v5386
    %v5621 = vadd.f32 %v4271, %v5391
    %v5622 = vadd.f32 %v4272, %v5396
    %v5623 = vadd.f32 %v4273, %v5401
    %v5624 = vadd.f32 %v4274, %v5406
    %v5625 = vadd.f32 %v4275, %v5411
    %v5626 = vadd.f32 %v4276, %v5416
    %v5627 = vadd.f32 %v4277, %v5421
    %v5628 = vadd.f32 %v4278, %v5426
    %v5629 = vadd.f32 %v4279, %v5431
    %v5630 = vadd.f32 %v4280, %v5436
    %v5631 = vadd.f32 %v4281, %v5441
    %v5632 = vadd.f32 %v4282, %v5446
    %v5633 = vadd.f32 %v4283, %v5451
    %v5634 = vadd.f32 %v4284, %v5456
    %v5635 = vadd.f32 %v4285, %v5461
    %v5636 = vadd.f32 %v4286, %v5466
    %v5637 = vadd.f32 %v4287, %v5471
    %v5638 = vadd.f32 %v4288, %v5476
    %v5639 = vadd.f32 %v4289, %v5481
    %v5640 = vadd.f32 %v4290, %v5486
    %v5641 = vadd.f32 %v4291, %v5491
    %v5642 = vadd.f32 %v4292, %v5496
    %v5643 = vadd.f32 %v4293, %v5501
    %v5644 = vadd.f32 %v4294, %v5506
    %v5645 = vadd.f32 %v4295, %v5511
    %v5646 = vadd.f32 %v4296, %v5516
    %v5647 = vld [vmem:[%s309 + $0x1] sm:$0xff]
    %v5648 = vld [vmem:[%s309 + $0x9] sm:$0xff]
    %v5649 = vld [vmem:[%s309 + $0x19] sm:$0xff]
    %v5650 = vld [vmem:[%s309 + $0x21] sm:$0xff]
    %v5651 = vld [vmem:[%s309 + $0x31] sm:$0xff]
    %v5652 = vld [vmem:[%s309 + $0x39] sm:$0xff]
    %v5653 = vld [vmem:[%s309 + $0x49] sm:$0xff]
    %v5654 = vld [vmem:[%s309 + $0x51] sm:$0xff]
    %v5655 = vld [vmem:[%s309 + $0x61] sm:$0xff]
    %v5656 = vld [vmem:[%s309 + $0x69] sm:$0xff]
    %v5657 = vld [vmem:[%s309 + $0x79] sm:$0xff]
    %v5658 = vld [vmem:[%s309 + $0x81] sm:$0xff]
    %v5659 = vld [vmem:[%s309 + $0x91] sm:$0xff]
    %v5660 = vld [vmem:[%s309 + $0x99] sm:$0xff]
    %v5661 = vld [vmem:[%s309 + $0xa9] sm:$0xff]
    %v5662 = vld [vmem:[%s309 + $0xb1] sm:$0xff]
    %v5663 = vld [vmem:[%s309 + $0xc1] sm:$0xff]
    %v5664 = vld [vmem:[%s309 + $0xc9] sm:$0xff]
    %v5665 = vld [vmem:[%s309 + $0xd9] sm:$0xff]
    %v5666 = vld [vmem:[%s309 + $0xe1] sm:$0xff]
    %v5667 = vld [vmem:[%s309 + $0xf1] sm:$0xff]
    %v5668 = vld [vmem:[%s309 + $0xf9] sm:$0xff]
    %v5669 = vld [vmem:[%s309 + $0x109] sm:$0xff]
    %v5670 = vld [vmem:[%s309 + $0x111] sm:$0xff]
    %v5671 = vld [vmem:[%s309 + $0x121] sm:$0xff]
    %v5672 = vld [vmem:[%s309 + $0x129] sm:$0xff]
    %v5673 = vld [vmem:[%s309 + $0x139] sm:$0xff]
    %v5674 = vld [vmem:[%s309 + $0x141] sm:$0xff]
    %v5675 = vld [vmem:[%s309 + $0x151] sm:$0xff]
    %v5676 = vld [vmem:[%s309 + $0x159] sm:$0xff]
    %v5677 = vld [vmem:[%s309 + $0x169] sm:$0xff]
    %v5678 = vld [vmem:[%s309 + $0x171] sm:$0xff]
    %v5679 = vld [vmem:[%s309 + $0x1b1] sm:$0xff]
    %v5680 = vld [vmem:[%s309 + $0x1b9] sm:$0xff]
    %v5681 = vld [vmem:[%s309 + $0x1c9] sm:$0xff]
    %v5682 = vld [vmem:[%s309 + $0x1d1] sm:$0xff]
    %v5683 = vld [vmem:[%s309 + $0x1e1] sm:$0xff]
    %v5684 = vld [vmem:[%s309 + $0x1e9] sm:$0xff]
    %v5685 = vld [vmem:[%s309 + $0x1f9] sm:$0xff]
    %v5686 = vld [vmem:[%s309 + $0x201] sm:$0xff]
    %v5687 = vld [vmem:[%s309 + $0x211] sm:$0xff]
    %v5688 = vld [vmem:[%s309 + $0x219] sm:$0xff]
    %v5689 = vld [vmem:[%s309 + $0x229] sm:$0xff]
    %v5690 = vld [vmem:[%s309 + $0x231] sm:$0xff]
    %v5691 = vld [vmem:[%s309 + $0x241] sm:$0xff]
    %v5692 = vld [vmem:[%s309 + $0x249] sm:$0xff]
    %v5693 = vld [vmem:[%s309 + $0x259] sm:$0xff]
    %v5694 = vld [vmem:[%s309 + $0x261] sm:$0xff]
    %v5695 = vld [vmem:[%s309 + $0x271] sm:$0xff]
    %v5696 = vld [vmem:[%s309 + $0x279] sm:$0xff]
    %v5697 = vld [vmem:[%s309 + $0x289] sm:$0xff]
    %v5698 = vld [vmem:[%s309 + $0x291] sm:$0xff]
    %v5699 = vld [vmem:[%s309 + $0x2a1] sm:$0xff]
    %v5700 = vld [vmem:[%s309 + $0x2a9] sm:$0xff]
    %v5701 = vld [vmem:[%s309 + $0x2b9] sm:$0xff]
    %v5702 = vld [vmem:[%s309 + $0x2c1] sm:$0xff]
    %v5703 = vld [vmem:[%s309 + $0x2d1] sm:$0xff]
    %v5704 = vld [vmem:[%s309 + $0x2d9] sm:$0xff]
    %v5705 = vld [vmem:[%s309 + $0x2e9] sm:$0xff]
    %v5706 = vld [vmem:[%s309 + $0x2f1] sm:$0xff]
    %v5707 = vld [vmem:[%s309 + $0x301] sm:$0xff]
    %v5708 = vld [vmem:[%s309 + $0x309] sm:$0xff]
    %v5709 = vld [vmem:[%s309 + $0x319] sm:$0xff]
    %v5710 = vld [vmem:[%s309 + $0x321] sm:$0xff]
    %v5711 = vld [vmem:[%s309 + $0x361] sm:$0xff]
    %v5712 = vld [vmem:[%s309 + $0x369] sm:$0xff]
    %v5713 = vld [vmem:[%s309 + $0x379] sm:$0xff]
    %v5714 = vld [vmem:[%s309 + $0x381] sm:$0xff]
    %v5715 = vld [vmem:[%s309 + $0x391] sm:$0xff]
    %v5716 = vld [vmem:[%s309 + $0x399] sm:$0xff]
    %v5717 = vld [vmem:[%s309 + $0x3a9] sm:$0xff]
    %v5718 = vld [vmem:[%s309 + $0x3b1] sm:$0xff]
    %v5719 = vld [vmem:[%s309 + $0x3c1] sm:$0xff]
    %v5720 = vld [vmem:[%s309 + $0x3c9] sm:$0xff]
    %v5721 = vld [vmem:[%s309 + $0x3d9] sm:$0xff]
    %v5722 = vld [vmem:[%s309 + $0x3e1] sm:$0xff]
    %v5723 = vld [vmem:[%s309 + $0x3f1] sm:$0xff]
    %v5724 = vld [vmem:[%s309 + $0x3f9] sm:$0xff]
    %v5725 = vld [vmem:[%s309 + $0x409] sm:$0xff]
    %v5726 = vld [vmem:[%s309 + $0x411] sm:$0xff]
    %v5727 = vld [vmem:[%s309 + $0x421] sm:$0xff]
    %v5728 = vld [vmem:[%s309 + $0x429] sm:$0xff]
    %v5729 = vld [vmem:[%s309 + $0x439] sm:$0xff]
    %v5730 = vld [vmem:[%s309 + $0x441] sm:$0xff]
    %v5731 = vld [vmem:[%s309 + $0x451] sm:$0xff]
    %v5732 = vld [vmem:[%s309 + $0x459] sm:$0xff]
    %v5733 = vld [vmem:[%s309 + $0x469] sm:$0xff]
    %v5734 = vld [vmem:[%s309 + $0x471] sm:$0xff]
    %v5735 = vld [vmem:[%s309 + $0x481] sm:$0xff]
    %v5736 = vld [vmem:[%s309 + $0x489] sm:$0xff]
    %v5737 = vld [vmem:[%s309 + $0x499] sm:$0xff]
    %v5738 = vld [vmem:[%s309 + $0x4a1] sm:$0xff]
    %v5739 = vld [vmem:[%s309 + $0x4b1] sm:$0xff]
    %v5740 = vld [vmem:[%s309 + $0x4b9] sm:$0xff]
    %v5741 = vld [vmem:[%s309 + $0x4c9] sm:$0xff]
    %v5742 = vld [vmem:[%s309 + $0x4d1] sm:$0xff]
    %v5743 = vld [vmem:[%s309 + $0x511] sm:$0xff]
    %v5744 = vld [vmem:[%s309 + $0x519] sm:$0xff]
    %v5745 = vld [vmem:[%s309 + $0x529] sm:$0xff]
    %v5746 = vld [vmem:[%s309 + $0x531] sm:$0xff]
    %v5747 = vld [vmem:[%s309 + $0x541] sm:$0xff]
    %v5748 = vld [vmem:[%s309 + $0x549] sm:$0xff]
    %v5749 = vld [vmem:[%s309 + $0x559] sm:$0xff]
    %v5750 = vld [vmem:[%s309 + $0x561] sm:$0xff]
    %v5751 = vld [vmem:[%s309 + $0x571] sm:$0xff]
    %v5752 = vld [vmem:[%s309 + $0x579] sm:$0xff]
    %v5753 = vld [vmem:[%s309 + $0x589] sm:$0xff]
    %v5754 = vld [vmem:[%s309 + $0x591] sm:$0xff]
    %v5755 = vld [vmem:[%s309 + $0x5a1] sm:$0xff]
    %v5756 = vld [vmem:[%s309 + $0x5a9] sm:$0xff]
    %v5757 = vld [vmem:[%s309 + $0x5b9] sm:$0xff]
    %v5758 = vld [vmem:[%s309 + $0x5c1] sm:$0xff]
    %v5759 = vld [vmem:[%s309 + $0x5d1] sm:$0xff]
    %v5760 = vld [vmem:[%s309 + $0x5d9] sm:$0xff]
    %v5761 = vld [vmem:[%s309 + $0x5e9] sm:$0xff]
    %v5762 = vld [vmem:[%s309 + $0x5f1] sm:$0xff]
    %v5763 = vld [vmem:[%s309 + $0x601] sm:$0xff]
    %v5764 = vld [vmem:[%s309 + $0x609] sm:$0xff]
    %v5765 = vld [vmem:[%s309 + $0x619] sm:$0xff]
    %v5766 = vld [vmem:[%s309 + $0x621] sm:$0xff]
    %v5767 = vld [vmem:[%s309 + $0x631] sm:$0xff]
    %v5768 = vld [vmem:[%s309 + $0x639] sm:$0xff]
    %v5769 = vld [vmem:[%s309 + $0x649] sm:$0xff]
    %v5770 = vld [vmem:[%s309 + $0x651] sm:$0xff]
    %v5771 = vld [vmem:[%s309 + $0x661] sm:$0xff]
    %v5772 = vld [vmem:[%s309 + $0x669] sm:$0xff]
    %v5773 = vld [vmem:[%s309 + $0x679] sm:$0xff]
    %v5774 = vld [vmem:[%s309 + $0x681] sm:$0xff]
    %s5775 = scalar_lea.vmem %s2, 16
    %v5776 = vld [vmem:[%s5775] sm:$0xf]
    %v5778 = vsel %vm27, %v5647, 0
    %v5781 = vsel %vm27, %v5648, 0
    %v5784 = vsel %vm27, %v5649, 0
    %v5787 = vsel %vm27, %v5650, 0
    %v5790 = vsel %vm27, %v5651, 0
    %v5793 = vsel %vm27, %v5652, 0
    %v5796 = vsel %vm27, %v5653, 0
    %v5799 = vsel %vm27, %v5654, 0
    %v5802 = vsel %vm27, %v5655, 0
    %v5805 = vsel %vm27, %v5656, 0
    %v5808 = vsel %vm27, %v5657, 0
    %v5811 = vsel %vm27, %v5658, 0
    %v5814 = vsel %vm27, %v5659, 0
    %v5817 = vsel %vm27, %v5660, 0
    %v5820 = vsel %vm27, %v5661, 0
    %v5823 = vsel %vm27, %v5662, 0
    %v5826 = vsel %vm27, %v5663, 0
    %v5829 = vsel %vm27, %v5664, 0
    %v5832 = vsel %vm27, %v5665, 0
    %v5835 = vsel %vm27, %v5666, 0
    %v5838 = vsel %vm27, %v5667, 0
    %v5841 = vsel %vm27, %v5668, 0
    %v5844 = vsel %vm27, %v5669, 0
    %v5847 = vsel %vm27, %v5670, 0
    %v5850 = vsel %vm27, %v5671, 0
    %v5853 = vsel %vm27, %v5672, 0
    %v5856 = vsel %vm27, %v5673, 0
    %v5859 = vsel %vm27, %v5674, 0
    %v5862 = vsel %vm27, %v5675, 0
    %v5865 = vsel %vm27, %v5676, 0
    %v5868 = vsel %vm27, %v5677, 0
    %v5871 = vsel %vm27, %v5678, 0
    %v5874 = vsel %vm27, %v5679, 0
    %v5877 = vsel %vm27, %v5680, 0
    %v5880 = vsel %vm27, %v5681, 0
    %v5883 = vsel %vm27, %v5682, 0
    %v5886 = vsel %vm27, %v5683, 0
    %v5889 = vsel %vm27, %v5684, 0
    %v5892 = vsel %vm27, %v5685, 0
    %v5895 = vsel %vm27, %v5686, 0
    %v5898 = vsel %vm27, %v5687, 0
    %v5901 = vsel %vm27, %v5688, 0
    %v5904 = vsel %vm27, %v5689, 0
    %v5907 = vsel %vm27, %v5690, 0
    %v5910 = vsel %vm27, %v5691, 0
    %v5913 = vsel %vm27, %v5692, 0
    %v5916 = vsel %vm27, %v5693, 0
    %v5919 = vsel %vm27, %v5694, 0
    %v5922 = vsel %vm27, %v5695, 0
    %v5925 = vsel %vm27, %v5696, 0
    %v5928 = vsel %vm27, %v5697, 0
    %v5931 = vsel %vm27, %v5698, 0
    %v5934 = vsel %vm27, %v5699, 0
    %v5937 = vsel %vm27, %v5700, 0
    %v5940 = vsel %vm27, %v5701, 0
    %v5943 = vsel %vm27, %v5702, 0
    %v5946 = vsel %vm27, %v5703, 0
    %v5949 = vsel %vm27, %v5704, 0
    %v5952 = vsel %vm27, %v5705, 0
    %v5955 = vsel %vm27, %v5706, 0
    %v5958 = vsel %vm27, %v5707, 0
    %v5961 = vsel %vm27, %v5708, 0
    %v5964 = vsel %vm27, %v5709, 0
    %v5967 = vsel %vm27, %v5710, 0
    %v5970 = vsel %vm27, %v5711, 0
    %v5973 = vsel %vm27, %v5712, 0
    %v5976 = vsel %vm27, %v5713, 0
    %v5979 = vsel %vm27, %v5714, 0
    %v5982 = vsel %vm27, %v5715, 0
    %v5985 = vsel %vm27, %v5716, 0
    %v5988 = vsel %vm27, %v5717, 0
    %v5991 = vsel %vm27, %v5718, 0
    %v5994 = vsel %vm27, %v5719, 0
    %v5997 = vsel %vm27, %v5720, 0
    %v6000 = vsel %vm27, %v5721, 0
    %v6003 = vsel %vm27, %v5722, 0
    %v6006 = vsel %vm27, %v5723, 0
    %v6009 = vsel %vm27, %v5724, 0
    %v6012 = vsel %vm27, %v5725, 0
    %v6015 = vsel %vm27, %v5726, 0
    %v6018 = vsel %vm27, %v5727, 0
    %v6021 = vsel %vm27, %v5728, 0
    %v6024 = vsel %vm27, %v5729, 0
    %v6027 = vsel %vm27, %v5730, 0
    %v6030 = vsel %vm27, %v5731, 0
    %v6033 = vsel %vm27, %v5732, 0
    %v6036 = vsel %vm27, %v5733, 0
    %v6039 = vsel %vm27, %v5734, 0
    %v6042 = vsel %vm27, %v5735, 0
    %v6045 = vsel %vm27, %v5736, 0
    %v6048 = vsel %vm27, %v5737, 0
    %v6051 = vsel %vm27, %v5738, 0
    %v6054 = vsel %vm27, %v5739, 0
    %v6057 = vsel %vm27, %v5740, 0
    %v6060 = vsel %vm27, %v5741, 0
    %v6063 = vsel %vm27, %v5742, 0
    %v6066 = vsel %vm27, %v5743, 0
    %v6069 = vsel %vm27, %v5744, 0
    %v6072 = vsel %vm27, %v5745, 0
    %v6075 = vsel %vm27, %v5746, 0
    %v6078 = vsel %vm27, %v5747, 0
    %v6081 = vsel %vm27, %v5748, 0
    %v6084 = vsel %vm27, %v5749, 0
    %v6087 = vsel %vm27, %v5750, 0
    %v6090 = vsel %vm27, %v5751, 0
    %v6093 = vsel %vm27, %v5752, 0
    %v6096 = vsel %vm27, %v5753, 0
    %v6099 = vsel %vm27, %v5754, 0
    %v6102 = vsel %vm27, %v5755, 0
    %v6105 = vsel %vm27, %v5756, 0
    %v6108 = vsel %vm27, %v5757, 0
    %v6111 = vsel %vm27, %v5758, 0
    %v6114 = vsel %vm27, %v5759, 0
    %v6117 = vsel %vm27, %v5760, 0
    %v6120 = vsel %vm27, %v5761, 0
    %v6123 = vsel %vm27, %v5762, 0
    %v6126 = vsel %vm27, %v5763, 0
    %v6129 = vsel %vm27, %v5764, 0
    %v6132 = vsel %vm27, %v5765, 0
    %v6135 = vsel %vm27, %v5766, 0
    %v6138 = vsel %vm27, %v5767, 0
    %v6141 = vsel %vm27, %v5768, 0
    %v6144 = vsel %vm27, %v5769, 0
    %v6147 = vsel %vm27, %v5770, 0
    %v6150 = vsel %vm27, %v5771, 0
    %v6153 = vsel %vm27, %v5772, 0
    %v6156 = vsel %vm27, %v5773, 0
    %v6159 = vsel %vm27, %v5774, 0
    %v6162 = vsel %vm1146, %v5776, 0
    %6164 = vmatprep.subr.mxu0 0.0
    %6165 = vmatpush1.msra.mxu0 0.0
    %6166 = vmatprep.subr.mxu0 0.0
    %6167 = vmatpush1.msra.mxu0 0.0
    %6168 = vmatprep.subr.mxu0 0.0
    %6169 = vmatpush1.msra.mxu0 0.0
    %6170 = vmatprep.subr.mxu0 0.0
    %6171 = vmatpush1.msra.mxu0 0.0
    %6172 = vmatprep.subr.mxu0 0.0
    %6173 = vmatpush1.msra.mxu0 0.0
    %6174 = vmatprep.subr.mxu0 0.0
    %6175 = vmatpush1.msra.mxu0 0.0
    %6176 = vmatprep.subr.mxu0 0.0
    %6177 = vmatpush1.msra.mxu0 0.0
    %6178 = vmatprep.subr.mxu0 0.0
    %6179 = vmatpush1.msra.mxu0 0.0
    %6180 = vmatprep.subr.mxu0 0.0
    %6181 = vmatpush1.msra.mxu0 0.0
    %6182 = vmatprep.subr.mxu0 0.0
    %6183 = vmatpush1.msra.mxu0 0.0
    %6184 = vmatprep.subr.mxu0 0.0
    %6185 = vmatpush1.msra.mxu0 0.0
    %6186 = vmatprep.subr.mxu0 0.0
    %6187 = vmatpush1.msra.mxu0 0.0
    %6188 = vmatprep.subr.mxu0 0.0
    %6189 = vmatpush1.msra.mxu0 0.0
    %6190 = vmatprep.subr.mxu0 0.0
    %6191 = vmatpush1.msra.mxu0 0.0
    %6192 = vmatprep.subr.mxu0 0.0
    %6193 = vmatpush1.msra.mxu0 0.0
    %6194 = vmatprep.subr.mxu0 0.0
    %6195 = vmatpush1.msra.mxu0 %v6162
    %6196 = vmatprep.subr.mxu0 0.0
    %6197 = vmatpush2.msra.mxu0 0.0
    %6198 = vmatprep.subr.mxu0 0.0
    %6199 = vmatpush2.msra.mxu0 0.0
    %6200 = vmatprep.subr.mxu0 0.0
    %6201 = vmatpush2.msra.mxu0 0.0
    %6202 = vmatprep.subr.mxu0 0.0
    %6203 = vmatpush2.msra.mxu0 0.0
    %6204 = vmatprep.subr.mxu0 0.0
    %6205 = vmatpush2.msra.mxu0 0.0
    %6206 = vmatprep.subr.mxu0 0.0
    %6207 = vmatpush2.msra.mxu0 0.0
    %6208 = vmatprep.subr.mxu0 0.0
    %6209 = vmatpush2.msra.mxu0 0.0
    %6210 = vmatprep.subr.mxu0 0.0
    %6211 = vmatpush2.msra.mxu0 0.0
    %6212 = vmatprep.subr.mxu0 0.0
    %6213 = vmatpush2.msra.mxu0 0.0
    %6214 = vmatprep.subr.mxu0 0.0
    %6215 = vmatpush2.msra.mxu0 0.0
    %6216 = vmatprep.subr.mxu0 0.0
    %6217 = vmatpush2.msra.mxu0 0.0
    %6218 = vmatprep.subr.mxu0 0.0
    %6219 = vmatpush2.msra.mxu0 0.0
    %6220 = vmatprep.subr.mxu0 0.0
    %6221 = vmatpush2.msra.mxu0 0.0
    %6222 = vmatprep.subr.mxu0 0.0
    %6223 = vmatpush2.msra.mxu0 0.0
    %6224 = vmatprep.subr.mxu0 0.0
    %6225 = vmatpush2.msra.mxu0 0.0
    %6226 = vmatprep.subr.mxu0 0.0
    %6227 = vmatpush2.msra.mxu0 0.0
    %6228 = vmatprep.mubr.f32.mxu0 0.0
    %6229 = vmatmul.mubr.f32.gmra.mxu0 %v5778
    %v6230 = vpop.f32.mrf.mxu0
    %v6231 = vadd.f32 0.0, %v6230
    %v6232 = vpop.f32.mrf.mxu0
    %6233 = vmatprep.mubr.f32.mxu0 0.0
    %6234 = vmatmul.mubr.f32.gmra.mxu0 %v5781
    %v6235 = vpop.f32.mrf.mxu0
    %v6236 = vadd.f32 0.0, %v6235
    %v6237 = vpop.f32.mrf.mxu0
    %6238 = vmatprep.mubr.f32.mxu0 0.0
    %6239 = vmatmul.mubr.f32.gmra.mxu0 %v5784
    %v6240 = vpop.f32.mrf.mxu0
    %v6241 = vadd.f32 0.0, %v6240
    %v6242 = vpop.f32.mrf.mxu0
    %6243 = vmatprep.mubr.f32.mxu0 0.0
    %6244 = vmatmul.mubr.f32.gmra.mxu0 %v5787
    %v6245 = vpop.f32.mrf.mxu0
    %v6246 = vadd.f32 0.0, %v6245
    %v6247 = vpop.f32.mrf.mxu0
    %6248 = vmatprep.mubr.f32.mxu0 0.0
    %6249 = vmatmul.mubr.f32.gmra.mxu0 %v5790
    %v6250 = vpop.f32.mrf.mxu0
    %v6251 = vadd.f32 0.0, %v6250
    %v6252 = vpop.f32.mrf.mxu0
    %6253 = vmatprep.mubr.f32.mxu0 0.0
    %6254 = vmatmul.mubr.f32.gmra.mxu0 %v5793
    %v6255 = vpop.f32.mrf.mxu0
    %v6256 = vadd.f32 0.0, %v6255
    %v6257 = vpop.f32.mrf.mxu0
    %6258 = vmatprep.mubr.f32.mxu0 0.0
    %6259 = vmatmul.mubr.f32.gmra.mxu0 %v5796
    %v6260 = vpop.f32.mrf.mxu0
    %v6261 = vadd.f32 0.0, %v6260
    %v6262 = vpop.f32.mrf.mxu0
    %6263 = vmatprep.mubr.f32.mxu0 0.0
    %6264 = vmatmul.mubr.f32.gmra.mxu0 %v5799
    %v6265 = vpop.f32.mrf.mxu0
    %v6266 = vadd.f32 0.0, %v6265
    %v6267 = vpop.f32.mrf.mxu0
    %6268 = vmatprep.mubr.f32.mxu0 0.0
    %6269 = vmatmul.mubr.f32.gmra.mxu0 %v5802
    %v6270 = vpop.f32.mrf.mxu0
    %v6271 = vadd.f32 0.0, %v6270
    %v6272 = vpop.f32.mrf.mxu0
    %6273 = vmatprep.mubr.f32.mxu0 0.0
    %6274 = vmatmul.mubr.f32.gmra.mxu0 %v5805
    %v6275 = vpop.f32.mrf.mxu0
    %v6276 = vadd.f32 0.0, %v6275
    %v6277 = vpop.f32.mrf.mxu0
    %6278 = vmatprep.mubr.f32.mxu0 0.0
    %6279 = vmatmul.mubr.f32.gmra.mxu0 %v5808
    %v6280 = vpop.f32.mrf.mxu0
    %v6281 = vadd.f32 0.0, %v6280
    %v6282 = vpop.f32.mrf.mxu0
    %6283 = vmatprep.mubr.f32.mxu0 0.0
    %6284 = vmatmul.mubr.f32.gmra.mxu0 %v5811
    %v6285 = vpop.f32.mrf.mxu0
    %v6286 = vadd.f32 0.0, %v6285
    %v6287 = vpop.f32.mrf.mxu0
    %6288 = vmatprep.mubr.f32.mxu0 0.0
    %6289 = vmatmul.mubr.f32.gmra.mxu0 %v5814
    %v6290 = vpop.f32.mrf.mxu0
    %v6291 = vadd.f32 0.0, %v6290
    %v6292 = vpop.f32.mrf.mxu0
    %6293 = vmatprep.mubr.f32.mxu0 0.0
    %6294 = vmatmul.mubr.f32.gmra.mxu0 %v5817
    %v6295 = vpop.f32.mrf.mxu0
    %v6296 = vadd.f32 0.0, %v6295
    %v6297 = vpop.f32.mrf.mxu0
    %6298 = vmatprep.mubr.f32.mxu0 0.0
    %6299 = vmatmul.mubr.f32.gmra.mxu0 %v5820
    %v6300 = vpop.f32.mrf.mxu0
    %v6301 = vadd.f32 0.0, %v6300
    %v6302 = vpop.f32.mrf.mxu0
    %6303 = vmatprep.mubr.f32.mxu0 0.0
    %6304 = vmatmul.mubr.f32.gmra.mxu0 %v5823
    %v6305 = vpop.f32.mrf.mxu0
    %v6306 = vadd.f32 0.0, %v6305
    %v6307 = vpop.f32.mrf.mxu0
    %6308 = vmatprep.mubr.f32.mxu0 0.0
    %6309 = vmatmul.mubr.f32.gmra.mxu0 %v5826
    %v6310 = vpop.f32.mrf.mxu0
    %v6311 = vadd.f32 0.0, %v6310
    %v6312 = vpop.f32.mrf.mxu0
    %6313 = vmatprep.mubr.f32.mxu0 0.0
    %6314 = vmatmul.mubr.f32.gmra.mxu0 %v5829
    %v6315 = vpop.f32.mrf.mxu0
    %v6316 = vadd.f32 0.0, %v6315
    %v6317 = vpop.f32.mrf.mxu0
    %6318 = vmatprep.mubr.f32.mxu0 0.0
    %6319 = vmatmul.mubr.f32.gmra.mxu0 %v5832
    %v6320 = vpop.f32.mrf.mxu0
    %v6321 = vadd.f32 0.0, %v6320
    %v6322 = vpop.f32.mrf.mxu0
    %6323 = vmatprep.mubr.f32.mxu0 0.0
    %6324 = vmatmul.mubr.f32.gmra.mxu0 %v5835
    %v6325 = vpop.f32.mrf.mxu0
    %v6326 = vadd.f32 0.0, %v6325
    %v6327 = vpop.f32.mrf.mxu0
    %6328 = vmatprep.mubr.f32.mxu0 0.0
    %6329 = vmatmul.mubr.f32.gmra.mxu0 %v5838
    %v6330 = vpop.f32.mrf.mxu0
    %v6331 = vadd.f32 0.0, %v6330
    %v6332 = vpop.f32.mrf.mxu0
    %6333 = vmatprep.mubr.f32.mxu0 0.0
    %6334 = vmatmul.mubr.f32.gmra.mxu0 %v5841
    %v6335 = vpop.f32.mrf.mxu0
    %v6336 = vadd.f32 0.0, %v6335
    %v6337 = vpop.f32.mrf.mxu0
    %6338 = vmatprep.mubr.f32.mxu0 0.0
    %6339 = vmatmul.mubr.f32.gmra.mxu0 %v5844
    %v6340 = vpop.f32.mrf.mxu0
    %v6341 = vadd.f32 0.0, %v6340
    %v6342 = vpop.f32.mrf.mxu0
    %6343 = vmatprep.mubr.f32.mxu0 0.0
    %6344 = vmatmul.mubr.f32.gmra.mxu0 %v5847
    %v6345 = vpop.f32.mrf.mxu0
    %v6346 = vadd.f32 0.0, %v6345
    %v6347 = vpop.f32.mrf.mxu0
    %6348 = vmatprep.mubr.f32.mxu0 0.0
    %6349 = vmatmul.mubr.f32.gmra.mxu0 %v5850
    %v6350 = vpop.f32.mrf.mxu0
    %v6351 = vadd.f32 0.0, %v6350
    %v6352 = vpop.f32.mrf.mxu0
    %6353 = vmatprep.mubr.f32.mxu0 0.0
    %6354 = vmatmul.mubr.f32.gmra.mxu0 %v5853
    %v6355 = vpop.f32.mrf.mxu0
    %v6356 = vadd.f32 0.0, %v6355
    %v6357 = vpop.f32.mrf.mxu0
    %6358 = vmatprep.mubr.f32.mxu0 0.0
    %6359 = vmatmul.mubr.f32.gmra.mxu0 %v5856
    %v6360 = vpop.f32.mrf.mxu0
    %v6361 = vadd.f32 0.0, %v6360
    %v6362 = vpop.f32.mrf.mxu0
    %6363 = vmatprep.mubr.f32.mxu0 0.0
    %6364 = vmatmul.mubr.f32.gmra.mxu0 %v5859
    %v6365 = vpop.f32.mrf.mxu0
    %v6366 = vadd.f32 0.0, %v6365
    %v6367 = vpop.f32.mrf.mxu0
    %6368 = vmatprep.mubr.f32.mxu0 0.0
    %6369 = vmatmul.mubr.f32.gmra.mxu0 %v5862
    %v6370 = vpop.f32.mrf.mxu0
    %v6371 = vadd.f32 0.0, %v6370
    %v6372 = vpop.f32.mrf.mxu0
    %6373 = vmatprep.mubr.f32.mxu0 0.0
    %6374 = vmatmul.mubr.f32.gmra.mxu0 %v5865
    %v6375 = vpop.f32.mrf.mxu0
    %v6376 = vadd.f32 0.0, %v6375
    %v6377 = vpop.f32.mrf.mxu0
    %6378 = vmatprep.mubr.f32.mxu0 0.0
    %6379 = vmatmul.mubr.f32.gmra.mxu0 %v5868
    %v6380 = vpop.f32.mrf.mxu0
    %v6381 = vadd.f32 0.0, %v6380
    %v6382 = vpop.f32.mrf.mxu0
    %6383 = vmatprep.mubr.f32.mxu0 0.0
    %6384 = vmatmul.mubr.f32.gmra.mxu0 %v5871
    %v6385 = vpop.f32.mrf.mxu0
    %v6386 = vadd.f32 0.0, %v6385
    %v6387 = vpop.f32.mrf.mxu0
    %6388 = vmatprep.mubr.f32.mxu0 0.0
    %6389 = vmatmul.mubr.f32.gmra.mxu0 %v5874
    %v6390 = vpop.f32.mrf.mxu0
    %v6391 = vadd.f32 0.0, %v6390
    %v6392 = vpop.f32.mrf.mxu0
    %6393 = vmatprep.mubr.f32.mxu0 0.0
    %6394 = vmatmul.mubr.f32.gmra.mxu0 %v5877
    %v6395 = vpop.f32.mrf.mxu0
    %v6396 = vadd.f32 0.0, %v6395
    %v6397 = vpop.f32.mrf.mxu0
    %6398 = vmatprep.mubr.f32.mxu0 0.0
    %6399 = vmatmul.mubr.f32.gmra.mxu0 %v5880
    %v6400 = vpop.f32.mrf.mxu0
    %v6401 = vadd.f32 0.0, %v6400
    %v6402 = vpop.f32.mrf.mxu0
    %6403 = vmatprep.mubr.f32.mxu0 0.0
    %6404 = vmatmul.mubr.f32.gmra.mxu0 %v5883
    %v6405 = vpop.f32.mrf.mxu0
    %v6406 = vadd.f32 0.0, %v6405
    %v6407 = vpop.f32.mrf.mxu0
    %6408 = vmatprep.mubr.f32.mxu0 0.0
    %6409 = vmatmul.mubr.f32.gmra.mxu0 %v5886
    %v6410 = vpop.f32.mrf.mxu0
    %v6411 = vadd.f32 0.0, %v6410
    %v6412 = vpop.f32.mrf.mxu0
    %6413 = vmatprep.mubr.f32.mxu0 0.0
    %6414 = vmatmul.mubr.f32.gmra.mxu0 %v5889
    %v6415 = vpop.f32.mrf.mxu0
    %v6416 = vadd.f32 0.0, %v6415
    %v6417 = vpop.f32.mrf.mxu0
    %6418 = vmatprep.mubr.f32.mxu0 0.0
    %6419 = vmatmul.mubr.f32.gmra.mxu0 %v5892
    %v6420 = vpop.f32.mrf.mxu0
    %v6421 = vadd.f32 0.0, %v6420
    %v6422 = vpop.f32.mrf.mxu0
    %6423 = vmatprep.mubr.f32.mxu0 0.0
    %6424 = vmatmul.mubr.f32.gmra.mxu0 %v5895
    %v6425 = vpop.f32.mrf.mxu0
    %v6426 = vadd.f32 0.0, %v6425
    %v6427 = vpop.f32.mrf.mxu0
    %6428 = vmatprep.mubr.f32.mxu0 0.0
    %6429 = vmatmul.mubr.f32.gmra.mxu0 %v5898
    %v6430 = vpop.f32.mrf.mxu0
    %v6431 = vadd.f32 0.0, %v6430
    %v6432 = vpop.f32.mrf.mxu0
    %6433 = vmatprep.mubr.f32.mxu0 0.0
    %6434 = vmatmul.mubr.f32.gmra.mxu0 %v5901
    %v6435 = vpop.f32.mrf.mxu0
    %v6436 = vadd.f32 0.0, %v6435
    %v6437 = vpop.f32.mrf.mxu0
    %6438 = vmatprep.mubr.f32.mxu0 0.0
    %6439 = vmatmul.mubr.f32.gmra.mxu0 %v5904
    %v6440 = vpop.f32.mrf.mxu0
    %v6441 = vadd.f32 0.0, %v6440
    %v6442 = vpop.f32.mrf.mxu0
    %6443 = vmatprep.mubr.f32.mxu0 0.0
    %6444 = vmatmul.mubr.f32.gmra.mxu0 %v5907
    %v6445 = vpop.f32.mrf.mxu0
    %v6446 = vadd.f32 0.0, %v6445
    %v6447 = vpop.f32.mrf.mxu0
    %6448 = vmatprep.mubr.f32.mxu0 0.0
    %6449 = vmatmul.mubr.f32.gmra.mxu0 %v5910
    %v6450 = vpop.f32.mrf.mxu0
    %v6451 = vadd.f32 0.0, %v6450
    %v6452 = vpop.f32.mrf.mxu0
    %6453 = vmatprep.mubr.f32.mxu0 0.0
    %6454 = vmatmul.mubr.f32.gmra.mxu0 %v5913
    %v6455 = vpop.f32.mrf.mxu0
    %v6456 = vadd.f32 0.0, %v6455
    %v6457 = vpop.f32.mrf.mxu0
    %6458 = vmatprep.mubr.f32.mxu0 0.0
    %6459 = vmatmul.mubr.f32.gmra.mxu0 %v5916
    %v6460 = vpop.f32.mrf.mxu0
    %v6461 = vadd.f32 0.0, %v6460
    %v6462 = vpop.f32.mrf.mxu0
    %6463 = vmatprep.mubr.f32.mxu0 0.0
    %6464 = vmatmul.mubr.f32.gmra.mxu0 %v5919
    %v6465 = vpop.f32.mrf.mxu0
    %v6466 = vadd.f32 0.0, %v6465
    %v6467 = vpop.f32.mrf.mxu0
    %6468 = vmatprep.mubr.f32.mxu0 0.0
    %6469 = vmatmul.mubr.f32.gmra.mxu0 %v5922
    %v6470 = vpop.f32.mrf.mxu0
    %v6471 = vadd.f32 0.0, %v6470
    %v6472 = vpop.f32.mrf.mxu0
    %6473 = vmatprep.mubr.f32.mxu0 0.0
    %6474 = vmatmul.mubr.f32.gmra.mxu0 %v5925
    %v6475 = vpop.f32.mrf.mxu0
    %v6476 = vadd.f32 0.0, %v6475
    %v6477 = vpop.f32.mrf.mxu0
    %6478 = vmatprep.mubr.f32.mxu0 0.0
    %6479 = vmatmul.mubr.f32.gmra.mxu0 %v5928
    %v6480 = vpop.f32.mrf.mxu0
    %v6481 = vadd.f32 0.0, %v6480
    %v6482 = vpop.f32.mrf.mxu0
    %6483 = vmatprep.mubr.f32.mxu0 0.0
    %6484 = vmatmul.mubr.f32.gmra.mxu0 %v5931
    %v6485 = vpop.f32.mrf.mxu0
    %v6486 = vadd.f32 0.0, %v6485
    %v6487 = vpop.f32.mrf.mxu0
    %6488 = vmatprep.mubr.f32.mxu0 0.0
    %6489 = vmatmul.mubr.f32.gmra.mxu0 %v5934
    %v6490 = vpop.f32.mrf.mxu0
    %v6491 = vadd.f32 0.0, %v6490
    %v6492 = vpop.f32.mrf.mxu0
    %6493 = vmatprep.mubr.f32.mxu0 0.0
    %6494 = vmatmul.mubr.f32.gmra.mxu0 %v5937
    %v6495 = vpop.f32.mrf.mxu0
    %v6496 = vadd.f32 0.0, %v6495
    %v6497 = vpop.f32.mrf.mxu0
    %6498 = vmatprep.mubr.f32.mxu0 0.0
    %6499 = vmatmul.mubr.f32.gmra.mxu0 %v5940
    %v6500 = vpop.f32.mrf.mxu0
    %v6501 = vadd.f32 0.0, %v6500
    %v6502 = vpop.f32.mrf.mxu0
    %6503 = vmatprep.mubr.f32.mxu0 0.0
    %6504 = vmatmul.mubr.f32.gmra.mxu0 %v5943
    %v6505 = vpop.f32.mrf.mxu0
    %v6506 = vadd.f32 0.0, %v6505
    %v6507 = vpop.f32.mrf.mxu0
    %6508 = vmatprep.mubr.f32.mxu0 0.0
    %6509 = vmatmul.mubr.f32.gmra.mxu0 %v5946
    %v6510 = vpop.f32.mrf.mxu0
    %v6511 = vadd.f32 0.0, %v6510
    %v6512 = vpop.f32.mrf.mxu0
    %6513 = vmatprep.mubr.f32.mxu0 0.0
    %6514 = vmatmul.mubr.f32.gmra.mxu0 %v5949
    %v6515 = vpop.f32.mrf.mxu0
    %v6516 = vadd.f32 0.0, %v6515
    %v6517 = vpop.f32.mrf.mxu0
    %6518 = vmatprep.mubr.f32.mxu0 0.0
    %6519 = vmatmul.mubr.f32.gmra.mxu0 %v5952
    %v6520 = vpop.f32.mrf.mxu0
    %v6521 = vadd.f32 0.0, %v6520
    %v6522 = vpop.f32.mrf.mxu0
    %6523 = vmatprep.mubr.f32.mxu0 0.0
    %6524 = vmatmul.mubr.f32.gmra.mxu0 %v5955
    %v6525 = vpop.f32.mrf.mxu0
    %v6526 = vadd.f32 0.0, %v6525
    %v6527 = vpop.f32.mrf.mxu0
    %6528 = vmatprep.mubr.f32.mxu0 0.0
    %6529 = vmatmul.mubr.f32.gmra.mxu0 %v5958
    %v6530 = vpop.f32.mrf.mxu0
    %v6531 = vadd.f32 0.0, %v6530
    %v6532 = vpop.f32.mrf.mxu0
    %6533 = vmatprep.mubr.f32.mxu0 0.0
    %6534 = vmatmul.mubr.f32.gmra.mxu0 %v5961
    %v6535 = vpop.f32.mrf.mxu0
    %v6536 = vadd.f32 0.0, %v6535
    %v6537 = vpop.f32.mrf.mxu0
    %6538 = vmatprep.mubr.f32.mxu0 0.0
    %6539 = vmatmul.mubr.f32.gmra.mxu0 %v5964
    %v6540 = vpop.f32.mrf.mxu0
    %v6541 = vadd.f32 0.0, %v6540
    %v6542 = vpop.f32.mrf.mxu0
    %6543 = vmatprep.mubr.f32.mxu0 0.0
    %6544 = vmatmul.mubr.f32.gmra.mxu0 %v5967
    %v6545 = vpop.f32.mrf.mxu0
    %v6546 = vadd.f32 0.0, %v6545
    %v6547 = vpop.f32.mrf.mxu0
    %6548 = vmatprep.mubr.f32.mxu0 0.0
    %6549 = vmatmul.mubr.f32.gmra.mxu0 %v5970
    %v6550 = vpop.f32.mrf.mxu0
    %v6551 = vadd.f32 0.0, %v6550
    %v6552 = vpop.f32.mrf.mxu0
    %6553 = vmatprep.mubr.f32.mxu0 0.0
    %6554 = vmatmul.mubr.f32.gmra.mxu0 %v5973
    %v6555 = vpop.f32.mrf.mxu0
    %v6556 = vadd.f32 0.0, %v6555
    %v6557 = vpop.f32.mrf.mxu0
    %6558 = vmatprep.mubr.f32.mxu0 0.0
    %6559 = vmatmul.mubr.f32.gmra.mxu0 %v5976
    %v6560 = vpop.f32.mrf.mxu0
    %v6561 = vadd.f32 0.0, %v6560
    %v6562 = vpop.f32.mrf.mxu0
    %6563 = vmatprep.mubr.f32.mxu0 0.0
    %6564 = vmatmul.mubr.f32.gmra.mxu0 %v5979
    %v6565 = vpop.f32.mrf.mxu0
    %v6566 = vadd.f32 0.0, %v6565
    %v6567 = vpop.f32.mrf.mxu0
    %6568 = vmatprep.mubr.f32.mxu0 0.0
    %6569 = vmatmul.mubr.f32.gmra.mxu0 %v5982
    %v6570 = vpop.f32.mrf.mxu0
    %v6571 = vadd.f32 0.0, %v6570
    %v6572 = vpop.f32.mrf.mxu0
    %6573 = vmatprep.mubr.f32.mxu0 0.0
    %6574 = vmatmul.mubr.f32.gmra.mxu0 %v5985
    %v6575 = vpop.f32.mrf.mxu0
    %v6576 = vadd.f32 0.0, %v6575
    %v6577 = vpop.f32.mrf.mxu0
    %6578 = vmatprep.mubr.f32.mxu0 0.0
    %6579 = vmatmul.mubr.f32.gmra.mxu0 %v5988
    %v6580 = vpop.f32.mrf.mxu0
    %v6581 = vadd.f32 0.0, %v6580
    %v6582 = vpop.f32.mrf.mxu0
    %6583 = vmatprep.mubr.f32.mxu0 0.0
    %6584 = vmatmul.mubr.f32.gmra.mxu0 %v5991
    %v6585 = vpop.f32.mrf.mxu0
    %v6586 = vadd.f32 0.0, %v6585
    %v6587 = vpop.f32.mrf.mxu0
    %6588 = vmatprep.mubr.f32.mxu0 0.0
    %6589 = vmatmul.mubr.f32.gmra.mxu0 %v5994
    %v6590 = vpop.f32.mrf.mxu0
    %v6591 = vadd.f32 0.0, %v6590
    %v6592 = vpop.f32.mrf.mxu0
    %6593 = vmatprep.mubr.f32.mxu0 0.0
    %6594 = vmatmul.mubr.f32.gmra.mxu0 %v5997
    %v6595 = vpop.f32.mrf.mxu0
    %v6596 = vadd.f32 0.0, %v6595
    %v6597 = vpop.f32.mrf.mxu0
    %6598 = vmatprep.mubr.f32.mxu0 0.0
    %6599 = vmatmul.mubr.f32.gmra.mxu0 %v6000
    %v6600 = vpop.f32.mrf.mxu0
    %v6601 = vadd.f32 0.0, %v6600
    %v6602 = vpop.f32.mrf.mxu0
    %6603 = vmatprep.mubr.f32.mxu0 0.0
    %6604 = vmatmul.mubr.f32.gmra.mxu0 %v6003
    %v6605 = vpop.f32.mrf.mxu0
    %v6606 = vadd.f32 0.0, %v6605
    %v6607 = vpop.f32.mrf.mxu0
    %6608 = vmatprep.mubr.f32.mxu0 0.0
    %6609 = vmatmul.mubr.f32.gmra.mxu0 %v6006
    %v6610 = vpop.f32.mrf.mxu0
    %v6611 = vadd.f32 0.0, %v6610
    %v6612 = vpop.f32.mrf.mxu0
    %6613 = vmatprep.mubr.f32.mxu0 0.0
    %6614 = vmatmul.mubr.f32.gmra.mxu0 %v6009
    %v6615 = vpop.f32.mrf.mxu0
    %v6616 = vadd.f32 0.0, %v6615
    %v6617 = vpop.f32.mrf.mxu0
    %6618 = vmatprep.mubr.f32.mxu0 0.0
    %6619 = vmatmul.mubr.f32.gmra.mxu0 %v6012
    %v6620 = vpop.f32.mrf.mxu0
    %v6621 = vadd.f32 0.0, %v6620
    %v6622 = vpop.f32.mrf.mxu0
    %6623 = vmatprep.mubr.f32.mxu0 0.0
    %6624 = vmatmul.mubr.f32.gmra.mxu0 %v6015
    %v6625 = vpop.f32.mrf.mxu0
    %v6626 = vadd.f32 0.0, %v6625
    %v6627 = vpop.f32.mrf.mxu0
    %6628 = vmatprep.mubr.f32.mxu0 0.0
    %6629 = vmatmul.mubr.f32.gmra.mxu0 %v6018
    %v6630 = vpop.f32.mrf.mxu0
    %v6631 = vadd.f32 0.0, %v6630
    %v6632 = vpop.f32.mrf.mxu0
    %6633 = vmatprep.mubr.f32.mxu0 0.0
    %6634 = vmatmul.mubr.f32.gmra.mxu0 %v6021
    %v6635 = vpop.f32.mrf.mxu0
    %v6636 = vadd.f32 0.0, %v6635
    %v6637 = vpop.f32.mrf.mxu0
    %6638 = vmatprep.mubr.f32.mxu0 0.0
    %6639 = vmatmul.mubr.f32.gmra.mxu0 %v6024
    %v6640 = vpop.f32.mrf.mxu0
    %v6641 = vadd.f32 0.0, %v6640
    %v6642 = vpop.f32.mrf.mxu0
    %6643 = vmatprep.mubr.f32.mxu0 0.0
    %6644 = vmatmul.mubr.f32.gmra.mxu0 %v6027
    %v6645 = vpop.f32.mrf.mxu0
    %v6646 = vadd.f32 0.0, %v6645
    %v6647 = vpop.f32.mrf.mxu0
    %6648 = vmatprep.mubr.f32.mxu0 0.0
    %6649 = vmatmul.mubr.f32.gmra.mxu0 %v6030
    %v6650 = vpop.f32.mrf.mxu0
    %v6651 = vadd.f32 0.0, %v6650
    %v6652 = vpop.f32.mrf.mxu0
    %6653 = vmatprep.mubr.f32.mxu0 0.0
    %6654 = vmatmul.mubr.f32.gmra.mxu0 %v6033
    %v6655 = vpop.f32.mrf.mxu0
    %v6656 = vadd.f32 0.0, %v6655
    %v6657 = vpop.f32.mrf.mxu0
    %6658 = vmatprep.mubr.f32.mxu0 0.0
    %6659 = vmatmul.mubr.f32.gmra.mxu0 %v6036
    %v6660 = vpop.f32.mrf.mxu0
    %v6661 = vadd.f32 0.0, %v6660
    %v6662 = vpop.f32.mrf.mxu0
    %6663 = vmatprep.mubr.f32.mxu0 0.0
    %6664 = vmatmul.mubr.f32.gmra.mxu0 %v6039
    %v6665 = vpop.f32.mrf.mxu0
    %v6666 = vadd.f32 0.0, %v6665
    %v6667 = vpop.f32.mrf.mxu0
    %6668 = vmatprep.mubr.f32.mxu0 0.0
    %6669 = vmatmul.mubr.f32.gmra.mxu0 %v6042
    %v6670 = vpop.f32.mrf.mxu0
    %v6671 = vadd.f32 0.0, %v6670
    %v6672 = vpop.f32.mrf.mxu0
    %6673 = vmatprep.mubr.f32.mxu0 0.0
    %6674 = vmatmul.mubr.f32.gmra.mxu0 %v6045
    %v6675 = vpop.f32.mrf.mxu0
    %v6676 = vadd.f32 0.0, %v6675
    %v6677 = vpop.f32.mrf.mxu0
    %6678 = vmatprep.mubr.f32.mxu0 0.0
    %6679 = vmatmul.mubr.f32.gmra.mxu0 %v6048
    %v6680 = vpop.f32.mrf.mxu0
    %v6681 = vadd.f32 0.0, %v6680
    %v6682 = vpop.f32.mrf.mxu0
    %6683 = vmatprep.mubr.f32.mxu0 0.0
    %6684 = vmatmul.mubr.f32.gmra.mxu0 %v6051
    %v6685 = vpop.f32.mrf.mxu0
    %v6686 = vadd.f32 0.0, %v6685
    %v6687 = vpop.f32.mrf.mxu0
    %6688 = vmatprep.mubr.f32.mxu0 0.0
    %6689 = vmatmul.mubr.f32.gmra.mxu0 %v6054
    %v6690 = vpop.f32.mrf.mxu0
    %v6691 = vadd.f32 0.0, %v6690
    %v6692 = vpop.f32.mrf.mxu0
    %6693 = vmatprep.mubr.f32.mxu0 0.0
    %6694 = vmatmul.mubr.f32.gmra.mxu0 %v6057
    %v6695 = vpop.f32.mrf.mxu0
    %v6696 = vadd.f32 0.0, %v6695
    %v6697 = vpop.f32.mrf.mxu0
    %6698 = vmatprep.mubr.f32.mxu0 0.0
    %6699 = vmatmul.mubr.f32.gmra.mxu0 %v6060
    %v6700 = vpop.f32.mrf.mxu0
    %v6701 = vadd.f32 0.0, %v6700
    %v6702 = vpop.f32.mrf.mxu0
    %6703 = vmatprep.mubr.f32.mxu0 0.0
    %6704 = vmatmul.mubr.f32.gmra.mxu0 %v6063
    %v6705 = vpop.f32.mrf.mxu0
    %v6706 = vadd.f32 0.0, %v6705
    %v6707 = vpop.f32.mrf.mxu0
    %6708 = vmatprep.mubr.f32.mxu0 0.0
    %6709 = vmatmul.mubr.f32.gmra.mxu0 %v6066
    %v6710 = vpop.f32.mrf.mxu0
    %v6711 = vadd.f32 0.0, %v6710
    %v6712 = vpop.f32.mrf.mxu0
    %6713 = vmatprep.mubr.f32.mxu0 0.0
    %6714 = vmatmul.mubr.f32.gmra.mxu0 %v6069
    %v6715 = vpop.f32.mrf.mxu0
    %v6716 = vadd.f32 0.0, %v6715
    %v6717 = vpop.f32.mrf.mxu0
    %6718 = vmatprep.mubr.f32.mxu0 0.0
    %6719 = vmatmul.mubr.f32.gmra.mxu0 %v6072
    %v6720 = vpop.f32.mrf.mxu0
    %v6721 = vadd.f32 0.0, %v6720
    %v6722 = vpop.f32.mrf.mxu0
    %6723 = vmatprep.mubr.f32.mxu0 0.0
    %6724 = vmatmul.mubr.f32.gmra.mxu0 %v6075
    %v6725 = vpop.f32.mrf.mxu0
    %v6726 = vadd.f32 0.0, %v6725
    %v6727 = vpop.f32.mrf.mxu0
    %6728 = vmatprep.mubr.f32.mxu0 0.0
    %6729 = vmatmul.mubr.f32.gmra.mxu0 %v6078
    %v6730 = vpop.f32.mrf.mxu0
    %v6731 = vadd.f32 0.0, %v6730
    %v6732 = vpop.f32.mrf.mxu0
    %6733 = vmatprep.mubr.f32.mxu0 0.0
    %6734 = vmatmul.mubr.f32.gmra.mxu0 %v6081
    %v6735 = vpop.f32.mrf.mxu0
    %v6736 = vadd.f32 0.0, %v6735
    %v6737 = vpop.f32.mrf.mxu0
    %6738 = vmatprep.mubr.f32.mxu0 0.0
    %6739 = vmatmul.mubr.f32.gmra.mxu0 %v6084
    %v6740 = vpop.f32.mrf.mxu0
    %v6741 = vadd.f32 0.0, %v6740
    %v6742 = vpop.f32.mrf.mxu0
    %6743 = vmatprep.mubr.f32.mxu0 0.0
    %6744 = vmatmul.mubr.f32.gmra.mxu0 %v6087
    %v6745 = vpop.f32.mrf.mxu0
    %v6746 = vadd.f32 0.0, %v6745
    %v6747 = vpop.f32.mrf.mxu0
    %6748 = vmatprep.mubr.f32.mxu0 0.0
    %6749 = vmatmul.mubr.f32.gmra.mxu0 %v6090
    %v6750 = vpop.f32.mrf.mxu0
    %v6751 = vadd.f32 0.0, %v6750
    %v6752 = vpop.f32.mrf.mxu0
    %6753 = vmatprep.mubr.f32.mxu0 0.0
    %6754 = vmatmul.mubr.f32.gmra.mxu0 %v6093
    %v6755 = vpop.f32.mrf.mxu0
    %v6756 = vadd.f32 0.0, %v6755
    %v6757 = vpop.f32.mrf.mxu0
    %6758 = vmatprep.mubr.f32.mxu0 0.0
    %6759 = vmatmul.mubr.f32.gmra.mxu0 %v6096
    %v6760 = vpop.f32.mrf.mxu0
    %v6761 = vadd.f32 0.0, %v6760
    %v6762 = vpop.f32.mrf.mxu0
    %6763 = vmatprep.mubr.f32.mxu0 0.0
    %6764 = vmatmul.mubr.f32.gmra.mxu0 %v6099
    %v6765 = vpop.f32.mrf.mxu0
    %v6766 = vadd.f32 0.0, %v6765
    %v6767 = vpop.f32.mrf.mxu0
    %6768 = vmatprep.mubr.f32.mxu0 0.0
    %6769 = vmatmul.mubr.f32.gmra.mxu0 %v6102
    %v6770 = vpop.f32.mrf.mxu0
    %v6771 = vadd.f32 0.0, %v6770
    %v6772 = vpop.f32.mrf.mxu0
    %6773 = vmatprep.mubr.f32.mxu0 0.0
    %6774 = vmatmul.mubr.f32.gmra.mxu0 %v6105
    %v6775 = vpop.f32.mrf.mxu0
    %v6776 = vadd.f32 0.0, %v6775
    %v6777 = vpop.f32.mrf.mxu0
    %6778 = vmatprep.mubr.f32.mxu0 0.0
    %6779 = vmatmul.mubr.f32.gmra.mxu0 %v6108
    %v6780 = vpop.f32.mrf.mxu0
    %v6781 = vadd.f32 0.0, %v6780
    %v6782 = vpop.f32.mrf.mxu0
    %6783 = vmatprep.mubr.f32.mxu0 0.0
    %6784 = vmatmul.mubr.f32.gmra.mxu0 %v6111
    %v6785 = vpop.f32.mrf.mxu0
    %v6786 = vadd.f32 0.0, %v6785
    %v6787 = vpop.f32.mrf.mxu0
    %6788 = vmatprep.mubr.f32.mxu0 0.0
    %6789 = vmatmul.mubr.f32.gmra.mxu0 %v6114
    %v6790 = vpop.f32.mrf.mxu0
    %v6791 = vadd.f32 0.0, %v6790
    %v6792 = vpop.f32.mrf.mxu0
    %6793 = vmatprep.mubr.f32.mxu0 0.0
    %6794 = vmatmul.mubr.f32.gmra.mxu0 %v6117
    %v6795 = vpop.f32.mrf.mxu0
    %v6796 = vadd.f32 0.0, %v6795
    %v6797 = vpop.f32.mrf.mxu0
    %6798 = vmatprep.mubr.f32.mxu0 0.0
    %6799 = vmatmul.mubr.f32.gmra.mxu0 %v6120
    %v6800 = vpop.f32.mrf.mxu0
    %v6801 = vadd.f32 0.0, %v6800
    %v6802 = vpop.f32.mrf.mxu0
    %6803 = vmatprep.mubr.f32.mxu0 0.0
    %6804 = vmatmul.mubr.f32.gmra.mxu0 %v6123
    %v6805 = vpop.f32.mrf.mxu0
    %v6806 = vadd.f32 0.0, %v6805
    %v6807 = vpop.f32.mrf.mxu0
    %6808 = vmatprep.mubr.f32.mxu0 0.0
    %6809 = vmatmul.mubr.f32.gmra.mxu0 %v6126
    %v6810 = vpop.f32.mrf.mxu0
    %v6811 = vadd.f32 0.0, %v6810
    %v6812 = vpop.f32.mrf.mxu0
    %6813 = vmatprep.mubr.f32.mxu0 0.0
    %6814 = vmatmul.mubr.f32.gmra.mxu0 %v6129
    %v6815 = vpop.f32.mrf.mxu0
    %v6816 = vadd.f32 0.0, %v6815
    %v6817 = vpop.f32.mrf.mxu0
    %6818 = vmatprep.mubr.f32.mxu0 0.0
    %6819 = vmatmul.mubr.f32.gmra.mxu0 %v6132
    %v6820 = vpop.f32.mrf.mxu0
    %v6821 = vadd.f32 0.0, %v6820
    %v6822 = vpop.f32.mrf.mxu0
    %6823 = vmatprep.mubr.f32.mxu0 0.0
    %6824 = vmatmul.mubr.f32.gmra.mxu0 %v6135
    %v6825 = vpop.f32.mrf.mxu0
    %v6826 = vadd.f32 0.0, %v6825
    %v6827 = vpop.f32.mrf.mxu0
    %6828 = vmatprep.mubr.f32.mxu0 0.0
    %6829 = vmatmul.mubr.f32.gmra.mxu0 %v6138
    %v6830 = vpop.f32.mrf.mxu0
    %v6831 = vadd.f32 0.0, %v6830
    %v6832 = vpop.f32.mrf.mxu0
    %6833 = vmatprep.mubr.f32.mxu0 0.0
    %6834 = vmatmul.mubr.f32.gmra.mxu0 %v6141
    %v6835 = vpop.f32.mrf.mxu0
    %v6836 = vadd.f32 0.0, %v6835
    %v6837 = vpop.f32.mrf.mxu0
    %6838 = vmatprep.mubr.f32.mxu0 0.0
    %6839 = vmatmul.mubr.f32.gmra.mxu0 %v6144
    %v6840 = vpop.f32.mrf.mxu0
    %v6841 = vadd.f32 0.0, %v6840
    %v6842 = vpop.f32.mrf.mxu0
    %6843 = vmatprep.mubr.f32.mxu0 0.0
    %6844 = vmatmul.mubr.f32.gmra.mxu0 %v6147
    %v6845 = vpop.f32.mrf.mxu0
    %v6846 = vadd.f32 0.0, %v6845
    %v6847 = vpop.f32.mrf.mxu0
    %6848 = vmatprep.mubr.f32.mxu0 0.0
    %6849 = vmatmul.mubr.f32.gmra.mxu0 %v6150
    %v6850 = vpop.f32.mrf.mxu0
    %v6851 = vadd.f32 0.0, %v6850
    %v6852 = vpop.f32.mrf.mxu0
    %6853 = vmatprep.mubr.f32.mxu0 0.0
    %6854 = vmatmul.mubr.f32.gmra.mxu0 %v6153
    %v6855 = vpop.f32.mrf.mxu0
    %v6856 = vadd.f32 0.0, %v6855
    %v6857 = vpop.f32.mrf.mxu0
    %6858 = vmatprep.mubr.f32.mxu0 0.0
    %6859 = vmatmul.mubr.f32.gmra.mxu0 %v6156
    %v6860 = vpop.f32.mrf.mxu0
    %v6861 = vadd.f32 0.0, %v6860
    %v6862 = vpop.f32.mrf.mxu0
    %6863 = vmatprep.mubr.f32.mxu0 0.0
    %6864 = vmatmul.mubr.f32.gmra.mxu0 %v6159
    %v6865 = vpop.f32.mrf.mxu0
    %v6866 = vadd.f32 0.0, %v6865
    %v6867 = vpop.f32.mrf.mxu0
    %6868 = vdwg.mxu0
    %v6869 = vadd.f32 %v5519, %v6231
    %v6870 = vadd.f32 %v5520, %v6236
    %v6871 = vadd.f32 %v5521, %v6241
    %v6872 = vadd.f32 %v5522, %v6246
    %v6873 = vadd.f32 %v5523, %v6251
    %v6874 = vadd.f32 %v5524, %v6256
    %v6875 = vadd.f32 %v5525, %v6261
    %v6876 = vadd.f32 %v5526, %v6266
    %v6877 = vadd.f32 %v5527, %v6271
    %v6878 = vadd.f32 %v5528, %v6276
    %v6879 = vadd.f32 %v5529, %v6281
    %v6880 = vadd.f32 %v5530, %v6286
    %v6881 = vadd.f32 %v5531, %v6291
    %v6882 = vadd.f32 %v5532, %v6296
    %v6883 = vadd.f32 %v5533, %v6301
    %v6884 = vadd.f32 %v5534, %v6306
    %v6885 = vadd.f32 %v5535, %v6311
    %v6886 = vadd.f32 %v5536, %v6316
    %v6887 = vadd.f32 %v5537, %v6321
    %v6888 = vadd.f32 %v5538, %v6326
    %v6889 = vadd.f32 %v5539, %v6331
    %v6890 = vadd.f32 %v5540, %v6336
    %v6891 = vadd.f32 %v5541, %v6341
    %v6892 = vadd.f32 %v5542, %v6346
    %v6893 = vadd.f32 %v5543, %v6351
    %v6894 = vadd.f32 %v5544, %v6356
    %v6895 = vadd.f32 %v5545, %v6361
    %v6896 = vadd.f32 %v5546, %v6366
    %v6897 = vadd.f32 %v5547, %v6371
    %v6898 = vadd.f32 %v5548, %v6376
    %v6899 = vadd.f32 %v5549, %v6381
    %v6900 = vadd.f32 %v5550, %v6386
    %v6901 = vadd.f32 %v5551, %v6391
    %v6902 = vadd.f32 %v5552, %v6396
    %v6903 = vadd.f32 %v5553, %v6401
    %v6904 = vadd.f32 %v5554, %v6406
    %v6905 = vadd.f32 %v5555, %v6411
    %v6906 = vadd.f32 %v5556, %v6416
    %v6907 = vadd.f32 %v5557, %v6421
    %v6908 = vadd.f32 %v5558, %v6426
    %v6909 = vadd.f32 %v5559, %v6431
    %v6910 = vadd.f32 %v5560, %v6436
    %v6911 = vadd.f32 %v5561, %v6441
    %v6912 = vadd.f32 %v5562, %v6446
    %v6913 = vadd.f32 %v5563, %v6451
    %v6914 = vadd.f32 %v5564, %v6456
    %v6915 = vadd.f32 %v5565, %v6461
    %v6916 = vadd.f32 %v5566, %v6466
    %v6917 = vadd.f32 %v5567, %v6471
    %v6918 = vadd.f32 %v5568, %v6476
    %v6919 = vadd.f32 %v5569, %v6481
    %v6920 = vadd.f32 %v5570, %v6486
    %v6921 = vadd.f32 %v5571, %v6491
    %v6922 = vadd.f32 %v5572, %v6496
    %v6923 = vadd.f32 %v5573, %v6501
    %v6924 = vadd.f32 %v5574, %v6506
    %v6925 = vadd.f32 %v5575, %v6511
    %v6926 = vadd.f32 %v5576, %v6516
    %v6927 = vadd.f32 %v5577, %v6521
    %v6928 = vadd.f32 %v5578, %v6526
    %v6929 = vadd.f32 %v5579, %v6531
    %v6930 = vadd.f32 %v5580, %v6536
    %v6931 = vadd.f32 %v5581, %v6541
    %v6932 = vadd.f32 %v5582, %v6546
    %v6933 = vadd.f32 %v5583, %v6551
    %v6934 = vadd.f32 %v5584, %v6556
    %v6935 = vadd.f32 %v5585, %v6561
    %v6936 = vadd.f32 %v5586, %v6566
    %v6937 = vadd.f32 %v5587, %v6571
    %v6938 = vadd.f32 %v5588, %v6576
    %v6939 = vadd.f32 %v5589, %v6581
    %v6940 = vadd.f32 %v5590, %v6586
    %v6941 = vadd.f32 %v5591, %v6591
    %v6942 = vadd.f32 %v5592, %v6596
    %v6943 = vadd.f32 %v5593, %v6601
    %v6944 = vadd.f32 %v5594, %v6606
    %v6945 = vadd.f32 %v5595, %v6611
    %v6946 = vadd.f32 %v5596, %v6616
    %v6947 = vadd.f32 %v5597, %v6621
    %v6948 = vadd.f32 %v5598, %v6626
    %v6949 = vadd.f32 %v5599, %v6631
    %v6950 = vadd.f32 %v5600, %v6636
    %v6951 = vadd.f32 %v5601, %v6641
    %v6952 = vadd.f32 %v5602, %v6646
    %v6953 = vadd.f32 %v5603, %v6651
    %v6954 = vadd.f32 %v5604, %v6656
    %v6955 = vadd.f32 %v5605, %v6661
    %v6956 = vadd.f32 %v5606, %v6666
    %v6957 = vadd.f32 %v5607, %v6671
    %v6958 = vadd.f32 %v5608, %v6676
    %v6959 = vadd.f32 %v5609, %v6681
    %v6960 = vadd.f32 %v5610, %v6686
    %v6961 = vadd.f32 %v5611, %v6691
    %v6962 = vadd.f32 %v5612, %v6696
    %v6963 = vadd.f32 %v5613, %v6701
    %v6964 = vadd.f32 %v5614, %v6706
    %v6965 = vadd.f32 %v5615, %v6711
    %v6966 = vadd.f32 %v5616, %v6716
    %v6967 = vadd.f32 %v5617, %v6721
    %v6968 = vadd.f32 %v5618, %v6726
    %v6969 = vadd.f32 %v5619, %v6731
    %v6970 = vadd.f32 %v5620, %v6736
    %v6971 = vadd.f32 %v5621, %v6741
    %v6972 = vadd.f32 %v5622, %v6746
    %v6973 = vadd.f32 %v5623, %v6751
    %v6974 = vadd.f32 %v5624, %v6756
    %v6975 = vadd.f32 %v5625, %v6761
    %v6976 = vadd.f32 %v5626, %v6766
    %v6977 = vadd.f32 %v5627, %v6771
    %v6978 = vadd.f32 %v5628, %v6776
    %v6979 = vadd.f32 %v5629, %v6781
    %v6980 = vadd.f32 %v5630, %v6786
    %v6981 = vadd.f32 %v5631, %v6791
    %v6982 = vadd.f32 %v5632, %v6796
    %v6983 = vadd.f32 %v5633, %v6801
    %v6984 = vadd.f32 %v5634, %v6806
    %v6985 = vadd.f32 %v5635, %v6811
    %v6986 = vadd.f32 %v5636, %v6816
    %v6987 = vadd.f32 %v5637, %v6821
    %v6988 = vadd.f32 %v5638, %v6826
    %v6989 = vadd.f32 %v5639, %v6831
    %v6990 = vadd.f32 %v5640, %v6836
    %v6991 = vadd.f32 %v5641, %v6841
    %v6992 = vadd.f32 %v5642, %v6846
    %v6993 = vadd.f32 %v5643, %v6851
    %v6994 = vadd.f32 %v5644, %v6856
    %v6995 = vadd.f32 %v5645, %v6861
    %v6996 = vadd.f32 %v5646, %v6866
    %v6997 = vld [vmem:[%s309 + $0x2] sm:$0xff]
    %v6998 = vld [vmem:[%s309 + $0xa] sm:$0xff]
    %v6999 = vld [vmem:[%s309 + $0x1a] sm:$0xff]
    %v7000 = vld [vmem:[%s309 + $0x22] sm:$0xff]
    %v7001 = vld [vmem:[%s309 + $0x32] sm:$0xff]
    %v7002 = vld [vmem:[%s309 + $0x3a] sm:$0xff]
    %v7003 = vld [vmem:[%s309 + $0x4a] sm:$0xff]
    %v7004 = vld [vmem:[%s309 + $0x52] sm:$0xff]
    %v7005 = vld [vmem:[%s309 + $0x62] sm:$0xff]
    %v7006 = vld [vmem:[%s309 + $0x6a] sm:$0xff]
    %v7007 = vld [vmem:[%s309 + $0x7a] sm:$0xff]
    %v7008 = vld [vmem:[%s309 + $0x82] sm:$0xff]
    %v7009 = vld [vmem:[%s309 + $0x92] sm:$0xff]
    %v7010 = vld [vmem:[%s309 + $0x9a] sm:$0xff]
    %v7011 = vld [vmem:[%s309 + $0xaa] sm:$0xff]
    %v7012 = vld [vmem:[%s309 + $0xb2] sm:$0xff]
    %v7013 = vld [vmem:[%s309 + $0xc2] sm:$0xff]
    %v7014 = vld [vmem:[%s309 + $0xca] sm:$0xff]
    %v7015 = vld [vmem:[%s309 + $0xda] sm:$0xff]
    %v7016 = vld [vmem:[%s309 + $0xe2] sm:$0xff]
    %v7017 = vld [vmem:[%s309 + $0xf2] sm:$0xff]
    %v7018 = vld [vmem:[%s309 + $0xfa] sm:$0xff]
    %v7019 = vld [vmem:[%s309 + $0x10a] sm:$0xff]
    %v7020 = vld [vmem:[%s309 + $0x112] sm:$0xff]
    %v7021 = vld [vmem:[%s309 + $0x122] sm:$0xff]
    %v7022 = vld [vmem:[%s309 + $0x12a] sm:$0xff]
    %v7023 = vld [vmem:[%s309 + $0x13a] sm:$0xff]
    %v7024 = vld [vmem:[%s309 + $0x142] sm:$0xff]
    %v7025 = vld [vmem:[%s309 + $0x152] sm:$0xff]
    %v7026 = vld [vmem:[%s309 + $0x15a] sm:$0xff]
    %v7027 = vld [vmem:[%s309 + $0x16a] sm:$0xff]
    %v7028 = vld [vmem:[%s309 + $0x172] sm:$0xff]
    %v7029 = vld [vmem:[%s309 + $0x1b2] sm:$0xff]
    %v7030 = vld [vmem:[%s309 + $0x1ba] sm:$0xff]
    %v7031 = vld [vmem:[%s309 + $0x1ca] sm:$0xff]
    %v7032 = vld [vmem:[%s309 + $0x1d2] sm:$0xff]
    %v7033 = vld [vmem:[%s309 + $0x1e2] sm:$0xff]
    %v7034 = vld [vmem:[%s309 + $0x1ea] sm:$0xff]
    %v7035 = vld [vmem:[%s309 + $0x1fa] sm:$0xff]
    %v7036 = vld [vmem:[%s309 + $0x202] sm:$0xff]
    %v7037 = vld [vmem:[%s309 + $0x212] sm:$0xff]
    %v7038 = vld [vmem:[%s309 + $0x21a] sm:$0xff]
    %v7039 = vld [vmem:[%s309 + $0x22a] sm:$0xff]
    %v7040 = vld [vmem:[%s309 + $0x232] sm:$0xff]
    %v7041 = vld [vmem:[%s309 + $0x242] sm:$0xff]
    %v7042 = vld [vmem:[%s309 + $0x24a] sm:$0xff]
    %v7043 = vld [vmem:[%s309 + $0x25a] sm:$0xff]
    %v7044 = vld [vmem:[%s309 + $0x262] sm:$0xff]
    %v7045 = vld [vmem:[%s309 + $0x272] sm:$0xff]
    %v7046 = vld [vmem:[%s309 + $0x27a] sm:$0xff]
    %v7047 = vld [vmem:[%s309 + $0x28a] sm:$0xff]
    %v7048 = vld [vmem:[%s309 + $0x292] sm:$0xff]
    %v7049 = vld [vmem:[%s309 + $0x2a2] sm:$0xff]
    %v7050 = vld [vmem:[%s309 + $0x2aa] sm:$0xff]
    %v7051 = vld [vmem:[%s309 + $0x2ba] sm:$0xff]
    %v7052 = vld [vmem:[%s309 + $0x2c2] sm:$0xff]
    %v7053 = vld [vmem:[%s309 + $0x2d2] sm:$0xff]
    %v7054 = vld [vmem:[%s309 + $0x2da] sm:$0xff]
    %v7055 = vld [vmem:[%s309 + $0x2ea] sm:$0xff]
    %v7056 = vld [vmem:[%s309 + $0x2f2] sm:$0xff]
    %v7057 = vld [vmem:[%s309 + $0x302] sm:$0xff]
    %v7058 = vld [vmem:[%s309 + $0x30a] sm:$0xff]
    %v7059 = vld [vmem:[%s309 + $0x31a] sm:$0xff]
    %v7060 = vld [vmem:[%s309 + $0x322] sm:$0xff]
    %v7061 = vld [vmem:[%s309 + $0x362] sm:$0xff]
    %v7062 = vld [vmem:[%s309 + $0x36a] sm:$0xff]
    %v7063 = vld [vmem:[%s309 + $0x37a] sm:$0xff]
    %v7064 = vld [vmem:[%s309 + $0x382] sm:$0xff]
    %v7065 = vld [vmem:[%s309 + $0x392] sm:$0xff]
    %v7066 = vld [vmem:[%s309 + $0x39a] sm:$0xff]
    %v7067 = vld [vmem:[%s309 + $0x3aa] sm:$0xff]
    %v7068 = vld [vmem:[%s309 + $0x3b2] sm:$0xff]
    %v7069 = vld [vmem:[%s309 + $0x3c2] sm:$0xff]
    %v7070 = vld [vmem:[%s309 + $0x3ca] sm:$0xff]
    %v7071 = vld [vmem:[%s309 + $0x3da] sm:$0xff]
    %v7072 = vld [vmem:[%s309 + $0x3e2] sm:$0xff]
    %v7073 = vld [vmem:[%s309 + $0x3f2] sm:$0xff]
    %v7074 = vld [vmem:[%s309 + $0x3fa] sm:$0xff]
    %v7075 = vld [vmem:[%s309 + $0x40a] sm:$0xff]
    %v7076 = vld [vmem:[%s309 + $0x412] sm:$0xff]
    %v7077 = vld [vmem:[%s309 + $0x422] sm:$0xff]
    %v7078 = vld [vmem:[%s309 + $0x42a] sm:$0xff]
    %v7079 = vld [vmem:[%s309 + $0x43a] sm:$0xff]
    %v7080 = vld [vmem:[%s309 + $0x442] sm:$0xff]
    %v7081 = vld [vmem:[%s309 + $0x452] sm:$0xff]
    %v7082 = vld [vmem:[%s309 + $0x45a] sm:$0xff]
    %v7083 = vld [vmem:[%s309 + $0x46a] sm:$0xff]
    %v7084 = vld [vmem:[%s309 + $0x472] sm:$0xff]
    %v7085 = vld [vmem:[%s309 + $0x482] sm:$0xff]
    %v7086 = vld [vmem:[%s309 + $0x48a] sm:$0xff]
    %v7087 = vld [vmem:[%s309 + $0x49a] sm:$0xff]
    %v7088 = vld [vmem:[%s309 + $0x4a2] sm:$0xff]
    %v7089 = vld [vmem:[%s309 + $0x4b2] sm:$0xff]
    %v7090 = vld [vmem:[%s309 + $0x4ba] sm:$0xff]
    %v7091 = vld [vmem:[%s309 + $0x4ca] sm:$0xff]
    %v7092 = vld [vmem:[%s309 + $0x4d2] sm:$0xff]
    %v7093 = vld [vmem:[%s309 + $0x512] sm:$0xff]
    %v7094 = vld [vmem:[%s309 + $0x51a] sm:$0xff]
    %v7095 = vld [vmem:[%s309 + $0x52a] sm:$0xff]
    %v7096 = vld [vmem:[%s309 + $0x532] sm:$0xff]
    %v7097 = vld [vmem:[%s309 + $0x542] sm:$0xff]
    %v7098 = vld [vmem:[%s309 + $0x54a] sm:$0xff]
    %v7099 = vld [vmem:[%s309 + $0x55a] sm:$0xff]
    %v7100 = vld [vmem:[%s309 + $0x562] sm:$0xff]
    %v7101 = vld [vmem:[%s309 + $0x572] sm:$0xff]
    %v7102 = vld [vmem:[%s309 + $0x57a] sm:$0xff]
    %v7103 = vld [vmem:[%s309 + $0x58a] sm:$0xff]
    %v7104 = vld [vmem:[%s309 + $0x592] sm:$0xff]
    %v7105 = vld [vmem:[%s309 + $0x5a2] sm:$0xff]
    %v7106 = vld [vmem:[%s309 + $0x5aa] sm:$0xff]
    %v7107 = vld [vmem:[%s309 + $0x5ba] sm:$0xff]
    %v7108 = vld [vmem:[%s309 + $0x5c2] sm:$0xff]
    %v7109 = vld [vmem:[%s309 + $0x5d2] sm:$0xff]
    %v7110 = vld [vmem:[%s309 + $0x5da] sm:$0xff]
    %v7111 = vld [vmem:[%s309 + $0x5ea] sm:$0xff]
    %v7112 = vld [vmem:[%s309 + $0x5f2] sm:$0xff]
    %v7113 = vld [vmem:[%s309 + $0x602] sm:$0xff]
    %v7114 = vld [vmem:[%s309 + $0x60a] sm:$0xff]
    %v7115 = vld [vmem:[%s309 + $0x61a] sm:$0xff]
    %v7116 = vld [vmem:[%s309 + $0x622] sm:$0xff]
    %v7117 = vld [vmem:[%s309 + $0x632] sm:$0xff]
    %v7118 = vld [vmem:[%s309 + $0x63a] sm:$0xff]
    %v7119 = vld [vmem:[%s309 + $0x64a] sm:$0xff]
    %v7120 = vld [vmem:[%s309 + $0x652] sm:$0xff]
    %v7121 = vld [vmem:[%s309 + $0x662] sm:$0xff]
    %v7122 = vld [vmem:[%s309 + $0x66a] sm:$0xff]
    %v7123 = vld [vmem:[%s309 + $0x67a] sm:$0xff]
    %v7124 = vld [vmem:[%s309 + $0x682] sm:$0xff]
    %s7125 = scalar_lea.vmem %s2, 20
    %v7126 = vld [vmem:[%s7125] sm:$0xf]
    %v7128 = vsel %vm27, %v6997, 0
    %v7131 = vsel %vm27, %v6998, 0
    %v7134 = vsel %vm27, %v6999, 0
    %v7137 = vsel %vm27, %v7000, 0
    %v7140 = vsel %vm27, %v7001, 0
    %v7143 = vsel %vm27, %v7002, 0
    %v7146 = vsel %vm27, %v7003, 0
    %v7149 = vsel %vm27, %v7004, 0
    %v7152 = vsel %vm27, %v7005, 0
    %v7155 = vsel %vm27, %v7006, 0
    %v7158 = vsel %vm27, %v7007, 0
    %v7161 = vsel %vm27, %v7008, 0
    %v7164 = vsel %vm27, %v7009, 0
    %v7167 = vsel %vm27, %v7010, 0
    %v7170 = vsel %vm27, %v7011, 0
    %v7173 = vsel %vm27, %v7012, 0
    %v7176 = vsel %vm27, %v7013, 0
    %v7179 = vsel %vm27, %v7014, 0
    %v7182 = vsel %vm27, %v7015, 0
    %v7185 = vsel %vm27, %v7016, 0
    %v7188 = vsel %vm27, %v7017, 0
    %v7191 = vsel %vm27, %v7018, 0
    %v7194 = vsel %vm27, %v7019, 0
    %v7197 = vsel %vm27, %v7020, 0
    %v7200 = vsel %vm27, %v7021, 0
    %v7203 = vsel %vm27, %v7022, 0
    %v7206 = vsel %vm27, %v7023, 0
    %v7209 = vsel %vm27, %v7024, 0
    %v7212 = vsel %vm27, %v7025, 0
    %v7215 = vsel %vm27, %v7026, 0
    %v7218 = vsel %vm27, %v7027, 0
    %v7221 = vsel %vm27, %v7028, 0
    %v7224 = vsel %vm27, %v7029, 0
    %v7227 = vsel %vm27, %v7030, 0
    %v7230 = vsel %vm27, %v7031, 0
    %v7233 = vsel %vm27, %v7032, 0
    %v7236 = vsel %vm27, %v7033, 0
    %v7239 = vsel %vm27, %v7034, 0
    %v7242 = vsel %vm27, %v7035, 0
    %v7245 = vsel %vm27, %v7036, 0
    %v7248 = vsel %vm27, %v7037, 0
    %v7251 = vsel %vm27, %v7038, 0
    %v7254 = vsel %vm27, %v7039, 0
    %v7257 = vsel %vm27, %v7040, 0
    %v7260 = vsel %vm27, %v7041, 0
    %v7263 = vsel %vm27, %v7042, 0
    %v7266 = vsel %vm27, %v7043, 0
    %v7269 = vsel %vm27, %v7044, 0
    %v7272 = vsel %vm27, %v7045, 0
    %v7275 = vsel %vm27, %v7046, 0
    %v7278 = vsel %vm27, %v7047, 0
    %v7281 = vsel %vm27, %v7048, 0
    %v7284 = vsel %vm27, %v7049, 0
    %v7287 = vsel %vm27, %v7050, 0
    %v7290 = vsel %vm27, %v7051, 0
    %v7293 = vsel %vm27, %v7052, 0
    %v7296 = vsel %vm27, %v7053, 0
    %v7299 = vsel %vm27, %v7054, 0
    %v7302 = vsel %vm27, %v7055, 0
    %v7305 = vsel %vm27, %v7056, 0
    %v7308 = vsel %vm27, %v7057, 0
    %v7311 = vsel %vm27, %v7058, 0
    %v7314 = vsel %vm27, %v7059, 0
    %v7317 = vsel %vm27, %v7060, 0
    %v7320 = vsel %vm27, %v7061, 0
    %v7323 = vsel %vm27, %v7062, 0
    %v7326 = vsel %vm27, %v7063, 0
    %v7329 = vsel %vm27, %v7064, 0
    %v7332 = vsel %vm27, %v7065, 0
    %v7335 = vsel %vm27, %v7066, 0
    %v7338 = vsel %vm27, %v7067, 0
    %v7341 = vsel %vm27, %v7068, 0
    %v7344 = vsel %vm27, %v7069, 0
    %v7347 = vsel %vm27, %v7070, 0
    %v7350 = vsel %vm27, %v7071, 0
    %v7353 = vsel %vm27, %v7072, 0
    %v7356 = vsel %vm27, %v7073, 0
    %v7359 = vsel %vm27, %v7074, 0
    %v7362 = vsel %vm27, %v7075, 0
    %v7365 = vsel %vm27, %v7076, 0
    %v7368 = vsel %vm27, %v7077, 0
    %v7371 = vsel %vm27, %v7078, 0
    %v7374 = vsel %vm27, %v7079, 0
    %v7377 = vsel %vm27, %v7080, 0
    %v7380 = vsel %vm27, %v7081, 0
    %v7383 = vsel %vm27, %v7082, 0
    %v7386 = vsel %vm27, %v7083, 0
    %v7389 = vsel %vm27, %v7084, 0
    %v7392 = vsel %vm27, %v7085, 0
    %v7395 = vsel %vm27, %v7086, 0
    %v7398 = vsel %vm27, %v7087, 0
    %v7401 = vsel %vm27, %v7088, 0
    %v7404 = vsel %vm27, %v7089, 0
    %v7407 = vsel %vm27, %v7090, 0
    %v7410 = vsel %vm27, %v7091, 0
    %v7413 = vsel %vm27, %v7092, 0
    %v7416 = vsel %vm27, %v7093, 0
    %v7419 = vsel %vm27, %v7094, 0
    %v7422 = vsel %vm27, %v7095, 0
    %v7425 = vsel %vm27, %v7096, 0
    %v7428 = vsel %vm27, %v7097, 0
    %v7431 = vsel %vm27, %v7098, 0
    %v7434 = vsel %vm27, %v7099, 0
    %v7437 = vsel %vm27, %v7100, 0
    %v7440 = vsel %vm27, %v7101, 0
    %v7443 = vsel %vm27, %v7102, 0
    %v7446 = vsel %vm27, %v7103, 0
    %v7449 = vsel %vm27, %v7104, 0
    %v7452 = vsel %vm27, %v7105, 0
    %v7455 = vsel %vm27, %v7106, 0
    %v7458 = vsel %vm27, %v7107, 0
    %v7461 = vsel %vm27, %v7108, 0
    %v7464 = vsel %vm27, %v7109, 0
    %v7467 = vsel %vm27, %v7110, 0
    %v7470 = vsel %vm27, %v7111, 0
    %v7473 = vsel %vm27, %v7112, 0
    %v7476 = vsel %vm27, %v7113, 0
    %v7479 = vsel %vm27, %v7114, 0
    %v7482 = vsel %vm27, %v7115, 0
    %v7485 = vsel %vm27, %v7116, 0
    %v7488 = vsel %vm27, %v7117, 0
    %v7491 = vsel %vm27, %v7118, 0
    %v7494 = vsel %vm27, %v7119, 0
    %v7497 = vsel %vm27, %v7120, 0
    %v7500 = vsel %vm27, %v7121, 0
    %v7503 = vsel %vm27, %v7122, 0
    %v7506 = vsel %vm27, %v7123, 0
    %v7509 = vsel %vm27, %v7124, 0
    %v7512 = vsel %vm1146, %v7126, 0
    %7514 = vmatprep.subr.mxu0 0.0
    %7515 = vmatpush1.msra.mxu0 0.0
    %7516 = vmatprep.subr.mxu0 0.0
    %7517 = vmatpush1.msra.mxu0 0.0
    %7518 = vmatprep.subr.mxu0 0.0
    %7519 = vmatpush1.msra.mxu0 0.0
    %7520 = vmatprep.subr.mxu0 0.0
    %7521 = vmatpush1.msra.mxu0 0.0
    %7522 = vmatprep.subr.mxu0 0.0
    %7523 = vmatpush1.msra.mxu0 0.0
    %7524 = vmatprep.subr.mxu0 0.0
    %7525 = vmatpush1.msra.mxu0 0.0
    %7526 = vmatprep.subr.mxu0 0.0
    %7527 = vmatpush1.msra.mxu0 0.0
    %7528 = vmatprep.subr.mxu0 0.0
    %7529 = vmatpush1.msra.mxu0 0.0
    %7530 = vmatprep.subr.mxu0 0.0
    %7531 = vmatpush1.msra.mxu0 0.0
    %7532 = vmatprep.subr.mxu0 0.0
    %7533 = vmatpush1.msra.mxu0 0.0
    %7534 = vmatprep.subr.mxu0 0.0
    %7535 = vmatpush1.msra.mxu0 0.0
    %7536 = vmatprep.subr.mxu0 0.0
    %7537 = vmatpush1.msra.mxu0 0.0
    %7538 = vmatprep.subr.mxu0 0.0
    %7539 = vmatpush1.msra.mxu0 0.0
    %7540 = vmatprep.subr.mxu0 0.0
    %7541 = vmatpush1.msra.mxu0 0.0
    %7542 = vmatprep.subr.mxu0 0.0
    %7543 = vmatpush1.msra.mxu0 0.0
    %7544 = vmatprep.subr.mxu0 0.0
    %7545 = vmatpush1.msra.mxu0 %v7512
    %7546 = vmatprep.subr.mxu0 0.0
    %7547 = vmatpush2.msra.mxu0 0.0
    %7548 = vmatprep.subr.mxu0 0.0
    %7549 = vmatpush2.msra.mxu0 0.0
    %7550 = vmatprep.subr.mxu0 0.0
    %7551 = vmatpush2.msra.mxu0 0.0
    %7552 = vmatprep.subr.mxu0 0.0
    %7553 = vmatpush2.msra.mxu0 0.0
    %7554 = vmatprep.subr.mxu0 0.0
    %7555 = vmatpush2.msra.mxu0 0.0
    %7556 = vmatprep.subr.mxu0 0.0
    %7557 = vmatpush2.msra.mxu0 0.0
    %7558 = vmatprep.subr.mxu0 0.0
    %7559 = vmatpush2.msra.mxu0 0.0
    %7560 = vmatprep.subr.mxu0 0.0
    %7561 = vmatpush2.msra.mxu0 0.0
    %7562 = vmatprep.subr.mxu0 0.0
    %7563 = vmatpush2.msra.mxu0 0.0
    %7564 = vmatprep.subr.mxu0 0.0
    %7565 = vmatpush2.msra.mxu0 0.0
    %7566 = vmatprep.subr.mxu0 0.0
    %7567 = vmatpush2.msra.mxu0 0.0
    %7568 = vmatprep.subr.mxu0 0.0
    %7569 = vmatpush2.msra.mxu0 0.0
    %7570 = vmatprep.subr.mxu0 0.0
    %7571 = vmatpush2.msra.mxu0 0.0
    %7572 = vmatprep.subr.mxu0 0.0
    %7573 = vmatpush2.msra.mxu0 0.0
    %7574 = vmatprep.subr.mxu0 0.0
    %7575 = vmatpush2.msra.mxu0 0.0
    %7576 = vmatprep.subr.mxu0 0.0
    %7577 = vmatpush2.msra.mxu0 0.0
    %7578 = vmatprep.mubr.f32.mxu0 0.0
    %7579 = vmatmul.mubr.f32.gmra.mxu0 %v7128
    %v7580 = vpop.f32.mrf.mxu0
    %v7581 = vadd.f32 0.0, %v7580
    %v7582 = vpop.f32.mrf.mxu0
    %7583 = vmatprep.mubr.f32.mxu0 0.0
    %7584 = vmatmul.mubr.f32.gmra.mxu0 %v7131
    %v7585 = vpop.f32.mrf.mxu0
    %v7586 = vadd.f32 0.0, %v7585
    %v7587 = vpop.f32.mrf.mxu0
    %7588 = vmatprep.mubr.f32.mxu0 0.0
    %7589 = vmatmul.mubr.f32.gmra.mxu0 %v7134
    %v7590 = vpop.f32.mrf.mxu0
    %v7591 = vadd.f32 0.0, %v7590
    %v7592 = vpop.f32.mrf.mxu0
    %7593 = vmatprep.mubr.f32.mxu0 0.0
    %7594 = vmatmul.mubr.f32.gmra.mxu0 %v7137
    %v7595 = vpop.f32.mrf.mxu0
    %v7596 = vadd.f32 0.0, %v7595
    %v7597 = vpop.f32.mrf.mxu0
    %7598 = vmatprep.mubr.f32.mxu0 0.0
    %7599 = vmatmul.mubr.f32.gmra.mxu0 %v7140
    %v7600 = vpop.f32.mrf.mxu0
    %v7601 = vadd.f32 0.0, %v7600
    %v7602 = vpop.f32.mrf.mxu0
    %7603 = vmatprep.mubr.f32.mxu0 0.0
    %7604 = vmatmul.mubr.f32.gmra.mxu0 %v7143
    %v7605 = vpop.f32.mrf.mxu0
    %v7606 = vadd.f32 0.0, %v7605
    %v7607 = vpop.f32.mrf.mxu0
    %7608 = vmatprep.mubr.f32.mxu0 0.0
    %7609 = vmatmul.mubr.f32.gmra.mxu0 %v7146
    %v7610 = vpop.f32.mrf.mxu0
    %v7611 = vadd.f32 0.0, %v7610
    %v7612 = vpop.f32.mrf.mxu0
    %7613 = vmatprep.mubr.f32.mxu0 0.0
    %7614 = vmatmul.mubr.f32.gmra.mxu0 %v7149
    %v7615 = vpop.f32.mrf.mxu0
    %v7616 = vadd.f32 0.0, %v7615
    %v7617 = vpop.f32.mrf.mxu0
    %7618 = vmatprep.mubr.f32.mxu0 0.0
    %7619 = vmatmul.mubr.f32.gmra.mxu0 %v7152
    %v7620 = vpop.f32.mrf.mxu0
    %v7621 = vadd.f32 0.0, %v7620
    %v7622 = vpop.f32.mrf.mxu0
    %7623 = vmatprep.mubr.f32.mxu0 0.0
    %7624 = vmatmul.mubr.f32.gmra.mxu0 %v7155
    %v7625 = vpop.f32.mrf.mxu0
    %v7626 = vadd.f32 0.0, %v7625
    %v7627 = vpop.f32.mrf.mxu0
    %7628 = vmatprep.mubr.f32.mxu0 0.0
    %7629 = vmatmul.mubr.f32.gmra.mxu0 %v7158
    %v7630 = vpop.f32.mrf.mxu0
    %v7631 = vadd.f32 0.0, %v7630
    %v7632 = vpop.f32.mrf.mxu0
    %7633 = vmatprep.mubr.f32.mxu0 0.0
    %7634 = vmatmul.mubr.f32.gmra.mxu0 %v7161
    %v7635 = vpop.f32.mrf.mxu0
    %v7636 = vadd.f32 0.0, %v7635
    %v7637 = vpop.f32.mrf.mxu0
    %7638 = vmatprep.mubr.f32.mxu0 0.0
    %7639 = vmatmul.mubr.f32.gmra.mxu0 %v7164
    %v7640 = vpop.f32.mrf.mxu0
    %v7641 = vadd.f32 0.0, %v7640
    %v7642 = vpop.f32.mrf.mxu0
    %7643 = vmatprep.mubr.f32.mxu0 0.0
    %7644 = vmatmul.mubr.f32.gmra.mxu0 %v7167
    %v7645 = vpop.f32.mrf.mxu0
    %v7646 = vadd.f32 0.0, %v7645
    %v7647 = vpop.f32.mrf.mxu0
    %7648 = vmatprep.mubr.f32.mxu0 0.0
    %7649 = vmatmul.mubr.f32.gmra.mxu0 %v7170
    %v7650 = vpop.f32.mrf.mxu0
    %v7651 = vadd.f32 0.0, %v7650
    %v7652 = vpop.f32.mrf.mxu0
    %7653 = vmatprep.mubr.f32.mxu0 0.0
    %7654 = vmatmul.mubr.f32.gmra.mxu0 %v7173
    %v7655 = vpop.f32.mrf.mxu0
    %v7656 = vadd.f32 0.0, %v7655
    %v7657 = vpop.f32.mrf.mxu0
    %7658 = vmatprep.mubr.f32.mxu0 0.0
    %7659 = vmatmul.mubr.f32.gmra.mxu0 %v7176
    %v7660 = vpop.f32.mrf.mxu0
    %v7661 = vadd.f32 0.0, %v7660
    %v7662 = vpop.f32.mrf.mxu0
    %7663 = vmatprep.mubr.f32.mxu0 0.0
    %7664 = vmatmul.mubr.f32.gmra.mxu0 %v7179
    %v7665 = vpop.f32.mrf.mxu0
    %v7666 = vadd.f32 0.0, %v7665
    %v7667 = vpop.f32.mrf.mxu0
    %7668 = vmatprep.mubr.f32.mxu0 0.0
    %7669 = vmatmul.mubr.f32.gmra.mxu0 %v7182
    %v7670 = vpop.f32.mrf.mxu0
    %v7671 = vadd.f32 0.0, %v7670
    %v7672 = vpop.f32.mrf.mxu0
    %7673 = vmatprep.mubr.f32.mxu0 0.0
    %7674 = vmatmul.mubr.f32.gmra.mxu0 %v7185
    %v7675 = vpop.f32.mrf.mxu0
    %v7676 = vadd.f32 0.0, %v7675
    %v7677 = vpop.f32.mrf.mxu0
    %7678 = vmatprep.mubr.f32.mxu0 0.0
    %7679 = vmatmul.mubr.f32.gmra.mxu0 %v7188
    %v7680 = vpop.f32.mrf.mxu0
    %v7681 = vadd.f32 0.0, %v7680
    %v7682 = vpop.f32.mrf.mxu0
    %7683 = vmatprep.mubr.f32.mxu0 0.0
    %7684 = vmatmul.mubr.f32.gmra.mxu0 %v7191
    %v7685 = vpop.f32.mrf.mxu0
    %v7686 = vadd.f32 0.0, %v7685
    %v7687 = vpop.f32.mrf.mxu0
    %7688 = vmatprep.mubr.f32.mxu0 0.0
    %7689 = vmatmul.mubr.f32.gmra.mxu0 %v7194
    %v7690 = vpop.f32.mrf.mxu0
    %v7691 = vadd.f32 0.0, %v7690
    %v7692 = vpop.f32.mrf.mxu0
    %7693 = vmatprep.mubr.f32.mxu0 0.0
    %7694 = vmatmul.mubr.f32.gmra.mxu0 %v7197
    %v7695 = vpop.f32.mrf.mxu0
    %v7696 = vadd.f32 0.0, %v7695
    %v7697 = vpop.f32.mrf.mxu0
    %7698 = vmatprep.mubr.f32.mxu0 0.0
    %7699 = vmatmul.mubr.f32.gmra.mxu0 %v7200
    %v7700 = vpop.f32.mrf.mxu0
    %v7701 = vadd.f32 0.0, %v7700
    %v7702 = vpop.f32.mrf.mxu0
    %7703 = vmatprep.mubr.f32.mxu0 0.0
    %7704 = vmatmul.mubr.f32.gmra.mxu0 %v7203
    %v7705 = vpop.f32.mrf.mxu0
    %v7706 = vadd.f32 0.0, %v7705
    %v7707 = vpop.f32.mrf.mxu0
    %7708 = vmatprep.mubr.f32.mxu0 0.0
    %7709 = vmatmul.mubr.f32.gmra.mxu0 %v7206
    %v7710 = vpop.f32.mrf.mxu0
    %v7711 = vadd.f32 0.0, %v7710
    %v7712 = vpop.f32.mrf.mxu0
    %7713 = vmatprep.mubr.f32.mxu0 0.0
    %7714 = vmatmul.mubr.f32.gmra.mxu0 %v7209
    %v7715 = vpop.f32.mrf.mxu0
    %v7716 = vadd.f32 0.0, %v7715
    %v7717 = vpop.f32.mrf.mxu0
    %7718 = vmatprep.mubr.f32.mxu0 0.0
    %7719 = vmatmul.mubr.f32.gmra.mxu0 %v7212
    %v7720 = vpop.f32.mrf.mxu0
    %v7721 = vadd.f32 0.0, %v7720
    %v7722 = vpop.f32.mrf.mxu0
    %7723 = vmatprep.mubr.f32.mxu0 0.0
    %7724 = vmatmul.mubr.f32.gmra.mxu0 %v7215
    %v7725 = vpop.f32.mrf.mxu0
    %v7726 = vadd.f32 0.0, %v7725
    %v7727 = vpop.f32.mrf.mxu0
    %7728 = vmatprep.mubr.f32.mxu0 0.0
    %7729 = vmatmul.mubr.f32.gmra.mxu0 %v7218
    %v7730 = vpop.f32.mrf.mxu0
    %v7731 = vadd.f32 0.0, %v7730
    %v7732 = vpop.f32.mrf.mxu0
    %7733 = vmatprep.mubr.f32.mxu0 0.0
    %7734 = vmatmul.mubr.f32.gmra.mxu0 %v7221
    %v7735 = vpop.f32.mrf.mxu0
    %v7736 = vadd.f32 0.0, %v7735
    %v7737 = vpop.f32.mrf.mxu0
    %7738 = vmatprep.mubr.f32.mxu0 0.0
    %7739 = vmatmul.mubr.f32.gmra.mxu0 %v7224
    %v7740 = vpop.f32.mrf.mxu0
    %v7741 = vadd.f32 0.0, %v7740
    %v7742 = vpop.f32.mrf.mxu0
    %7743 = vmatprep.mubr.f32.mxu0 0.0
    %7744 = vmatmul.mubr.f32.gmra.mxu0 %v7227
    %v7745 = vpop.f32.mrf.mxu0
    %v7746 = vadd.f32 0.0, %v7745
    %v7747 = vpop.f32.mrf.mxu0
    %7748 = vmatprep.mubr.f32.mxu0 0.0
    %7749 = vmatmul.mubr.f32.gmra.mxu0 %v7230
    %v7750 = vpop.f32.mrf.mxu0
    %v7751 = vadd.f32 0.0, %v7750
    %v7752 = vpop.f32.mrf.mxu0
    %7753 = vmatprep.mubr.f32.mxu0 0.0
    %7754 = vmatmul.mubr.f32.gmra.mxu0 %v7233
    %v7755 = vpop.f32.mrf.mxu0
    %v7756 = vadd.f32 0.0, %v7755
    %v7757 = vpop.f32.mrf.mxu0
    %7758 = vmatprep.mubr.f32.mxu0 0.0
    %7759 = vmatmul.mubr.f32.gmra.mxu0 %v7236
    %v7760 = vpop.f32.mrf.mxu0
    %v7761 = vadd.f32 0.0, %v7760
    %v7762 = vpop.f32.mrf.mxu0
    %7763 = vmatprep.mubr.f32.mxu0 0.0
    %7764 = vmatmul.mubr.f32.gmra.mxu0 %v7239
    %v7765 = vpop.f32.mrf.mxu0
    %v7766 = vadd.f32 0.0, %v7765
    %v7767 = vpop.f32.mrf.mxu0
    %7768 = vmatprep.mubr.f32.mxu0 0.0
    %7769 = vmatmul.mubr.f32.gmra.mxu0 %v7242
    %v7770 = vpop.f32.mrf.mxu0
    %v7771 = vadd.f32 0.0, %v7770
    %v7772 = vpop.f32.mrf.mxu0
    %7773 = vmatprep.mubr.f32.mxu0 0.0
    %7774 = vmatmul.mubr.f32.gmra.mxu0 %v7245
    %v7775 = vpop.f32.mrf.mxu0
    %v7776 = vadd.f32 0.0, %v7775
    %v7777 = vpop.f32.mrf.mxu0
    %7778 = vmatprep.mubr.f32.mxu0 0.0
    %7779 = vmatmul.mubr.f32.gmra.mxu0 %v7248
    %v7780 = vpop.f32.mrf.mxu0
    %v7781 = vadd.f32 0.0, %v7780
    %v7782 = vpop.f32.mrf.mxu0
    %7783 = vmatprep.mubr.f32.mxu0 0.0
    %7784 = vmatmul.mubr.f32.gmra.mxu0 %v7251
    %v7785 = vpop.f32.mrf.mxu0
    %v7786 = vadd.f32 0.0, %v7785
    %v7787 = vpop.f32.mrf.mxu0
    %7788 = vmatprep.mubr.f32.mxu0 0.0
    %7789 = vmatmul.mubr.f32.gmra.mxu0 %v7254
    %v7790 = vpop.f32.mrf.mxu0
    %v7791 = vadd.f32 0.0, %v7790
    %v7792 = vpop.f32.mrf.mxu0
    %7793 = vmatprep.mubr.f32.mxu0 0.0
    %7794 = vmatmul.mubr.f32.gmra.mxu0 %v7257
    %v7795 = vpop.f32.mrf.mxu0
    %v7796 = vadd.f32 0.0, %v7795
    %v7797 = vpop.f32.mrf.mxu0
    %7798 = vmatprep.mubr.f32.mxu0 0.0
    %7799 = vmatmul.mubr.f32.gmra.mxu0 %v7260
    %v7800 = vpop.f32.mrf.mxu0
    %v7801 = vadd.f32 0.0, %v7800
    %v7802 = vpop.f32.mrf.mxu0
    %7803 = vmatprep.mubr.f32.mxu0 0.0
    %7804 = vmatmul.mubr.f32.gmra.mxu0 %v7263
    %v7805 = vpop.f32.mrf.mxu0
    %v7806 = vadd.f32 0.0, %v7805
    %v7807 = vpop.f32.mrf.mxu0
    %7808 = vmatprep.mubr.f32.mxu0 0.0
    %7809 = vmatmul.mubr.f32.gmra.mxu0 %v7266
    %v7810 = vpop.f32.mrf.mxu0
    %v7811 = vadd.f32 0.0, %v7810
    %v7812 = vpop.f32.mrf.mxu0
    %7813 = vmatprep.mubr.f32.mxu0 0.0
    %7814 = vmatmul.mubr.f32.gmra.mxu0 %v7269
    %v7815 = vpop.f32.mrf.mxu0
    %v7816 = vadd.f32 0.0, %v7815
    %v7817 = vpop.f32.mrf.mxu0
    %7818 = vmatprep.mubr.f32.mxu0 0.0
    %7819 = vmatmul.mubr.f32.gmra.mxu0 %v7272
    %v7820 = vpop.f32.mrf.mxu0
    %v7821 = vadd.f32 0.0, %v7820
    %v7822 = vpop.f32.mrf.mxu0
    %7823 = vmatprep.mubr.f32.mxu0 0.0
    %7824 = vmatmul.mubr.f32.gmra.mxu0 %v7275
    %v7825 = vpop.f32.mrf.mxu0
    %v7826 = vadd.f32 0.0, %v7825
    %v7827 = vpop.f32.mrf.mxu0
    %7828 = vmatprep.mubr.f32.mxu0 0.0
    %7829 = vmatmul.mubr.f32.gmra.mxu0 %v7278
    %v7830 = vpop.f32.mrf.mxu0
    %v7831 = vadd.f32 0.0, %v7830
    %v7832 = vpop.f32.mrf.mxu0
    %7833 = vmatprep.mubr.f32.mxu0 0.0
    %7834 = vmatmul.mubr.f32.gmra.mxu0 %v7281
    %v7835 = vpop.f32.mrf.mxu0
    %v7836 = vadd.f32 0.0, %v7835
    %v7837 = vpop.f32.mrf.mxu0
    %7838 = vmatprep.mubr.f32.mxu0 0.0
    %7839 = vmatmul.mubr.f32.gmra.mxu0 %v7284
    %v7840 = vpop.f32.mrf.mxu0
    %v7841 = vadd.f32 0.0, %v7840
    %v7842 = vpop.f32.mrf.mxu0
    %7843 = vmatprep.mubr.f32.mxu0 0.0
    %7844 = vmatmul.mubr.f32.gmra.mxu0 %v7287
    %v7845 = vpop.f32.mrf.mxu0
    %v7846 = vadd.f32 0.0, %v7845
    %v7847 = vpop.f32.mrf.mxu0
    %7848 = vmatprep.mubr.f32.mxu0 0.0
    %7849 = vmatmul.mubr.f32.gmra.mxu0 %v7290
    %v7850 = vpop.f32.mrf.mxu0
    %v7851 = vadd.f32 0.0, %v7850
    %v7852 = vpop.f32.mrf.mxu0
    %7853 = vmatprep.mubr.f32.mxu0 0.0
    %7854 = vmatmul.mubr.f32.gmra.mxu0 %v7293
    %v7855 = vpop.f32.mrf.mxu0
    %v7856 = vadd.f32 0.0, %v7855
    %v7857 = vpop.f32.mrf.mxu0
    %7858 = vmatprep.mubr.f32.mxu0 0.0
    %7859 = vmatmul.mubr.f32.gmra.mxu0 %v7296
    %v7860 = vpop.f32.mrf.mxu0
    %v7861 = vadd.f32 0.0, %v7860
    %v7862 = vpop.f32.mrf.mxu0
    %7863 = vmatprep.mubr.f32.mxu0 0.0
    %7864 = vmatmul.mubr.f32.gmra.mxu0 %v7299
    %v7865 = vpop.f32.mrf.mxu0
    %v7866 = vadd.f32 0.0, %v7865
    %v7867 = vpop.f32.mrf.mxu0
    %7868 = vmatprep.mubr.f32.mxu0 0.0
    %7869 = vmatmul.mubr.f32.gmra.mxu0 %v7302
    %v7870 = vpop.f32.mrf.mxu0
    %v7871 = vadd.f32 0.0, %v7870
    %v7872 = vpop.f32.mrf.mxu0
    %7873 = vmatprep.mubr.f32.mxu0 0.0
    %7874 = vmatmul.mubr.f32.gmra.mxu0 %v7305
    %v7875 = vpop.f32.mrf.mxu0
    %v7876 = vadd.f32 0.0, %v7875
    %v7877 = vpop.f32.mrf.mxu0
    %7878 = vmatprep.mubr.f32.mxu0 0.0
    %7879 = vmatmul.mubr.f32.gmra.mxu0 %v7308
    %v7880 = vpop.f32.mrf.mxu0
    %v7881 = vadd.f32 0.0, %v7880
    %v7882 = vpop.f32.mrf.mxu0
    %7883 = vmatprep.mubr.f32.mxu0 0.0
    %7884 = vmatmul.mubr.f32.gmra.mxu0 %v7311
    %v7885 = vpop.f32.mrf.mxu0
    %v7886 = vadd.f32 0.0, %v7885
    %v7887 = vpop.f32.mrf.mxu0
    %7888 = vmatprep.mubr.f32.mxu0 0.0
    %7889 = vmatmul.mubr.f32.gmra.mxu0 %v7314
    %v7890 = vpop.f32.mrf.mxu0
    %v7891 = vadd.f32 0.0, %v7890
    %v7892 = vpop.f32.mrf.mxu0
    %7893 = vmatprep.mubr.f32.mxu0 0.0
    %7894 = vmatmul.mubr.f32.gmra.mxu0 %v7317
    %v7895 = vpop.f32.mrf.mxu0
    %v7896 = vadd.f32 0.0, %v7895
    %v7897 = vpop.f32.mrf.mxu0
    %7898 = vmatprep.mubr.f32.mxu0 0.0
    %7899 = vmatmul.mubr.f32.gmra.mxu0 %v7320
    %v7900 = vpop.f32.mrf.mxu0
    %v7901 = vadd.f32 0.0, %v7900
    %v7902 = vpop.f32.mrf.mxu0
    %7903 = vmatprep.mubr.f32.mxu0 0.0
    %7904 = vmatmul.mubr.f32.gmra.mxu0 %v7323
    %v7905 = vpop.f32.mrf.mxu0
    %v7906 = vadd.f32 0.0, %v7905
    %v7907 = vpop.f32.mrf.mxu0
    %7908 = vmatprep.mubr.f32.mxu0 0.0
    %7909 = vmatmul.mubr.f32.gmra.mxu0 %v7326
    %v7910 = vpop.f32.mrf.mxu0
    %v7911 = vadd.f32 0.0, %v7910
    %v7912 = vpop.f32.mrf.mxu0
    %7913 = vmatprep.mubr.f32.mxu0 0.0
    %7914 = vmatmul.mubr.f32.gmra.mxu0 %v7329
    %v7915 = vpop.f32.mrf.mxu0
    %v7916 = vadd.f32 0.0, %v7915
    %v7917 = vpop.f32.mrf.mxu0
    %7918 = vmatprep.mubr.f32.mxu0 0.0
    %7919 = vmatmul.mubr.f32.gmra.mxu0 %v7332
    %v7920 = vpop.f32.mrf.mxu0
    %v7921 = vadd.f32 0.0, %v7920
    %v7922 = vpop.f32.mrf.mxu0
    %7923 = vmatprep.mubr.f32.mxu0 0.0
    %7924 = vmatmul.mubr.f32.gmra.mxu0 %v7335
    %v7925 = vpop.f32.mrf.mxu0
    %v7926 = vadd.f32 0.0, %v7925
    %v7927 = vpop.f32.mrf.mxu0
    %7928 = vmatprep.mubr.f32.mxu0 0.0
    %7929 = vmatmul.mubr.f32.gmra.mxu0 %v7338
    %v7930 = vpop.f32.mrf.mxu0
    %v7931 = vadd.f32 0.0, %v7930
    %v7932 = vpop.f32.mrf.mxu0
    %7933 = vmatprep.mubr.f32.mxu0 0.0
    %7934 = vmatmul.mubr.f32.gmra.mxu0 %v7341
    %v7935 = vpop.f32.mrf.mxu0
    %v7936 = vadd.f32 0.0, %v7935
    %v7937 = vpop.f32.mrf.mxu0
    %7938 = vmatprep.mubr.f32.mxu0 0.0
    %7939 = vmatmul.mubr.f32.gmra.mxu0 %v7344
    %v7940 = vpop.f32.mrf.mxu0
    %v7941 = vadd.f32 0.0, %v7940
    %v7942 = vpop.f32.mrf.mxu0
    %7943 = vmatprep.mubr.f32.mxu0 0.0
    %7944 = vmatmul.mubr.f32.gmra.mxu0 %v7347
    %v7945 = vpop.f32.mrf.mxu0
    %v7946 = vadd.f32 0.0, %v7945
    %v7947 = vpop.f32.mrf.mxu0
    %7948 = vmatprep.mubr.f32.mxu0 0.0
    %7949 = vmatmul.mubr.f32.gmra.mxu0 %v7350
    %v7950 = vpop.f32.mrf.mxu0
    %v7951 = vadd.f32 0.0, %v7950
    %v7952 = vpop.f32.mrf.mxu0
    %7953 = vmatprep.mubr.f32.mxu0 0.0
    %7954 = vmatmul.mubr.f32.gmra.mxu0 %v7353
    %v7955 = vpop.f32.mrf.mxu0
    %v7956 = vadd.f32 0.0, %v7955
    %v7957 = vpop.f32.mrf.mxu0
    %7958 = vmatprep.mubr.f32.mxu0 0.0
    %7959 = vmatmul.mubr.f32.gmra.mxu0 %v7356
    %v7960 = vpop.f32.mrf.mxu0
    %v7961 = vadd.f32 0.0, %v7960
    %v7962 = vpop.f32.mrf.mxu0
    %7963 = vmatprep.mubr.f32.mxu0 0.0
    %7964 = vmatmul.mubr.f32.gmra.mxu0 %v7359
    %v7965 = vpop.f32.mrf.mxu0
    %v7966 = vadd.f32 0.0, %v7965
    %v7967 = vpop.f32.mrf.mxu0
    %7968 = vmatprep.mubr.f32.mxu0 0.0
    %7969 = vmatmul.mubr.f32.gmra.mxu0 %v7362
    %v7970 = vpop.f32.mrf.mxu0
    %v7971 = vadd.f32 0.0, %v7970
    %v7972 = vpop.f32.mrf.mxu0
    %7973 = vmatprep.mubr.f32.mxu0 0.0
    %7974 = vmatmul.mubr.f32.gmra.mxu0 %v7365
    %v7975 = vpop.f32.mrf.mxu0
    %v7976 = vadd.f32 0.0, %v7975
    %v7977 = vpop.f32.mrf.mxu0
    %7978 = vmatprep.mubr.f32.mxu0 0.0
    %7979 = vmatmul.mubr.f32.gmra.mxu0 %v7368
    %v7980 = vpop.f32.mrf.mxu0
    %v7981 = vadd.f32 0.0, %v7980
    %v7982 = vpop.f32.mrf.mxu0
    %7983 = vmatprep.mubr.f32.mxu0 0.0
    %7984 = vmatmul.mubr.f32.gmra.mxu0 %v7371
    %v7985 = vpop.f32.mrf.mxu0
    %v7986 = vadd.f32 0.0, %v7985
    %v7987 = vpop.f32.mrf.mxu0
    %7988 = vmatprep.mubr.f32.mxu0 0.0
    %7989 = vmatmul.mubr.f32.gmra.mxu0 %v7374
    %v7990 = vpop.f32.mrf.mxu0
    %v7991 = vadd.f32 0.0, %v7990
    %v7992 = vpop.f32.mrf.mxu0
    %7993 = vmatprep.mubr.f32.mxu0 0.0
    %7994 = vmatmul.mubr.f32.gmra.mxu0 %v7377
    %v7995 = vpop.f32.mrf.mxu0
    %v7996 = vadd.f32 0.0, %v7995
    %v7997 = vpop.f32.mrf.mxu0
    %7998 = vmatprep.mubr.f32.mxu0 0.0
    %7999 = vmatmul.mubr.f32.gmra.mxu0 %v7380
    %v8000 = vpop.f32.mrf.mxu0
    %v8001 = vadd.f32 0.0, %v8000
    %v8002 = vpop.f32.mrf.mxu0
    %8003 = vmatprep.mubr.f32.mxu0 0.0
    %8004 = vmatmul.mubr.f32.gmra.mxu0 %v7383
    %v8005 = vpop.f32.mrf.mxu0
    %v8006 = vadd.f32 0.0, %v8005
    %v8007 = vpop.f32.mrf.mxu0
    %8008 = vmatprep.mubr.f32.mxu0 0.0
    %8009 = vmatmul.mubr.f32.gmra.mxu0 %v7386
    %v8010 = vpop.f32.mrf.mxu0
    %v8011 = vadd.f32 0.0, %v8010
    %v8012 = vpop.f32.mrf.mxu0
    %8013 = vmatprep.mubr.f32.mxu0 0.0
    %8014 = vmatmul.mubr.f32.gmra.mxu0 %v7389
    %v8015 = vpop.f32.mrf.mxu0
    %v8016 = vadd.f32 0.0, %v8015
    %v8017 = vpop.f32.mrf.mxu0
    %8018 = vmatprep.mubr.f32.mxu0 0.0
    %8019 = vmatmul.mubr.f32.gmra.mxu0 %v7392
    %v8020 = vpop.f32.mrf.mxu0
    %v8021 = vadd.f32 0.0, %v8020
    %v8022 = vpop.f32.mrf.mxu0
    %8023 = vmatprep.mubr.f32.mxu0 0.0
    %8024 = vmatmul.mubr.f32.gmra.mxu0 %v7395
    %v8025 = vpop.f32.mrf.mxu0
    %v8026 = vadd.f32 0.0, %v8025
    %v8027 = vpop.f32.mrf.mxu0
    %8028 = vmatprep.mubr.f32.mxu0 0.0
    %8029 = vmatmul.mubr.f32.gmra.mxu0 %v7398
    %v8030 = vpop.f32.mrf.mxu0
    %v8031 = vadd.f32 0.0, %v8030
    %v8032 = vpop.f32.mrf.mxu0
    %8033 = vmatprep.mubr.f32.mxu0 0.0
    %8034 = vmatmul.mubr.f32.gmra.mxu0 %v7401
    %v8035 = vpop.f32.mrf.mxu0
    %v8036 = vadd.f32 0.0, %v8035
    %v8037 = vpop.f32.mrf.mxu0
    %8038 = vmatprep.mubr.f32.mxu0 0.0
    %8039 = vmatmul.mubr.f32.gmra.mxu0 %v7404
    %v8040 = vpop.f32.mrf.mxu0
    %v8041 = vadd.f32 0.0, %v8040
    %v8042 = vpop.f32.mrf.mxu0
    %8043 = vmatprep.mubr.f32.mxu0 0.0
    %8044 = vmatmul.mubr.f32.gmra.mxu0 %v7407
    %v8045 = vpop.f32.mrf.mxu0
    %v8046 = vadd.f32 0.0, %v8045
    %v8047 = vpop.f32.mrf.mxu0
    %8048 = vmatprep.mubr.f32.mxu0 0.0
    %8049 = vmatmul.mubr.f32.gmra.mxu0 %v7410
    %v8050 = vpop.f32.mrf.mxu0
    %v8051 = vadd.f32 0.0, %v8050
    %v8052 = vpop.f32.mrf.mxu0
    %8053 = vmatprep.mubr.f32.mxu0 0.0
    %8054 = vmatmul.mubr.f32.gmra.mxu0 %v7413
    %v8055 = vpop.f32.mrf.mxu0
    %v8056 = vadd.f32 0.0, %v8055
    %v8057 = vpop.f32.mrf.mxu0
    %8058 = vmatprep.mubr.f32.mxu0 0.0
    %8059 = vmatmul.mubr.f32.gmra.mxu0 %v7416
    %v8060 = vpop.f32.mrf.mxu0
    %v8061 = vadd.f32 0.0, %v8060
    %v8062 = vpop.f32.mrf.mxu0
    %8063 = vmatprep.mubr.f32.mxu0 0.0
    %8064 = vmatmul.mubr.f32.gmra.mxu0 %v7419
    %v8065 = vpop.f32.mrf.mxu0
    %v8066 = vadd.f32 0.0, %v8065
    %v8067 = vpop.f32.mrf.mxu0
    %8068 = vmatprep.mubr.f32.mxu0 0.0
    %8069 = vmatmul.mubr.f32.gmra.mxu0 %v7422
    %v8070 = vpop.f32.mrf.mxu0
    %v8071 = vadd.f32 0.0, %v8070
    %v8072 = vpop.f32.mrf.mxu0
    %8073 = vmatprep.mubr.f32.mxu0 0.0
    %8074 = vmatmul.mubr.f32.gmra.mxu0 %v7425
    %v8075 = vpop.f32.mrf.mxu0
    %v8076 = vadd.f32 0.0, %v8075
    %v8077 = vpop.f32.mrf.mxu0
    %8078 = vmatprep.mubr.f32.mxu0 0.0
    %8079 = vmatmul.mubr.f32.gmra.mxu0 %v7428
    %v8080 = vpop.f32.mrf.mxu0
    %v8081 = vadd.f32 0.0, %v8080
    %v8082 = vpop.f32.mrf.mxu0
    %8083 = vmatprep.mubr.f32.mxu0 0.0
    %8084 = vmatmul.mubr.f32.gmra.mxu0 %v7431
    %v8085 = vpop.f32.mrf.mxu0
    %v8086 = vadd.f32 0.0, %v8085
    %v8087 = vpop.f32.mrf.mxu0
    %8088 = vmatprep.mubr.f32.mxu0 0.0
    %8089 = vmatmul.mubr.f32.gmra.mxu0 %v7434
    %v8090 = vpop.f32.mrf.mxu0
    %v8091 = vadd.f32 0.0, %v8090
    %v8092 = vpop.f32.mrf.mxu0
    %8093 = vmatprep.mubr.f32.mxu0 0.0
    %8094 = vmatmul.mubr.f32.gmra.mxu0 %v7437
    %v8095 = vpop.f32.mrf.mxu0
    %v8096 = vadd.f32 0.0, %v8095
    %v8097 = vpop.f32.mrf.mxu0
    %8098 = vmatprep.mubr.f32.mxu0 0.0
    %8099 = vmatmul.mubr.f32.gmra.mxu0 %v7440
    %v8100 = vpop.f32.mrf.mxu0
    %v8101 = vadd.f32 0.0, %v8100
    %v8102 = vpop.f32.mrf.mxu0
    %8103 = vmatprep.mubr.f32.mxu0 0.0
    %8104 = vmatmul.mubr.f32.gmra.mxu0 %v7443
    %v8105 = vpop.f32.mrf.mxu0
    %v8106 = vadd.f32 0.0, %v8105
    %v8107 = vpop.f32.mrf.mxu0
    %8108 = vmatprep.mubr.f32.mxu0 0.0
    %8109 = vmatmul.mubr.f32.gmra.mxu0 %v7446
    %v8110 = vpop.f32.mrf.mxu0
    %v8111 = vadd.f32 0.0, %v8110
    %v8112 = vpop.f32.mrf.mxu0
    %8113 = vmatprep.mubr.f32.mxu0 0.0
    %8114 = vmatmul.mubr.f32.gmra.mxu0 %v7449
    %v8115 = vpop.f32.mrf.mxu0
    %v8116 = vadd.f32 0.0, %v8115
    %v8117 = vpop.f32.mrf.mxu0
    %8118 = vmatprep.mubr.f32.mxu0 0.0
    %8119 = vmatmul.mubr.f32.gmra.mxu0 %v7452
    %v8120 = vpop.f32.mrf.mxu0
    %v8121 = vadd.f32 0.0, %v8120
    %v8122 = vpop.f32.mrf.mxu0
    %8123 = vmatprep.mubr.f32.mxu0 0.0
    %8124 = vmatmul.mubr.f32.gmra.mxu0 %v7455
    %v8125 = vpop.f32.mrf.mxu0
    %v8126 = vadd.f32 0.0, %v8125
    %v8127 = vpop.f32.mrf.mxu0
    %8128 = vmatprep.mubr.f32.mxu0 0.0
    %8129 = vmatmul.mubr.f32.gmra.mxu0 %v7458
    %v8130 = vpop.f32.mrf.mxu0
    %v8131 = vadd.f32 0.0, %v8130
    %v8132 = vpop.f32.mrf.mxu0
    %8133 = vmatprep.mubr.f32.mxu0 0.0
    %8134 = vmatmul.mubr.f32.gmra.mxu0 %v7461
    %v8135 = vpop.f32.mrf.mxu0
    %v8136 = vadd.f32 0.0, %v8135
    %v8137 = vpop.f32.mrf.mxu0
    %8138 = vmatprep.mubr.f32.mxu0 0.0
    %8139 = vmatmul.mubr.f32.gmra.mxu0 %v7464
    %v8140 = vpop.f32.mrf.mxu0
    %v8141 = vadd.f32 0.0, %v8140
    %v8142 = vpop.f32.mrf.mxu0
    %8143 = vmatprep.mubr.f32.mxu0 0.0
    %8144 = vmatmul.mubr.f32.gmra.mxu0 %v7467
    %v8145 = vpop.f32.mrf.mxu0
    %v8146 = vadd.f32 0.0, %v8145
    %v8147 = vpop.f32.mrf.mxu0
    %8148 = vmatprep.mubr.f32.mxu0 0.0
    %8149 = vmatmul.mubr.f32.gmra.mxu0 %v7470
    %v8150 = vpop.f32.mrf.mxu0
    %v8151 = vadd.f32 0.0, %v8150
    %v8152 = vpop.f32.mrf.mxu0
    %8153 = vmatprep.mubr.f32.mxu0 0.0
    %8154 = vmatmul.mubr.f32.gmra.mxu0 %v7473
    %v8155 = vpop.f32.mrf.mxu0
    %v8156 = vadd.f32 0.0, %v8155
    %v8157 = vpop.f32.mrf.mxu0
    %8158 = vmatprep.mubr.f32.mxu0 0.0
    %8159 = vmatmul.mubr.f32.gmra.mxu0 %v7476
    %v8160 = vpop.f32.mrf.mxu0
    %v8161 = vadd.f32 0.0, %v8160
    %v8162 = vpop.f32.mrf.mxu0
    %8163 = vmatprep.mubr.f32.mxu0 0.0
    %8164 = vmatmul.mubr.f32.gmra.mxu0 %v7479
    %v8165 = vpop.f32.mrf.mxu0
    %v8166 = vadd.f32 0.0, %v8165
    %v8167 = vpop.f32.mrf.mxu0
    %8168 = vmatprep.mubr.f32.mxu0 0.0
    %8169 = vmatmul.mubr.f32.gmra.mxu0 %v7482
    %v8170 = vpop.f32.mrf.mxu0
    %v8171 = vadd.f32 0.0, %v8170
    %v8172 = vpop.f32.mrf.mxu0
    %8173 = vmatprep.mubr.f32.mxu0 0.0
    %8174 = vmatmul.mubr.f32.gmra.mxu0 %v7485
    %v8175 = vpop.f32.mrf.mxu0
    %v8176 = vadd.f32 0.0, %v8175
    %v8177 = vpop.f32.mrf.mxu0
    %8178 = vmatprep.mubr.f32.mxu0 0.0
    %8179 = vmatmul.mubr.f32.gmra.mxu0 %v7488
    %v8180 = vpop.f32.mrf.mxu0
    %v8181 = vadd.f32 0.0, %v8180
    %v8182 = vpop.f32.mrf.mxu0
    %8183 = vmatprep.mubr.f32.mxu0 0.0
    %8184 = vmatmul.mubr.f32.gmra.mxu0 %v7491
    %v8185 = vpop.f32.mrf.mxu0
    %v8186 = vadd.f32 0.0, %v8185
    %v8187 = vpop.f32.mrf.mxu0
    %8188 = vmatprep.mubr.f32.mxu0 0.0
    %8189 = vmatmul.mubr.f32.gmra.mxu0 %v7494
    %v8190 = vpop.f32.mrf.mxu0
    %v8191 = vadd.f32 0.0, %v8190
    %v8192 = vpop.f32.mrf.mxu0
    %8193 = vmatprep.mubr.f32.mxu0 0.0
    %8194 = vmatmul.mubr.f32.gmra.mxu0 %v7497
    %v8195 = vpop.f32.mrf.mxu0
    %v8196 = vadd.f32 0.0, %v8195
    %v8197 = vpop.f32.mrf.mxu0
    %8198 = vmatprep.mubr.f32.mxu0 0.0
    %8199 = vmatmul.mubr.f32.gmra.mxu0 %v7500
    %v8200 = vpop.f32.mrf.mxu0
    %v8201 = vadd.f32 0.0, %v8200
    %v8202 = vpop.f32.mrf.mxu0
    %8203 = vmatprep.mubr.f32.mxu0 0.0
    %8204 = vmatmul.mubr.f32.gmra.mxu0 %v7503
    %v8205 = vpop.f32.mrf.mxu0
    %v8206 = vadd.f32 0.0, %v8205
    %v8207 = vpop.f32.mrf.mxu0
    %8208 = vmatprep.mubr.f32.mxu0 0.0
    %8209 = vmatmul.mubr.f32.gmra.mxu0 %v7506
    %v8210 = vpop.f32.mrf.mxu0
    %v8211 = vadd.f32 0.0, %v8210
    %v8212 = vpop.f32.mrf.mxu0
    %8213 = vmatprep.mubr.f32.mxu0 0.0
    %8214 = vmatmul.mubr.f32.gmra.mxu0 %v7509
    %v8215 = vpop.f32.mrf.mxu0
    %v8216 = vadd.f32 0.0, %v8215
    %v8217 = vpop.f32.mrf.mxu0
    %8218 = vdwg.mxu0
    %v8219 = vadd.f32 %v6869, %v7581
    %v8220 = vadd.f32 %v6870, %v7586
    %v8221 = vadd.f32 %v6871, %v7591
    %v8222 = vadd.f32 %v6872, %v7596
    %v8223 = vadd.f32 %v6873, %v7601
    %v8224 = vadd.f32 %v6874, %v7606
    %v8225 = vadd.f32 %v6875, %v7611
    %v8226 = vadd.f32 %v6876, %v7616
    %v8227 = vadd.f32 %v6877, %v7621
    %v8228 = vadd.f32 %v6878, %v7626
    %v8229 = vadd.f32 %v6879, %v7631
    %v8230 = vadd.f32 %v6880, %v7636
    %v8231 = vadd.f32 %v6881, %v7641
    %v8232 = vadd.f32 %v6882, %v7646
    %v8233 = vadd.f32 %v6883, %v7651
    %v8234 = vadd.f32 %v6884, %v7656
    %v8235 = vadd.f32 %v6885, %v7661
    %v8236 = vadd.f32 %v6886, %v7666
    %v8237 = vadd.f32 %v6887, %v7671
    %v8238 = vadd.f32 %v6888, %v7676
    %v8239 = vadd.f32 %v6889, %v7681
    %v8240 = vadd.f32 %v6890, %v7686
    %v8241 = vadd.f32 %v6891, %v7691
    %v8242 = vadd.f32 %v6892, %v7696
    %v8243 = vadd.f32 %v6893, %v7701
    %v8244 = vadd.f32 %v6894, %v7706
    %v8245 = vadd.f32 %v6895, %v7711
    %v8246 = vadd.f32 %v6896, %v7716
    %v8247 = vadd.f32 %v6897, %v7721
    %v8248 = vadd.f32 %v6898, %v7726
    %v8249 = vadd.f32 %v6899, %v7731
    %v8250 = vadd.f32 %v6900, %v7736
    %v8251 = vadd.f32 %v6901, %v7741
    %v8252 = vadd.f32 %v6902, %v7746
    %v8253 = vadd.f32 %v6903, %v7751
    %v8254 = vadd.f32 %v6904, %v7756
    %v8255 = vadd.f32 %v6905, %v7761
    %v8256 = vadd.f32 %v6906, %v7766
    %v8257 = vadd.f32 %v6907, %v7771
    %v8258 = vadd.f32 %v6908, %v7776
    %v8259 = vadd.f32 %v6909, %v7781
    %v8260 = vadd.f32 %v6910, %v7786
    %v8261 = vadd.f32 %v6911, %v7791
    %v8262 = vadd.f32 %v6912, %v7796
    %v8263 = vadd.f32 %v6913, %v7801
    %v8264 = vadd.f32 %v6914, %v7806
    %v8265 = vadd.f32 %v6915, %v7811
    %v8266 = vadd.f32 %v6916, %v7816
    %v8267 = vadd.f32 %v6917, %v7821
    %v8268 = vadd.f32 %v6918, %v7826
    %v8269 = vadd.f32 %v6919, %v7831
    %v8270 = vadd.f32 %v6920, %v7836
    %v8271 = vadd.f32 %v6921, %v7841
    %v8272 = vadd.f32 %v6922, %v7846
    %v8273 = vadd.f32 %v6923, %v7851
    %v8274 = vadd.f32 %v6924, %v7856
    %v8275 = vadd.f32 %v6925, %v7861
    %v8276 = vadd.f32 %v6926, %v7866
    %v8277 = vadd.f32 %v6927, %v7871
    %v8278 = vadd.f32 %v6928, %v7876
    %v8279 = vadd.f32 %v6929, %v7881
    %v8280 = vadd.f32 %v6930, %v7886
    %v8281 = vadd.f32 %v6931, %v7891
    %v8282 = vadd.f32 %v6932, %v7896
    %v8283 = vadd.f32 %v6933, %v7901
    %v8284 = vadd.f32 %v6934, %v7906
    %v8285 = vadd.f32 %v6935, %v7911
    %v8286 = vadd.f32 %v6936, %v7916
    %v8287 = vadd.f32 %v6937, %v7921
    %v8288 = vadd.f32 %v6938, %v7926
    %v8289 = vadd.f32 %v6939, %v7931
    %v8290 = vadd.f32 %v6940, %v7936
    %v8291 = vadd.f32 %v6941, %v7941
    %v8292 = vadd.f32 %v6942, %v7946
    %v8293 = vadd.f32 %v6943, %v7951
    %v8294 = vadd.f32 %v6944, %v7956
    %v8295 = vadd.f32 %v6945, %v7961
    %v8296 = vadd.f32 %v6946, %v7966
    %v8297 = vadd.f32 %v6947, %v7971
    %v8298 = vadd.f32 %v6948, %v7976
    %v8299 = vadd.f32 %v6949, %v7981
    %v8300 = vadd.f32 %v6950, %v7986
    %v8301 = vadd.f32 %v6951, %v7991
    %v8302 = vadd.f32 %v6952, %v7996
    %v8303 = vadd.f32 %v6953, %v8001
    %v8304 = vadd.f32 %v6954, %v8006
    %v8305 = vadd.f32 %v6955, %v8011
    %v8306 = vadd.f32 %v6956, %v8016
    %v8307 = vadd.f32 %v6957, %v8021
    %v8308 = vadd.f32 %v6958, %v8026
    %v8309 = vadd.f32 %v6959, %v8031
    %v8310 = vadd.f32 %v6960, %v8036
    %v8311 = vadd.f32 %v6961, %v8041
    %v8312 = vadd.f32 %v6962, %v8046
    %v8313 = vadd.f32 %v6963, %v8051
    %v8314 = vadd.f32 %v6964, %v8056
    %v8315 = vadd.f32 %v6965, %v8061
    %v8316 = vadd.f32 %v6966, %v8066
    %v8317 = vadd.f32 %v6967, %v8071
    %v8318 = vadd.f32 %v6968, %v8076
    %v8319 = vadd.f32 %v6969, %v8081
    %v8320 = vadd.f32 %v6970, %v8086
    %v8321 = vadd.f32 %v6971, %v8091
    %v8322 = vadd.f32 %v6972, %v8096
    %v8323 = vadd.f32 %v6973, %v8101
    %v8324 = vadd.f32 %v6974, %v8106
    %v8325 = vadd.f32 %v6975, %v8111
    %v8326 = vadd.f32 %v6976, %v8116
    %v8327 = vadd.f32 %v6977, %v8121
    %v8328 = vadd.f32 %v6978, %v8126
    %v8329 = vadd.f32 %v6979, %v8131
    %v8330 = vadd.f32 %v6980, %v8136
    %v8331 = vadd.f32 %v6981, %v8141
    %v8332 = vadd.f32 %v6982, %v8146
    %v8333 = vadd.f32 %v6983, %v8151
    %v8334 = vadd.f32 %v6984, %v8156
    %v8335 = vadd.f32 %v6985, %v8161
    %v8336 = vadd.f32 %v6986, %v8166
    %v8337 = vadd.f32 %v6987, %v8171
    %v8338 = vadd.f32 %v6988, %v8176
    %v8339 = vadd.f32 %v6989, %v8181
    %v8340 = vadd.f32 %v6990, %v8186
    %v8341 = vadd.f32 %v6991, %v8191
    %v8342 = vadd.f32 %v6992, %v8196
    %v8343 = vadd.f32 %v6993, %v8201
    %v8344 = vadd.f32 %v6994, %v8206
    %v8345 = vadd.f32 %v6995, %v8211
    %v8346 = vadd.f32 %v6996, %v8216
    %s8347 = scalar_lea.vmem [#allocation2], 48
    %v8348 = vld [vmem:[%s8347] sm:$0xff]
    %v8349 = vld [vmem:[%s8347 + $0x8] sm:$0xff]
    %v8350 = vld [vmem:[%s8347 + $0x18] sm:$0xff]
    %v8351 = vld [vmem:[%s8347 + $0x20] sm:$0xff]
    %v8352 = vld [vmem:[%s8347 + $0x30] sm:$0xff]
    %v8353 = vld [vmem:[%s8347 + $0x38] sm:$0xff]
    %v8354 = vld [vmem:[%s8347 + $0x48] sm:$0xff]
    %v8355 = vld [vmem:[%s8347 + $0x50] sm:$0xff]
    %v8356 = vld [vmem:[%s8347 + $0x60] sm:$0xff]
    %v8357 = vld [vmem:[%s8347 + $0x68] sm:$0xff]
    %v8358 = vld [vmem:[%s8347 + $0x78] sm:$0xff]
    %v8359 = vld [vmem:[%s8347 + $0x80] sm:$0xff]
    %v8360 = vld [vmem:[%s8347 + $0x90] sm:$0xff]
    %v8361 = vld [vmem:[%s8347 + $0x98] sm:$0xff]
    %v8362 = vld [vmem:[%s8347 + $0xa8] sm:$0xff]
    %v8363 = vld [vmem:[%s8347 + $0xb0] sm:$0xff]
    %v8364 = vld [vmem:[%s8347 + $0xc0] sm:$0xff]
    %v8365 = vld [vmem:[%s8347 + $0xc8] sm:$0xff]
    %v8366 = vld [vmem:[%s8347 + $0xd8] sm:$0xff]
    %v8367 = vld [vmem:[%s8347 + $0xe0] sm:$0xff]
    %v8368 = vld [vmem:[%s8347 + $0xf0] sm:$0xff]
    %v8369 = vld [vmem:[%s8347 + $0xf8] sm:$0xff]
    %v8370 = vld [vmem:[%s8347 + $0x108] sm:$0xff]
    %v8371 = vld [vmem:[%s8347 + $0x110] sm:$0xff]
    %v8372 = vld [vmem:[%s8347 + $0x120] sm:$0xff]
    %v8373 = vld [vmem:[%s8347 + $0x128] sm:$0xff]
    %v8374 = vld [vmem:[%s8347 + $0x138] sm:$0xff]
    %v8375 = vld [vmem:[%s8347 + $0x140] sm:$0xff]
    %v8376 = vld [vmem:[%s8347 + $0x150] sm:$0xff]
    %v8377 = vld [vmem:[%s8347 + $0x158] sm:$0xff]
    %v8378 = vld [vmem:[%s8347 + $0x168] sm:$0xff]
    %v8379 = vld [vmem:[%s8347 + $0x170] sm:$0xff]
    %v8380 = vld [vmem:[%s8347 + $0x1b0] sm:$0xff]
    %v8381 = vld [vmem:[%s8347 + $0x1b8] sm:$0xff]
    %v8382 = vld [vmem:[%s8347 + $0x1c8] sm:$0xff]
    %v8383 = vld [vmem:[%s8347 + $0x1d0] sm:$0xff]
    %v8384 = vld [vmem:[%s8347 + $0x1e0] sm:$0xff]
    %v8385 = vld [vmem:[%s8347 + $0x1e8] sm:$0xff]
    %v8386 = vld [vmem:[%s8347 + $0x1f8] sm:$0xff]
    %v8387 = vld [vmem:[%s8347 + $0x200] sm:$0xff]
    %v8388 = vld [vmem:[%s8347 + $0x210] sm:$0xff]
    %v8389 = vld [vmem:[%s8347 + $0x218] sm:$0xff]
    %v8390 = vld [vmem:[%s8347 + $0x228] sm:$0xff]
    %v8391 = vld [vmem:[%s8347 + $0x230] sm:$0xff]
    %v8392 = vld [vmem:[%s8347 + $0x240] sm:$0xff]
    %v8393 = vld [vmem:[%s8347 + $0x248] sm:$0xff]
    %v8394 = vld [vmem:[%s8347 + $0x258] sm:$0xff]
    %v8395 = vld [vmem:[%s8347 + $0x260] sm:$0xff]
    %v8396 = vld [vmem:[%s8347 + $0x270] sm:$0xff]
    %v8397 = vld [vmem:[%s8347 + $0x278] sm:$0xff]
    %v8398 = vld [vmem:[%s8347 + $0x288] sm:$0xff]
    %v8399 = vld [vmem:[%s8347 + $0x290] sm:$0xff]
    %v8400 = vld [vmem:[%s8347 + $0x2a0] sm:$0xff]
    %v8401 = vld [vmem:[%s8347 + $0x2a8] sm:$0xff]
    %v8402 = vld [vmem:[%s8347 + $0x2b8] sm:$0xff]
    %v8403 = vld [vmem:[%s8347 + $0x2c0] sm:$0xff]
    %v8404 = vld [vmem:[%s8347 + $0x2d0] sm:$0xff]
    %v8405 = vld [vmem:[%s8347 + $0x2d8] sm:$0xff]
    %v8406 = vld [vmem:[%s8347 + $0x2e8] sm:$0xff]
    %v8407 = vld [vmem:[%s8347 + $0x2f0] sm:$0xff]
    %v8408 = vld [vmem:[%s8347 + $0x300] sm:$0xff]
    %v8409 = vld [vmem:[%s8347 + $0x308] sm:$0xff]
    %v8410 = vld [vmem:[%s8347 + $0x318] sm:$0xff]
    %v8411 = vld [vmem:[%s8347 + $0x320] sm:$0xff]
    %v8412 = vld [vmem:[%s8347 + $0x360] sm:$0xff]
    %v8413 = vld [vmem:[%s8347 + $0x368] sm:$0xff]
    %v8414 = vld [vmem:[%s8347 + $0x378] sm:$0xff]
    %v8415 = vld [vmem:[%s8347 + $0x380] sm:$0xff]
    %v8416 = vld [vmem:[%s8347 + $0x390] sm:$0xff]
    %v8417 = vld [vmem:[%s8347 + $0x398] sm:$0xff]
    %v8418 = vld [vmem:[%s8347 + $0x3a8] sm:$0xff]
    %v8419 = vld [vmem:[%s8347 + $0x3b0] sm:$0xff]
    %v8420 = vld [vmem:[%s8347 + $0x3c0] sm:$0xff]
    %v8421 = vld [vmem:[%s8347 + $0x3c8] sm:$0xff]
    %v8422 = vld [vmem:[%s8347 + $0x3d8] sm:$0xff]
    %v8423 = vld [vmem:[%s8347 + $0x3e0] sm:$0xff]
    %v8424 = vld [vmem:[%s8347 + $0x3f0] sm:$0xff]
    %v8425 = vld [vmem:[%s8347 + $0x3f8] sm:$0xff]
    %v8426 = vld [vmem:[%s8347 + $0x408] sm:$0xff]
    %v8427 = vld [vmem:[%s8347 + $0x410] sm:$0xff]
    %v8428 = vld [vmem:[%s8347 + $0x420] sm:$0xff]
    %v8429 = vld [vmem:[%s8347 + $0x428] sm:$0xff]
    %v8430 = vld [vmem:[%s8347 + $0x438] sm:$0xff]
    %v8431 = vld [vmem:[%s8347 + $0x440] sm:$0xff]
    %v8432 = vld [vmem:[%s8347 + $0x450] sm:$0xff]
    %v8433 = vld [vmem:[%s8347 + $0x458] sm:$0xff]
    %v8434 = vld [vmem:[%s8347 + $0x468] sm:$0xff]
    %v8435 = vld [vmem:[%s8347 + $0x470] sm:$0xff]
    %v8436 = vld [vmem:[%s8347 + $0x480] sm:$0xff]
    %v8437 = vld [vmem:[%s8347 + $0x488] sm:$0xff]
    %v8438 = vld [vmem:[%s8347 + $0x498] sm:$0xff]
    %v8439 = vld [vmem:[%s8347 + $0x4a0] sm:$0xff]
    %v8440 = vld [vmem:[%s8347 + $0x4b0] sm:$0xff]
    %v8441 = vld [vmem:[%s8347 + $0x4b8] sm:$0xff]
    %v8442 = vld [vmem:[%s8347 + $0x4c8] sm:$0xff]
    %v8443 = vld [vmem:[%s8347 + $0x4d0] sm:$0xff]
    %v8444 = vld [vmem:[%s8347 + $0x510] sm:$0xff]
    %v8445 = vld [vmem:[%s8347 + $0x518] sm:$0xff]
    %v8446 = vld [vmem:[%s8347 + $0x528] sm:$0xff]
    %v8447 = vld [vmem:[%s8347 + $0x530] sm:$0xff]
    %v8448 = vld [vmem:[%s8347 + $0x540] sm:$0xff]
    %v8449 = vld [vmem:[%s8347 + $0x548] sm:$0xff]
    %v8450 = vld [vmem:[%s8347 + $0x558] sm:$0xff]
    %v8451 = vld [vmem:[%s8347 + $0x560] sm:$0xff]
    %v8452 = vld [vmem:[%s8347 + $0x570] sm:$0xff]
    %v8453 = vld [vmem:[%s8347 + $0x578] sm:$0xff]
    %v8454 = vld [vmem:[%s8347 + $0x588] sm:$0xff]
    %v8455 = vld [vmem:[%s8347 + $0x590] sm:$0xff]
    %v8456 = vld [vmem:[%s8347 + $0x5a0] sm:$0xff]
    %v8457 = vld [vmem:[%s8347 + $0x5a8] sm:$0xff]
    %v8458 = vld [vmem:[%s8347 + $0x5b8] sm:$0xff]
    %v8459 = vld [vmem:[%s8347 + $0x5c0] sm:$0xff]
    %v8460 = vld [vmem:[%s8347 + $0x5d0] sm:$0xff]
    %v8461 = vld [vmem:[%s8347 + $0x5d8] sm:$0xff]
    %v8462 = vld [vmem:[%s8347 + $0x5e8] sm:$0xff]
    %v8463 = vld [vmem:[%s8347 + $0x5f0] sm:$0xff]
    %v8464 = vld [vmem:[%s8347 + $0x600] sm:$0xff]
    %v8465 = vld [vmem:[%s8347 + $0x608] sm:$0xff]
    %v8466 = vld [vmem:[%s8347 + $0x618] sm:$0xff]
    %v8467 = vld [vmem:[%s8347 + $0x620] sm:$0xff]
    %v8468 = vld [vmem:[%s8347 + $0x630] sm:$0xff]
    %v8469 = vld [vmem:[%s8347 + $0x638] sm:$0xff]
    %v8470 = vld [vmem:[%s8347 + $0x648] sm:$0xff]
    %v8471 = vld [vmem:[%s8347 + $0x650] sm:$0xff]
    %v8472 = vld [vmem:[%s8347 + $0x660] sm:$0xff]
    %v8473 = vld [vmem:[%s8347 + $0x668] sm:$0xff]
    %v8474 = vld [vmem:[%s8347 + $0x678] sm:$0xff]
    %v8475 = vld [vmem:[%s8347 + $0x680] sm:$0xff]
    %s8476 = scalar_lea.vmem %s2, 24
    %v8477 = vld [vmem:[%s8476] sm:$0xf]
    %v8479 = vsel %vm27, %v8348, 0
    %v8482 = vsel %vm27, %v8349, 0
    %v8485 = vsel %vm27, %v8350, 0
    %v8488 = vsel %vm27, %v8351, 0
    %v8491 = vsel %vm27, %v8352, 0
    %v8494 = vsel %vm27, %v8353, 0
    %v8497 = vsel %vm27, %v8354, 0
    %v8500 = vsel %vm27, %v8355, 0
    %v8503 = vsel %vm27, %v8356, 0
    %v8506 = vsel %vm27, %v8357, 0
    %v8509 = vsel %vm27, %v8358, 0
    %v8512 = vsel %vm27, %v8359, 0
    %v8515 = vsel %vm27, %v8360, 0
    %v8518 = vsel %vm27, %v8361, 0
    %v8521 = vsel %vm27, %v8362, 0
    %v8524 = vsel %vm27, %v8363, 0
    %v8527 = vsel %vm27, %v8364, 0
    %v8530 = vsel %vm27, %v8365, 0
    %v8533 = vsel %vm27, %v8366, 0
    %v8536 = vsel %vm27, %v8367, 0
    %v8539 = vsel %vm27, %v8368, 0
    %v8542 = vsel %vm27, %v8369, 0
    %v8545 = vsel %vm27, %v8370, 0
    %v8548 = vsel %vm27, %v8371, 0
    %v8551 = vsel %vm27, %v8372, 0
    %v8554 = vsel %vm27, %v8373, 0
    %v8557 = vsel %vm27, %v8374, 0
    %v8560 = vsel %vm27, %v8375, 0
    %v8563 = vsel %vm27, %v8376, 0
    %v8566 = vsel %vm27, %v8377, 0
    %v8569 = vsel %vm27, %v8378, 0
    %v8572 = vsel %vm27, %v8379, 0
    %v8575 = vsel %vm27, %v8380, 0
    %v8578 = vsel %vm27, %v8381, 0
    %v8581 = vsel %vm27, %v8382, 0
    %v8584 = vsel %vm27, %v8383, 0
    %v8587 = vsel %vm27, %v8384, 0
    %v8590 = vsel %vm27, %v8385, 0
    %v8593 = vsel %vm27, %v8386, 0
    %v8596 = vsel %vm27, %v8387, 0
    %v8599 = vsel %vm27, %v8388, 0
    %v8602 = vsel %vm27, %v8389, 0
    %v8605 = vsel %vm27, %v8390, 0
    %v8608 = vsel %vm27, %v8391, 0
    %v8611 = vsel %vm27, %v8392, 0
    %v8614 = vsel %vm27, %v8393, 0
    %v8617 = vsel %vm27, %v8394, 0
    %v8620 = vsel %vm27, %v8395, 0
    %v8623 = vsel %vm27, %v8396, 0
    %v8626 = vsel %vm27, %v8397, 0
    %v8629 = vsel %vm27, %v8398, 0
    %v8632 = vsel %vm27, %v8399, 0
    %v8635 = vsel %vm27, %v8400, 0
    %v8638 = vsel %vm27, %v8401, 0
    %v8641 = vsel %vm27, %v8402, 0
    %v8644 = vsel %vm27, %v8403, 0
    %v8647 = vsel %vm27, %v8404, 0
    %v8650 = vsel %vm27, %v8405, 0
    %v8653 = vsel %vm27, %v8406, 0
    %v8656 = vsel %vm27, %v8407, 0
    %v8659 = vsel %vm27, %v8408, 0
    %v8662 = vsel %vm27, %v8409, 0
    %v8665 = vsel %vm27, %v8410, 0
    %v8668 = vsel %vm27, %v8411, 0
    %v8671 = vsel %vm27, %v8412, 0
    %v8674 = vsel %vm27, %v8413, 0
    %v8677 = vsel %vm27, %v8414, 0
    %v8680 = vsel %vm27, %v8415, 0
    %v8683 = vsel %vm27, %v8416, 0
    %v8686 = vsel %vm27, %v8417, 0
    %v8689 = vsel %vm27, %v8418, 0
    %v8692 = vsel %vm27, %v8419, 0
    %v8695 = vsel %vm27, %v8420, 0
    %v8698 = vsel %vm27, %v8421, 0
    %v8701 = vsel %vm27, %v8422, 0
    %v8704 = vsel %vm27, %v8423, 0
    %v8707 = vsel %vm27, %v8424, 0
    %v8710 = vsel %vm27, %v8425, 0
    %v8713 = vsel %vm27, %v8426, 0
    %v8716 = vsel %vm27, %v8427, 0
    %v8719 = vsel %vm27, %v8428, 0
    %v8722 = vsel %vm27, %v8429, 0
    %v8725 = vsel %vm27, %v8430, 0
    %v8728 = vsel %vm27, %v8431, 0
    %v8731 = vsel %vm27, %v8432, 0
    %v8734 = vsel %vm27, %v8433, 0
    %v8737 = vsel %vm27, %v8434, 0
    %v8740 = vsel %vm27, %v8435, 0
    %v8743 = vsel %vm27, %v8436, 0
    %v8746 = vsel %vm27, %v8437, 0
    %v8749 = vsel %vm27, %v8438, 0
    %v8752 = vsel %vm27, %v8439, 0
    %v8755 = vsel %vm27, %v8440, 0
    %v8758 = vsel %vm27, %v8441, 0
    %v8761 = vsel %vm27, %v8442, 0
    %v8764 = vsel %vm27, %v8443, 0
    %v8767 = vsel %vm27, %v8444, 0
    %v8770 = vsel %vm27, %v8445, 0
    %v8773 = vsel %vm27, %v8446, 0
    %v8776 = vsel %vm27, %v8447, 0
    %v8779 = vsel %vm27, %v8448, 0
    %v8782 = vsel %vm27, %v8449, 0
    %v8785 = vsel %vm27, %v8450, 0
    %v8788 = vsel %vm27, %v8451, 0
    %v8791 = vsel %vm27, %v8452, 0
    %v8794 = vsel %vm27, %v8453, 0
    %v8797 = vsel %vm27, %v8454, 0
    %v8800 = vsel %vm27, %v8455, 0
    %v8803 = vsel %vm27, %v8456, 0
    %v8806 = vsel %vm27, %v8457, 0
    %v8809 = vsel %vm27, %v8458, 0
    %v8812 = vsel %vm27, %v8459, 0
    %v8815 = vsel %vm27, %v8460, 0
    %v8818 = vsel %vm27, %v8461, 0
    %v8821 = vsel %vm27, %v8462, 0
    %v8824 = vsel %vm27, %v8463, 0
    %v8827 = vsel %vm27, %v8464, 0
    %v8830 = vsel %vm27, %v8465, 0
    %v8833 = vsel %vm27, %v8466, 0
    %v8836 = vsel %vm27, %v8467, 0
    %v8839 = vsel %vm27, %v8468, 0
    %v8842 = vsel %vm27, %v8469, 0
    %v8845 = vsel %vm27, %v8470, 0
    %v8848 = vsel %vm27, %v8471, 0
    %v8851 = vsel %vm27, %v8472, 0
    %v8854 = vsel %vm27, %v8473, 0
    %v8857 = vsel %vm27, %v8474, 0
    %v8860 = vsel %vm27, %v8475, 0
    %v8863 = vsel %vm1146, %v8477, 0
    %8865 = vmatprep.subr.mxu0 0.0
    %8866 = vmatpush1.msra.mxu0 0.0
    %8867 = vmatprep.subr.mxu0 0.0
    %8868 = vmatpush1.msra.mxu0 0.0
    %8869 = vmatprep.subr.mxu0 0.0
    %8870 = vmatpush1.msra.mxu0 0.0
    %8871 = vmatprep.subr.mxu0 0.0
    %8872 = vmatpush1.msra.mxu0 0.0
    %8873 = vmatprep.subr.mxu0 0.0
    %8874 = vmatpush1.msra.mxu0 0.0
    %8875 = vmatprep.subr.mxu0 0.0
    %8876 = vmatpush1.msra.mxu0 0.0
    %8877 = vmatprep.subr.mxu0 0.0
    %8878 = vmatpush1.msra.mxu0 0.0
    %8879 = vmatprep.subr.mxu0 0.0
    %8880 = vmatpush1.msra.mxu0 0.0
    %8881 = vmatprep.subr.mxu0 0.0
    %8882 = vmatpush1.msra.mxu0 0.0
    %8883 = vmatprep.subr.mxu0 0.0
    %8884 = vmatpush1.msra.mxu0 0.0
    %8885 = vmatprep.subr.mxu0 0.0
    %8886 = vmatpush1.msra.mxu0 0.0
    %8887 = vmatprep.subr.mxu0 0.0
    %8888 = vmatpush1.msra.mxu0 0.0
    %8889 = vmatprep.subr.mxu0 0.0
    %8890 = vmatpush1.msra.mxu0 0.0
    %8891 = vmatprep.subr.mxu0 0.0
    %8892 = vmatpush1.msra.mxu0 0.0
    %8893 = vmatprep.subr.mxu0 0.0
    %8894 = vmatpush1.msra.mxu0 0.0
    %8895 = vmatprep.subr.mxu0 0.0
    %8896 = vmatpush1.msra.mxu0 %v8863
    %8897 = vmatprep.subr.mxu0 0.0
    %8898 = vmatpush2.msra.mxu0 0.0
    %8899 = vmatprep.subr.mxu0 0.0
    %8900 = vmatpush2.msra.mxu0 0.0
    %8901 = vmatprep.subr.mxu0 0.0
    %8902 = vmatpush2.msra.mxu0 0.0
    %8903 = vmatprep.subr.mxu0 0.0
    %8904 = vmatpush2.msra.mxu0 0.0
    %8905 = vmatprep.subr.mxu0 0.0
    %8906 = vmatpush2.msra.mxu0 0.0
    %8907 = vmatprep.subr.mxu0 0.0
    %8908 = vmatpush2.msra.mxu0 0.0
    %8909 = vmatprep.subr.mxu0 0.0
    %8910 = vmatpush2.msra.mxu0 0.0
    %8911 = vmatprep.subr.mxu0 0.0
    %8912 = vmatpush2.msra.mxu0 0.0
    %8913 = vmatprep.subr.mxu0 0.0
    %8914 = vmatpush2.msra.mxu0 0.0
    %8915 = vmatprep.subr.mxu0 0.0
    %8916 = vmatpush2.msra.mxu0 0.0
    %8917 = vmatprep.subr.mxu0 0.0
    %8918 = vmatpush2.msra.mxu0 0.0
    %8919 = vmatprep.subr.mxu0 0.0
    %8920 = vmatpush2.msra.mxu0 0.0
    %8921 = vmatprep.subr.mxu0 0.0
    %8922 = vmatpush2.msra.mxu0 0.0
    %8923 = vmatprep.subr.mxu0 0.0
    %8924 = vmatpush2.msra.mxu0 0.0
    %8925 = vmatprep.subr.mxu0 0.0
    %8926 = vmatpush2.msra.mxu0 0.0
    %8927 = vmatprep.subr.mxu0 0.0
    %8928 = vmatpush2.msra.mxu0 0.0
    %8929 = vmatprep.mubr.f32.mxu0 0.0
    %8930 = vmatmul.mubr.f32.gmra.mxu0 %v8479
    %v8931 = vpop.f32.mrf.mxu0
    %v8932 = vadd.f32 0.0, %v8931
    %v8933 = vpop.f32.mrf.mxu0
    %8934 = vmatprep.mubr.f32.mxu0 0.0
    %8935 = vmatmul.mubr.f32.gmra.mxu0 %v8482
    %v8936 = vpop.f32.mrf.mxu0
    %v8937 = vadd.f32 0.0, %v8936
    %v8938 = vpop.f32.mrf.mxu0
    %8939 = vmatprep.mubr.f32.mxu0 0.0
    %8940 = vmatmul.mubr.f32.gmra.mxu0 %v8485
    %v8941 = vpop.f32.mrf.mxu0
    %v8942 = vadd.f32 0.0, %v8941
    %v8943 = vpop.f32.mrf.mxu0
    %8944 = vmatprep.mubr.f32.mxu0 0.0
    %8945 = vmatmul.mubr.f32.gmra.mxu0 %v8488
    %v8946 = vpop.f32.mrf.mxu0
    %v8947 = vadd.f32 0.0, %v8946
    %v8948 = vpop.f32.mrf.mxu0
    %8949 = vmatprep.mubr.f32.mxu0 0.0
    %8950 = vmatmul.mubr.f32.gmra.mxu0 %v8491
    %v8951 = vpop.f32.mrf.mxu0
    %v8952 = vadd.f32 0.0, %v8951
    %v8953 = vpop.f32.mrf.mxu0
    %8954 = vmatprep.mubr.f32.mxu0 0.0
    %8955 = vmatmul.mubr.f32.gmra.mxu0 %v8494
    %v8956 = vpop.f32.mrf.mxu0
    %v8957 = vadd.f32 0.0, %v8956
    %v8958 = vpop.f32.mrf.mxu0
    %8959 = vmatprep.mubr.f32.mxu0 0.0
    %8960 = vmatmul.mubr.f32.gmra.mxu0 %v8497
    %v8961 = vpop.f32.mrf.mxu0
    %v8962 = vadd.f32 0.0, %v8961
    %v8963 = vpop.f32.mrf.mxu0
    %8964 = vmatprep.mubr.f32.mxu0 0.0
    %8965 = vmatmul.mubr.f32.gmra.mxu0 %v8500
    %v8966 = vpop.f32.mrf.mxu0
    %v8967 = vadd.f32 0.0, %v8966
    %v8968 = vpop.f32.mrf.mxu0
    %8969 = vmatprep.mubr.f32.mxu0 0.0
    %8970 = vmatmul.mubr.f32.gmra.mxu0 %v8503
    %v8971 = vpop.f32.mrf.mxu0
    %v8972 = vadd.f32 0.0, %v8971
    %v8973 = vpop.f32.mrf.mxu0
    %8974 = vmatprep.mubr.f32.mxu0 0.0
    %8975 = vmatmul.mubr.f32.gmra.mxu0 %v8506
    %v8976 = vpop.f32.mrf.mxu0
    %v8977 = vadd.f32 0.0, %v8976
    %v8978 = vpop.f32.mrf.mxu0
    %8979 = vmatprep.mubr.f32.mxu0 0.0
    %8980 = vmatmul.mubr.f32.gmra.mxu0 %v8509
    %v8981 = vpop.f32.mrf.mxu0
    %v8982 = vadd.f32 0.0, %v8981
    %v8983 = vpop.f32.mrf.mxu0
    %8984 = vmatprep.mubr.f32.mxu0 0.0
    %8985 = vmatmul.mubr.f32.gmra.mxu0 %v8512
    %v8986 = vpop.f32.mrf.mxu0
    %v8987 = vadd.f32 0.0, %v8986
    %v8988 = vpop.f32.mrf.mxu0
    %8989 = vmatprep.mubr.f32.mxu0 0.0
    %8990 = vmatmul.mubr.f32.gmra.mxu0 %v8515
    %v8991 = vpop.f32.mrf.mxu0
    %v8992 = vadd.f32 0.0, %v8991
    %v8993 = vpop.f32.mrf.mxu0
    %8994 = vmatprep.mubr.f32.mxu0 0.0
    %8995 = vmatmul.mubr.f32.gmra.mxu0 %v8518
    %v8996 = vpop.f32.mrf.mxu0
    %v8997 = vadd.f32 0.0, %v8996
    %v8998 = vpop.f32.mrf.mxu0
    %8999 = vmatprep.mubr.f32.mxu0 0.0
    %9000 = vmatmul.mubr.f32.gmra.mxu0 %v8521
    %v9001 = vpop.f32.mrf.mxu0
    %v9002 = vadd.f32 0.0, %v9001
    %v9003 = vpop.f32.mrf.mxu0
    %9004 = vmatprep.mubr.f32.mxu0 0.0
    %9005 = vmatmul.mubr.f32.gmra.mxu0 %v8524
    %v9006 = vpop.f32.mrf.mxu0
    %v9007 = vadd.f32 0.0, %v9006
    %v9008 = vpop.f32.mrf.mxu0
    %9009 = vmatprep.mubr.f32.mxu0 0.0
    %9010 = vmatmul.mubr.f32.gmra.mxu0 %v8527
    %v9011 = vpop.f32.mrf.mxu0
    %v9012 = vadd.f32 0.0, %v9011
    %v9013 = vpop.f32.mrf.mxu0
    %9014 = vmatprep.mubr.f32.mxu0 0.0
    %9015 = vmatmul.mubr.f32.gmra.mxu0 %v8530
    %v9016 = vpop.f32.mrf.mxu0
    %v9017 = vadd.f32 0.0, %v9016
    %v9018 = vpop.f32.mrf.mxu0
    %9019 = vmatprep.mubr.f32.mxu0 0.0
    %9020 = vmatmul.mubr.f32.gmra.mxu0 %v8533
    %v9021 = vpop.f32.mrf.mxu0
    %v9022 = vadd.f32 0.0, %v9021
    %v9023 = vpop.f32.mrf.mxu0
    %9024 = vmatprep.mubr.f32.mxu0 0.0
    %9025 = vmatmul.mubr.f32.gmra.mxu0 %v8536
    %v9026 = vpop.f32.mrf.mxu0
    %v9027 = vadd.f32 0.0, %v9026
    %v9028 = vpop.f32.mrf.mxu0
    %9029 = vmatprep.mubr.f32.mxu0 0.0
    %9030 = vmatmul.mubr.f32.gmra.mxu0 %v8539
    %v9031 = vpop.f32.mrf.mxu0
    %v9032 = vadd.f32 0.0, %v9031
    %v9033 = vpop.f32.mrf.mxu0
    %9034 = vmatprep.mubr.f32.mxu0 0.0
    %9035 = vmatmul.mubr.f32.gmra.mxu0 %v8542
    %v9036 = vpop.f32.mrf.mxu0
    %v9037 = vadd.f32 0.0, %v9036
    %v9038 = vpop.f32.mrf.mxu0
    %9039 = vmatprep.mubr.f32.mxu0 0.0
    %9040 = vmatmul.mubr.f32.gmra.mxu0 %v8545
    %v9041 = vpop.f32.mrf.mxu0
    %v9042 = vadd.f32 0.0, %v9041
    %v9043 = vpop.f32.mrf.mxu0
    %9044 = vmatprep.mubr.f32.mxu0 0.0
    %9045 = vmatmul.mubr.f32.gmra.mxu0 %v8548
    %v9046 = vpop.f32.mrf.mxu0
    %v9047 = vadd.f32 0.0, %v9046
    %v9048 = vpop.f32.mrf.mxu0
    %9049 = vmatprep.mubr.f32.mxu0 0.0
    %9050 = vmatmul.mubr.f32.gmra.mxu0 %v8551
    %v9051 = vpop.f32.mrf.mxu0
    %v9052 = vadd.f32 0.0, %v9051
    %v9053 = vpop.f32.mrf.mxu0
    %9054 = vmatprep.mubr.f32.mxu0 0.0
    %9055 = vmatmul.mubr.f32.gmra.mxu0 %v8554
    %v9056 = vpop.f32.mrf.mxu0
    %v9057 = vadd.f32 0.0, %v9056
    %v9058 = vpop.f32.mrf.mxu0
    %9059 = vmatprep.mubr.f32.mxu0 0.0
    %9060 = vmatmul.mubr.f32.gmra.mxu0 %v8557
    %v9061 = vpop.f32.mrf.mxu0
    %v9062 = vadd.f32 0.0, %v9061
    %v9063 = vpop.f32.mrf.mxu0
    %9064 = vmatprep.mubr.f32.mxu0 0.0
    %9065 = vmatmul.mubr.f32.gmra.mxu0 %v8560
    %v9066 = vpop.f32.mrf.mxu0
    %v9067 = vadd.f32 0.0, %v9066
    %v9068 = vpop.f32.mrf.mxu0
    %9069 = vmatprep.mubr.f32.mxu0 0.0
    %9070 = vmatmul.mubr.f32.gmra.mxu0 %v8563
    %v9071 = vpop.f32.mrf.mxu0
    %v9072 = vadd.f32 0.0, %v9071
    %v9073 = vpop.f32.mrf.mxu0
    %9074 = vmatprep.mubr.f32.mxu0 0.0
    %9075 = vmatmul.mubr.f32.gmra.mxu0 %v8566
    %v9076 = vpop.f32.mrf.mxu0
    %v9077 = vadd.f32 0.0, %v9076
    %v9078 = vpop.f32.mrf.mxu0
    %9079 = vmatprep.mubr.f32.mxu0 0.0
    %9080 = vmatmul.mubr.f32.gmra.mxu0 %v8569
    %v9081 = vpop.f32.mrf.mxu0
    %v9082 = vadd.f32 0.0, %v9081
    %v9083 = vpop.f32.mrf.mxu0
    %9084 = vmatprep.mubr.f32.mxu0 0.0
    %9085 = vmatmul.mubr.f32.gmra.mxu0 %v8572
    %v9086 = vpop.f32.mrf.mxu0
    %v9087 = vadd.f32 0.0, %v9086
    %v9088 = vpop.f32.mrf.mxu0
    %9089 = vmatprep.mubr.f32.mxu0 0.0
    %9090 = vmatmul.mubr.f32.gmra.mxu0 %v8575
    %v9091 = vpop.f32.mrf.mxu0
    %v9092 = vadd.f32 0.0, %v9091
    %v9093 = vpop.f32.mrf.mxu0
    %9094 = vmatprep.mubr.f32.mxu0 0.0
    %9095 = vmatmul.mubr.f32.gmra.mxu0 %v8578
    %v9096 = vpop.f32.mrf.mxu0
    %v9097 = vadd.f32 0.0, %v9096
    %v9098 = vpop.f32.mrf.mxu0
    %9099 = vmatprep.mubr.f32.mxu0 0.0
    %9100 = vmatmul.mubr.f32.gmra.mxu0 %v8581
    %v9101 = vpop.f32.mrf.mxu0
    %v9102 = vadd.f32 0.0, %v9101
    %v9103 = vpop.f32.mrf.mxu0
    %9104 = vmatprep.mubr.f32.mxu0 0.0
    %9105 = vmatmul.mubr.f32.gmra.mxu0 %v8584
    %v9106 = vpop.f32.mrf.mxu0
    %v9107 = vadd.f32 0.0, %v9106
    %v9108 = vpop.f32.mrf.mxu0
    %9109 = vmatprep.mubr.f32.mxu0 0.0
    %9110 = vmatmul.mubr.f32.gmra.mxu0 %v8587
    %v9111 = vpop.f32.mrf.mxu0
    %v9112 = vadd.f32 0.0, %v9111
    %v9113 = vpop.f32.mrf.mxu0
    %9114 = vmatprep.mubr.f32.mxu0 0.0
    %9115 = vmatmul.mubr.f32.gmra.mxu0 %v8590
    %v9116 = vpop.f32.mrf.mxu0
    %v9117 = vadd.f32 0.0, %v9116
    %v9118 = vpop.f32.mrf.mxu0
    %9119 = vmatprep.mubr.f32.mxu0 0.0
    %9120 = vmatmul.mubr.f32.gmra.mxu0 %v8593
    %v9121 = vpop.f32.mrf.mxu0
    %v9122 = vadd.f32 0.0, %v9121
    %v9123 = vpop.f32.mrf.mxu0
    %9124 = vmatprep.mubr.f32.mxu0 0.0
    %9125 = vmatmul.mubr.f32.gmra.mxu0 %v8596
    %v9126 = vpop.f32.mrf.mxu0
    %v9127 = vadd.f32 0.0, %v9126
    %v9128 = vpop.f32.mrf.mxu0
    %9129 = vmatprep.mubr.f32.mxu0 0.0
    %9130 = vmatmul.mubr.f32.gmra.mxu0 %v8599
    %v9131 = vpop.f32.mrf.mxu0
    %v9132 = vadd.f32 0.0, %v9131
    %v9133 = vpop.f32.mrf.mxu0
    %9134 = vmatprep.mubr.f32.mxu0 0.0
    %9135 = vmatmul.mubr.f32.gmra.mxu0 %v8602
    %v9136 = vpop.f32.mrf.mxu0
    %v9137 = vadd.f32 0.0, %v9136
    %v9138 = vpop.f32.mrf.mxu0
    %9139 = vmatprep.mubr.f32.mxu0 0.0
    %9140 = vmatmul.mubr.f32.gmra.mxu0 %v8605
    %v9141 = vpop.f32.mrf.mxu0
    %v9142 = vadd.f32 0.0, %v9141
    %v9143 = vpop.f32.mrf.mxu0
    %9144 = vmatprep.mubr.f32.mxu0 0.0
    %9145 = vmatmul.mubr.f32.gmra.mxu0 %v8608
    %v9146 = vpop.f32.mrf.mxu0
    %v9147 = vadd.f32 0.0, %v9146
    %v9148 = vpop.f32.mrf.mxu0
    %9149 = vmatprep.mubr.f32.mxu0 0.0
    %9150 = vmatmul.mubr.f32.gmra.mxu0 %v8611
    %v9151 = vpop.f32.mrf.mxu0
    %v9152 = vadd.f32 0.0, %v9151
    %v9153 = vpop.f32.mrf.mxu0
    %9154 = vmatprep.mubr.f32.mxu0 0.0
    %9155 = vmatmul.mubr.f32.gmra.mxu0 %v8614
    %v9156 = vpop.f32.mrf.mxu0
    %v9157 = vadd.f32 0.0, %v9156
    %v9158 = vpop.f32.mrf.mxu0
    %9159 = vmatprep.mubr.f32.mxu0 0.0
    %9160 = vmatmul.mubr.f32.gmra.mxu0 %v8617
    %v9161 = vpop.f32.mrf.mxu0
    %v9162 = vadd.f32 0.0, %v9161
    %v9163 = vpop.f32.mrf.mxu0
    %9164 = vmatprep.mubr.f32.mxu0 0.0
    %9165 = vmatmul.mubr.f32.gmra.mxu0 %v8620
    %v9166 = vpop.f32.mrf.mxu0
    %v9167 = vadd.f32 0.0, %v9166
    %v9168 = vpop.f32.mrf.mxu0
    %9169 = vmatprep.mubr.f32.mxu0 0.0
    %9170 = vmatmul.mubr.f32.gmra.mxu0 %v8623
    %v9171 = vpop.f32.mrf.mxu0
    %v9172 = vadd.f32 0.0, %v9171
    %v9173 = vpop.f32.mrf.mxu0
    %9174 = vmatprep.mubr.f32.mxu0 0.0
    %9175 = vmatmul.mubr.f32.gmra.mxu0 %v8626
    %v9176 = vpop.f32.mrf.mxu0
    %v9177 = vadd.f32 0.0, %v9176
    %v9178 = vpop.f32.mrf.mxu0
    %9179 = vmatprep.mubr.f32.mxu0 0.0
    %9180 = vmatmul.mubr.f32.gmra.mxu0 %v8629
    %v9181 = vpop.f32.mrf.mxu0
    %v9182 = vadd.f32 0.0, %v9181
    %v9183 = vpop.f32.mrf.mxu0
    %9184 = vmatprep.mubr.f32.mxu0 0.0
    %9185 = vmatmul.mubr.f32.gmra.mxu0 %v8632
    %v9186 = vpop.f32.mrf.mxu0
    %v9187 = vadd.f32 0.0, %v9186
    %v9188 = vpop.f32.mrf.mxu0
    %9189 = vmatprep.mubr.f32.mxu0 0.0
    %9190 = vmatmul.mubr.f32.gmra.mxu0 %v8635
    %v9191 = vpop.f32.mrf.mxu0
    %v9192 = vadd.f32 0.0, %v9191
    %v9193 = vpop.f32.mrf.mxu0
    %9194 = vmatprep.mubr.f32.mxu0 0.0
    %9195 = vmatmul.mubr.f32.gmra.mxu0 %v8638
    %v9196 = vpop.f32.mrf.mxu0
    %v9197 = vadd.f32 0.0, %v9196
    %v9198 = vpop.f32.mrf.mxu0
    %9199 = vmatprep.mubr.f32.mxu0 0.0
    %9200 = vmatmul.mubr.f32.gmra.mxu0 %v8641
    %v9201 = vpop.f32.mrf.mxu0
    %v9202 = vadd.f32 0.0, %v9201
    %v9203 = vpop.f32.mrf.mxu0
    %9204 = vmatprep.mubr.f32.mxu0 0.0
    %9205 = vmatmul.mubr.f32.gmra.mxu0 %v8644
    %v9206 = vpop.f32.mrf.mxu0
    %v9207 = vadd.f32 0.0, %v9206
    %v9208 = vpop.f32.mrf.mxu0
    %9209 = vmatprep.mubr.f32.mxu0 0.0
    %9210 = vmatmul.mubr.f32.gmra.mxu0 %v8647
    %v9211 = vpop.f32.mrf.mxu0
    %v9212 = vadd.f32 0.0, %v9211
    %v9213 = vpop.f32.mrf.mxu0
    %9214 = vmatprep.mubr.f32.mxu0 0.0
    %9215 = vmatmul.mubr.f32.gmra.mxu0 %v8650
    %v9216 = vpop.f32.mrf.mxu0
    %v9217 = vadd.f32 0.0, %v9216
    %v9218 = vpop.f32.mrf.mxu0
    %9219 = vmatprep.mubr.f32.mxu0 0.0
    %9220 = vmatmul.mubr.f32.gmra.mxu0 %v8653
    %v9221 = vpop.f32.mrf.mxu0
    %v9222 = vadd.f32 0.0, %v9221
    %v9223 = vpop.f32.mrf.mxu0
    %9224 = vmatprep.mubr.f32.mxu0 0.0
    %9225 = vmatmul.mubr.f32.gmra.mxu0 %v8656
    %v9226 = vpop.f32.mrf.mxu0
    %v9227 = vadd.f32 0.0, %v9226
    %v9228 = vpop.f32.mrf.mxu0
    %9229 = vmatprep.mubr.f32.mxu0 0.0
    %9230 = vmatmul.mubr.f32.gmra.mxu0 %v8659
    %v9231 = vpop.f32.mrf.mxu0
    %v9232 = vadd.f32 0.0, %v9231
    %v9233 = vpop.f32.mrf.mxu0
    %9234 = vmatprep.mubr.f32.mxu0 0.0
    %9235 = vmatmul.mubr.f32.gmra.mxu0 %v8662
    %v9236 = vpop.f32.mrf.mxu0
    %v9237 = vadd.f32 0.0, %v9236
    %v9238 = vpop.f32.mrf.mxu0
    %9239 = vmatprep.mubr.f32.mxu0 0.0
    %9240 = vmatmul.mubr.f32.gmra.mxu0 %v8665
    %v9241 = vpop.f32.mrf.mxu0
    %v9242 = vadd.f32 0.0, %v9241
    %v9243 = vpop.f32.mrf.mxu0
    %9244 = vmatprep.mubr.f32.mxu0 0.0
    %9245 = vmatmul.mubr.f32.gmra.mxu0 %v8668
    %v9246 = vpop.f32.mrf.mxu0
    %v9247 = vadd.f32 0.0, %v9246
    %v9248 = vpop.f32.mrf.mxu0
    %9249 = vmatprep.mubr.f32.mxu0 0.0
    %9250 = vmatmul.mubr.f32.gmra.mxu0 %v8671
    %v9251 = vpop.f32.mrf.mxu0
    %v9252 = vadd.f32 0.0, %v9251
    %v9253 = vpop.f32.mrf.mxu0
    %9254 = vmatprep.mubr.f32.mxu0 0.0
    %9255 = vmatmul.mubr.f32.gmra.mxu0 %v8674
    %v9256 = vpop.f32.mrf.mxu0
    %v9257 = vadd.f32 0.0, %v9256
    %v9258 = vpop.f32.mrf.mxu0
    %9259 = vmatprep.mubr.f32.mxu0 0.0
    %9260 = vmatmul.mubr.f32.gmra.mxu0 %v8677
    %v9261 = vpop.f32.mrf.mxu0
    %v9262 = vadd.f32 0.0, %v9261
    %v9263 = vpop.f32.mrf.mxu0
    %9264 = vmatprep.mubr.f32.mxu0 0.0
    %9265 = vmatmul.mubr.f32.gmra.mxu0 %v8680
    %v9266 = vpop.f32.mrf.mxu0
    %v9267 = vadd.f32 0.0, %v9266
    %v9268 = vpop.f32.mrf.mxu0
    %9269 = vmatprep.mubr.f32.mxu0 0.0
    %9270 = vmatmul.mubr.f32.gmra.mxu0 %v8683
    %v9271 = vpop.f32.mrf.mxu0
    %v9272 = vadd.f32 0.0, %v9271
    %v9273 = vpop.f32.mrf.mxu0
    %9274 = vmatprep.mubr.f32.mxu0 0.0
    %9275 = vmatmul.mubr.f32.gmra.mxu0 %v8686
    %v9276 = vpop.f32.mrf.mxu0
    %v9277 = vadd.f32 0.0, %v9276
    %v9278 = vpop.f32.mrf.mxu0
    %9279 = vmatprep.mubr.f32.mxu0 0.0
    %9280 = vmatmul.mubr.f32.gmra.mxu0 %v8689
    %v9281 = vpop.f32.mrf.mxu0
    %v9282 = vadd.f32 0.0, %v9281
    %v9283 = vpop.f32.mrf.mxu0
    %9284 = vmatprep.mubr.f32.mxu0 0.0
    %9285 = vmatmul.mubr.f32.gmra.mxu0 %v8692
    %v9286 = vpop.f32.mrf.mxu0
    %v9287 = vadd.f32 0.0, %v9286
    %v9288 = vpop.f32.mrf.mxu0
    %9289 = vmatprep.mubr.f32.mxu0 0.0
    %9290 = vmatmul.mubr.f32.gmra.mxu0 %v8695
    %v9291 = vpop.f32.mrf.mxu0
    %v9292 = vadd.f32 0.0, %v9291
    %v9293 = vpop.f32.mrf.mxu0
    %9294 = vmatprep.mubr.f32.mxu0 0.0
    %9295 = vmatmul.mubr.f32.gmra.mxu0 %v8698
    %v9296 = vpop.f32.mrf.mxu0
    %v9297 = vadd.f32 0.0, %v9296
    %v9298 = vpop.f32.mrf.mxu0
    %9299 = vmatprep.mubr.f32.mxu0 0.0
    %9300 = vmatmul.mubr.f32.gmra.mxu0 %v8701
    %v9301 = vpop.f32.mrf.mxu0
    %v9302 = vadd.f32 0.0, %v9301
    %v9303 = vpop.f32.mrf.mxu0
    %9304 = vmatprep.mubr.f32.mxu0 0.0
    %9305 = vmatmul.mubr.f32.gmra.mxu0 %v8704
    %v9306 = vpop.f32.mrf.mxu0
    %v9307 = vadd.f32 0.0, %v9306
    %v9308 = vpop.f32.mrf.mxu0
    %9309 = vmatprep.mubr.f32.mxu0 0.0
    %9310 = vmatmul.mubr.f32.gmra.mxu0 %v8707
    %v9311 = vpop.f32.mrf.mxu0
    %v9312 = vadd.f32 0.0, %v9311
    %v9313 = vpop.f32.mrf.mxu0
    %9314 = vmatprep.mubr.f32.mxu0 0.0
    %9315 = vmatmul.mubr.f32.gmra.mxu0 %v8710
    %v9316 = vpop.f32.mrf.mxu0
    %v9317 = vadd.f32 0.0, %v9316
    %v9318 = vpop.f32.mrf.mxu0
    %9319 = vmatprep.mubr.f32.mxu0 0.0
    %9320 = vmatmul.mubr.f32.gmra.mxu0 %v8713
    %v9321 = vpop.f32.mrf.mxu0
    %v9322 = vadd.f32 0.0, %v9321
    %v9323 = vpop.f32.mrf.mxu0
    %9324 = vmatprep.mubr.f32.mxu0 0.0
    %9325 = vmatmul.mubr.f32.gmra.mxu0 %v8716
    %v9326 = vpop.f32.mrf.mxu0
    %v9327 = vadd.f32 0.0, %v9326
    %v9328 = vpop.f32.mrf.mxu0
    %9329 = vmatprep.mubr.f32.mxu0 0.0
    %9330 = vmatmul.mubr.f32.gmra.mxu0 %v8719
    %v9331 = vpop.f32.mrf.mxu0
    %v9332 = vadd.f32 0.0, %v9331
    %v9333 = vpop.f32.mrf.mxu0
    %9334 = vmatprep.mubr.f32.mxu0 0.0
    %9335 = vmatmul.mubr.f32.gmra.mxu0 %v8722
    %v9336 = vpop.f32.mrf.mxu0
    %v9337 = vadd.f32 0.0, %v9336
    %v9338 = vpop.f32.mrf.mxu0
    %9339 = vmatprep.mubr.f32.mxu0 0.0
    %9340 = vmatmul.mubr.f32.gmra.mxu0 %v8725
    %v9341 = vpop.f32.mrf.mxu0
    %v9342 = vadd.f32 0.0, %v9341
    %v9343 = vpop.f32.mrf.mxu0
    %9344 = vmatprep.mubr.f32.mxu0 0.0
    %9345 = vmatmul.mubr.f32.gmra.mxu0 %v8728
    %v9346 = vpop.f32.mrf.mxu0
    %v9347 = vadd.f32 0.0, %v9346
    %v9348 = vpop.f32.mrf.mxu0
    %9349 = vmatprep.mubr.f32.mxu0 0.0
    %9350 = vmatmul.mubr.f32.gmra.mxu0 %v8731
    %v9351 = vpop.f32.mrf.mxu0
    %v9352 = vadd.f32 0.0, %v9351
    %v9353 = vpop.f32.mrf.mxu0
    %9354 = vmatprep.mubr.f32.mxu0 0.0
    %9355 = vmatmul.mubr.f32.gmra.mxu0 %v8734
    %v9356 = vpop.f32.mrf.mxu0
    %v9357 = vadd.f32 0.0, %v9356
    %v9358 = vpop.f32.mrf.mxu0
    %9359 = vmatprep.mubr.f32.mxu0 0.0
    %9360 = vmatmul.mubr.f32.gmra.mxu0 %v8737
    %v9361 = vpop.f32.mrf.mxu0
    %v9362 = vadd.f32 0.0, %v9361
    %v9363 = vpop.f32.mrf.mxu0
    %9364 = vmatprep.mubr.f32.mxu0 0.0
    %9365 = vmatmul.mubr.f32.gmra.mxu0 %v8740
    %v9366 = vpop.f32.mrf.mxu0
    %v9367 = vadd.f32 0.0, %v9366
    %v9368 = vpop.f32.mrf.mxu0
    %9369 = vmatprep.mubr.f32.mxu0 0.0
    %9370 = vmatmul.mubr.f32.gmra.mxu0 %v8743
    %v9371 = vpop.f32.mrf.mxu0
    %v9372 = vadd.f32 0.0, %v9371
    %v9373 = vpop.f32.mrf.mxu0
    %9374 = vmatprep.mubr.f32.mxu0 0.0
    %9375 = vmatmul.mubr.f32.gmra.mxu0 %v8746
    %v9376 = vpop.f32.mrf.mxu0
    %v9377 = vadd.f32 0.0, %v9376
    %v9378 = vpop.f32.mrf.mxu0
    %9379 = vmatprep.mubr.f32.mxu0 0.0
    %9380 = vmatmul.mubr.f32.gmra.mxu0 %v8749
    %v9381 = vpop.f32.mrf.mxu0
    %v9382 = vadd.f32 0.0, %v9381
    %v9383 = vpop.f32.mrf.mxu0
    %9384 = vmatprep.mubr.f32.mxu0 0.0
    %9385 = vmatmul.mubr.f32.gmra.mxu0 %v8752
    %v9386 = vpop.f32.mrf.mxu0
    %v9387 = vadd.f32 0.0, %v9386
    %v9388 = vpop.f32.mrf.mxu0
    %9389 = vmatprep.mubr.f32.mxu0 0.0
    %9390 = vmatmul.mubr.f32.gmra.mxu0 %v8755
    %v9391 = vpop.f32.mrf.mxu0
    %v9392 = vadd.f32 0.0, %v9391
    %v9393 = vpop.f32.mrf.mxu0
    %9394 = vmatprep.mubr.f32.mxu0 0.0
    %9395 = vmatmul.mubr.f32.gmra.mxu0 %v8758
    %v9396 = vpop.f32.mrf.mxu0
    %v9397 = vadd.f32 0.0, %v9396
    %v9398 = vpop.f32.mrf.mxu0
    %9399 = vmatprep.mubr.f32.mxu0 0.0
    %9400 = vmatmul.mubr.f32.gmra.mxu0 %v8761
    %v9401 = vpop.f32.mrf.mxu0
    %v9402 = vadd.f32 0.0, %v9401
    %v9403 = vpop.f32.mrf.mxu0
    %9404 = vmatprep.mubr.f32.mxu0 0.0
    %9405 = vmatmul.mubr.f32.gmra.mxu0 %v8764
    %v9406 = vpop.f32.mrf.mxu0
    %v9407 = vadd.f32 0.0, %v9406
    %v9408 = vpop.f32.mrf.mxu0
    %9409 = vmatprep.mubr.f32.mxu0 0.0
    %9410 = vmatmul.mubr.f32.gmra.mxu0 %v8767
    %v9411 = vpop.f32.mrf.mxu0
    %v9412 = vadd.f32 0.0, %v9411
    %v9413 = vpop.f32.mrf.mxu0
    %9414 = vmatprep.mubr.f32.mxu0 0.0
    %9415 = vmatmul.mubr.f32.gmra.mxu0 %v8770
    %v9416 = vpop.f32.mrf.mxu0
    %v9417 = vadd.f32 0.0, %v9416
    %v9418 = vpop.f32.mrf.mxu0
    %9419 = vmatprep.mubr.f32.mxu0 0.0
    %9420 = vmatmul.mubr.f32.gmra.mxu0 %v8773
    %v9421 = vpop.f32.mrf.mxu0
    %v9422 = vadd.f32 0.0, %v9421
    %v9423 = vpop.f32.mrf.mxu0
    %9424 = vmatprep.mubr.f32.mxu0 0.0
    %9425 = vmatmul.mubr.f32.gmra.mxu0 %v8776
    %v9426 = vpop.f32.mrf.mxu0
    %v9427 = vadd.f32 0.0, %v9426
    %v9428 = vpop.f32.mrf.mxu0
    %9429 = vmatprep.mubr.f32.mxu0 0.0
    %9430 = vmatmul.mubr.f32.gmra.mxu0 %v8779
    %v9431 = vpop.f32.mrf.mxu0
    %v9432 = vadd.f32 0.0, %v9431
    %v9433 = vpop.f32.mrf.mxu0
    %9434 = vmatprep.mubr.f32.mxu0 0.0
    %9435 = vmatmul.mubr.f32.gmra.mxu0 %v8782
    %v9436 = vpop.f32.mrf.mxu0
    %v9437 = vadd.f32 0.0, %v9436
    %v9438 = vpop.f32.mrf.mxu0
    %9439 = vmatprep.mubr.f32.mxu0 0.0
    %9440 = vmatmul.mubr.f32.gmra.mxu0 %v8785
    %v9441 = vpop.f32.mrf.mxu0
    %v9442 = vadd.f32 0.0, %v9441
    %v9443 = vpop.f32.mrf.mxu0
    %9444 = vmatprep.mubr.f32.mxu0 0.0
    %9445 = vmatmul.mubr.f32.gmra.mxu0 %v8788
    %v9446 = vpop.f32.mrf.mxu0
    %v9447 = vadd.f32 0.0, %v9446
    %v9448 = vpop.f32.mrf.mxu0
    %9449 = vmatprep.mubr.f32.mxu0 0.0
    %9450 = vmatmul.mubr.f32.gmra.mxu0 %v8791
    %v9451 = vpop.f32.mrf.mxu0
    %v9452 = vadd.f32 0.0, %v9451
    %v9453 = vpop.f32.mrf.mxu0
    %9454 = vmatprep.mubr.f32.mxu0 0.0
    %9455 = vmatmul.mubr.f32.gmra.mxu0 %v8794
    %v9456 = vpop.f32.mrf.mxu0
    %v9457 = vadd.f32 0.0, %v9456
    %v9458 = vpop.f32.mrf.mxu0
    %9459 = vmatprep.mubr.f32.mxu0 0.0
    %9460 = vmatmul.mubr.f32.gmra.mxu0 %v8797
    %v9461 = vpop.f32.mrf.mxu0
    %v9462 = vadd.f32 0.0, %v9461
    %v9463 = vpop.f32.mrf.mxu0
    %9464 = vmatprep.mubr.f32.mxu0 0.0
    %9465 = vmatmul.mubr.f32.gmra.mxu0 %v8800
    %v9466 = vpop.f32.mrf.mxu0
    %v9467 = vadd.f32 0.0, %v9466
    %v9468 = vpop.f32.mrf.mxu0
    %9469 = vmatprep.mubr.f32.mxu0 0.0
    %9470 = vmatmul.mubr.f32.gmra.mxu0 %v8803
    %v9471 = vpop.f32.mrf.mxu0
    %v9472 = vadd.f32 0.0, %v9471
    %v9473 = vpop.f32.mrf.mxu0
    %9474 = vmatprep.mubr.f32.mxu0 0.0
    %9475 = vmatmul.mubr.f32.gmra.mxu0 %v8806
    %v9476 = vpop.f32.mrf.mxu0
    %v9477 = vadd.f32 0.0, %v9476
    %v9478 = vpop.f32.mrf.mxu0
    %9479 = vmatprep.mubr.f32.mxu0 0.0
    %9480 = vmatmul.mubr.f32.gmra.mxu0 %v8809
    %v9481 = vpop.f32.mrf.mxu0
    %v9482 = vadd.f32 0.0, %v9481
    %v9483 = vpop.f32.mrf.mxu0
    %9484 = vmatprep.mubr.f32.mxu0 0.0
    %9485 = vmatmul.mubr.f32.gmra.mxu0 %v8812
    %v9486 = vpop.f32.mrf.mxu0
    %v9487 = vadd.f32 0.0, %v9486
    %v9488 = vpop.f32.mrf.mxu0
    %9489 = vmatprep.mubr.f32.mxu0 0.0
    %9490 = vmatmul.mubr.f32.gmra.mxu0 %v8815
    %v9491 = vpop.f32.mrf.mxu0
    %v9492 = vadd.f32 0.0, %v9491
    %v9493 = vpop.f32.mrf.mxu0
    %9494 = vmatprep.mubr.f32.mxu0 0.0
    %9495 = vmatmul.mubr.f32.gmra.mxu0 %v8818
    %v9496 = vpop.f32.mrf.mxu0
    %v9497 = vadd.f32 0.0, %v9496
    %v9498 = vpop.f32.mrf.mxu0
    %9499 = vmatprep.mubr.f32.mxu0 0.0
    %9500 = vmatmul.mubr.f32.gmra.mxu0 %v8821
    %v9501 = vpop.f32.mrf.mxu0
    %v9502 = vadd.f32 0.0, %v9501
    %v9503 = vpop.f32.mrf.mxu0
    %9504 = vmatprep.mubr.f32.mxu0 0.0
    %9505 = vmatmul.mubr.f32.gmra.mxu0 %v8824
    %v9506 = vpop.f32.mrf.mxu0
    %v9507 = vadd.f32 0.0, %v9506
    %v9508 = vpop.f32.mrf.mxu0
    %9509 = vmatprep.mubr.f32.mxu0 0.0
    %9510 = vmatmul.mubr.f32.gmra.mxu0 %v8827
    %v9511 = vpop.f32.mrf.mxu0
    %v9512 = vadd.f32 0.0, %v9511
    %v9513 = vpop.f32.mrf.mxu0
    %9514 = vmatprep.mubr.f32.mxu0 0.0
    %9515 = vmatmul.mubr.f32.gmra.mxu0 %v8830
    %v9516 = vpop.f32.mrf.mxu0
    %v9517 = vadd.f32 0.0, %v9516
    %v9518 = vpop.f32.mrf.mxu0
    %9519 = vmatprep.mubr.f32.mxu0 0.0
    %9520 = vmatmul.mubr.f32.gmra.mxu0 %v8833
    %v9521 = vpop.f32.mrf.mxu0
    %v9522 = vadd.f32 0.0, %v9521
    %v9523 = vpop.f32.mrf.mxu0
    %9524 = vmatprep.mubr.f32.mxu0 0.0
    %9525 = vmatmul.mubr.f32.gmra.mxu0 %v8836
    %v9526 = vpop.f32.mrf.mxu0
    %v9527 = vadd.f32 0.0, %v9526
    %v9528 = vpop.f32.mrf.mxu0
    %9529 = vmatprep.mubr.f32.mxu0 0.0
    %9530 = vmatmul.mubr.f32.gmra.mxu0 %v8839
    %v9531 = vpop.f32.mrf.mxu0
    %v9532 = vadd.f32 0.0, %v9531
    %v9533 = vpop.f32.mrf.mxu0
    %9534 = vmatprep.mubr.f32.mxu0 0.0
    %9535 = vmatmul.mubr.f32.gmra.mxu0 %v8842
    %v9536 = vpop.f32.mrf.mxu0
    %v9537 = vadd.f32 0.0, %v9536
    %v9538 = vpop.f32.mrf.mxu0
    %9539 = vmatprep.mubr.f32.mxu0 0.0
    %9540 = vmatmul.mubr.f32.gmra.mxu0 %v8845
    %v9541 = vpop.f32.mrf.mxu0
    %v9542 = vadd.f32 0.0, %v9541
    %v9543 = vpop.f32.mrf.mxu0
    %9544 = vmatprep.mubr.f32.mxu0 0.0
    %9545 = vmatmul.mubr.f32.gmra.mxu0 %v8848
    %v9546 = vpop.f32.mrf.mxu0
    %v9547 = vadd.f32 0.0, %v9546
    %v9548 = vpop.f32.mrf.mxu0
    %9549 = vmatprep.mubr.f32.mxu0 0.0
    %9550 = vmatmul.mubr.f32.gmra.mxu0 %v8851
    %v9551 = vpop.f32.mrf.mxu0
    %v9552 = vadd.f32 0.0, %v9551
    %v9553 = vpop.f32.mrf.mxu0
    %9554 = vmatprep.mubr.f32.mxu0 0.0
    %9555 = vmatmul.mubr.f32.gmra.mxu0 %v8854
    %v9556 = vpop.f32.mrf.mxu0
    %v9557 = vadd.f32 0.0, %v9556
    %v9558 = vpop.f32.mrf.mxu0
    %9559 = vmatprep.mubr.f32.mxu0 0.0
    %9560 = vmatmul.mubr.f32.gmra.mxu0 %v8857
    %v9561 = vpop.f32.mrf.mxu0
    %v9562 = vadd.f32 0.0, %v9561
    %v9563 = vpop.f32.mrf.mxu0
    %9564 = vmatprep.mubr.f32.mxu0 0.0
    %9565 = vmatmul.mubr.f32.gmra.mxu0 %v8860
    %v9566 = vpop.f32.mrf.mxu0
    %v9567 = vadd.f32 0.0, %v9566
    %v9568 = vpop.f32.mrf.mxu0
    %9569 = vdwg.mxu0
    %v9570 = vadd.f32 %v8219, %v8932
    %v9571 = vadd.f32 %v8220, %v8937
    %v9572 = vadd.f32 %v8221, %v8942
    %v9573 = vadd.f32 %v8222, %v8947
    %v9574 = vadd.f32 %v8223, %v8952
    %v9575 = vadd.f32 %v8224, %v8957
    %v9576 = vadd.f32 %v8225, %v8962
    %v9577 = vadd.f32 %v8226, %v8967
    %v9578 = vadd.f32 %v8227, %v8972
    %v9579 = vadd.f32 %v8228, %v8977
    %v9580 = vadd.f32 %v8229, %v8982
    %v9581 = vadd.f32 %v8230, %v8987
    %v9582 = vadd.f32 %v8231, %v8992
    %v9583 = vadd.f32 %v8232, %v8997
    %v9584 = vadd.f32 %v8233, %v9002
    %v9585 = vadd.f32 %v8234, %v9007
    %v9586 = vadd.f32 %v8235, %v9012
    %v9587 = vadd.f32 %v8236, %v9017
    %v9588 = vadd.f32 %v8237, %v9022
    %v9589 = vadd.f32 %v8238, %v9027
    %v9590 = vadd.f32 %v8239, %v9032
    %v9591 = vadd.f32 %v8240, %v9037
    %v9592 = vadd.f32 %v8241, %v9042
    %v9593 = vadd.f32 %v8242, %v9047
    %v9594 = vadd.f32 %v8243, %v9052
    %v9595 = vadd.f32 %v8244, %v9057
    %v9596 = vadd.f32 %v8245, %v9062
    %v9597 = vadd.f32 %v8246, %v9067
    %v9598 = vadd.f32 %v8247, %v9072
    %v9599 = vadd.f32 %v8248, %v9077
    %v9600 = vadd.f32 %v8249, %v9082
    %v9601 = vadd.f32 %v8250, %v9087
    %v9602 = vadd.f32 %v8251, %v9092
    %v9603 = vadd.f32 %v8252, %v9097
    %v9604 = vadd.f32 %v8253, %v9102
    %v9605 = vadd.f32 %v8254, %v9107
    %v9606 = vadd.f32 %v8255, %v9112
    %v9607 = vadd.f32 %v8256, %v9117
    %v9608 = vadd.f32 %v8257, %v9122
    %v9609 = vadd.f32 %v8258, %v9127
    %v9610 = vadd.f32 %v8259, %v9132
    %v9611 = vadd.f32 %v8260, %v9137
    %v9612 = vadd.f32 %v8261, %v9142
    %v9613 = vadd.f32 %v8262, %v9147
    %v9614 = vadd.f32 %v8263, %v9152
    %v9615 = vadd.f32 %v8264, %v9157
    %v9616 = vadd.f32 %v8265, %v9162
    %v9617 = vadd.f32 %v8266, %v9167
    %v9618 = vadd.f32 %v8267, %v9172
    %v9619 = vadd.f32 %v8268, %v9177
    %v9620 = vadd.f32 %v8269, %v9182
    %v9621 = vadd.f32 %v8270, %v9187
    %v9622 = vadd.f32 %v8271, %v9192
    %v9623 = vadd.f32 %v8272, %v9197
    %v9624 = vadd.f32 %v8273, %v9202
    %v9625 = vadd.f32 %v8274, %v9207
    %v9626 = vadd.f32 %v8275, %v9212
    %v9627 = vadd.f32 %v8276, %v9217
    %v9628 = vadd.f32 %v8277, %v9222
    %v9629 = vadd.f32 %v8278, %v9227
    %v9630 = vadd.f32 %v8279, %v9232
    %v9631 = vadd.f32 %v8280, %v9237
    %v9632 = vadd.f32 %v8281, %v9242
    %v9633 = vadd.f32 %v8282, %v9247
    %v9634 = vadd.f32 %v8283, %v9252
    %v9635 = vadd.f32 %v8284, %v9257
    %v9636 = vadd.f32 %v8285, %v9262
    %v9637 = vadd.f32 %v8286, %v9267
    %v9638 = vadd.f32 %v8287, %v9272
    %v9639 = vadd.f32 %v8288, %v9277
    %v9640 = vadd.f32 %v8289, %v9282
    %v9641 = vadd.f32 %v8290, %v9287
    %v9642 = vadd.f32 %v8291, %v9292
    %v9643 = vadd.f32 %v8292, %v9297
    %v9644 = vadd.f32 %v8293, %v9302
    %v9645 = vadd.f32 %v8294, %v9307
    %v9646 = vadd.f32 %v8295, %v9312
    %v9647 = vadd.f32 %v8296, %v9317
    %v9648 = vadd.f32 %v8297, %v9322
    %v9649 = vadd.f32 %v8298, %v9327
    %v9650 = vadd.f32 %v8299, %v9332
    %v9651 = vadd.f32 %v8300, %v9337
    %v9652 = vadd.f32 %v8301, %v9342
    %v9653 = vadd.f32 %v8302, %v9347
    %v9654 = vadd.f32 %v8303, %v9352
    %v9655 = vadd.f32 %v8304, %v9357
    %v9656 = vadd.f32 %v8305, %v9362
    %v9657 = vadd.f32 %v8306, %v9367
    %v9658 = vadd.f32 %v8307, %v9372
    %v9659 = vadd.f32 %v8308, %v9377
    %v9660 = vadd.f32 %v8309, %v9382
    %v9661 = vadd.f32 %v8310, %v9387
    %v9662 = vadd.f32 %v8311, %v9392
    %v9663 = vadd.f32 %v8312, %v9397
    %v9664 = vadd.f32 %v8313, %v9402
    %v9665 = vadd.f32 %v8314, %v9407
    %v9666 = vadd.f32 %v8315, %v9412
    %v9667 = vadd.f32 %v8316, %v9417
    %v9668 = vadd.f32 %v8317, %v9422
    %v9669 = vadd.f32 %v8318, %v9427
    %v9670 = vadd.f32 %v8319, %v9432
    %v9671 = vadd.f32 %v8320, %v9437
    %v9672 = vadd.f32 %v8321, %v9442
    %v9673 = vadd.f32 %v8322, %v9447
    %v9674 = vadd.f32 %v8323, %v9452
    %v9675 = vadd.f32 %v8324, %v9457
    %v9676 = vadd.f32 %v8325, %v9462
    %v9677 = vadd.f32 %v8326, %v9467
    %v9678 = vadd.f32 %v8327, %v9472
    %v9679 = vadd.f32 %v8328, %v9477
    %v9680 = vadd.f32 %v8329, %v9482
    %v9681 = vadd.f32 %v8330, %v9487
    %v9682 = vadd.f32 %v8331, %v9492
    %v9683 = vadd.f32 %v8332, %v9497
    %v9684 = vadd.f32 %v8333, %v9502
    %v9685 = vadd.f32 %v8334, %v9507
    %v9686 = vadd.f32 %v8335, %v9512
    %v9687 = vadd.f32 %v8336, %v9517
    %v9688 = vadd.f32 %v8337, %v9522
    %v9689 = vadd.f32 %v8338, %v9527
    %v9690 = vadd.f32 %v8339, %v9532
    %v9691 = vadd.f32 %v8340, %v9537
    %v9692 = vadd.f32 %v8341, %v9542
    %v9693 = vadd.f32 %v8342, %v9547
    %v9694 = vadd.f32 %v8343, %v9552
    %v9695 = vadd.f32 %v8344, %v9557
    %v9696 = vadd.f32 %v8345, %v9562
    %v9697 = vadd.f32 %v8346, %v9567
    %v9698 = vld [vmem:[%s8347 + $0x1] sm:$0xff]
    %v9699 = vld [vmem:[%s8347 + $0x9] sm:$0xff]
    %v9700 = vld [vmem:[%s8347 + $0x19] sm:$0xff]
    %v9701 = vld [vmem:[%s8347 + $0x21] sm:$0xff]
    %v9702 = vld [vmem:[%s8347 + $0x31] sm:$0xff]
    %v9703 = vld [vmem:[%s8347 + $0x39] sm:$0xff]
    %v9704 = vld [vmem:[%s8347 + $0x49] sm:$0xff]
    %v9705 = vld [vmem:[%s8347 + $0x51] sm:$0xff]
    %v9706 = vld [vmem:[%s8347 + $0x61] sm:$0xff]
    %v9707 = vld [vmem:[%s8347 + $0x69] sm:$0xff]
    %v9708 = vld [vmem:[%s8347 + $0x79] sm:$0xff]
    %v9709 = vld [vmem:[%s8347 + $0x81] sm:$0xff]
    %v9710 = vld [vmem:[%s8347 + $0x91] sm:$0xff]
    %v9711 = vld [vmem:[%s8347 + $0x99] sm:$0xff]
    %v9712 = vld [vmem:[%s8347 + $0xa9] sm:$0xff]
    %v9713 = vld [vmem:[%s8347 + $0xb1] sm:$0xff]
    %v9714 = vld [vmem:[%s8347 + $0xc1] sm:$0xff]
    %v9715 = vld [vmem:[%s8347 + $0xc9] sm:$0xff]
    %v9716 = vld [vmem:[%s8347 + $0xd9] sm:$0xff]
    %v9717 = vld [vmem:[%s8347 + $0xe1] sm:$0xff]
    %v9718 = vld [vmem:[%s8347 + $0xf1] sm:$0xff]
    %v9719 = vld [vmem:[%s8347 + $0xf9] sm:$0xff]
    %v9720 = vld [vmem:[%s8347 + $0x109] sm:$0xff]
    %v9721 = vld [vmem:[%s8347 + $0x111] sm:$0xff]
    %v9722 = vld [vmem:[%s8347 + $0x121] sm:$0xff]
    %v9723 = vld [vmem:[%s8347 + $0x129] sm:$0xff]
    %v9724 = vld [vmem:[%s8347 + $0x139] sm:$0xff]
    %v9725 = vld [vmem:[%s8347 + $0x141] sm:$0xff]
    %v9726 = vld [vmem:[%s8347 + $0x151] sm:$0xff]
    %v9727 = vld [vmem:[%s8347 + $0x159] sm:$0xff]
    %v9728 = vld [vmem:[%s8347 + $0x169] sm:$0xff]
    %v9729 = vld [vmem:[%s8347 + $0x171] sm:$0xff]
    %v9730 = vld [vmem:[%s8347 + $0x1b1] sm:$0xff]
    %v9731 = vld [vmem:[%s8347 + $0x1b9] sm:$0xff]
    %v9732 = vld [vmem:[%s8347 + $0x1c9] sm:$0xff]
    %v9733 = vld [vmem:[%s8347 + $0x1d1] sm:$0xff]
    %v9734 = vld [vmem:[%s8347 + $0x1e1] sm:$0xff]
    %v9735 = vld [vmem:[%s8347 + $0x1e9] sm:$0xff]
    %v9736 = vld [vmem:[%s8347 + $0x1f9] sm:$0xff]
    %v9737 = vld [vmem:[%s8347 + $0x201] sm:$0xff]
    %v9738 = vld [vmem:[%s8347 + $0x211] sm:$0xff]
    %v9739 = vld [vmem:[%s8347 + $0x219] sm:$0xff]
    %v9740 = vld [vmem:[%s8347 + $0x229] sm:$0xff]
    %v9741 = vld [vmem:[%s8347 + $0x231] sm:$0xff]
    %v9742 = vld [vmem:[%s8347 + $0x241] sm:$0xff]
    %v9743 = vld [vmem:[%s8347 + $0x249] sm:$0xff]
    %v9744 = vld [vmem:[%s8347 + $0x259] sm:$0xff]
    %v9745 = vld [vmem:[%s8347 + $0x261] sm:$0xff]
    %v9746 = vld [vmem:[%s8347 + $0x271] sm:$0xff]
    %v9747 = vld [vmem:[%s8347 + $0x279] sm:$0xff]
    %v9748 = vld [vmem:[%s8347 + $0x289] sm:$0xff]
    %v9749 = vld [vmem:[%s8347 + $0x291] sm:$0xff]
    %v9750 = vld [vmem:[%s8347 + $0x2a1] sm:$0xff]
    %v9751 = vld [vmem:[%s8347 + $0x2a9] sm:$0xff]
    %v9752 = vld [vmem:[%s8347 + $0x2b9] sm:$0xff]
    %v9753 = vld [vmem:[%s8347 + $0x2c1] sm:$0xff]
    %v9754 = vld [vmem:[%s8347 + $0x2d1] sm:$0xff]
    %v9755 = vld [vmem:[%s8347 + $0x2d9] sm:$0xff]
    %v9756 = vld [vmem:[%s8347 + $0x2e9] sm:$0xff]
    %v9757 = vld [vmem:[%s8347 + $0x2f1] sm:$0xff]
    %v9758 = vld [vmem:[%s8347 + $0x301] sm:$0xff]
    %v9759 = vld [vmem:[%s8347 + $0x309] sm:$0xff]
    %v9760 = vld [vmem:[%s8347 + $0x319] sm:$0xff]
    %v9761 = vld [vmem:[%s8347 + $0x321] sm:$0xff]
    %v9762 = vld [vmem:[%s8347 + $0x361] sm:$0xff]
    %v9763 = vld [vmem:[%s8347 + $0x369] sm:$0xff]
    %v9764 = vld [vmem:[%s8347 + $0x379] sm:$0xff]
    %v9765 = vld [vmem:[%s8347 + $0x381] sm:$0xff]
    %v9766 = vld [vmem:[%s8347 + $0x391] sm:$0xff]
    %v9767 = vld [vmem:[%s8347 + $0x399] sm:$0xff]
    %v9768 = vld [vmem:[%s8347 + $0x3a9] sm:$0xff]
    %v9769 = vld [vmem:[%s8347 + $0x3b1] sm:$0xff]
    %v9770 = vld [vmem:[%s8347 + $0x3c1] sm:$0xff]
    %v9771 = vld [vmem:[%s8347 + $0x3c9] sm:$0xff]
    %v9772 = vld [vmem:[%s8347 + $0x3d9] sm:$0xff]
    %v9773 = vld [vmem:[%s8347 + $0x3e1] sm:$0xff]
    %v9774 = vld [vmem:[%s8347 + $0x3f1] sm:$0xff]
    %v9775 = vld [vmem:[%s8347 + $0x3f9] sm:$0xff]
    %v9776 = vld [vmem:[%s8347 + $0x409] sm:$0xff]
    %v9777 = vld [vmem:[%s8347 + $0x411] sm:$0xff]
    %v9778 = vld [vmem:[%s8347 + $0x421] sm:$0xff]
    %v9779 = vld [vmem:[%s8347 + $0x429] sm:$0xff]
    %v9780 = vld [vmem:[%s8347 + $0x439] sm:$0xff]
    %v9781 = vld [vmem:[%s8347 + $0x441] sm:$0xff]
    %v9782 = vld [vmem:[%s8347 + $0x451] sm:$0xff]
    %v9783 = vld [vmem:[%s8347 + $0x459] sm:$0xff]
    %v9784 = vld [vmem:[%s8347 + $0x469] sm:$0xff]
    %v9785 = vld [vmem:[%s8347 + $0x471] sm:$0xff]
    %v9786 = vld [vmem:[%s8347 + $0x481] sm:$0xff]
    %v9787 = vld [vmem:[%s8347 + $0x489] sm:$0xff]
    %v9788 = vld [vmem:[%s8347 + $0x499] sm:$0xff]
    %v9789 = vld [vmem:[%s8347 + $0x4a1] sm:$0xff]
    %v9790 = vld [vmem:[%s8347 + $0x4b1] sm:$0xff]
    %v9791 = vld [vmem:[%s8347 + $0x4b9] sm:$0xff]
    %v9792 = vld [vmem:[%s8347 + $0x4c9] sm:$0xff]
    %v9793 = vld [vmem:[%s8347 + $0x4d1] sm:$0xff]
    %v9794 = vld [vmem:[%s8347 + $0x511] sm:$0xff]
    %v9795 = vld [vmem:[%s8347 + $0x519] sm:$0xff]
    %v9796 = vld [vmem:[%s8347 + $0x529] sm:$0xff]
    %v9797 = vld [vmem:[%s8347 + $0x531] sm:$0xff]
    %v9798 = vld [vmem:[%s8347 + $0x541] sm:$0xff]
    %v9799 = vld [vmem:[%s8347 + $0x549] sm:$0xff]
    %v9800 = vld [vmem:[%s8347 + $0x559] sm:$0xff]
    %v9801 = vld [vmem:[%s8347 + $0x561] sm:$0xff]
    %v9802 = vld [vmem:[%s8347 + $0x571] sm:$0xff]
    %v9803 = vld [vmem:[%s8347 + $0x579] sm:$0xff]
    %v9804 = vld [vmem:[%s8347 + $0x589] sm:$0xff]
    %v9805 = vld [vmem:[%s8347 + $0x591] sm:$0xff]
    %v9806 = vld [vmem:[%s8347 + $0x5a1] sm:$0xff]
    %v9807 = vld [vmem:[%s8347 + $0x5a9] sm:$0xff]
    %v9808 = vld [vmem:[%s8347 + $0x5b9] sm:$0xff]
    %v9809 = vld [vmem:[%s8347 + $0x5c1] sm:$0xff]
    %v9810 = vld [vmem:[%s8347 + $0x5d1] sm:$0xff]
    %v9811 = vld [vmem:[%s8347 + $0x5d9] sm:$0xff]
    %v9812 = vld [vmem:[%s8347 + $0x5e9] sm:$0xff]
    %v9813 = vld [vmem:[%s8347 + $0x5f1] sm:$0xff]
    %v9814 = vld [vmem:[%s8347 + $0x601] sm:$0xff]
    %v9815 = vld [vmem:[%s8347 + $0x609] sm:$0xff]
    %v9816 = vld [vmem:[%s8347 + $0x619] sm:$0xff]
    %v9817 = vld [vmem:[%s8347 + $0x621] sm:$0xff]
    %v9818 = vld [vmem:[%s8347 + $0x631] sm:$0xff]
    %v9819 = vld [vmem:[%s8347 + $0x639] sm:$0xff]
    %v9820 = vld [vmem:[%s8347 + $0x649] sm:$0xff]
    %v9821 = vld [vmem:[%s8347 + $0x651] sm:$0xff]
    %v9822 = vld [vmem:[%s8347 + $0x661] sm:$0xff]
    %v9823 = vld [vmem:[%s8347 + $0x669] sm:$0xff]
    %v9824 = vld [vmem:[%s8347 + $0x679] sm:$0xff]
    %v9825 = vld [vmem:[%s8347 + $0x681] sm:$0xff]
    %s9826 = scalar_lea.vmem %s2, 28
    %v9827 = vld [vmem:[%s9826] sm:$0xf]
    %v9829 = vsel %vm27, %v9698, 0
    %v9832 = vsel %vm27, %v9699, 0
    %v9835 = vsel %vm27, %v9700, 0
    %v9838 = vsel %vm27, %v9701, 0
    %v9841 = vsel %vm27, %v9702, 0
    %v9844 = vsel %vm27, %v9703, 0
    %v9847 = vsel %vm27, %v9704, 0
    %v9850 = vsel %vm27, %v9705, 0
    %v9853 = vsel %vm27, %v9706, 0
    %v9856 = vsel %vm27, %v9707, 0
    %v9859 = vsel %vm27, %v9708, 0
    %v9862 = vsel %vm27, %v9709, 0
    %v9865 = vsel %vm27, %v9710, 0
    %v9868 = vsel %vm27, %v9711, 0
    %v9871 = vsel %vm27, %v9712, 0
    %v9874 = vsel %vm27, %v9713, 0
    %v9877 = vsel %vm27, %v9714, 0
    %v9880 = vsel %vm27, %v9715, 0
    %v9883 = vsel %vm27, %v9716, 0
    %v9886 = vsel %vm27, %v9717, 0
    %v9889 = vsel %vm27, %v9718, 0
    %v9892 = vsel %vm27, %v9719, 0
    %v9895 = vsel %vm27, %v9720, 0
    %v9898 = vsel %vm27, %v9721, 0
    %v9901 = vsel %vm27, %v9722, 0
    %v9904 = vsel %vm27, %v9723, 0
    %v9907 = vsel %vm27, %v9724, 0
    %v9910 = vsel %vm27, %v9725, 0
    %v9913 = vsel %vm27, %v9726, 0
    %v9916 = vsel %vm27, %v9727, 0
    %v9919 = vsel %vm27, %v9728, 0
    %v9922 = vsel %vm27, %v9729, 0
    %v9925 = vsel %vm27, %v9730, 0
    %v9928 = vsel %vm27, %v9731, 0
    %v9931 = vsel %vm27, %v9732, 0
    %v9934 = vsel %vm27, %v9733, 0
    %v9937 = vsel %vm27, %v9734, 0
    %v9940 = vsel %vm27, %v9735, 0
    %v9943 = vsel %vm27, %v9736, 0
    %v9946 = vsel %vm27, %v9737, 0
    %v9949 = vsel %vm27, %v9738, 0
    %v9952 = vsel %vm27, %v9739, 0
    %v9955 = vsel %vm27, %v9740, 0
    %v9958 = vsel %vm27, %v9741, 0
    %v9961 = vsel %vm27, %v9742, 0
    %v9964 = vsel %vm27, %v9743, 0
    %v9967 = vsel %vm27, %v9744, 0
    %v9970 = vsel %vm27, %v9745, 0
    %v9973 = vsel %vm27, %v9746, 0
    %v9976 = vsel %vm27, %v9747, 0
    %v9979 = vsel %vm27, %v9748, 0
    %v9982 = vsel %vm27, %v9749, 0
    %v9985 = vsel %vm27, %v9750, 0
    %v9988 = vsel %vm27, %v9751, 0
    %v9991 = vsel %vm27, %v9752, 0
    %v9994 = vsel %vm27, %v9753, 0
    %v9997 = vsel %vm27, %v9754, 0
    %v10000 = vsel %vm27, %v9755, 0
    %v10003 = vsel %vm27, %v9756, 0
    %v10006 = vsel %vm27, %v9757, 0
    %v10009 = vsel %vm27, %v9758, 0
    %v10012 = vsel %vm27, %v9759, 0
    %v10015 = vsel %vm27, %v9760, 0
    %v10018 = vsel %vm27, %v9761, 0
    %v10021 = vsel %vm27, %v9762, 0
    %v10024 = vsel %vm27, %v9763, 0
    %v10027 = vsel %vm27, %v9764, 0
    %v10030 = vsel %vm27, %v9765, 0
    %v10033 = vsel %vm27, %v9766, 0
    %v10036 = vsel %vm27, %v9767, 0
    %v10039 = vsel %vm27, %v9768, 0
    %v10042 = vsel %vm27, %v9769, 0
    %v10045 = vsel %vm27, %v9770, 0
    %v10048 = vsel %vm27, %v9771, 0
    %v10051 = vsel %vm27, %v9772, 0
    %v10054 = vsel %vm27, %v9773, 0
    %v10057 = vsel %vm27, %v9774, 0
    %v10060 = vsel %vm27, %v9775, 0
    %v10063 = vsel %vm27, %v9776, 0
    %v10066 = vsel %vm27, %v9777, 0
    %v10069 = vsel %vm27, %v9778, 0
    %v10072 = vsel %vm27, %v9779, 0
    %v10075 = vsel %vm27, %v9780, 0
    %v10078 = vsel %vm27, %v9781, 0
    %v10081 = vsel %vm27, %v9782, 0
    %v10084 = vsel %vm27, %v9783, 0
    %v10087 = vsel %vm27, %v9784, 0
    %v10090 = vsel %vm27, %v9785, 0
    %v10093 = vsel %vm27, %v9786, 0
    %v10096 = vsel %vm27, %v9787, 0
    %v10099 = vsel %vm27, %v9788, 0
    %v10102 = vsel %vm27, %v9789, 0
    %v10105 = vsel %vm27, %v9790, 0
    %v10108 = vsel %vm27, %v9791, 0
    %v10111 = vsel %vm27, %v9792, 0
    %v10114 = vsel %vm27, %v9793, 0
    %v10117 = vsel %vm27, %v9794, 0
    %v10120 = vsel %vm27, %v9795, 0
    %v10123 = vsel %vm27, %v9796, 0
    %v10126 = vsel %vm27, %v9797, 0
    %v10129 = vsel %vm27, %v9798, 0
    %v10132 = vsel %vm27, %v9799, 0
    %v10135 = vsel %vm27, %v9800, 0
    %v10138 = vsel %vm27, %v9801, 0
    %v10141 = vsel %vm27, %v9802, 0
    %v10144 = vsel %vm27, %v9803, 0
    %v10147 = vsel %vm27, %v9804, 0
    %v10150 = vsel %vm27, %v9805, 0
    %v10153 = vsel %vm27, %v9806, 0
    %v10156 = vsel %vm27, %v9807, 0
    %v10159 = vsel %vm27, %v9808, 0
    %v10162 = vsel %vm27, %v9809, 0
    %v10165 = vsel %vm27, %v9810, 0
    %v10168 = vsel %vm27, %v9811, 0
    %v10171 = vsel %vm27, %v9812, 0
    %v10174 = vsel %vm27, %v9813, 0
    %v10177 = vsel %vm27, %v9814, 0
    %v10180 = vsel %vm27, %v9815, 0
    %v10183 = vsel %vm27, %v9816, 0
    %v10186 = vsel %vm27, %v9817, 0
    %v10189 = vsel %vm27, %v9818, 0
    %v10192 = vsel %vm27, %v9819, 0
    %v10195 = vsel %vm27, %v9820, 0
    %v10198 = vsel %vm27, %v9821, 0
    %v10201 = vsel %vm27, %v9822, 0
    %v10204 = vsel %vm27, %v9823, 0
    %v10207 = vsel %vm27, %v9824, 0
    %v10210 = vsel %vm27, %v9825, 0
    %v10213 = vsel %vm1146, %v9827, 0
    %10215 = vmatprep.subr.mxu0 0.0
    %10216 = vmatpush1.msra.mxu0 0.0
    %10217 = vmatprep.subr.mxu0 0.0
    %10218 = vmatpush1.msra.mxu0 0.0
    %10219 = vmatprep.subr.mxu0 0.0
    %10220 = vmatpush1.msra.mxu0 0.0
    %10221 = vmatprep.subr.mxu0 0.0
    %10222 = vmatpush1.msra.mxu0 0.0
    %10223 = vmatprep.subr.mxu0 0.0
    %10224 = vmatpush1.msra.mxu0 0.0
    %10225 = vmatprep.subr.mxu0 0.0
    %10226 = vmatpush1.msra.mxu0 0.0
    %10227 = vmatprep.subr.mxu0 0.0
    %10228 = vmatpush1.msra.mxu0 0.0
    %10229 = vmatprep.subr.mxu0 0.0
    %10230 = vmatpush1.msra.mxu0 0.0
    %10231 = vmatprep.subr.mxu0 0.0
    %10232 = vmatpush1.msra.mxu0 0.0
    %10233 = vmatprep.subr.mxu0 0.0
    %10234 = vmatpush1.msra.mxu0 0.0
    %10235 = vmatprep.subr.mxu0 0.0
    %10236 = vmatpush1.msra.mxu0 0.0
    %10237 = vmatprep.subr.mxu0 0.0
    %10238 = vmatpush1.msra.mxu0 0.0
    %10239 = vmatprep.subr.mxu0 0.0
    %10240 = vmatpush1.msra.mxu0 0.0
    %10241 = vmatprep.subr.mxu0 0.0
    %10242 = vmatpush1.msra.mxu0 0.0
    %10243 = vmatprep.subr.mxu0 0.0
    %10244 = vmatpush1.msra.mxu0 0.0
    %10245 = vmatprep.subr.mxu0 0.0
    %10246 = vmatpush1.msra.mxu0 %v10213
    %10247 = vmatprep.subr.mxu0 0.0
    %10248 = vmatpush2.msra.mxu0 0.0
    %10249 = vmatprep.subr.mxu0 0.0
    %10250 = vmatpush2.msra.mxu0 0.0
    %10251 = vmatprep.subr.mxu0 0.0
    %10252 = vmatpush2.msra.mxu0 0.0
    %10253 = vmatprep.subr.mxu0 0.0
    %10254 = vmatpush2.msra.mxu0 0.0
    %10255 = vmatprep.subr.mxu0 0.0
    %10256 = vmatpush2.msra.mxu0 0.0
    %10257 = vmatprep.subr.mxu0 0.0
    %10258 = vmatpush2.msra.mxu0 0.0
    %10259 = vmatprep.subr.mxu0 0.0
    %10260 = vmatpush2.msra.mxu0 0.0
    %10261 = vmatprep.subr.mxu0 0.0
    %10262 = vmatpush2.msra.mxu0 0.0
    %10263 = vmatprep.subr.mxu0 0.0
    %10264 = vmatpush2.msra.mxu0 0.0
    %10265 = vmatprep.subr.mxu0 0.0
    %10266 = vmatpush2.msra.mxu0 0.0
    %10267 = vmatprep.subr.mxu0 0.0
    %10268 = vmatpush2.msra.mxu0 0.0
    %10269 = vmatprep.subr.mxu0 0.0
    %10270 = vmatpush2.msra.mxu0 0.0
    %10271 = vmatprep.subr.mxu0 0.0
    %10272 = vmatpush2.msra.mxu0 0.0
    %10273 = vmatprep.subr.mxu0 0.0
    %10274 = vmatpush2.msra.mxu0 0.0
    %10275 = vmatprep.subr.mxu0 0.0
    %10276 = vmatpush2.msra.mxu0 0.0
    %10277 = vmatprep.subr.mxu0 0.0
    %10278 = vmatpush2.msra.mxu0 0.0
    %10279 = vmatprep.mubr.f32.mxu0 0.0
    %10280 = vmatmul.mubr.f32.gmra.mxu0 %v9829
    %v10281 = vpop.f32.mrf.mxu0
    %v10282 = vadd.f32 0.0, %v10281
    %v10283 = vpop.f32.mrf.mxu0
    %10284 = vmatprep.mubr.f32.mxu0 0.0
    %10285 = vmatmul.mubr.f32.gmra.mxu0 %v9832
    %v10286 = vpop.f32.mrf.mxu0
    %v10287 = vadd.f32 0.0, %v10286
    %v10288 = vpop.f32.mrf.mxu0
    %10289 = vmatprep.mubr.f32.mxu0 0.0
    %10290 = vmatmul.mubr.f32.gmra.mxu0 %v9835
    %v10291 = vpop.f32.mrf.mxu0
    %v10292 = vadd.f32 0.0, %v10291
    %v10293 = vpop.f32.mrf.mxu0
    %10294 = vmatprep.mubr.f32.mxu0 0.0
    %10295 = vmatmul.mubr.f32.gmra.mxu0 %v9838
    %v10296 = vpop.f32.mrf.mxu0
    %v10297 = vadd.f32 0.0, %v10296
    %v10298 = vpop.f32.mrf.mxu0
    %10299 = vmatprep.mubr.f32.mxu0 0.0
    %10300 = vmatmul.mubr.f32.gmra.mxu0 %v9841
    %v10301 = vpop.f32.mrf.mxu0
    %v10302 = vadd.f32 0.0, %v10301
    %v10303 = vpop.f32.mrf.mxu0
    %10304 = vmatprep.mubr.f32.mxu0 0.0
    %10305 = vmatmul.mubr.f32.gmra.mxu0 %v9844
    %v10306 = vpop.f32.mrf.mxu0
    %v10307 = vadd.f32 0.0, %v10306
    %v10308 = vpop.f32.mrf.mxu0
    %10309 = vmatprep.mubr.f32.mxu0 0.0
    %10310 = vmatmul.mubr.f32.gmra.mxu0 %v9847
    %v10311 = vpop.f32.mrf.mxu0
    %v10312 = vadd.f32 0.0, %v10311
    %v10313 = vpop.f32.mrf.mxu0
    %10314 = vmatprep.mubr.f32.mxu0 0.0
    %10315 = vmatmul.mubr.f32.gmra.mxu0 %v9850
    %v10316 = vpop.f32.mrf.mxu0
    %v10317 = vadd.f32 0.0, %v10316
    %v10318 = vpop.f32.mrf.mxu0
    %10319 = vmatprep.mubr.f32.mxu0 0.0
    %10320 = vmatmul.mubr.f32.gmra.mxu0 %v9853
    %v10321 = vpop.f32.mrf.mxu0
    %v10322 = vadd.f32 0.0, %v10321
    %v10323 = vpop.f32.mrf.mxu0
    %10324 = vmatprep.mubr.f32.mxu0 0.0
    %10325 = vmatmul.mubr.f32.gmra.mxu0 %v9856
    %v10326 = vpop.f32.mrf.mxu0
    %v10327 = vadd.f32 0.0, %v10326
    %v10328 = vpop.f32.mrf.mxu0
    %10329 = vmatprep.mubr.f32.mxu0 0.0
    %10330 = vmatmul.mubr.f32.gmra.mxu0 %v9859
    %v10331 = vpop.f32.mrf.mxu0
    %v10332 = vadd.f32 0.0, %v10331
    %v10333 = vpop.f32.mrf.mxu0
    %10334 = vmatprep.mubr.f32.mxu0 0.0
    %10335 = vmatmul.mubr.f32.gmra.mxu0 %v9862
    %v10336 = vpop.f32.mrf.mxu0
    %v10337 = vadd.f32 0.0, %v10336
    %v10338 = vpop.f32.mrf.mxu0
    %10339 = vmatprep.mubr.f32.mxu0 0.0
    %10340 = vmatmul.mubr.f32.gmra.mxu0 %v9865
    %v10341 = vpop.f32.mrf.mxu0
    %v10342 = vadd.f32 0.0, %v10341
    %v10343 = vpop.f32.mrf.mxu0
    %10344 = vmatprep.mubr.f32.mxu0 0.0
    %10345 = vmatmul.mubr.f32.gmra.mxu0 %v9868
    %v10346 = vpop.f32.mrf.mxu0
    %v10347 = vadd.f32 0.0, %v10346
    %v10348 = vpop.f32.mrf.mxu0
    %10349 = vmatprep.mubr.f32.mxu0 0.0
    %10350 = vmatmul.mubr.f32.gmra.mxu0 %v9871
    %v10351 = vpop.f32.mrf.mxu0
    %v10352 = vadd.f32 0.0, %v10351
    %v10353 = vpop.f32.mrf.mxu0
    %10354 = vmatprep.mubr.f32.mxu0 0.0
    %10355 = vmatmul.mubr.f32.gmra.mxu0 %v9874
    %v10356 = vpop.f32.mrf.mxu0
    %v10357 = vadd.f32 0.0, %v10356
    %v10358 = vpop.f32.mrf.mxu0
    %10359 = vmatprep.mubr.f32.mxu0 0.0
    %10360 = vmatmul.mubr.f32.gmra.mxu0 %v9877
    %v10361 = vpop.f32.mrf.mxu0
    %v10362 = vadd.f32 0.0, %v10361
    %v10363 = vpop.f32.mrf.mxu0
    %10364 = vmatprep.mubr.f32.mxu0 0.0
    %10365 = vmatmul.mubr.f32.gmra.mxu0 %v9880
    %v10366 = vpop.f32.mrf.mxu0
    %v10367 = vadd.f32 0.0, %v10366
    %v10368 = vpop.f32.mrf.mxu0
    %10369 = vmatprep.mubr.f32.mxu0 0.0
    %10370 = vmatmul.mubr.f32.gmra.mxu0 %v9883
    %v10371 = vpop.f32.mrf.mxu0
    %v10372 = vadd.f32 0.0, %v10371
    %v10373 = vpop.f32.mrf.mxu0
    %10374 = vmatprep.mubr.f32.mxu0 0.0
    %10375 = vmatmul.mubr.f32.gmra.mxu0 %v9886
    %v10376 = vpop.f32.mrf.mxu0
    %v10377 = vadd.f32 0.0, %v10376
    %v10378 = vpop.f32.mrf.mxu0
    %10379 = vmatprep.mubr.f32.mxu0 0.0
    %10380 = vmatmul.mubr.f32.gmra.mxu0 %v9889
    %v10381 = vpop.f32.mrf.mxu0
    %v10382 = vadd.f32 0.0, %v10381
    %v10383 = vpop.f32.mrf.mxu0
    %10384 = vmatprep.mubr.f32.mxu0 0.0
    %10385 = vmatmul.mubr.f32.gmra.mxu0 %v9892
    %v10386 = vpop.f32.mrf.mxu0
    %v10387 = vadd.f32 0.0, %v10386
    %v10388 = vpop.f32.mrf.mxu0
    %10389 = vmatprep.mubr.f32.mxu0 0.0
    %10390 = vmatmul.mubr.f32.gmra.mxu0 %v9895
    %v10391 = vpop.f32.mrf.mxu0
    %v10392 = vadd.f32 0.0, %v10391
    %v10393 = vpop.f32.mrf.mxu0
    %10394 = vmatprep.mubr.f32.mxu0 0.0
    %10395 = vmatmul.mubr.f32.gmra.mxu0 %v9898
    %v10396 = vpop.f32.mrf.mxu0
    %v10397 = vadd.f32 0.0, %v10396
    %v10398 = vpop.f32.mrf.mxu0
    %10399 = vmatprep.mubr.f32.mxu0 0.0
    %10400 = vmatmul.mubr.f32.gmra.mxu0 %v9901
    %v10401 = vpop.f32.mrf.mxu0
    %v10402 = vadd.f32 0.0, %v10401
    %v10403 = vpop.f32.mrf.mxu0
    %10404 = vmatprep.mubr.f32.mxu0 0.0
    %10405 = vmatmul.mubr.f32.gmra.mxu0 %v9904
    %v10406 = vpop.f32.mrf.mxu0
    %v10407 = vadd.f32 0.0, %v10406
    %v10408 = vpop.f32.mrf.mxu0
    %10409 = vmatprep.mubr.f32.mxu0 0.0
    %10410 = vmatmul.mubr.f32.gmra.mxu0 %v9907
    %v10411 = vpop.f32.mrf.mxu0
    %v10412 = vadd.f32 0.0, %v10411
    %v10413 = vpop.f32.mrf.mxu0
    %10414 = vmatprep.mubr.f32.mxu0 0.0
    %10415 = vmatmul.mubr.f32.gmra.mxu0 %v9910
    %v10416 = vpop.f32.mrf.mxu0
    %v10417 = vadd.f32 0.0, %v10416
    %v10418 = vpop.f32.mrf.mxu0
    %10419 = vmatprep.mubr.f32.mxu0 0.0
    %10420 = vmatmul.mubr.f32.gmra.mxu0 %v9913
    %v10421 = vpop.f32.mrf.mxu0
    %v10422 = vadd.f32 0.0, %v10421
    %v10423 = vpop.f32.mrf.mxu0
    %10424 = vmatprep.mubr.f32.mxu0 0.0
    %10425 = vmatmul.mubr.f32.gmra.mxu0 %v9916
    %v10426 = vpop.f32.mrf.mxu0
    %v10427 = vadd.f32 0.0, %v10426
    %v10428 = vpop.f32.mrf.mxu0
    %10429 = vmatprep.mubr.f32.mxu0 0.0
    %10430 = vmatmul.mubr.f32.gmra.mxu0 %v9919
    %v10431 = vpop.f32.mrf.mxu0
    %v10432 = vadd.f32 0.0, %v10431
    %v10433 = vpop.f32.mrf.mxu0
    %10434 = vmatprep.mubr.f32.mxu0 0.0
    %10435 = vmatmul.mubr.f32.gmra.mxu0 %v9922
    %v10436 = vpop.f32.mrf.mxu0
    %v10437 = vadd.f32 0.0, %v10436
    %v10438 = vpop.f32.mrf.mxu0
    %10439 = vmatprep.mubr.f32.mxu0 0.0
    %10440 = vmatmul.mubr.f32.gmra.mxu0 %v9925
    %v10441 = vpop.f32.mrf.mxu0
    %v10442 = vadd.f32 0.0, %v10441
    %v10443 = vpop.f32.mrf.mxu0
    %10444 = vmatprep.mubr.f32.mxu0 0.0
    %10445 = vmatmul.mubr.f32.gmra.mxu0 %v9928
    %v10446 = vpop.f32.mrf.mxu0
    %v10447 = vadd.f32 0.0, %v10446
    %v10448 = vpop.f32.mrf.mxu0
    %10449 = vmatprep.mubr.f32.mxu0 0.0
    %10450 = vmatmul.mubr.f32.gmra.mxu0 %v9931
    %v10451 = vpop.f32.mrf.mxu0
    %v10452 = vadd.f32 0.0, %v10451
    %v10453 = vpop.f32.mrf.mxu0
    %10454 = vmatprep.mubr.f32.mxu0 0.0
    %10455 = vmatmul.mubr.f32.gmra.mxu0 %v9934
    %v10456 = vpop.f32.mrf.mxu0
    %v10457 = vadd.f32 0.0, %v10456
    %v10458 = vpop.f32.mrf.mxu0
    %10459 = vmatprep.mubr.f32.mxu0 0.0
    %10460 = vmatmul.mubr.f32.gmra.mxu0 %v9937
    %v10461 = vpop.f32.mrf.mxu0
    %v10462 = vadd.f32 0.0, %v10461
    %v10463 = vpop.f32.mrf.mxu0
    %10464 = vmatprep.mubr.f32.mxu0 0.0
    %10465 = vmatmul.mubr.f32.gmra.mxu0 %v9940
    %v10466 = vpop.f32.mrf.mxu0
    %v10467 = vadd.f32 0.0, %v10466
    %v10468 = vpop.f32.mrf.mxu0
    %10469 = vmatprep.mubr.f32.mxu0 0.0
    %10470 = vmatmul.mubr.f32.gmra.mxu0 %v9943
    %v10471 = vpop.f32.mrf.mxu0
    %v10472 = vadd.f32 0.0, %v10471
    %v10473 = vpop.f32.mrf.mxu0
    %10474 = vmatprep.mubr.f32.mxu0 0.0
    %10475 = vmatmul.mubr.f32.gmra.mxu0 %v9946
    %v10476 = vpop.f32.mrf.mxu0
    %v10477 = vadd.f32 0.0, %v10476
    %v10478 = vpop.f32.mrf.mxu0
    %10479 = vmatprep.mubr.f32.mxu0 0.0
    %10480 = vmatmul.mubr.f32.gmra.mxu0 %v9949
    %v10481 = vpop.f32.mrf.mxu0
    %v10482 = vadd.f32 0.0, %v10481
    %v10483 = vpop.f32.mrf.mxu0
    %10484 = vmatprep.mubr.f32.mxu0 0.0
    %10485 = vmatmul.mubr.f32.gmra.mxu0 %v9952
    %v10486 = vpop.f32.mrf.mxu0
    %v10487 = vadd.f32 0.0, %v10486
    %v10488 = vpop.f32.mrf.mxu0
    %10489 = vmatprep.mubr.f32.mxu0 0.0
    %10490 = vmatmul.mubr.f32.gmra.mxu0 %v9955
    %v10491 = vpop.f32.mrf.mxu0
    %v10492 = vadd.f32 0.0, %v10491
    %v10493 = vpop.f32.mrf.mxu0
    %10494 = vmatprep.mubr.f32.mxu0 0.0
    %10495 = vmatmul.mubr.f32.gmra.mxu0 %v9958
    %v10496 = vpop.f32.mrf.mxu0
    %v10497 = vadd.f32 0.0, %v10496
    %v10498 = vpop.f32.mrf.mxu0
    %10499 = vmatprep.mubr.f32.mxu0 0.0
    %10500 = vmatmul.mubr.f32.gmra.mxu0 %v9961
    %v10501 = vpop.f32.mrf.mxu0
    %v10502 = vadd.f32 0.0, %v10501
    %v10503 = vpop.f32.mrf.mxu0
    %10504 = vmatprep.mubr.f32.mxu0 0.0
    %10505 = vmatmul.mubr.f32.gmra.mxu0 %v9964
    %v10506 = vpop.f32.mrf.mxu0
    %v10507 = vadd.f32 0.0, %v10506
    %v10508 = vpop.f32.mrf.mxu0
    %10509 = vmatprep.mubr.f32.mxu0 0.0
    %10510 = vmatmul.mubr.f32.gmra.mxu0 %v9967
    %v10511 = vpop.f32.mrf.mxu0
    %v10512 = vadd.f32 0.0, %v10511
    %v10513 = vpop.f32.mrf.mxu0
    %10514 = vmatprep.mubr.f32.mxu0 0.0
    %10515 = vmatmul.mubr.f32.gmra.mxu0 %v9970
    %v10516 = vpop.f32.mrf.mxu0
    %v10517 = vadd.f32 0.0, %v10516
    %v10518 = vpop.f32.mrf.mxu0
    %10519 = vmatprep.mubr.f32.mxu0 0.0
    %10520 = vmatmul.mubr.f32.gmra.mxu0 %v9973
    %v10521 = vpop.f32.mrf.mxu0
    %v10522 = vadd.f32 0.0, %v10521
    %v10523 = vpop.f32.mrf.mxu0
    %10524 = vmatprep.mubr.f32.mxu0 0.0
    %10525 = vmatmul.mubr.f32.gmra.mxu0 %v9976
    %v10526 = vpop.f32.mrf.mxu0
    %v10527 = vadd.f32 0.0, %v10526
    %v10528 = vpop.f32.mrf.mxu0
    %10529 = vmatprep.mubr.f32.mxu0 0.0
    %10530 = vmatmul.mubr.f32.gmra.mxu0 %v9979
    %v10531 = vpop.f32.mrf.mxu0
    %v10532 = vadd.f32 0.0, %v10531
    %v10533 = vpop.f32.mrf.mxu0
    %10534 = vmatprep.mubr.f32.mxu0 0.0
    %10535 = vmatmul.mubr.f32.gmra.mxu0 %v9982
    %v10536 = vpop.f32.mrf.mxu0
    %v10537 = vadd.f32 0.0, %v10536
    %v10538 = vpop.f32.mrf.mxu0
    %10539 = vmatprep.mubr.f32.mxu0 0.0
    %10540 = vmatmul.mubr.f32.gmra.mxu0 %v9985
    %v10541 = vpop.f32.mrf.mxu0
    %v10542 = vadd.f32 0.0, %v10541
    %v10543 = vpop.f32.mrf.mxu0
    %10544 = vmatprep.mubr.f32.mxu0 0.0
    %10545 = vmatmul.mubr.f32.gmra.mxu0 %v9988
    %v10546 = vpop.f32.mrf.mxu0
    %v10547 = vadd.f32 0.0, %v10546
    %v10548 = vpop.f32.mrf.mxu0
    %10549 = vmatprep.mubr.f32.mxu0 0.0
    %10550 = vmatmul.mubr.f32.gmra.mxu0 %v9991
    %v10551 = vpop.f32.mrf.mxu0
    %v10552 = vadd.f32 0.0, %v10551
    %v10553 = vpop.f32.mrf.mxu0
    %10554 = vmatprep.mubr.f32.mxu0 0.0
    %10555 = vmatmul.mubr.f32.gmra.mxu0 %v9994
    %v10556 = vpop.f32.mrf.mxu0
    %v10557 = vadd.f32 0.0, %v10556
    %v10558 = vpop.f32.mrf.mxu0
    %10559 = vmatprep.mubr.f32.mxu0 0.0
    %10560 = vmatmul.mubr.f32.gmra.mxu0 %v9997
    %v10561 = vpop.f32.mrf.mxu0
    %v10562 = vadd.f32 0.0, %v10561
    %v10563 = vpop.f32.mrf.mxu0
    %10564 = vmatprep.mubr.f32.mxu0 0.0
    %10565 = vmatmul.mubr.f32.gmra.mxu0 %v10000
    %v10566 = vpop.f32.mrf.mxu0
    %v10567 = vadd.f32 0.0, %v10566
    %v10568 = vpop.f32.mrf.mxu0
    %10569 = vmatprep.mubr.f32.mxu0 0.0
    %10570 = vmatmul.mubr.f32.gmra.mxu0 %v10003
    %v10571 = vpop.f32.mrf.mxu0
    %v10572 = vadd.f32 0.0, %v10571
    %v10573 = vpop.f32.mrf.mxu0
    %10574 = vmatprep.mubr.f32.mxu0 0.0
    %10575 = vmatmul.mubr.f32.gmra.mxu0 %v10006
    %v10576 = vpop.f32.mrf.mxu0
    %v10577 = vadd.f32 0.0, %v10576
    %v10578 = vpop.f32.mrf.mxu0
    %10579 = vmatprep.mubr.f32.mxu0 0.0
    %10580 = vmatmul.mubr.f32.gmra.mxu0 %v10009
    %v10581 = vpop.f32.mrf.mxu0
    %v10582 = vadd.f32 0.0, %v10581
    %v10583 = vpop.f32.mrf.mxu0
    %10584 = vmatprep.mubr.f32.mxu0 0.0
    %10585 = vmatmul.mubr.f32.gmra.mxu0 %v10012
    %v10586 = vpop.f32.mrf.mxu0
    %v10587 = vadd.f32 0.0, %v10586
    %v10588 = vpop.f32.mrf.mxu0
    %10589 = vmatprep.mubr.f32.mxu0 0.0
    %10590 = vmatmul.mubr.f32.gmra.mxu0 %v10015
    %v10591 = vpop.f32.mrf.mxu0
    %v10592 = vadd.f32 0.0, %v10591
    %v10593 = vpop.f32.mrf.mxu0
    %10594 = vmatprep.mubr.f32.mxu0 0.0
    %10595 = vmatmul.mubr.f32.gmra.mxu0 %v10018
    %v10596 = vpop.f32.mrf.mxu0
    %v10597 = vadd.f32 0.0, %v10596
    %v10598 = vpop.f32.mrf.mxu0
    %10599 = vmatprep.mubr.f32.mxu0 0.0
    %10600 = vmatmul.mubr.f32.gmra.mxu0 %v10021
    %v10601 = vpop.f32.mrf.mxu0
    %v10602 = vadd.f32 0.0, %v10601
    %v10603 = vpop.f32.mrf.mxu0
    %10604 = vmatprep.mubr.f32.mxu0 0.0
    %10605 = vmatmul.mubr.f32.gmra.mxu0 %v10024
    %v10606 = vpop.f32.mrf.mxu0
    %v10607 = vadd.f32 0.0, %v10606
    %v10608 = vpop.f32.mrf.mxu0
    %10609 = vmatprep.mubr.f32.mxu0 0.0
    %10610 = vmatmul.mubr.f32.gmra.mxu0 %v10027
    %v10611 = vpop.f32.mrf.mxu0
    %v10612 = vadd.f32 0.0, %v10611
    %v10613 = vpop.f32.mrf.mxu0
    %10614 = vmatprep.mubr.f32.mxu0 0.0
    %10615 = vmatmul.mubr.f32.gmra.mxu0 %v10030
    %v10616 = vpop.f32.mrf.mxu0
    %v10617 = vadd.f32 0.0, %v10616
    %v10618 = vpop.f32.mrf.mxu0
    %10619 = vmatprep.mubr.f32.mxu0 0.0
    %10620 = vmatmul.mubr.f32.gmra.mxu0 %v10033
    %v10621 = vpop.f32.mrf.mxu0
    %v10622 = vadd.f32 0.0, %v10621
    %v10623 = vpop.f32.mrf.mxu0
    %10624 = vmatprep.mubr.f32.mxu0 0.0
    %10625 = vmatmul.mubr.f32.gmra.mxu0 %v10036
    %v10626 = vpop.f32.mrf.mxu0
    %v10627 = vadd.f32 0.0, %v10626
    %v10628 = vpop.f32.mrf.mxu0
    %10629 = vmatprep.mubr.f32.mxu0 0.0
    %10630 = vmatmul.mubr.f32.gmra.mxu0 %v10039
    %v10631 = vpop.f32.mrf.mxu0
    %v10632 = vadd.f32 0.0, %v10631
    %v10633 = vpop.f32.mrf.mxu0
    %10634 = vmatprep.mubr.f32.mxu0 0.0
    %10635 = vmatmul.mubr.f32.gmra.mxu0 %v10042
    %v10636 = vpop.f32.mrf.mxu0
    %v10637 = vadd.f32 0.0, %v10636
    %v10638 = vpop.f32.mrf.mxu0
    %10639 = vmatprep.mubr.f32.mxu0 0.0
    %10640 = vmatmul.mubr.f32.gmra.mxu0 %v10045
    %v10641 = vpop.f32.mrf.mxu0
    %v10642 = vadd.f32 0.0, %v10641
    %v10643 = vpop.f32.mrf.mxu0
    %10644 = vmatprep.mubr.f32.mxu0 0.0
    %10645 = vmatmul.mubr.f32.gmra.mxu0 %v10048
    %v10646 = vpop.f32.mrf.mxu0
    %v10647 = vadd.f32 0.0, %v10646
    %v10648 = vpop.f32.mrf.mxu0
    %10649 = vmatprep.mubr.f32.mxu0 0.0
    %10650 = vmatmul.mubr.f32.gmra.mxu0 %v10051
    %v10651 = vpop.f32.mrf.mxu0
    %v10652 = vadd.f32 0.0, %v10651
    %v10653 = vpop.f32.mrf.mxu0
    %10654 = vmatprep.mubr.f32.mxu0 0.0
    %10655 = vmatmul.mubr.f32.gmra.mxu0 %v10054
    %v10656 = vpop.f32.mrf.mxu0
    %v10657 = vadd.f32 0.0, %v10656
    %v10658 = vpop.f32.mrf.mxu0
    %10659 = vmatprep.mubr.f32.mxu0 0.0
    %10660 = vmatmul.mubr.f32.gmra.mxu0 %v10057
    %v10661 = vpop.f32.mrf.mxu0
    %v10662 = vadd.f32 0.0, %v10661
    %v10663 = vpop.f32.mrf.mxu0
    %10664 = vmatprep.mubr.f32.mxu0 0.0
    %10665 = vmatmul.mubr.f32.gmra.mxu0 %v10060
    %v10666 = vpop.f32.mrf.mxu0
    %v10667 = vadd.f32 0.0, %v10666
    %v10668 = vpop.f32.mrf.mxu0
    %10669 = vmatprep.mubr.f32.mxu0 0.0
    %10670 = vmatmul.mubr.f32.gmra.mxu0 %v10063
    %v10671 = vpop.f32.mrf.mxu0
    %v10672 = vadd.f32 0.0, %v10671
    %v10673 = vpop.f32.mrf.mxu0
    %10674 = vmatprep.mubr.f32.mxu0 0.0
    %10675 = vmatmul.mubr.f32.gmra.mxu0 %v10066
    %v10676 = vpop.f32.mrf.mxu0
    %v10677 = vadd.f32 0.0, %v10676
    %v10678 = vpop.f32.mrf.mxu0
    %10679 = vmatprep.mubr.f32.mxu0 0.0
    %10680 = vmatmul.mubr.f32.gmra.mxu0 %v10069
    %v10681 = vpop.f32.mrf.mxu0
    %v10682 = vadd.f32 0.0, %v10681
    %v10683 = vpop.f32.mrf.mxu0
    %10684 = vmatprep.mubr.f32.mxu0 0.0
    %10685 = vmatmul.mubr.f32.gmra.mxu0 %v10072
    %v10686 = vpop.f32.mrf.mxu0
    %v10687 = vadd.f32 0.0, %v10686
    %v10688 = vpop.f32.mrf.mxu0
    %10689 = vmatprep.mubr.f32.mxu0 0.0
    %10690 = vmatmul.mubr.f32.gmra.mxu0 %v10075
    %v10691 = vpop.f32.mrf.mxu0
    %v10692 = vadd.f32 0.0, %v10691
    %v10693 = vpop.f32.mrf.mxu0
    %10694 = vmatprep.mubr.f32.mxu0 0.0
    %10695 = vmatmul.mubr.f32.gmra.mxu0 %v10078
    %v10696 = vpop.f32.mrf.mxu0
    %v10697 = vadd.f32 0.0, %v10696
    %v10698 = vpop.f32.mrf.mxu0
    %10699 = vmatprep.mubr.f32.mxu0 0.0
    %10700 = vmatmul.mubr.f32.gmra.mxu0 %v10081
    %v10701 = vpop.f32.mrf.mxu0
    %v10702 = vadd.f32 0.0, %v10701
    %v10703 = vpop.f32.mrf.mxu0
    %10704 = vmatprep.mubr.f32.mxu0 0.0
    %10705 = vmatmul.mubr.f32.gmra.mxu0 %v10084
    %v10706 = vpop.f32.mrf.mxu0
    %v10707 = vadd.f32 0.0, %v10706
    %v10708 = vpop.f32.mrf.mxu0
    %10709 = vmatprep.mubr.f32.mxu0 0.0
    %10710 = vmatmul.mubr.f32.gmra.mxu0 %v10087
    %v10711 = vpop.f32.mrf.mxu0
    %v10712 = vadd.f32 0.0, %v10711
    %v10713 = vpop.f32.mrf.mxu0
    %10714 = vmatprep.mubr.f32.mxu0 0.0
    %10715 = vmatmul.mubr.f32.gmra.mxu0 %v10090
    %v10716 = vpop.f32.mrf.mxu0
    %v10717 = vadd.f32 0.0, %v10716
    %v10718 = vpop.f32.mrf.mxu0
    %10719 = vmatprep.mubr.f32.mxu0 0.0
    %10720 = vmatmul.mubr.f32.gmra.mxu0 %v10093
    %v10721 = vpop.f32.mrf.mxu0
    %v10722 = vadd.f32 0.0, %v10721
    %v10723 = vpop.f32.mrf.mxu0
    %10724 = vmatprep.mubr.f32.mxu0 0.0
    %10725 = vmatmul.mubr.f32.gmra.mxu0 %v10096
    %v10726 = vpop.f32.mrf.mxu0
    %v10727 = vadd.f32 0.0, %v10726
    %v10728 = vpop.f32.mrf.mxu0
    %10729 = vmatprep.mubr.f32.mxu0 0.0
    %10730 = vmatmul.mubr.f32.gmra.mxu0 %v10099
    %v10731 = vpop.f32.mrf.mxu0
    %v10732 = vadd.f32 0.0, %v10731
    %v10733 = vpop.f32.mrf.mxu0
    %10734 = vmatprep.mubr.f32.mxu0 0.0
    %10735 = vmatmul.mubr.f32.gmra.mxu0 %v10102
    %v10736 = vpop.f32.mrf.mxu0
    %v10737 = vadd.f32 0.0, %v10736
    %v10738 = vpop.f32.mrf.mxu0
    %10739 = vmatprep.mubr.f32.mxu0 0.0
    %10740 = vmatmul.mubr.f32.gmra.mxu0 %v10105
    %v10741 = vpop.f32.mrf.mxu0
    %v10742 = vadd.f32 0.0, %v10741
    %v10743 = vpop.f32.mrf.mxu0
    %10744 = vmatprep.mubr.f32.mxu0 0.0
    %10745 = vmatmul.mubr.f32.gmra.mxu0 %v10108
    %v10746 = vpop.f32.mrf.mxu0
    %v10747 = vadd.f32 0.0, %v10746
    %v10748 = vpop.f32.mrf.mxu0
    %10749 = vmatprep.mubr.f32.mxu0 0.0
    %10750 = vmatmul.mubr.f32.gmra.mxu0 %v10111
    %v10751 = vpop.f32.mrf.mxu0
    %v10752 = vadd.f32 0.0, %v10751
    %v10753 = vpop.f32.mrf.mxu0
    %10754 = vmatprep.mubr.f32.mxu0 0.0
    %10755 = vmatmul.mubr.f32.gmra.mxu0 %v10114
    %v10756 = vpop.f32.mrf.mxu0
    %v10757 = vadd.f32 0.0, %v10756
    %v10758 = vpop.f32.mrf.mxu0
    %10759 = vmatprep.mubr.f32.mxu0 0.0
    %10760 = vmatmul.mubr.f32.gmra.mxu0 %v10117
    %v10761 = vpop.f32.mrf.mxu0
    %v10762 = vadd.f32 0.0, %v10761
    %v10763 = vpop.f32.mrf.mxu0
    %10764 = vmatprep.mubr.f32.mxu0 0.0
    %10765 = vmatmul.mubr.f32.gmra.mxu0 %v10120
    %v10766 = vpop.f32.mrf.mxu0
    %v10767 = vadd.f32 0.0, %v10766
    %v10768 = vpop.f32.mrf.mxu0
    %10769 = vmatprep.mubr.f32.mxu0 0.0
    %10770 = vmatmul.mubr.f32.gmra.mxu0 %v10123
    %v10771 = vpop.f32.mrf.mxu0
    %v10772 = vadd.f32 0.0, %v10771
    %v10773 = vpop.f32.mrf.mxu0
    %10774 = vmatprep.mubr.f32.mxu0 0.0
    %10775 = vmatmul.mubr.f32.gmra.mxu0 %v10126
    %v10776 = vpop.f32.mrf.mxu0
    %v10777 = vadd.f32 0.0, %v10776
    %v10778 = vpop.f32.mrf.mxu0
    %10779 = vmatprep.mubr.f32.mxu0 0.0
    %10780 = vmatmul.mubr.f32.gmra.mxu0 %v10129
    %v10781 = vpop.f32.mrf.mxu0
    %v10782 = vadd.f32 0.0, %v10781
    %v10783 = vpop.f32.mrf.mxu0
    %10784 = vmatprep.mubr.f32.mxu0 0.0
    %10785 = vmatmul.mubr.f32.gmra.mxu0 %v10132
    %v10786 = vpop.f32.mrf.mxu0
    %v10787 = vadd.f32 0.0, %v10786
    %v10788 = vpop.f32.mrf.mxu0
    %10789 = vmatprep.mubr.f32.mxu0 0.0
    %10790 = vmatmul.mubr.f32.gmra.mxu0 %v10135
    %v10791 = vpop.f32.mrf.mxu0
    %v10792 = vadd.f32 0.0, %v10791
    %v10793 = vpop.f32.mrf.mxu0
    %10794 = vmatprep.mubr.f32.mxu0 0.0
    %10795 = vmatmul.mubr.f32.gmra.mxu0 %v10138
    %v10796 = vpop.f32.mrf.mxu0
    %v10797 = vadd.f32 0.0, %v10796
    %v10798 = vpop.f32.mrf.mxu0
    %10799 = vmatprep.mubr.f32.mxu0 0.0
    %10800 = vmatmul.mubr.f32.gmra.mxu0 %v10141
    %v10801 = vpop.f32.mrf.mxu0
    %v10802 = vadd.f32 0.0, %v10801
    %v10803 = vpop.f32.mrf.mxu0
    %10804 = vmatprep.mubr.f32.mxu0 0.0
    %10805 = vmatmul.mubr.f32.gmra.mxu0 %v10144
    %v10806 = vpop.f32.mrf.mxu0
    %v10807 = vadd.f32 0.0, %v10806
    %v10808 = vpop.f32.mrf.mxu0
    %10809 = vmatprep.mubr.f32.mxu0 0.0
    %10810 = vmatmul.mubr.f32.gmra.mxu0 %v10147
    %v10811 = vpop.f32.mrf.mxu0
    %v10812 = vadd.f32 0.0, %v10811
    %v10813 = vpop.f32.mrf.mxu0
    %10814 = vmatprep.mubr.f32.mxu0 0.0
    %10815 = vmatmul.mubr.f32.gmra.mxu0 %v10150
    %v10816 = vpop.f32.mrf.mxu0
    %v10817 = vadd.f32 0.0, %v10816
    %v10818 = vpop.f32.mrf.mxu0
    %10819 = vmatprep.mubr.f32.mxu0 0.0
    %10820 = vmatmul.mubr.f32.gmra.mxu0 %v10153
    %v10821 = vpop.f32.mrf.mxu0
    %v10822 = vadd.f32 0.0, %v10821
    %v10823 = vpop.f32.mrf.mxu0
    %10824 = vmatprep.mubr.f32.mxu0 0.0
    %10825 = vmatmul.mubr.f32.gmra.mxu0 %v10156
    %v10826 = vpop.f32.mrf.mxu0
    %v10827 = vadd.f32 0.0, %v10826
    %v10828 = vpop.f32.mrf.mxu0
    %10829 = vmatprep.mubr.f32.mxu0 0.0
    %10830 = vmatmul.mubr.f32.gmra.mxu0 %v10159
    %v10831 = vpop.f32.mrf.mxu0
    %v10832 = vadd.f32 0.0, %v10831
    %v10833 = vpop.f32.mrf.mxu0
    %10834 = vmatprep.mubr.f32.mxu0 0.0
    %10835 = vmatmul.mubr.f32.gmra.mxu0 %v10162
    %v10836 = vpop.f32.mrf.mxu0
    %v10837 = vadd.f32 0.0, %v10836
    %v10838 = vpop.f32.mrf.mxu0
    %10839 = vmatprep.mubr.f32.mxu0 0.0
    %10840 = vmatmul.mubr.f32.gmra.mxu0 %v10165
    %v10841 = vpop.f32.mrf.mxu0
    %v10842 = vadd.f32 0.0, %v10841
    %v10843 = vpop.f32.mrf.mxu0
    %10844 = vmatprep.mubr.f32.mxu0 0.0
    %10845 = vmatmul.mubr.f32.gmra.mxu0 %v10168
    %v10846 = vpop.f32.mrf.mxu0
    %v10847 = vadd.f32 0.0, %v10846
    %v10848 = vpop.f32.mrf.mxu0
    %10849 = vmatprep.mubr.f32.mxu0 0.0
    %10850 = vmatmul.mubr.f32.gmra.mxu0 %v10171
    %v10851 = vpop.f32.mrf.mxu0
    %v10852 = vadd.f32 0.0, %v10851
    %v10853 = vpop.f32.mrf.mxu0
    %10854 = vmatprep.mubr.f32.mxu0 0.0
    %10855 = vmatmul.mubr.f32.gmra.mxu0 %v10174
    %v10856 = vpop.f32.mrf.mxu0
    %v10857 = vadd.f32 0.0, %v10856
    %v10858 = vpop.f32.mrf.mxu0
    %10859 = vmatprep.mubr.f32.mxu0 0.0
    %10860 = vmatmul.mubr.f32.gmra.mxu0 %v10177
    %v10861 = vpop.f32.mrf.mxu0
    %v10862 = vadd.f32 0.0, %v10861
    %v10863 = vpop.f32.mrf.mxu0
    %10864 = vmatprep.mubr.f32.mxu0 0.0
    %10865 = vmatmul.mubr.f32.gmra.mxu0 %v10180
    %v10866 = vpop.f32.mrf.mxu0
    %v10867 = vadd.f32 0.0, %v10866
    %v10868 = vpop.f32.mrf.mxu0
    %10869 = vmatprep.mubr.f32.mxu0 0.0
    %10870 = vmatmul.mubr.f32.gmra.mxu0 %v10183
    %v10871 = vpop.f32.mrf.mxu0
    %v10872 = vadd.f32 0.0, %v10871
    %v10873 = vpop.f32.mrf.mxu0
    %10874 = vmatprep.mubr.f32.mxu0 0.0
    %10875 = vmatmul.mubr.f32.gmra.mxu0 %v10186
    %v10876 = vpop.f32.mrf.mxu0
    %v10877 = vadd.f32 0.0, %v10876
    %v10878 = vpop.f32.mrf.mxu0
    %10879 = vmatprep.mubr.f32.mxu0 0.0
    %10880 = vmatmul.mubr.f32.gmra.mxu0 %v10189
    %v10881 = vpop.f32.mrf.mxu0
    %v10882 = vadd.f32 0.0, %v10881
    %v10883 = vpop.f32.mrf.mxu0
    %10884 = vmatprep.mubr.f32.mxu0 0.0
    %10885 = vmatmul.mubr.f32.gmra.mxu0 %v10192
    %v10886 = vpop.f32.mrf.mxu0
    %v10887 = vadd.f32 0.0, %v10886
    %v10888 = vpop.f32.mrf.mxu0
    %10889 = vmatprep.mubr.f32.mxu0 0.0
    %10890 = vmatmul.mubr.f32.gmra.mxu0 %v10195
    %v10891 = vpop.f32.mrf.mxu0
    %v10892 = vadd.f32 0.0, %v10891
    %v10893 = vpop.f32.mrf.mxu0
    %10894 = vmatprep.mubr.f32.mxu0 0.0
    %10895 = vmatmul.mubr.f32.gmra.mxu0 %v10198
    %v10896 = vpop.f32.mrf.mxu0
    %v10897 = vadd.f32 0.0, %v10896
    %v10898 = vpop.f32.mrf.mxu0
    %10899 = vmatprep.mubr.f32.mxu0 0.0
    %10900 = vmatmul.mubr.f32.gmra.mxu0 %v10201
    %v10901 = vpop.f32.mrf.mxu0
    %v10902 = vadd.f32 0.0, %v10901
    %v10903 = vpop.f32.mrf.mxu0
    %10904 = vmatprep.mubr.f32.mxu0 0.0
    %10905 = vmatmul.mubr.f32.gmra.mxu0 %v10204
    %v10906 = vpop.f32.mrf.mxu0
    %v10907 = vadd.f32 0.0, %v10906
    %v10908 = vpop.f32.mrf.mxu0
    %10909 = vmatprep.mubr.f32.mxu0 0.0
    %10910 = vmatmul.mubr.f32.gmra.mxu0 %v10207
    %v10911 = vpop.f32.mrf.mxu0
    %v10912 = vadd.f32 0.0, %v10911
    %v10913 = vpop.f32.mrf.mxu0
    %10914 = vmatprep.mubr.f32.mxu0 0.0
    %10915 = vmatmul.mubr.f32.gmra.mxu0 %v10210
    %v10916 = vpop.f32.mrf.mxu0
    %v10917 = vadd.f32 0.0, %v10916
    %v10918 = vpop.f32.mrf.mxu0
    %10919 = vdwg.mxu0
    %v10920 = vadd.f32 %v9570, %v10282
    %v10921 = vadd.f32 %v9571, %v10287
    %v10922 = vadd.f32 %v9572, %v10292
    %v10923 = vadd.f32 %v9573, %v10297
    %v10924 = vadd.f32 %v9574, %v10302
    %v10925 = vadd.f32 %v9575, %v10307
    %v10926 = vadd.f32 %v9576, %v10312
    %v10927 = vadd.f32 %v9577, %v10317
    %v10928 = vadd.f32 %v9578, %v10322
    %v10929 = vadd.f32 %v9579, %v10327
    %v10930 = vadd.f32 %v9580, %v10332
    %v10931 = vadd.f32 %v9581, %v10337
    %v10932 = vadd.f32 %v9582, %v10342
    %v10933 = vadd.f32 %v9583, %v10347
    %v10934 = vadd.f32 %v9584, %v10352
    %v10935 = vadd.f32 %v9585, %v10357
    %v10936 = vadd.f32 %v9586, %v10362
    %v10937 = vadd.f32 %v9587, %v10367
    %v10938 = vadd.f32 %v9588, %v10372
    %v10939 = vadd.f32 %v9589, %v10377
    %v10940 = vadd.f32 %v9590, %v10382
    %v10941 = vadd.f32 %v9591, %v10387
    %v10942 = vadd.f32 %v9592, %v10392
    %v10943 = vadd.f32 %v9593, %v10397
    %v10944 = vadd.f32 %v9594, %v10402
    %v10945 = vadd.f32 %v9595, %v10407
    %v10946 = vadd.f32 %v9596, %v10412
    %v10947 = vadd.f32 %v9597, %v10417
    %v10948 = vadd.f32 %v9598, %v10422
    %v10949 = vadd.f32 %v9599, %v10427
    %v10950 = vadd.f32 %v9600, %v10432
    %v10951 = vadd.f32 %v9601, %v10437
    %v10952 = vadd.f32 %v9602, %v10442
    %v10953 = vadd.f32 %v9603, %v10447
    %v10954 = vadd.f32 %v9604, %v10452
    %v10955 = vadd.f32 %v9605, %v10457
    %v10956 = vadd.f32 %v9606, %v10462
    %v10957 = vadd.f32 %v9607, %v10467
    %v10958 = vadd.f32 %v9608, %v10472
    %v10959 = vadd.f32 %v9609, %v10477
    %v10960 = vadd.f32 %v9610, %v10482
    %v10961 = vadd.f32 %v9611, %v10487
    %v10962 = vadd.f32 %v9612, %v10492
    %v10963 = vadd.f32 %v9613, %v10497
    %v10964 = vadd.f32 %v9614, %v10502
    %v10965 = vadd.f32 %v9615, %v10507
    %v10966 = vadd.f32 %v9616, %v10512
    %v10967 = vadd.f32 %v9617, %v10517
    %v10968 = vadd.f32 %v9618, %v10522
    %v10969 = vadd.f32 %v9619, %v10527
    %v10970 = vadd.f32 %v9620, %v10532
    %v10971 = vadd.f32 %v9621, %v10537
    %v10972 = vadd.f32 %v9622, %v10542
    %v10973 = vadd.f32 %v9623, %v10547
    %v10974 = vadd.f32 %v9624, %v10552
    %v10975 = vadd.f32 %v9625, %v10557
    %v10976 = vadd.f32 %v9626, %v10562
    %v10977 = vadd.f32 %v9627, %v10567
    %v10978 = vadd.f32 %v9628, %v10572
    %v10979 = vadd.f32 %v9629, %v10577
    %v10980 = vadd.f32 %v9630, %v10582
    %v10981 = vadd.f32 %v9631, %v10587
    %v10982 = vadd.f32 %v9632, %v10592
    %v10983 = vadd.f32 %v9633, %v10597
    %v10984 = vadd.f32 %v9634, %v10602
    %v10985 = vadd.f32 %v9635, %v10607
    %v10986 = vadd.f32 %v9636, %v10612
    %v10987 = vadd.f32 %v9637, %v10617
    %v10988 = vadd.f32 %v9638, %v10622
    %v10989 = vadd.f32 %v9639, %v10627
    %v10990 = vadd.f32 %v9640, %v10632
    %v10991 = vadd.f32 %v9641, %v10637
    %v10992 = vadd.f32 %v9642, %v10642
    %v10993 = vadd.f32 %v9643, %v10647
    %v10994 = vadd.f32 %v9644, %v10652
    %v10995 = vadd.f32 %v9645, %v10657
    %v10996 = vadd.f32 %v9646, %v10662
    %v10997 = vadd.f32 %v9647, %v10667
    %v10998 = vadd.f32 %v9648, %v10672
    %v10999 = vadd.f32 %v9649, %v10677
    %v11000 = vadd.f32 %v9650, %v10682
    %v11001 = vadd.f32 %v9651, %v10687
    %v11002 = vadd.f32 %v9652, %v10692
    %v11003 = vadd.f32 %v9653, %v10697
    %v11004 = vadd.f32 %v9654, %v10702
    %v11005 = vadd.f32 %v9655, %v10707
    %v11006 = vadd.f32 %v9656, %v10712
    %v11007 = vadd.f32 %v9657, %v10717
    %v11008 = vadd.f32 %v9658, %v10722
    %v11009 = vadd.f32 %v9659, %v10727
    %v11010 = vadd.f32 %v9660, %v10732
    %v11011 = vadd.f32 %v9661, %v10737
    %v11012 = vadd.f32 %v9662, %v10742
    %v11013 = vadd.f32 %v9663, %v10747
    %v11014 = vadd.f32 %v9664, %v10752
    %v11015 = vadd.f32 %v9665, %v10757
    %v11016 = vadd.f32 %v9666, %v10762
    %v11017 = vadd.f32 %v9667, %v10767
    %v11018 = vadd.f32 %v9668, %v10772
    %v11019 = vadd.f32 %v9669, %v10777
    %v11020 = vadd.f32 %v9670, %v10782
    %v11021 = vadd.f32 %v9671, %v10787
    %v11022 = vadd.f32 %v9672, %v10792
    %v11023 = vadd.f32 %v9673, %v10797
    %v11024 = vadd.f32 %v9674, %v10802
    %v11025 = vadd.f32 %v9675, %v10807
    %v11026 = vadd.f32 %v9676, %v10812
    %v11027 = vadd.f32 %v9677, %v10817
    %v11028 = vadd.f32 %v9678, %v10822
    %v11029 = vadd.f32 %v9679, %v10827
    %v11030 = vadd.f32 %v9680, %v10832
    %v11031 = vadd.f32 %v9681, %v10837
    %v11032 = vadd.f32 %v9682, %v10842
    %v11033 = vadd.f32 %v9683, %v10847
    %v11034 = vadd.f32 %v9684, %v10852
    %v11035 = vadd.f32 %v9685, %v10857
    %v11036 = vadd.f32 %v9686, %v10862
    %v11037 = vadd.f32 %v9687, %v10867
    %v11038 = vadd.f32 %v9688, %v10872
    %v11039 = vadd.f32 %v9689, %v10877
    %v11040 = vadd.f32 %v9690, %v10882
    %v11041 = vadd.f32 %v9691, %v10887
    %v11042 = vadd.f32 %v9692, %v10892
    %v11043 = vadd.f32 %v9693, %v10897
    %v11044 = vadd.f32 %v9694, %v10902
    %v11045 = vadd.f32 %v9695, %v10907
    %v11046 = vadd.f32 %v9696, %v10912
    %v11047 = vadd.f32 %v9697, %v10917
    %v11048 = vld [vmem:[%s8347 + $0x2] sm:$0xff]
    %v11049 = vld [vmem:[%s8347 + $0xa] sm:$0xff]
    %v11050 = vld [vmem:[%s8347 + $0x1a] sm:$0xff]
    %v11051 = vld [vmem:[%s8347 + $0x22] sm:$0xff]
    %v11052 = vld [vmem:[%s8347 + $0x32] sm:$0xff]
    %v11053 = vld [vmem:[%s8347 + $0x3a] sm:$0xff]
    %v11054 = vld [vmem:[%s8347 + $0x4a] sm:$0xff]
    %v11055 = vld [vmem:[%s8347 + $0x52] sm:$0xff]
    %v11056 = vld [vmem:[%s8347 + $0x62] sm:$0xff]
    %v11057 = vld [vmem:[%s8347 + $0x6a] sm:$0xff]
    %v11058 = vld [vmem:[%s8347 + $0x7a] sm:$0xff]
    %v11059 = vld [vmem:[%s8347 + $0x82] sm:$0xff]
    %v11060 = vld [vmem:[%s8347 + $0x92] sm:$0xff]
    %v11061 = vld [vmem:[%s8347 + $0x9a] sm:$0xff]
    %v11062 = vld [vmem:[%s8347 + $0xaa] sm:$0xff]
    %v11063 = vld [vmem:[%s8347 + $0xb2] sm:$0xff]
    %v11064 = vld [vmem:[%s8347 + $0xc2] sm:$0xff]
    %v11065 = vld [vmem:[%s8347 + $0xca] sm:$0xff]
    %v11066 = vld [vmem:[%s8347 + $0xda] sm:$0xff]
    %v11067 = vld [vmem:[%s8347 + $0xe2] sm:$0xff]
    %v11068 = vld [vmem:[%s8347 + $0xf2] sm:$0xff]
    %v11069 = vld [vmem:[%s8347 + $0xfa] sm:$0xff]
    %v11070 = vld [vmem:[%s8347 + $0x10a] sm:$0xff]
    %v11071 = vld [vmem:[%s8347 + $0x112] sm:$0xff]
    %v11072 = vld [vmem:[%s8347 + $0x122] sm:$0xff]
    %v11073 = vld [vmem:[%s8347 + $0x12a] sm:$0xff]
    %v11074 = vld [vmem:[%s8347 + $0x13a] sm:$0xff]
    %v11075 = vld [vmem:[%s8347 + $0x142] sm:$0xff]
    %v11076 = vld [vmem:[%s8347 + $0x152] sm:$0xff]
    %v11077 = vld [vmem:[%s8347 + $0x15a] sm:$0xff]
    %v11078 = vld [vmem:[%s8347 + $0x16a] sm:$0xff]
    %v11079 = vld [vmem:[%s8347 + $0x172] sm:$0xff]
    %v11080 = vld [vmem:[%s8347 + $0x1b2] sm:$0xff]
    %v11081 = vld [vmem:[%s8347 + $0x1ba] sm:$0xff]
    %v11082 = vld [vmem:[%s8347 + $0x1ca] sm:$0xff]
    %v11083 = vld [vmem:[%s8347 + $0x1d2] sm:$0xff]
    %v11084 = vld [vmem:[%s8347 + $0x1e2] sm:$0xff]
    %v11085 = vld [vmem:[%s8347 + $0x1ea] sm:$0xff]
    %v11086 = vld [vmem:[%s8347 + $0x1fa] sm:$0xff]
    %v11087 = vld [vmem:[%s8347 + $0x202] sm:$0xff]
    %v11088 = vld [vmem:[%s8347 + $0x212] sm:$0xff]
    %v11089 = vld [vmem:[%s8347 + $0x21a] sm:$0xff]
    %v11090 = vld [vmem:[%s8347 + $0x22a] sm:$0xff]
    %v11091 = vld [vmem:[%s8347 + $0x232] sm:$0xff]
    %v11092 = vld [vmem:[%s8347 + $0x242] sm:$0xff]
    %v11093 = vld [vmem:[%s8347 + $0x24a] sm:$0xff]
    %v11094 = vld [vmem:[%s8347 + $0x25a] sm:$0xff]
    %v11095 = vld [vmem:[%s8347 + $0x262] sm:$0xff]
    %v11096 = vld [vmem:[%s8347 + $0x272] sm:$0xff]
    %v11097 = vld [vmem:[%s8347 + $0x27a] sm:$0xff]
    %v11098 = vld [vmem:[%s8347 + $0x28a] sm:$0xff]
    %v11099 = vld [vmem:[%s8347 + $0x292] sm:$0xff]
    %v11100 = vld [vmem:[%s8347 + $0x2a2] sm:$0xff]
    %v11101 = vld [vmem:[%s8347 + $0x2aa] sm:$0xff]
    %v11102 = vld [vmem:[%s8347 + $0x2ba] sm:$0xff]
    %v11103 = vld [vmem:[%s8347 + $0x2c2] sm:$0xff]
    %v11104 = vld [vmem:[%s8347 + $0x2d2] sm:$0xff]
    %v11105 = vld [vmem:[%s8347 + $0x2da] sm:$0xff]
    %v11106 = vld [vmem:[%s8347 + $0x2ea] sm:$0xff]
    %v11107 = vld [vmem:[%s8347 + $0x2f2] sm:$0xff]
    %v11108 = vld [vmem:[%s8347 + $0x302] sm:$0xff]
    %v11109 = vld [vmem:[%s8347 + $0x30a] sm:$0xff]
    %v11110 = vld [vmem:[%s8347 + $0x31a] sm:$0xff]
    %v11111 = vld [vmem:[%s8347 + $0x322] sm:$0xff]
    %v11112 = vld [vmem:[%s8347 + $0x362] sm:$0xff]
    %v11113 = vld [vmem:[%s8347 + $0x36a] sm:$0xff]
    %v11114 = vld [vmem:[%s8347 + $0x37a] sm:$0xff]
    %v11115 = vld [vmem:[%s8347 + $0x382] sm:$0xff]
    %v11116 = vld [vmem:[%s8347 + $0x392] sm:$0xff]
    %v11117 = vld [vmem:[%s8347 + $0x39a] sm:$0xff]
    %v11118 = vld [vmem:[%s8347 + $0x3aa] sm:$0xff]
    %v11119 = vld [vmem:[%s8347 + $0x3b2] sm:$0xff]
    %v11120 = vld [vmem:[%s8347 + $0x3c2] sm:$0xff]
    %v11121 = vld [vmem:[%s8347 + $0x3ca] sm:$0xff]
    %v11122 = vld [vmem:[%s8347 + $0x3da] sm:$0xff]
    %v11123 = vld [vmem:[%s8347 + $0x3e2] sm:$0xff]
    %v11124 = vld [vmem:[%s8347 + $0x3f2] sm:$0xff]
    %v11125 = vld [vmem:[%s8347 + $0x3fa] sm:$0xff]
    %v11126 = vld [vmem:[%s8347 + $0x40a] sm:$0xff]
    %v11127 = vld [vmem:[%s8347 + $0x412] sm:$0xff]
    %v11128 = vld [vmem:[%s8347 + $0x422] sm:$0xff]
    %v11129 = vld [vmem:[%s8347 + $0x42a] sm:$0xff]
    %v11130 = vld [vmem:[%s8347 + $0x43a] sm:$0xff]
    %v11131 = vld [vmem:[%s8347 + $0x442] sm:$0xff]
    %v11132 = vld [vmem:[%s8347 + $0x452] sm:$0xff]
    %v11133 = vld [vmem:[%s8347 + $0x45a] sm:$0xff]
    %v11134 = vld [vmem:[%s8347 + $0x46a] sm:$0xff]
    %v11135 = vld [vmem:[%s8347 + $0x472] sm:$0xff]
    %v11136 = vld [vmem:[%s8347 + $0x482] sm:$0xff]
    %v11137 = vld [vmem:[%s8347 + $0x48a] sm:$0xff]
    %v11138 = vld [vmem:[%s8347 + $0x49a] sm:$0xff]
    %v11139 = vld [vmem:[%s8347 + $0x4a2] sm:$0xff]
    %v11140 = vld [vmem:[%s8347 + $0x4b2] sm:$0xff]
    %v11141 = vld [vmem:[%s8347 + $0x4ba] sm:$0xff]
    %v11142 = vld [vmem:[%s8347 + $0x4ca] sm:$0xff]
    %v11143 = vld [vmem:[%s8347 + $0x4d2] sm:$0xff]
    %v11144 = vld [vmem:[%s8347 + $0x512] sm:$0xff]
    %v11145 = vld [vmem:[%s8347 + $0x51a] sm:$0xff]
    %v11146 = vld [vmem:[%s8347 + $0x52a] sm:$0xff]
    %v11147 = vld [vmem:[%s8347 + $0x532] sm:$0xff]
    %v11148 = vld [vmem:[%s8347 + $0x542] sm:$0xff]
    %v11149 = vld [vmem:[%s8347 + $0x54a] sm:$0xff]
    %v11150 = vld [vmem:[%s8347 + $0x55a] sm:$0xff]
    %v11151 = vld [vmem:[%s8347 + $0x562] sm:$0xff]
    %v11152 = vld [vmem:[%s8347 + $0x572] sm:$0xff]
    %v11153 = vld [vmem:[%s8347 + $0x57a] sm:$0xff]
    %v11154 = vld [vmem:[%s8347 + $0x58a] sm:$0xff]
    %v11155 = vld [vmem:[%s8347 + $0x592] sm:$0xff]
    %v11156 = vld [vmem:[%s8347 + $0x5a2] sm:$0xff]
    %v11157 = vld [vmem:[%s8347 + $0x5aa] sm:$0xff]
    %v11158 = vld [vmem:[%s8347 + $0x5ba] sm:$0xff]
    %v11159 = vld [vmem:[%s8347 + $0x5c2] sm:$0xff]
    %v11160 = vld [vmem:[%s8347 + $0x5d2] sm:$0xff]
    %v11161 = vld [vmem:[%s8347 + $0x5da] sm:$0xff]
    %v11162 = vld [vmem:[%s8347 + $0x5ea] sm:$0xff]
    %v11163 = vld [vmem:[%s8347 + $0x5f2] sm:$0xff]
    %v11164 = vld [vmem:[%s8347 + $0x602] sm:$0xff]
    %v11165 = vld [vmem:[%s8347 + $0x60a] sm:$0xff]
    %v11166 = vld [vmem:[%s8347 + $0x61a] sm:$0xff]
    %v11167 = vld [vmem:[%s8347 + $0x622] sm:$0xff]
    %v11168 = vld [vmem:[%s8347 + $0x632] sm:$0xff]
    %v11169 = vld [vmem:[%s8347 + $0x63a] sm:$0xff]
    %v11170 = vld [vmem:[%s8347 + $0x64a] sm:$0xff]
    %v11171 = vld [vmem:[%s8347 + $0x652] sm:$0xff]
    %v11172 = vld [vmem:[%s8347 + $0x662] sm:$0xff]
    %v11173 = vld [vmem:[%s8347 + $0x66a] sm:$0xff]
    %v11174 = vld [vmem:[%s8347 + $0x67a] sm:$0xff]
    %v11175 = vld [vmem:[%s8347 + $0x682] sm:$0xff]
    %s11176 = scalar_lea.vmem %s2, 32
    %v11177 = vld [vmem:[%s11176] sm:$0xf]
    %v11179 = vsel %vm27, %v11048, 0
    %v11182 = vsel %vm27, %v11049, 0
    %v11185 = vsel %vm27, %v11050, 0
    %v11188 = vsel %vm27, %v11051, 0
    %v11191 = vsel %vm27, %v11052, 0
    %v11194 = vsel %vm27, %v11053, 0
    %v11197 = vsel %vm27, %v11054, 0
    %v11200 = vsel %vm27, %v11055, 0
    %v11203 = vsel %vm27, %v11056, 0
    %v11206 = vsel %vm27, %v11057, 0
    %v11209 = vsel %vm27, %v11058, 0
    %v11212 = vsel %vm27, %v11059, 0
    %v11215 = vsel %vm27, %v11060, 0
    %v11218 = vsel %vm27, %v11061, 0
    %v11221 = vsel %vm27, %v11062, 0
    %v11224 = vsel %vm27, %v11063, 0
    %v11227 = vsel %vm27, %v11064, 0
    %v11230 = vsel %vm27, %v11065, 0
    %v11233 = vsel %vm27, %v11066, 0
    %v11236 = vsel %vm27, %v11067, 0
    %v11239 = vsel %vm27, %v11068, 0
    %v11242 = vsel %vm27, %v11069, 0
    %v11245 = vsel %vm27, %v11070, 0
    %v11248 = vsel %vm27, %v11071, 0
    %v11251 = vsel %vm27, %v11072, 0
    %v11254 = vsel %vm27, %v11073, 0
    %v11257 = vsel %vm27, %v11074, 0
    %v11260 = vsel %vm27, %v11075, 0
    %v11263 = vsel %vm27, %v11076, 0
    %v11266 = vsel %vm27, %v11077, 0
    %v11269 = vsel %vm27, %v11078, 0
    %v11272 = vsel %vm27, %v11079, 0
    %v11275 = vsel %vm27, %v11080, 0
    %v11278 = vsel %vm27, %v11081, 0
    %v11281 = vsel %vm27, %v11082, 0
    %v11284 = vsel %vm27, %v11083, 0
    %v11287 = vsel %vm27, %v11084, 0
    %v11290 = vsel %vm27, %v11085, 0
    %v11293 = vsel %vm27, %v11086, 0
    %v11296 = vsel %vm27, %v11087, 0
    %v11299 = vsel %vm27, %v11088, 0
    %v11302 = vsel %vm27, %v11089, 0
    %v11305 = vsel %vm27, %v11090, 0
    %v11308 = vsel %vm27, %v11091, 0
    %v11311 = vsel %vm27, %v11092, 0
    %v11314 = vsel %vm27, %v11093, 0
    %v11317 = vsel %vm27, %v11094, 0
    %v11320 = vsel %vm27, %v11095, 0
    %v11323 = vsel %vm27, %v11096, 0
    %v11326 = vsel %vm27, %v11097, 0
    %v11329 = vsel %vm27, %v11098, 0
    %v11332 = vsel %vm27, %v11099, 0
    %v11335 = vsel %vm27, %v11100, 0
    %v11338 = vsel %vm27, %v11101, 0
    %v11341 = vsel %vm27, %v11102, 0
    %v11344 = vsel %vm27, %v11103, 0
    %v11347 = vsel %vm27, %v11104, 0
    %v11350 = vsel %vm27, %v11105, 0
    %v11353 = vsel %vm27, %v11106, 0
    %v11356 = vsel %vm27, %v11107, 0
    %v11359 = vsel %vm27, %v11108, 0
    %v11362 = vsel %vm27, %v11109, 0
    %v11365 = vsel %vm27, %v11110, 0
    %v11368 = vsel %vm27, %v11111, 0
    %v11371 = vsel %vm27, %v11112, 0
    %v11374 = vsel %vm27, %v11113, 0
    %v11377 = vsel %vm27, %v11114, 0
    %v11380 = vsel %vm27, %v11115, 0
    %v11383 = vsel %vm27, %v11116, 0
    %v11386 = vsel %vm27, %v11117, 0
    %v11389 = vsel %vm27, %v11118, 0
    %v11392 = vsel %vm27, %v11119, 0
    %v11395 = vsel %vm27, %v11120, 0
    %v11398 = vsel %vm27, %v11121, 0
    %v11401 = vsel %vm27, %v11122, 0
    %v11404 = vsel %vm27, %v11123, 0
    %v11407 = vsel %vm27, %v11124, 0
    %v11410 = vsel %vm27, %v11125, 0
    %v11413 = vsel %vm27, %v11126, 0
    %v11416 = vsel %vm27, %v11127, 0
    %v11419 = vsel %vm27, %v11128, 0
    %v11422 = vsel %vm27, %v11129, 0
    %v11425 = vsel %vm27, %v11130, 0
    %v11428 = vsel %vm27, %v11131, 0
    %v11431 = vsel %vm27, %v11132, 0
    %v11434 = vsel %vm27, %v11133, 0
    %v11437 = vsel %vm27, %v11134, 0
    %v11440 = vsel %vm27, %v11135, 0
    %v11443 = vsel %vm27, %v11136, 0
    %v11446 = vsel %vm27, %v11137, 0
    %v11449 = vsel %vm27, %v11138, 0
    %v11452 = vsel %vm27, %v11139, 0
    %v11455 = vsel %vm27, %v11140, 0
    %v11458 = vsel %vm27, %v11141, 0
    %v11461 = vsel %vm27, %v11142, 0
    %v11464 = vsel %vm27, %v11143, 0
    %v11467 = vsel %vm27, %v11144, 0
    %v11470 = vsel %vm27, %v11145, 0
    %v11473 = vsel %vm27, %v11146, 0
    %v11476 = vsel %vm27, %v11147, 0
    %v11479 = vsel %vm27, %v11148, 0
    %v11482 = vsel %vm27, %v11149, 0
    %v11485 = vsel %vm27, %v11150, 0
    %v11488 = vsel %vm27, %v11151, 0
    %v11491 = vsel %vm27, %v11152, 0
    %v11494 = vsel %vm27, %v11153, 0
    %v11497 = vsel %vm27, %v11154, 0
    %v11500 = vsel %vm27, %v11155, 0
    %v11503 = vsel %vm27, %v11156, 0
    %v11506 = vsel %vm27, %v11157, 0
    %v11509 = vsel %vm27, %v11158, 0
    %v11512 = vsel %vm27, %v11159, 0
    %v11515 = vsel %vm27, %v11160, 0
    %v11518 = vsel %vm27, %v11161, 0
    %v11521 = vsel %vm27, %v11162, 0
    %v11524 = vsel %vm27, %v11163, 0
    %v11527 = vsel %vm27, %v11164, 0
    %v11530 = vsel %vm27, %v11165, 0
    %v11533 = vsel %vm27, %v11166, 0
    %v11536 = vsel %vm27, %v11167, 0
    %v11539 = vsel %vm27, %v11168, 0
    %v11542 = vsel %vm27, %v11169, 0
    %v11545 = vsel %vm27, %v11170, 0
    %v11548 = vsel %vm27, %v11171, 0
    %v11551 = vsel %vm27, %v11172, 0
    %v11554 = vsel %vm27, %v11173, 0
    %v11557 = vsel %vm27, %v11174, 0
    %v11560 = vsel %vm27, %v11175, 0
    %v11563 = vsel %vm1146, %v11177, 0
    %11565 = vmatprep.subr.mxu0 0.0
    %11566 = vmatpush1.msra.mxu0 0.0
    %11567 = vmatprep.subr.mxu0 0.0
    %11568 = vmatpush1.msra.mxu0 0.0
    %11569 = vmatprep.subr.mxu0 0.0
    %11570 = vmatpush1.msra.mxu0 0.0
    %11571 = vmatprep.subr.mxu0 0.0
    %11572 = vmatpush1.msra.mxu0 0.0
    %11573 = vmatprep.subr.mxu0 0.0
    %11574 = vmatpush1.msra.mxu0 0.0
    %11575 = vmatprep.subr.mxu0 0.0
    %11576 = vmatpush1.msra.mxu0 0.0
    %11577 = vmatprep.subr.mxu0 0.0
    %11578 = vmatpush1.msra.mxu0 0.0
    %11579 = vmatprep.subr.mxu0 0.0
    %11580 = vmatpush1.msra.mxu0 0.0
    %11581 = vmatprep.subr.mxu0 0.0
    %11582 = vmatpush1.msra.mxu0 0.0
    %11583 = vmatprep.subr.mxu0 0.0
    %11584 = vmatpush1.msra.mxu0 0.0
    %11585 = vmatprep.subr.mxu0 0.0
    %11586 = vmatpush1.msra.mxu0 0.0
    %11587 = vmatprep.subr.mxu0 0.0
    %11588 = vmatpush1.msra.mxu0 0.0
    %11589 = vmatprep.subr.mxu0 0.0
    %11590 = vmatpush1.msra.mxu0 0.0
    %11591 = vmatprep.subr.mxu0 0.0
    %11592 = vmatpush1.msra.mxu0 0.0
    %11593 = vmatprep.subr.mxu0 0.0
    %11594 = vmatpush1.msra.mxu0 0.0
    %11595 = vmatprep.subr.mxu0 0.0
    %11596 = vmatpush1.msra.mxu0 %v11563
    %11597 = vmatprep.subr.mxu0 0.0
    %11598 = vmatpush2.msra.mxu0 0.0
    %11599 = vmatprep.subr.mxu0 0.0
    %11600 = vmatpush2.msra.mxu0 0.0
    %11601 = vmatprep.subr.mxu0 0.0
    %11602 = vmatpush2.msra.mxu0 0.0
    %11603 = vmatprep.subr.mxu0 0.0
    %11604 = vmatpush2.msra.mxu0 0.0
    %11605 = vmatprep.subr.mxu0 0.0
    %11606 = vmatpush2.msra.mxu0 0.0
    %11607 = vmatprep.subr.mxu0 0.0
    %11608 = vmatpush2.msra.mxu0 0.0
    %11609 = vmatprep.subr.mxu0 0.0
    %11610 = vmatpush2.msra.mxu0 0.0
    %11611 = vmatprep.subr.mxu0 0.0
    %11612 = vmatpush2.msra.mxu0 0.0
    %11613 = vmatprep.subr.mxu0 0.0
    %11614 = vmatpush2.msra.mxu0 0.0
    %11615 = vmatprep.subr.mxu0 0.0
    %11616 = vmatpush2.msra.mxu0 0.0
    %11617 = vmatprep.subr.mxu0 0.0
    %11618 = vmatpush2.msra.mxu0 0.0
    %11619 = vmatprep.subr.mxu0 0.0
    %11620 = vmatpush2.msra.mxu0 0.0
    %11621 = vmatprep.subr.mxu0 0.0
    %11622 = vmatpush2.msra.mxu0 0.0
    %11623 = vmatprep.subr.mxu0 0.0
    %11624 = vmatpush2.msra.mxu0 0.0
    %11625 = vmatprep.subr.mxu0 0.0
    %11626 = vmatpush2.msra.mxu0 0.0
    %11627 = vmatprep.subr.mxu0 0.0
    %11628 = vmatpush2.msra.mxu0 0.0
    %11629 = vmatprep.mubr.f32.mxu0 0.0
    %11630 = vmatmul.mubr.f32.gmra.mxu0 %v11179
    %v11631 = vpop.f32.mrf.mxu0
    %v11632 = vadd.f32 0.0, %v11631
    %v11633 = vpop.f32.mrf.mxu0
    %11634 = vmatprep.mubr.f32.mxu0 0.0
    %11635 = vmatmul.mubr.f32.gmra.mxu0 %v11182
    %v11636 = vpop.f32.mrf.mxu0
    %v11637 = vadd.f32 0.0, %v11636
    %v11638 = vpop.f32.mrf.mxu0
    %11639 = vmatprep.mubr.f32.mxu0 0.0
    %11640 = vmatmul.mubr.f32.gmra.mxu0 %v11185
    %v11641 = vpop.f32.mrf.mxu0
    %v11642 = vadd.f32 0.0, %v11641
    %v11643 = vpop.f32.mrf.mxu0
    %11644 = vmatprep.mubr.f32.mxu0 0.0
    %11645 = vmatmul.mubr.f32.gmra.mxu0 %v11188
    %v11646 = vpop.f32.mrf.mxu0
    %v11647 = vadd.f32 0.0, %v11646
    %v11648 = vpop.f32.mrf.mxu0
    %11649 = vmatprep.mubr.f32.mxu0 0.0
    %11650 = vmatmul.mubr.f32.gmra.mxu0 %v11191
    %v11651 = vpop.f32.mrf.mxu0
    %v11652 = vadd.f32 0.0, %v11651
    %v11653 = vpop.f32.mrf.mxu0
    %11654 = vmatprep.mubr.f32.mxu0 0.0
    %11655 = vmatmul.mubr.f32.gmra.mxu0 %v11194
    %v11656 = vpop.f32.mrf.mxu0
    %v11657 = vadd.f32 0.0, %v11656
    %v11658 = vpop.f32.mrf.mxu0
    %11659 = vmatprep.mubr.f32.mxu0 0.0
    %11660 = vmatmul.mubr.f32.gmra.mxu0 %v11197
    %v11661 = vpop.f32.mrf.mxu0
    %v11662 = vadd.f32 0.0, %v11661
    %v11663 = vpop.f32.mrf.mxu0
    %11664 = vmatprep.mubr.f32.mxu0 0.0
    %11665 = vmatmul.mubr.f32.gmra.mxu0 %v11200
    %v11666 = vpop.f32.mrf.mxu0
    %v11667 = vadd.f32 0.0, %v11666
    %v11668 = vpop.f32.mrf.mxu0
    %11669 = vmatprep.mubr.f32.mxu0 0.0
    %11670 = vmatmul.mubr.f32.gmra.mxu0 %v11203
    %v11671 = vpop.f32.mrf.mxu0
    %v11672 = vadd.f32 0.0, %v11671
    %v11673 = vpop.f32.mrf.mxu0
    %11674 = vmatprep.mubr.f32.mxu0 0.0
    %11675 = vmatmul.mubr.f32.gmra.mxu0 %v11206
    %v11676 = vpop.f32.mrf.mxu0
    %v11677 = vadd.f32 0.0, %v11676
    %v11678 = vpop.f32.mrf.mxu0
    %11679 = vmatprep.mubr.f32.mxu0 0.0
    %11680 = vmatmul.mubr.f32.gmra.mxu0 %v11209
    %v11681 = vpop.f32.mrf.mxu0
    %v11682 = vadd.f32 0.0, %v11681
    %v11683 = vpop.f32.mrf.mxu0
    %11684 = vmatprep.mubr.f32.mxu0 0.0
    %11685 = vmatmul.mubr.f32.gmra.mxu0 %v11212
    %v11686 = vpop.f32.mrf.mxu0
    %v11687 = vadd.f32 0.0, %v11686
    %v11688 = vpop.f32.mrf.mxu0
    %11689 = vmatprep.mubr.f32.mxu0 0.0
    %11690 = vmatmul.mubr.f32.gmra.mxu0 %v11215
    %v11691 = vpop.f32.mrf.mxu0
    %v11692 = vadd.f32 0.0, %v11691
    %v11693 = vpop.f32.mrf.mxu0
    %11694 = vmatprep.mubr.f32.mxu0 0.0
    %11695 = vmatmul.mubr.f32.gmra.mxu0 %v11218
    %v11696 = vpop.f32.mrf.mxu0
    %v11697 = vadd.f32 0.0, %v11696
    %v11698 = vpop.f32.mrf.mxu0
    %11699 = vmatprep.mubr.f32.mxu0 0.0
    %11700 = vmatmul.mubr.f32.gmra.mxu0 %v11221
    %v11701 = vpop.f32.mrf.mxu0
    %v11702 = vadd.f32 0.0, %v11701
    %v11703 = vpop.f32.mrf.mxu0
    %11704 = vmatprep.mubr.f32.mxu0 0.0
    %11705 = vmatmul.mubr.f32.gmra.mxu0 %v11224
    %v11706 = vpop.f32.mrf.mxu0
    %v11707 = vadd.f32 0.0, %v11706
    %v11708 = vpop.f32.mrf.mxu0
    %11709 = vmatprep.mubr.f32.mxu0 0.0
    %11710 = vmatmul.mubr.f32.gmra.mxu0 %v11227
    %v11711 = vpop.f32.mrf.mxu0
    %v11712 = vadd.f32 0.0, %v11711
    %v11713 = vpop.f32.mrf.mxu0
    %11714 = vmatprep.mubr.f32.mxu0 0.0
    %11715 = vmatmul.mubr.f32.gmra.mxu0 %v11230
    %v11716 = vpop.f32.mrf.mxu0
    %v11717 = vadd.f32 0.0, %v11716
    %v11718 = vpop.f32.mrf.mxu0
    %11719 = vmatprep.mubr.f32.mxu0 0.0
    %11720 = vmatmul.mubr.f32.gmra.mxu0 %v11233
    %v11721 = vpop.f32.mrf.mxu0
    %v11722 = vadd.f32 0.0, %v11721
    %v11723 = vpop.f32.mrf.mxu0
    %11724 = vmatprep.mubr.f32.mxu0 0.0
    %11725 = vmatmul.mubr.f32.gmra.mxu0 %v11236
    %v11726 = vpop.f32.mrf.mxu0
    %v11727 = vadd.f32 0.0, %v11726
    %v11728 = vpop.f32.mrf.mxu0
    %11729 = vmatprep.mubr.f32.mxu0 0.0
    %11730 = vmatmul.mubr.f32.gmra.mxu0 %v11239
    %v11731 = vpop.f32.mrf.mxu0
    %v11732 = vadd.f32 0.0, %v11731
    %v11733 = vpop.f32.mrf.mxu0
    %11734 = vmatprep.mubr.f32.mxu0 0.0
    %11735 = vmatmul.mubr.f32.gmra.mxu0 %v11242
    %v11736 = vpop.f32.mrf.mxu0
    %v11737 = vadd.f32 0.0, %v11736
    %v11738 = vpop.f32.mrf.mxu0
    %11739 = vmatprep.mubr.f32.mxu0 0.0
    %11740 = vmatmul.mubr.f32.gmra.mxu0 %v11245
    %v11741 = vpop.f32.mrf.mxu0
    %v11742 = vadd.f32 0.0, %v11741
    %v11743 = vpop.f32.mrf.mxu0
    %11744 = vmatprep.mubr.f32.mxu0 0.0
    %11745 = vmatmul.mubr.f32.gmra.mxu0 %v11248
    %v11746 = vpop.f32.mrf.mxu0
    %v11747 = vadd.f32 0.0, %v11746
    %v11748 = vpop.f32.mrf.mxu0
    %11749 = vmatprep.mubr.f32.mxu0 0.0
    %11750 = vmatmul.mubr.f32.gmra.mxu0 %v11251
    %v11751 = vpop.f32.mrf.mxu0
    %v11752 = vadd.f32 0.0, %v11751
    %v11753 = vpop.f32.mrf.mxu0
    %11754 = vmatprep.mubr.f32.mxu0 0.0
    %11755 = vmatmul.mubr.f32.gmra.mxu0 %v11254
    %v11756 = vpop.f32.mrf.mxu0
    %v11757 = vadd.f32 0.0, %v11756
    %v11758 = vpop.f32.mrf.mxu0
    %11759 = vmatprep.mubr.f32.mxu0 0.0
    %11760 = vmatmul.mubr.f32.gmra.mxu0 %v11257
    %v11761 = vpop.f32.mrf.mxu0
    %v11762 = vadd.f32 0.0, %v11761
    %v11763 = vpop.f32.mrf.mxu0
    %11764 = vmatprep.mubr.f32.mxu0 0.0
    %11765 = vmatmul.mubr.f32.gmra.mxu0 %v11260
    %v11766 = vpop.f32.mrf.mxu0
    %v11767 = vadd.f32 0.0, %v11766
    %v11768 = vpop.f32.mrf.mxu0
    %11769 = vmatprep.mubr.f32.mxu0 0.0
    %11770 = vmatmul.mubr.f32.gmra.mxu0 %v11263
    %v11771 = vpop.f32.mrf.mxu0
    %v11772 = vadd.f32 0.0, %v11771
    %v11773 = vpop.f32.mrf.mxu0
    %11774 = vmatprep.mubr.f32.mxu0 0.0
    %11775 = vmatmul.mubr.f32.gmra.mxu0 %v11266
    %v11776 = vpop.f32.mrf.mxu0
    %v11777 = vadd.f32 0.0, %v11776
    %v11778 = vpop.f32.mrf.mxu0
    %11779 = vmatprep.mubr.f32.mxu0 0.0
    %11780 = vmatmul.mubr.f32.gmra.mxu0 %v11269
    %v11781 = vpop.f32.mrf.mxu0
    %v11782 = vadd.f32 0.0, %v11781
    %v11783 = vpop.f32.mrf.mxu0
    %11784 = vmatprep.mubr.f32.mxu0 0.0
    %11785 = vmatmul.mubr.f32.gmra.mxu0 %v11272
    %v11786 = vpop.f32.mrf.mxu0
    %v11787 = vadd.f32 0.0, %v11786
    %v11788 = vpop.f32.mrf.mxu0
    %11789 = vmatprep.mubr.f32.mxu0 0.0
    %11790 = vmatmul.mubr.f32.gmra.mxu0 %v11275
    %v11791 = vpop.f32.mrf.mxu0
    %v11792 = vadd.f32 0.0, %v11791
    %v11793 = vpop.f32.mrf.mxu0
    %11794 = vmatprep.mubr.f32.mxu0 0.0
    %11795 = vmatmul.mubr.f32.gmra.mxu0 %v11278
    %v11796 = vpop.f32.mrf.mxu0
    %v11797 = vadd.f32 0.0, %v11796
    %v11798 = vpop.f32.mrf.mxu0
    %11799 = vmatprep.mubr.f32.mxu0 0.0
    %11800 = vmatmul.mubr.f32.gmra.mxu0 %v11281
    %v11801 = vpop.f32.mrf.mxu0
    %v11802 = vadd.f32 0.0, %v11801
    %v11803 = vpop.f32.mrf.mxu0
    %11804 = vmatprep.mubr.f32.mxu0 0.0
    %11805 = vmatmul.mubr.f32.gmra.mxu0 %v11284
    %v11806 = vpop.f32.mrf.mxu0
    %v11807 = vadd.f32 0.0, %v11806
    %v11808 = vpop.f32.mrf.mxu0
    %11809 = vmatprep.mubr.f32.mxu0 0.0
    %11810 = vmatmul.mubr.f32.gmra.mxu0 %v11287
    %v11811 = vpop.f32.mrf.mxu0
    %v11812 = vadd.f32 0.0, %v11811
    %v11813 = vpop.f32.mrf.mxu0
    %11814 = vmatprep.mubr.f32.mxu0 0.0
    %11815 = vmatmul.mubr.f32.gmra.mxu0 %v11290
    %v11816 = vpop.f32.mrf.mxu0
    %v11817 = vadd.f32 0.0, %v11816
    %v11818 = vpop.f32.mrf.mxu0
    %11819 = vmatprep.mubr.f32.mxu0 0.0
    %11820 = vmatmul.mubr.f32.gmra.mxu0 %v11293
    %v11821 = vpop.f32.mrf.mxu0
    %v11822 = vadd.f32 0.0, %v11821
    %v11823 = vpop.f32.mrf.mxu0
    %11824 = vmatprep.mubr.f32.mxu0 0.0
    %11825 = vmatmul.mubr.f32.gmra.mxu0 %v11296
    %v11826 = vpop.f32.mrf.mxu0
    %v11827 = vadd.f32 0.0, %v11826
    %v11828 = vpop.f32.mrf.mxu0
    %11829 = vmatprep.mubr.f32.mxu0 0.0
    %11830 = vmatmul.mubr.f32.gmra.mxu0 %v11299
    %v11831 = vpop.f32.mrf.mxu0
    %v11832 = vadd.f32 0.0, %v11831
    %v11833 = vpop.f32.mrf.mxu0
    %11834 = vmatprep.mubr.f32.mxu0 0.0
    %11835 = vmatmul.mubr.f32.gmra.mxu0 %v11302
    %v11836 = vpop.f32.mrf.mxu0
    %v11837 = vadd.f32 0.0, %v11836
    %v11838 = vpop.f32.mrf.mxu0
    %11839 = vmatprep.mubr.f32.mxu0 0.0
    %11840 = vmatmul.mubr.f32.gmra.mxu0 %v11305
    %v11841 = vpop.f32.mrf.mxu0
    %v11842 = vadd.f32 0.0, %v11841
    %v11843 = vpop.f32.mrf.mxu0
    %11844 = vmatprep.mubr.f32.mxu0 0.0
    %11845 = vmatmul.mubr.f32.gmra.mxu0 %v11308
    %v11846 = vpop.f32.mrf.mxu0
    %v11847 = vadd.f32 0.0, %v11846
    %v11848 = vpop.f32.mrf.mxu0
    %11849 = vmatprep.mubr.f32.mxu0 0.0
    %11850 = vmatmul.mubr.f32.gmra.mxu0 %v11311
    %v11851 = vpop.f32.mrf.mxu0
    %v11852 = vadd.f32 0.0, %v11851
    %v11853 = vpop.f32.mrf.mxu0
    %11854 = vmatprep.mubr.f32.mxu0 0.0
    %11855 = vmatmul.mubr.f32.gmra.mxu0 %v11314
    %v11856 = vpop.f32.mrf.mxu0
    %v11857 = vadd.f32 0.0, %v11856
    %v11858 = vpop.f32.mrf.mxu0
    %11859 = vmatprep.mubr.f32.mxu0 0.0
    %11860 = vmatmul.mubr.f32.gmra.mxu0 %v11317
    %v11861 = vpop.f32.mrf.mxu0
    %v11862 = vadd.f32 0.0, %v11861
    %v11863 = vpop.f32.mrf.mxu0
    %11864 = vmatprep.mubr.f32.mxu0 0.0
    %11865 = vmatmul.mubr.f32.gmra.mxu0 %v11320
    %v11866 = vpop.f32.mrf.mxu0
    %v11867 = vadd.f32 0.0, %v11866
    %v11868 = vpop.f32.mrf.mxu0
    %11869 = vmatprep.mubr.f32.mxu0 0.0
    %11870 = vmatmul.mubr.f32.gmra.mxu0 %v11323
    %v11871 = vpop.f32.mrf.mxu0
    %v11872 = vadd.f32 0.0, %v11871
    %v11873 = vpop.f32.mrf.mxu0
    %11874 = vmatprep.mubr.f32.mxu0 0.0
    %11875 = vmatmul.mubr.f32.gmra.mxu0 %v11326
    %v11876 = vpop.f32.mrf.mxu0
    %v11877 = vadd.f32 0.0, %v11876
    %v11878 = vpop.f32.mrf.mxu0
    %11879 = vmatprep.mubr.f32.mxu0 0.0
    %11880 = vmatmul.mubr.f32.gmra.mxu0 %v11329
    %v11881 = vpop.f32.mrf.mxu0
    %v11882 = vadd.f32 0.0, %v11881
    %v11883 = vpop.f32.mrf.mxu0
    %11884 = vmatprep.mubr.f32.mxu0 0.0
    %11885 = vmatmul.mubr.f32.gmra.mxu0 %v11332
    %v11886 = vpop.f32.mrf.mxu0
    %v11887 = vadd.f32 0.0, %v11886
    %v11888 = vpop.f32.mrf.mxu0
    %11889 = vmatprep.mubr.f32.mxu0 0.0
    %11890 = vmatmul.mubr.f32.gmra.mxu0 %v11335
    %v11891 = vpop.f32.mrf.mxu0
    %v11892 = vadd.f32 0.0, %v11891
    %v11893 = vpop.f32.mrf.mxu0
    %11894 = vmatprep.mubr.f32.mxu0 0.0
    %11895 = vmatmul.mubr.f32.gmra.mxu0 %v11338
    %v11896 = vpop.f32.mrf.mxu0
    %v11897 = vadd.f32 0.0, %v11896
    %v11898 = vpop.f32.mrf.mxu0
    %11899 = vmatprep.mubr.f32.mxu0 0.0
    %11900 = vmatmul.mubr.f32.gmra.mxu0 %v11341
    %v11901 = vpop.f32.mrf.mxu0
    %v11902 = vadd.f32 0.0, %v11901
    %v11903 = vpop.f32.mrf.mxu0
    %11904 = vmatprep.mubr.f32.mxu0 0.0
    %11905 = vmatmul.mubr.f32.gmra.mxu0 %v11344
    %v11906 = vpop.f32.mrf.mxu0
    %v11907 = vadd.f32 0.0, %v11906
    %v11908 = vpop.f32.mrf.mxu0
    %11909 = vmatprep.mubr.f32.mxu0 0.0
    %11910 = vmatmul.mubr.f32.gmra.mxu0 %v11347
    %v11911 = vpop.f32.mrf.mxu0
    %v11912 = vadd.f32 0.0, %v11911
    %v11913 = vpop.f32.mrf.mxu0
    %11914 = vmatprep.mubr.f32.mxu0 0.0
    %11915 = vmatmul.mubr.f32.gmra.mxu0 %v11350
    %v11916 = vpop.f32.mrf.mxu0
    %v11917 = vadd.f32 0.0, %v11916
    %v11918 = vpop.f32.mrf.mxu0
    %11919 = vmatprep.mubr.f32.mxu0 0.0
    %11920 = vmatmul.mubr.f32.gmra.mxu0 %v11353
    %v11921 = vpop.f32.mrf.mxu0
    %v11922 = vadd.f32 0.0, %v11921
    %v11923 = vpop.f32.mrf.mxu0
    %11924 = vmatprep.mubr.f32.mxu0 0.0
    %11925 = vmatmul.mubr.f32.gmra.mxu0 %v11356
    %v11926 = vpop.f32.mrf.mxu0
    %v11927 = vadd.f32 0.0, %v11926
    %v11928 = vpop.f32.mrf.mxu0
    %11929 = vmatprep.mubr.f32.mxu0 0.0
    %11930 = vmatmul.mubr.f32.gmra.mxu0 %v11359
    %v11931 = vpop.f32.mrf.mxu0
    %v11932 = vadd.f32 0.0, %v11931
    %v11933 = vpop.f32.mrf.mxu0
    %11934 = vmatprep.mubr.f32.mxu0 0.0
    %11935 = vmatmul.mubr.f32.gmra.mxu0 %v11362
    %v11936 = vpop.f32.mrf.mxu0
    %v11937 = vadd.f32 0.0, %v11936
    %v11938 = vpop.f32.mrf.mxu0
    %11939 = vmatprep.mubr.f32.mxu0 0.0
    %11940 = vmatmul.mubr.f32.gmra.mxu0 %v11365
    %v11941 = vpop.f32.mrf.mxu0
    %v11942 = vadd.f32 0.0, %v11941
    %v11943 = vpop.f32.mrf.mxu0
    %11944 = vmatprep.mubr.f32.mxu0 0.0
    %11945 = vmatmul.mubr.f32.gmra.mxu0 %v11368
    %v11946 = vpop.f32.mrf.mxu0
    %v11947 = vadd.f32 0.0, %v11946
    %v11948 = vpop.f32.mrf.mxu0
    %11949 = vmatprep.mubr.f32.mxu0 0.0
    %11950 = vmatmul.mubr.f32.gmra.mxu0 %v11371
    %v11951 = vpop.f32.mrf.mxu0
    %v11952 = vadd.f32 0.0, %v11951
    %v11953 = vpop.f32.mrf.mxu0
    %11954 = vmatprep.mubr.f32.mxu0 0.0
    %11955 = vmatmul.mubr.f32.gmra.mxu0 %v11374
    %v11956 = vpop.f32.mrf.mxu0
    %v11957 = vadd.f32 0.0, %v11956
    %v11958 = vpop.f32.mrf.mxu0
    %11959 = vmatprep.mubr.f32.mxu0 0.0
    %11960 = vmatmul.mubr.f32.gmra.mxu0 %v11377
    %v11961 = vpop.f32.mrf.mxu0
    %v11962 = vadd.f32 0.0, %v11961
    %v11963 = vpop.f32.mrf.mxu0
    %11964 = vmatprep.mubr.f32.mxu0 0.0
    %11965 = vmatmul.mubr.f32.gmra.mxu0 %v11380
    %v11966 = vpop.f32.mrf.mxu0
    %v11967 = vadd.f32 0.0, %v11966
    %v11968 = vpop.f32.mrf.mxu0
    %11969 = vmatprep.mubr.f32.mxu0 0.0
    %11970 = vmatmul.mubr.f32.gmra.mxu0 %v11383
    %v11971 = vpop.f32.mrf.mxu0
    %v11972 = vadd.f32 0.0, %v11971
    %v11973 = vpop.f32.mrf.mxu0
    %11974 = vmatprep.mubr.f32.mxu0 0.0
    %11975 = vmatmul.mubr.f32.gmra.mxu0 %v11386
    %v11976 = vpop.f32.mrf.mxu0
    %v11977 = vadd.f32 0.0, %v11976
    %v11978 = vpop.f32.mrf.mxu0
    %11979 = vmatprep.mubr.f32.mxu0 0.0
    %11980 = vmatmul.mubr.f32.gmra.mxu0 %v11389
    %v11981 = vpop.f32.mrf.mxu0
    %v11982 = vadd.f32 0.0, %v11981
    %v11983 = vpop.f32.mrf.mxu0
    %11984 = vmatprep.mubr.f32.mxu0 0.0
    %11985 = vmatmul.mubr.f32.gmra.mxu0 %v11392
    %v11986 = vpop.f32.mrf.mxu0
    %v11987 = vadd.f32 0.0, %v11986
    %v11988 = vpop.f32.mrf.mxu0
    %11989 = vmatprep.mubr.f32.mxu0 0.0
    %11990 = vmatmul.mubr.f32.gmra.mxu0 %v11395
    %v11991 = vpop.f32.mrf.mxu0
    %v11992 = vadd.f32 0.0, %v11991
    %v11993 = vpop.f32.mrf.mxu0
    %11994 = vmatprep.mubr.f32.mxu0 0.0
    %11995 = vmatmul.mubr.f32.gmra.mxu0 %v11398
    %v11996 = vpop.f32.mrf.mxu0
    %v11997 = vadd.f32 0.0, %v11996
    %v11998 = vpop.f32.mrf.mxu0
    %11999 = vmatprep.mubr.f32.mxu0 0.0
    %12000 = vmatmul.mubr.f32.gmra.mxu0 %v11401
    %v12001 = vpop.f32.mrf.mxu0
    %v12002 = vadd.f32 0.0, %v12001
    %v12003 = vpop.f32.mrf.mxu0
    %12004 = vmatprep.mubr.f32.mxu0 0.0
    %12005 = vmatmul.mubr.f32.gmra.mxu0 %v11404
    %v12006 = vpop.f32.mrf.mxu0
    %v12007 = vadd.f32 0.0, %v12006
    %v12008 = vpop.f32.mrf.mxu0
    %12009 = vmatprep.mubr.f32.mxu0 0.0
    %12010 = vmatmul.mubr.f32.gmra.mxu0 %v11407
    %v12011 = vpop.f32.mrf.mxu0
    %v12012 = vadd.f32 0.0, %v12011
    %v12013 = vpop.f32.mrf.mxu0
    %12014 = vmatprep.mubr.f32.mxu0 0.0
    %12015 = vmatmul.mubr.f32.gmra.mxu0 %v11410
    %v12016 = vpop.f32.mrf.mxu0
    %v12017 = vadd.f32 0.0, %v12016
    %v12018 = vpop.f32.mrf.mxu0
    %12019 = vmatprep.mubr.f32.mxu0 0.0
    %12020 = vmatmul.mubr.f32.gmra.mxu0 %v11413
    %v12021 = vpop.f32.mrf.mxu0
    %v12022 = vadd.f32 0.0, %v12021
    %v12023 = vpop.f32.mrf.mxu0
    %12024 = vmatprep.mubr.f32.mxu0 0.0
    %12025 = vmatmul.mubr.f32.gmra.mxu0 %v11416
    %v12026 = vpop.f32.mrf.mxu0
    %v12027 = vadd.f32 0.0, %v12026
    %v12028 = vpop.f32.mrf.mxu0
    %12029 = vmatprep.mubr.f32.mxu0 0.0
    %12030 = vmatmul.mubr.f32.gmra.mxu0 %v11419
    %v12031 = vpop.f32.mrf.mxu0
    %v12032 = vadd.f32 0.0, %v12031
    %v12033 = vpop.f32.mrf.mxu0
    %12034 = vmatprep.mubr.f32.mxu0 0.0
    %12035 = vmatmul.mubr.f32.gmra.mxu0 %v11422
    %v12036 = vpop.f32.mrf.mxu0
    %v12037 = vadd.f32 0.0, %v12036
    %v12038 = vpop.f32.mrf.mxu0
    %12039 = vmatprep.mubr.f32.mxu0 0.0
    %12040 = vmatmul.mubr.f32.gmra.mxu0 %v11425
    %v12041 = vpop.f32.mrf.mxu0
    %v12042 = vadd.f32 0.0, %v12041
    %v12043 = vpop.f32.mrf.mxu0
    %12044 = vmatprep.mubr.f32.mxu0 0.0
    %12045 = vmatmul.mubr.f32.gmra.mxu0 %v11428
    %v12046 = vpop.f32.mrf.mxu0
    %v12047 = vadd.f32 0.0, %v12046
    %v12048 = vpop.f32.mrf.mxu0
    %12049 = vmatprep.mubr.f32.mxu0 0.0
    %12050 = vmatmul.mubr.f32.gmra.mxu0 %v11431
    %v12051 = vpop.f32.mrf.mxu0
    %v12052 = vadd.f32 0.0, %v12051
    %v12053 = vpop.f32.mrf.mxu0
    %12054 = vmatprep.mubr.f32.mxu0 0.0
    %12055 = vmatmul.mubr.f32.gmra.mxu0 %v11434
    %v12056 = vpop.f32.mrf.mxu0
    %v12057 = vadd.f32 0.0, %v12056
    %v12058 = vpop.f32.mrf.mxu0
    %12059 = vmatprep.mubr.f32.mxu0 0.0
    %12060 = vmatmul.mubr.f32.gmra.mxu0 %v11437
    %v12061 = vpop.f32.mrf.mxu0
    %v12062 = vadd.f32 0.0, %v12061
    %v12063 = vpop.f32.mrf.mxu0
    %12064 = vmatprep.mubr.f32.mxu0 0.0
    %12065 = vmatmul.mubr.f32.gmra.mxu0 %v11440
    %v12066 = vpop.f32.mrf.mxu0
    %v12067 = vadd.f32 0.0, %v12066
    %v12068 = vpop.f32.mrf.mxu0
    %12069 = vmatprep.mubr.f32.mxu0 0.0
    %12070 = vmatmul.mubr.f32.gmra.mxu0 %v11443
    %v12071 = vpop.f32.mrf.mxu0
    %v12072 = vadd.f32 0.0, %v12071
    %v12073 = vpop.f32.mrf.mxu0
    %12074 = vmatprep.mubr.f32.mxu0 0.0
    %12075 = vmatmul.mubr.f32.gmra.mxu0 %v11446
    %v12076 = vpop.f32.mrf.mxu0
    %v12077 = vadd.f32 0.0, %v12076
    %v12078 = vpop.f32.mrf.mxu0
    %12079 = vmatprep.mubr.f32.mxu0 0.0
    %12080 = vmatmul.mubr.f32.gmra.mxu0 %v11449
    %v12081 = vpop.f32.mrf.mxu0
    %v12082 = vadd.f32 0.0, %v12081
    %v12083 = vpop.f32.mrf.mxu0
    %12084 = vmatprep.mubr.f32.mxu0 0.0
    %12085 = vmatmul.mubr.f32.gmra.mxu0 %v11452
    %v12086 = vpop.f32.mrf.mxu0
    %v12087 = vadd.f32 0.0, %v12086
    %v12088 = vpop.f32.mrf.mxu0
    %12089 = vmatprep.mubr.f32.mxu0 0.0
    %12090 = vmatmul.mubr.f32.gmra.mxu0 %v11455
    %v12091 = vpop.f32.mrf.mxu0
    %v12092 = vadd.f32 0.0, %v12091
    %v12093 = vpop.f32.mrf.mxu0
    %12094 = vmatprep.mubr.f32.mxu0 0.0
    %12095 = vmatmul.mubr.f32.gmra.mxu0 %v11458
    %v12096 = vpop.f32.mrf.mxu0
    %v12097 = vadd.f32 0.0, %v12096
    %v12098 = vpop.f32.mrf.mxu0
    %12099 = vmatprep.mubr.f32.mxu0 0.0
    %12100 = vmatmul.mubr.f32.gmra.mxu0 %v11461
    %v12101 = vpop.f32.mrf.mxu0
    %v12102 = vadd.f32 0.0, %v12101
    %v12103 = vpop.f32.mrf.mxu0
    %12104 = vmatprep.mubr.f32.mxu0 0.0
    %12105 = vmatmul.mubr.f32.gmra.mxu0 %v11464
    %v12106 = vpop.f32.mrf.mxu0
    %v12107 = vadd.f32 0.0, %v12106
    %v12108 = vpop.f32.mrf.mxu0
    %12109 = vmatprep.mubr.f32.mxu0 0.0
    %12110 = vmatmul.mubr.f32.gmra.mxu0 %v11467
    %v12111 = vpop.f32.mrf.mxu0
    %v12112 = vadd.f32 0.0, %v12111
    %v12113 = vpop.f32.mrf.mxu0
    %12114 = vmatprep.mubr.f32.mxu0 0.0
    %12115 = vmatmul.mubr.f32.gmra.mxu0 %v11470
    %v12116 = vpop.f32.mrf.mxu0
    %v12117 = vadd.f32 0.0, %v12116
    %v12118 = vpop.f32.mrf.mxu0
    %12119 = vmatprep.mubr.f32.mxu0 0.0
    %12120 = vmatmul.mubr.f32.gmra.mxu0 %v11473
    %v12121 = vpop.f32.mrf.mxu0
    %v12122 = vadd.f32 0.0, %v12121
    %v12123 = vpop.f32.mrf.mxu0
    %12124 = vmatprep.mubr.f32.mxu0 0.0
    %12125 = vmatmul.mubr.f32.gmra.mxu0 %v11476
    %v12126 = vpop.f32.mrf.mxu0
    %v12127 = vadd.f32 0.0, %v12126
    %v12128 = vpop.f32.mrf.mxu0
    %12129 = vmatprep.mubr.f32.mxu0 0.0
    %12130 = vmatmul.mubr.f32.gmra.mxu0 %v11479
    %v12131 = vpop.f32.mrf.mxu0
    %v12132 = vadd.f32 0.0, %v12131
    %v12133 = vpop.f32.mrf.mxu0
    %12134 = vmatprep.mubr.f32.mxu0 0.0
    %12135 = vmatmul.mubr.f32.gmra.mxu0 %v11482
    %v12136 = vpop.f32.mrf.mxu0
    %v12137 = vadd.f32 0.0, %v12136
    %v12138 = vpop.f32.mrf.mxu0
    %12139 = vmatprep.mubr.f32.mxu0 0.0
    %12140 = vmatmul.mubr.f32.gmra.mxu0 %v11485
    %v12141 = vpop.f32.mrf.mxu0
    %v12142 = vadd.f32 0.0, %v12141
    %v12143 = vpop.f32.mrf.mxu0
    %12144 = vmatprep.mubr.f32.mxu0 0.0
    %12145 = vmatmul.mubr.f32.gmra.mxu0 %v11488
    %v12146 = vpop.f32.mrf.mxu0
    %v12147 = vadd.f32 0.0, %v12146
    %v12148 = vpop.f32.mrf.mxu0
    %12149 = vmatprep.mubr.f32.mxu0 0.0
    %12150 = vmatmul.mubr.f32.gmra.mxu0 %v11491
    %v12151 = vpop.f32.mrf.mxu0
    %v12152 = vadd.f32 0.0, %v12151
    %v12153 = vpop.f32.mrf.mxu0
    %12154 = vmatprep.mubr.f32.mxu0 0.0
    %12155 = vmatmul.mubr.f32.gmra.mxu0 %v11494
    %v12156 = vpop.f32.mrf.mxu0
    %v12157 = vadd.f32 0.0, %v12156
    %v12158 = vpop.f32.mrf.mxu0
    %12159 = vmatprep.mubr.f32.mxu0 0.0
    %12160 = vmatmul.mubr.f32.gmra.mxu0 %v11497
    %v12161 = vpop.f32.mrf.mxu0
    %v12162 = vadd.f32 0.0, %v12161
    %v12163 = vpop.f32.mrf.mxu0
    %12164 = vmatprep.mubr.f32.mxu0 0.0
    %12165 = vmatmul.mubr.f32.gmra.mxu0 %v11500
    %v12166 = vpop.f32.mrf.mxu0
    %v12167 = vadd.f32 0.0, %v12166
    %v12168 = vpop.f32.mrf.mxu0
    %12169 = vmatprep.mubr.f32.mxu0 0.0
    %12170 = vmatmul.mubr.f32.gmra.mxu0 %v11503
    %v12171 = vpop.f32.mrf.mxu0
    %v12172 = vadd.f32 0.0, %v12171
    %v12173 = vpop.f32.mrf.mxu0
    %12174 = vmatprep.mubr.f32.mxu0 0.0
    %12175 = vmatmul.mubr.f32.gmra.mxu0 %v11506
    %v12176 = vpop.f32.mrf.mxu0
    %v12177 = vadd.f32 0.0, %v12176
    %v12178 = vpop.f32.mrf.mxu0
    %12179 = vmatprep.mubr.f32.mxu0 0.0
    %12180 = vmatmul.mubr.f32.gmra.mxu0 %v11509
    %v12181 = vpop.f32.mrf.mxu0
    %v12182 = vadd.f32 0.0, %v12181
    %v12183 = vpop.f32.mrf.mxu0
    %12184 = vmatprep.mubr.f32.mxu0 0.0
    %12185 = vmatmul.mubr.f32.gmra.mxu0 %v11512
    %v12186 = vpop.f32.mrf.mxu0
    %v12187 = vadd.f32 0.0, %v12186
    %v12188 = vpop.f32.mrf.mxu0
    %12189 = vmatprep.mubr.f32.mxu0 0.0
    %12190 = vmatmul.mubr.f32.gmra.mxu0 %v11515
    %v12191 = vpop.f32.mrf.mxu0
    %v12192 = vadd.f32 0.0, %v12191
    %v12193 = vpop.f32.mrf.mxu0
    %12194 = vmatprep.mubr.f32.mxu0 0.0
    %12195 = vmatmul.mubr.f32.gmra.mxu0 %v11518
    %v12196 = vpop.f32.mrf.mxu0
    %v12197 = vadd.f32 0.0, %v12196
    %v12198 = vpop.f32.mrf.mxu0
    %12199 = vmatprep.mubr.f32.mxu0 0.0
    %12200 = vmatmul.mubr.f32.gmra.mxu0 %v11521
    %v12201 = vpop.f32.mrf.mxu0
    %v12202 = vadd.f32 0.0, %v12201
    %v12203 = vpop.f32.mrf.mxu0
    %12204 = vmatprep.mubr.f32.mxu0 0.0
    %12205 = vmatmul.mubr.f32.gmra.mxu0 %v11524
    %v12206 = vpop.f32.mrf.mxu0
    %v12207 = vadd.f32 0.0, %v12206
    %v12208 = vpop.f32.mrf.mxu0
    %12209 = vmatprep.mubr.f32.mxu0 0.0
    %12210 = vmatmul.mubr.f32.gmra.mxu0 %v11527
    %v12211 = vpop.f32.mrf.mxu0
    %v12212 = vadd.f32 0.0, %v12211
    %v12213 = vpop.f32.mrf.mxu0
    %12214 = vmatprep.mubr.f32.mxu0 0.0
    %12215 = vmatmul.mubr.f32.gmra.mxu0 %v11530
    %v12216 = vpop.f32.mrf.mxu0
    %v12217 = vadd.f32 0.0, %v12216
    %v12218 = vpop.f32.mrf.mxu0
    %12219 = vmatprep.mubr.f32.mxu0 0.0
    %12220 = vmatmul.mubr.f32.gmra.mxu0 %v11533
    %v12221 = vpop.f32.mrf.mxu0
    %v12222 = vadd.f32 0.0, %v12221
    %v12223 = vpop.f32.mrf.mxu0
    %12224 = vmatprep.mubr.f32.mxu0 0.0
    %12225 = vmatmul.mubr.f32.gmra.mxu0 %v11536
    %v12226 = vpop.f32.mrf.mxu0
    %v12227 = vadd.f32 0.0, %v12226
    %v12228 = vpop.f32.mrf.mxu0
    %12229 = vmatprep.mubr.f32.mxu0 0.0
    %12230 = vmatmul.mubr.f32.gmra.mxu0 %v11539
    %v12231 = vpop.f32.mrf.mxu0
    %v12232 = vadd.f32 0.0, %v12231
    %v12233 = vpop.f32.mrf.mxu0
    %12234 = vmatprep.mubr.f32.mxu0 0.0
    %12235 = vmatmul.mubr.f32.gmra.mxu0 %v11542
    %v12236 = vpop.f32.mrf.mxu0
    %v12237 = vadd.f32 0.0, %v12236
    %v12238 = vpop.f32.mrf.mxu0
    %12239 = vmatprep.mubr.f32.mxu0 0.0
    %12240 = vmatmul.mubr.f32.gmra.mxu0 %v11545
    %v12241 = vpop.f32.mrf.mxu0
    %v12242 = vadd.f32 0.0, %v12241
    %v12243 = vpop.f32.mrf.mxu0
    %12244 = vmatprep.mubr.f32.mxu0 0.0
    %12245 = vmatmul.mubr.f32.gmra.mxu0 %v11548
    %v12246 = vpop.f32.mrf.mxu0
    %v12247 = vadd.f32 0.0, %v12246
    %v12248 = vpop.f32.mrf.mxu0
    %12249 = vmatprep.mubr.f32.mxu0 0.0
    %12250 = vmatmul.mubr.f32.gmra.mxu0 %v11551
    %v12251 = vpop.f32.mrf.mxu0
    %v12252 = vadd.f32 0.0, %v12251
    %v12253 = vpop.f32.mrf.mxu0
    %12254 = vmatprep.mubr.f32.mxu0 0.0
    %12255 = vmatmul.mubr.f32.gmra.mxu0 %v11554
    %v12256 = vpop.f32.mrf.mxu0
    %v12257 = vadd.f32 0.0, %v12256
    %v12258 = vpop.f32.mrf.mxu0
    %12259 = vmatprep.mubr.f32.mxu0 0.0
    %12260 = vmatmul.mubr.f32.gmra.mxu0 %v11557
    %v12261 = vpop.f32.mrf.mxu0
    %v12262 = vadd.f32 0.0, %v12261
    %v12263 = vpop.f32.mrf.mxu0
    %12264 = vmatprep.mubr.f32.mxu0 0.0
    %12265 = vmatmul.mubr.f32.gmra.mxu0 %v11560
    %v12266 = vpop.f32.mrf.mxu0
    %v12267 = vadd.f32 0.0, %v12266
    %v12268 = vpop.f32.mrf.mxu0
    %12269 = vdwg.mxu0
    %v12270 = vadd.f32 %v10920, %v11632
    %v12271 = vadd.f32 %v10921, %v11637
    %v12272 = vadd.f32 %v10922, %v11642
    %v12273 = vadd.f32 %v10923, %v11647
    %v12274 = vadd.f32 %v10924, %v11652
    %v12275 = vadd.f32 %v10925, %v11657
    %v12276 = vadd.f32 %v10926, %v11662
    %v12277 = vadd.f32 %v10927, %v11667
    %v12278 = vadd.f32 %v10928, %v11672
    %v12279 = vadd.f32 %v10929, %v11677
    %v12280 = vadd.f32 %v10930, %v11682
    %v12281 = vadd.f32 %v10931, %v11687
    %v12282 = vadd.f32 %v10932, %v11692
    %v12283 = vadd.f32 %v10933, %v11697
    %v12284 = vadd.f32 %v10934, %v11702
    %v12285 = vadd.f32 %v10935, %v11707
    %v12286 = vadd.f32 %v10936, %v11712
    %v12287 = vadd.f32 %v10937, %v11717
    %v12288 = vadd.f32 %v10938, %v11722
    %v12289 = vadd.f32 %v10939, %v11727
    %v12290 = vadd.f32 %v10940, %v11732
    %v12291 = vadd.f32 %v10941, %v11737
    %v12292 = vadd.f32 %v10942, %v11742
    %v12293 = vadd.f32 %v10943, %v11747
    %v12294 = vadd.f32 %v10944, %v11752
    %v12295 = vadd.f32 %v10945, %v11757
    %v12296 = vadd.f32 %v10946, %v11762
    %v12297 = vadd.f32 %v10947, %v11767
    %v12298 = vadd.f32 %v10948, %v11772
    %v12299 = vadd.f32 %v10949, %v11777
    %v12300 = vadd.f32 %v10950, %v11782
    %v12301 = vadd.f32 %v10951, %v11787
    %v12302 = vadd.f32 %v10952, %v11792
    %v12303 = vadd.f32 %v10953, %v11797
    %v12304 = vadd.f32 %v10954, %v11802
    %v12305 = vadd.f32 %v10955, %v11807
    %v12306 = vadd.f32 %v10956, %v11812
    %v12307 = vadd.f32 %v10957, %v11817
    %v12308 = vadd.f32 %v10958, %v11822
    %v12309 = vadd.f32 %v10959, %v11827
    %v12310 = vadd.f32 %v10960, %v11832
    %v12311 = vadd.f32 %v10961, %v11837
    %v12312 = vadd.f32 %v10962, %v11842
    %v12313 = vadd.f32 %v10963, %v11847
    %v12314 = vadd.f32 %v10964, %v11852
    %v12315 = vadd.f32 %v10965, %v11857
    %v12316 = vadd.f32 %v10966, %v11862
    %v12317 = vadd.f32 %v10967, %v11867
    %v12318 = vadd.f32 %v10968, %v11872
    %v12319 = vadd.f32 %v10969, %v11877
    %v12320 = vadd.f32 %v10970, %v11882
    %v12321 = vadd.f32 %v10971, %v11887
    %v12322 = vadd.f32 %v10972, %v11892
    %v12323 = vadd.f32 %v10973, %v11897
    %v12324 = vadd.f32 %v10974, %v11902
    %v12325 = vadd.f32 %v10975, %v11907
    %v12326 = vadd.f32 %v10976, %v11912
    %v12327 = vadd.f32 %v10977, %v11917
    %v12328 = vadd.f32 %v10978, %v11922
    %v12329 = vadd.f32 %v10979, %v11927
    %v12330 = vadd.f32 %v10980, %v11932
    %v12331 = vadd.f32 %v10981, %v11937
    %v12332 = vadd.f32 %v10982, %v11942
    %v12333 = vadd.f32 %v10983, %v11947
    %v12334 = vadd.f32 %v10984, %v11952
    %v12335 = vadd.f32 %v10985, %v11957
    %v12336 = vadd.f32 %v10986, %v11962
    %v12337 = vadd.f32 %v10987, %v11967
    %v12338 = vadd.f32 %v10988, %v11972
    %v12339 = vadd.f32 %v10989, %v11977
    %v12340 = vadd.f32 %v10990, %v11982
    %v12341 = vadd.f32 %v10991, %v11987
    %v12342 = vadd.f32 %v10992, %v11992
    %v12343 = vadd.f32 %v10993, %v11997
    %v12344 = vadd.f32 %v10994, %v12002
    %v12345 = vadd.f32 %v10995, %v12007
    %v12346 = vadd.f32 %v10996, %v12012
    %v12347 = vadd.f32 %v10997, %v12017
    %v12348 = vadd.f32 %v10998, %v12022
    %v12349 = vadd.f32 %v10999, %v12027
    %v12350 = vadd.f32 %v11000, %v12032
    %v12351 = vadd.f32 %v11001, %v12037
    %v12352 = vadd.f32 %v11002, %v12042
    %v12353 = vadd.f32 %v11003, %v12047
    %v12354 = vadd.f32 %v11004, %v12052
    %v12355 = vadd.f32 %v11005, %v12057
    %v12356 = vadd.f32 %v11006, %v12062
    %v12357 = vadd.f32 %v11007, %v12067
    %v12358 = vadd.f32 %v11008, %v12072
    %v12359 = vadd.f32 %v11009, %v12077
    %v12360 = vadd.f32 %v11010, %v12082
    %v12361 = vadd.f32 %v11011, %v12087
    %v12362 = vadd.f32 %v11012, %v12092
    %v12363 = vadd.f32 %v11013, %v12097
    %v12364 = vadd.f32 %v11014, %v12102
    %v12365 = vadd.f32 %v11015, %v12107
    %v12366 = vadd.f32 %v11016, %v12112
    %v12367 = vadd.f32 %v11017, %v12117
    %v12368 = vadd.f32 %v11018, %v12122
    %v12369 = vadd.f32 %v11019, %v12127
    %v12370 = vadd.f32 %v11020, %v12132
    %v12371 = vadd.f32 %v11021, %v12137
    %v12372 = vadd.f32 %v11022, %v12142
    %v12373 = vadd.f32 %v11023, %v12147
    %v12374 = vadd.f32 %v11024, %v12152
    %v12375 = vadd.f32 %v11025, %v12157
    %v12376 = vadd.f32 %v11026, %v12162
    %v12377 = vadd.f32 %v11027, %v12167
    %v12378 = vadd.f32 %v11028, %v12172
    %v12379 = vadd.f32 %v11029, %v12177
    %v12380 = vadd.f32 %v11030, %v12182
    %v12381 = vadd.f32 %v11031, %v12187
    %v12382 = vadd.f32 %v11032, %v12192
    %v12383 = vadd.f32 %v11033, %v12197
    %v12384 = vadd.f32 %v11034, %v12202
    %v12385 = vadd.f32 %v11035, %v12207
    %v12386 = vadd.f32 %v11036, %v12212
    %v12387 = vadd.f32 %v11037, %v12217
    %v12388 = vadd.f32 %v11038, %v12222
    %v12389 = vadd.f32 %v11039, %v12227
    %v12390 = vadd.f32 %v11040, %v12232
    %v12391 = vadd.f32 %v11041, %v12237
    %v12392 = vadd.f32 %v11042, %v12242
    %v12393 = vadd.f32 %v11043, %v12247
    %v12394 = vadd.f32 %v11044, %v12252
    %v12395 = vadd.f32 %v11045, %v12257
    %v12396 = vadd.f32 %v11046, %v12262
    %v12397 = vadd.f32 %v11047, %v12267
    %v12398 = vld [vmem:[%s3] sm:$0x1]
    %v12400 = vlaneseq
    %v12401 = vshrl.u32 %v12400, 7
    %v12402 = vsub.s32 0, %v12401
    %v12403 = vrot.slane %v12398, %v12402
    %v12405 = vadd.f32 %v12270, %v12403
    %v12406 = vadd.f32 %v12271, %v12403
    %v12407 = vadd.f32 %v12272, %v12403
    %v12408 = vadd.f32 %v12273, %v12403
    %v12409 = vadd.f32 %v12274, %v12403
    %v12410 = vadd.f32 %v12275, %v12403
    %v12411 = vadd.f32 %v12276, %v12403
    %v12412 = vadd.f32 %v12277, %v12403
    %v12413 = vadd.f32 %v12278, %v12403
    %v12414 = vadd.f32 %v12279, %v12403
    %v12415 = vadd.f32 %v12280, %v12403
    %v12416 = vadd.f32 %v12281, %v12403
    %v12417 = vadd.f32 %v12282, %v12403
    %v12418 = vadd.f32 %v12283, %v12403
    %v12419 = vadd.f32 %v12284, %v12403
    %v12420 = vadd.f32 %v12285, %v12403
    %v12421 = vadd.f32 %v12286, %v12403
    %v12422 = vadd.f32 %v12287, %v12403
    %v12423 = vadd.f32 %v12288, %v12403
    %v12424 = vadd.f32 %v12289, %v12403
    %v12425 = vadd.f32 %v12290, %v12403
    %v12426 = vadd.f32 %v12291, %v12403
    %v12427 = vadd.f32 %v12292, %v12403
    %v12428 = vadd.f32 %v12293, %v12403
    %v12429 = vadd.f32 %v12294, %v12403
    %v12430 = vadd.f32 %v12295, %v12403
    %v12431 = vadd.f32 %v12296, %v12403
    %v12432 = vadd.f32 %v12297, %v12403
    %v12433 = vadd.f32 %v12298, %v12403
    %v12434 = vadd.f32 %v12299, %v12403
    %v12435 = vadd.f32 %v12300, %v12403
    %v12436 = vadd.f32 %v12301, %v12403
    %v12437 = vadd.f32 %v12302, %v12403
    %v12438 = vadd.f32 %v12303, %v12403
    %v12439 = vadd.f32 %v12304, %v12403
    %v12440 = vadd.f32 %v12305, %v12403
    %v12441 = vadd.f32 %v12306, %v12403
    %v12442 = vadd.f32 %v12307, %v12403
    %v12443 = vadd.f32 %v12308, %v12403
    %v12444 = vadd.f32 %v12309, %v12403
    %v12445 = vadd.f32 %v12310, %v12403
    %v12446 = vadd.f32 %v12311, %v12403
    %v12447 = vadd.f32 %v12312, %v12403
    %v12448 = vadd.f32 %v12313, %v12403
    %v12449 = vadd.f32 %v12314, %v12403
    %v12450 = vadd.f32 %v12315, %v12403
    %v12451 = vadd.f32 %v12316, %v12403
    %v12452 = vadd.f32 %v12317, %v12403
    %v12453 = vadd.f32 %v12318, %v12403
    %v12454 = vadd.f32 %v12319, %v12403
    %v12455 = vadd.f32 %v12320, %v12403
    %v12456 = vadd.f32 %v12321, %v12403
    %v12457 = vadd.f32 %v12322, %v12403
    %v12458 = vadd.f32 %v12323, %v12403
    %v12459 = vadd.f32 %v12324, %v12403
    %v12460 = vadd.f32 %v12325, %v12403
    %v12461 = vadd.f32 %v12326, %v12403
    %v12462 = vadd.f32 %v12327, %v12403
    %v12463 = vadd.f32 %v12328, %v12403
    %v12464 = vadd.f32 %v12329, %v12403
    %v12465 = vadd.f32 %v12330, %v12403
    %v12466 = vadd.f32 %v12331, %v12403
    %v12467 = vadd.f32 %v12332, %v12403
    %v12468 = vadd.f32 %v12333, %v12403
    %v12469 = vadd.f32 %v12334, %v12403
    %v12470 = vadd.f32 %v12335, %v12403
    %v12471 = vadd.f32 %v12336, %v12403
    %v12472 = vadd.f32 %v12337, %v12403
    %v12473 = vadd.f32 %v12338, %v12403
    %v12474 = vadd.f32 %v12339, %v12403
    %v12475 = vadd.f32 %v12340, %v12403
    %v12476 = vadd.f32 %v12341, %v12403
    %v12477 = vadd.f32 %v12342, %v12403
    %v12478 = vadd.f32 %v12343, %v12403
    %v12479 = vadd.f32 %v12344, %v12403
    %v12480 = vadd.f32 %v12345, %v12403
    %v12481 = vadd.f32 %v12346, %v12403
    %v12482 = vadd.f32 %v12347, %v12403
    %v12483 = vadd.f32 %v12348, %v12403
    %v12484 = vadd.f32 %v12349, %v12403
    %v12485 = vadd.f32 %v12350, %v12403
    %v12486 = vadd.f32 %v12351, %v12403
    %v12487 = vadd.f32 %v12352, %v12403
    %v12488 = vadd.f32 %v12353, %v12403
    %v12489 = vadd.f32 %v12354, %v12403
    %v12490 = vadd.f32 %v12355, %v12403
    %v12491 = vadd.f32 %v12356, %v12403
    %v12492 = vadd.f32 %v12357, %v12403
    %v12493 = vadd.f32 %v12358, %v12403
    %v12494 = vadd.f32 %v12359, %v12403
    %v12495 = vadd.f32 %v12360, %v12403
    %v12496 = vadd.f32 %v12361, %v12403
    %v12497 = vadd.f32 %v12362, %v12403
    %v12498 = vadd.f32 %v12363, %v12403
    %v12499 = vadd.f32 %v12364, %v12403
    %v12500 = vadd.f32 %v12365, %v12403
    %v12501 = vadd.f32 %v12366, %v12403
    %v12502 = vadd.f32 %v12367, %v12403
    %v12503 = vadd.f32 %v12368, %v12403
    %v12504 = vadd.f32 %v12369, %v12403
    %v12505 = vadd.f32 %v12370, %v12403
    %v12506 = vadd.f32 %v12371, %v12403
    %v12507 = vadd.f32 %v12372, %v12403
    %v12508 = vadd.f32 %v12373, %v12403
    %v12509 = vadd.f32 %v12374, %v12403
    %v12510 = vadd.f32 %v12375, %v12403
    %v12511 = vadd.f32 %v12376, %v12403
    %v12512 = vadd.f32 %v12377, %v12403
    %v12513 = vadd.f32 %v12378, %v12403
    %v12514 = vadd.f32 %v12379, %v12403
    %v12515 = vadd.f32 %v12380, %v12403
    %v12516 = vadd.f32 %v12381, %v12403
    %v12517 = vadd.f32 %v12382, %v12403
    %v12518 = vadd.f32 %v12383, %v12403
    %v12519 = vadd.f32 %v12384, %v12403
    %v12520 = vadd.f32 %v12385, %v12403
    %v12521 = vadd.f32 %v12386, %v12403
    %v12522 = vadd.f32 %v12387, %v12403
    %v12523 = vadd.f32 %v12388, %v12403
    %v12524 = vadd.f32 %v12389, %v12403
    %v12525 = vadd.f32 %v12390, %v12403
    %v12526 = vadd.f32 %v12391, %v12403
    %v12527 = vadd.f32 %v12392, %v12403
    %v12528 = vadd.f32 %v12393, %v12403
    %v12529 = vadd.f32 %v12394, %v12403
    %v12530 = vadd.f32 %v12395, %v12403
    %v12531 = vadd.f32 %v12396, %v12403
    %v12532 = vadd.f32 %v12397, %v12403
    %v12533 = vmax.f32 %v12405, 0.0
    %v12534 = vmax.f32 %v12406, 0.0
    %v12535 = vmax.f32 %v12407, 0.0
    %v12536 = vmax.f32 %v12408, 0.0
    %v12537 = vmax.f32 %v12409, 0.0
    %v12538 = vmax.f32 %v12410, 0.0
    %v12539 = vmax.f32 %v12411, 0.0
    %v12540 = vmax.f32 %v12412, 0.0
    %v12541 = vmax.f32 %v12413, 0.0
    %v12542 = vmax.f32 %v12414, 0.0
    %v12543 = vmax.f32 %v12415, 0.0
    %v12544 = vmax.f32 %v12416, 0.0
    %v12545 = vmax.f32 %v12417, 0.0
    %v12546 = vmax.f32 %v12418, 0.0
    %v12547 = vmax.f32 %v12419, 0.0
    %v12548 = vmax.f32 %v12420, 0.0
    %v12549 = vmax.f32 %v12421, 0.0
    %v12550 = vmax.f32 %v12422, 0.0
    %v12551 = vmax.f32 %v12423, 0.0
    %v12552 = vmax.f32 %v12424, 0.0
    %v12553 = vmax.f32 %v12425, 0.0
    %v12554 = vmax.f32 %v12426, 0.0
    %v12555 = vmax.f32 %v12427, 0.0
    %v12556 = vmax.f32 %v12428, 0.0
    %v12557 = vmax.f32 %v12429, 0.0
    %v12558 = vmax.f32 %v12430, 0.0
    %v12559 = vmax.f32 %v12431, 0.0
    %v12560 = vmax.f32 %v12432, 0.0
    %v12561 = vmax.f32 %v12433, 0.0
    %v12562 = vmax.f32 %v12434, 0.0
    %v12563 = vmax.f32 %v12435, 0.0
    %v12564 = vmax.f32 %v12436, 0.0
    %v12565 = vmax.f32 %v12437, 0.0
    %v12566 = vmax.f32 %v12438, 0.0
    %v12567 = vmax.f32 %v12439, 0.0
    %v12568 = vmax.f32 %v12440, 0.0
    %v12569 = vmax.f32 %v12441, 0.0
    %v12570 = vmax.f32 %v12442, 0.0
    %v12571 = vmax.f32 %v12443, 0.0
    %v12572 = vmax.f32 %v12444, 0.0
    %v12573 = vmax.f32 %v12445, 0.0
    %v12574 = vmax.f32 %v12446, 0.0
    %v12575 = vmax.f32 %v12447, 0.0
    %v12576 = vmax.f32 %v12448, 0.0
    %v12577 = vmax.f32 %v12449, 0.0
    %v12578 = vmax.f32 %v12450, 0.0
    %v12579 = vmax.f32 %v12451, 0.0
    %v12580 = vmax.f32 %v12452, 0.0
    %v12581 = vmax.f32 %v12453, 0.0
    %v12582 = vmax.f32 %v12454, 0.0
    %v12583 = vmax.f32 %v12455, 0.0
    %v12584 = vmax.f32 %v12456, 0.0
    %v12585 = vmax.f32 %v12457, 0.0
    %v12586 = vmax.f32 %v12458, 0.0
    %v12587 = vmax.f32 %v12459, 0.0
    %v12588 = vmax.f32 %v12460, 0.0
    %v12589 = vmax.f32 %v12461, 0.0
    %v12590 = vmax.f32 %v12462, 0.0
    %v12591 = vmax.f32 %v12463, 0.0
    %v12592 = vmax.f32 %v12464, 0.0
    %v12593 = vmax.f32 %v12465, 0.0
    %v12594 = vmax.f32 %v12466, 0.0
    %v12595 = vmax.f32 %v12467, 0.0
    %v12596 = vmax.f32 %v12468, 0.0
    %v12597 = vmax.f32 %v12469, 0.0
    %v12598 = vmax.f32 %v12470, 0.0
    %v12599 = vmax.f32 %v12471, 0.0
    %v12600 = vmax.f32 %v12472, 0.0
    %v12601 = vmax.f32 %v12473, 0.0
    %v12602 = vmax.f32 %v12474, 0.0
    %v12603 = vmax.f32 %v12475, 0.0
    %v12604 = vmax.f32 %v12476, 0.0
    %v12605 = vmax.f32 %v12477, 0.0
    %v12606 = vmax.f32 %v12478, 0.0
    %v12607 = vmax.f32 %v12479, 0.0
    %v12608 = vmax.f32 %v12480, 0.0
    %v12609 = vmax.f32 %v12481, 0.0
    %v12610 = vmax.f32 %v12482, 0.0
    %v12611 = vmax.f32 %v12483, 0.0
    %v12612 = vmax.f32 %v12484, 0.0
    %v12613 = vmax.f32 %v12485, 0.0
    %v12614 = vmax.f32 %v12486, 0.0
    %v12615 = vmax.f32 %v12487, 0.0
    %v12616 = vmax.f32 %v12488, 0.0
    %v12617 = vmax.f32 %v12489, 0.0
    %v12618 = vmax.f32 %v12490, 0.0
    %v12619 = vmax.f32 %v12491, 0.0
    %v12620 = vmax.f32 %v12492, 0.0
    %v12621 = vmax.f32 %v12493, 0.0
    %v12622 = vmax.f32 %v12494, 0.0
    %v12623 = vmax.f32 %v12495, 0.0
    %v12624 = vmax.f32 %v12496, 0.0
    %v12625 = vmax.f32 %v12497, 0.0
    %v12626 = vmax.f32 %v12498, 0.0
    %v12627 = vmax.f32 %v12499, 0.0
    %v12628 = vmax.f32 %v12500, 0.0
    %v12629 = vmax.f32 %v12501, 0.0
    %v12630 = vmax.f32 %v12502, 0.0
    %v12631 = vmax.f32 %v12503, 0.0
    %v12632 = vmax.f32 %v12504, 0.0
    %v12633 = vmax.f32 %v12505, 0.0
    %v12634 = vmax.f32 %v12506, 0.0
    %v12635 = vmax.f32 %v12507, 0.0
    %v12636 = vmax.f32 %v12508, 0.0
    %v12637 = vmax.f32 %v12509, 0.0
    %v12638 = vmax.f32 %v12510, 0.0
    %v12639 = vmax.f32 %v12511, 0.0
    %v12640 = vmax.f32 %v12512, 0.0
    %v12641 = vmax.f32 %v12513, 0.0
    %v12642 = vmax.f32 %v12514, 0.0
    %v12643 = vmax.f32 %v12515, 0.0
    %v12644 = vmax.f32 %v12516, 0.0
    %v12645 = vmax.f32 %v12517, 0.0
    %v12646 = vmax.f32 %v12518, 0.0
    %v12647 = vmax.f32 %v12519, 0.0
    %v12648 = vmax.f32 %v12520, 0.0
    %v12649 = vmax.f32 %v12521, 0.0
    %v12650 = vmax.f32 %v12522, 0.0
    %v12651 = vmax.f32 %v12523, 0.0
    %v12652 = vmax.f32 %v12524, 0.0
    %v12653 = vmax.f32 %v12525, 0.0
    %v12654 = vmax.f32 %v12526, 0.0
    %v12655 = vmax.f32 %v12527, 0.0
    %v12656 = vmax.f32 %v12528, 0.0
    %v12657 = vmax.f32 %v12529, 0.0
    %v12658 = vmax.f32 %v12530, 0.0
    %v12659 = vmax.f32 %v12531, 0.0
    %v12660 = vmax.f32 %v12532, 0.0
    %vm12661 = vcmask 64512
    %v12662 = vsel %vm12661, %v12533, 0.0
    %v12663 = vsel %vm12661, %v12534, 0.0
    %v12664 = vadd.f32 %v12662, %v12663
    %v12665 = vsel %vm12661, %v12535, 0.0
    %v12666 = vadd.f32 %v12664, %v12665
    %v12667 = vsel %vm12661, %v12536, 0.0
    %v12668 = vadd.f32 %v12666, %v12667
    %v12669 = vsel %vm12661, %v12537, 0.0
    %v12670 = vadd.f32 %v12668, %v12669
    %v12671 = vsel %vm12661, %v12538, 0.0
    %v12672 = vadd.f32 %v12670, %v12671
    %v12673 = vsel %vm12661, %v12539, 0.0
    %v12674 = vadd.f32 %v12672, %v12673
    %v12675 = vsel %vm12661, %v12540, 0.0
    %v12676 = vadd.f32 %v12674, %v12675
    %v12677 = vsel %vm12661, %v12541, 0.0
    %v12678 = vadd.f32 %v12676, %v12677
    %v12679 = vsel %vm12661, %v12542, 0.0
    %v12680 = vadd.f32 %v12678, %v12679
    %v12681 = vsel %vm12661, %v12543, 0.0
    %v12682 = vadd.f32 %v12680, %v12681
    %v12683 = vsel %vm12661, %v12544, 0.0
    %v12684 = vadd.f32 %v12682, %v12683
    %v12685 = vsel %vm12661, %v12545, 0.0
    %v12686 = vadd.f32 %v12684, %v12685
    %v12687 = vsel %vm12661, %v12546, 0.0
    %v12688 = vadd.f32 %v12686, %v12687
    %v12689 = vsel %vm12661, %v12547, 0.0
    %v12690 = vadd.f32 %v12688, %v12689
    %v12691 = vsel %vm12661, %v12548, 0.0
    %v12692 = vadd.f32 %v12690, %v12691
    %v12693 = vsel %vm12661, %v12549, 0.0
    %v12694 = vadd.f32 %v12692, %v12693
    %v12695 = vsel %vm12661, %v12550, 0.0
    %v12696 = vadd.f32 %v12694, %v12695
    %v12697 = vsel %vm12661, %v12551, 0.0
    %v12698 = vadd.f32 %v12696, %v12697
    %v12699 = vsel %vm12661, %v12552, 0.0
    %v12700 = vadd.f32 %v12698, %v12699
    %v12701 = vsel %vm12661, %v12553, 0.0
    %v12702 = vadd.f32 %v12700, %v12701
    %v12703 = vsel %vm12661, %v12554, 0.0
    %v12704 = vadd.f32 %v12702, %v12703
    %v12705 = vsel %vm12661, %v12555, 0.0
    %v12706 = vadd.f32 %v12704, %v12705
    %v12707 = vsel %vm12661, %v12556, 0.0
    %v12708 = vadd.f32 %v12706, %v12707
    %v12709 = vsel %vm12661, %v12557, 0.0
    %v12710 = vadd.f32 %v12708, %v12709
    %v12711 = vsel %vm12661, %v12558, 0.0
    %v12712 = vadd.f32 %v12710, %v12711
    %v12713 = vsel %vm12661, %v12559, 0.0
    %v12714 = vadd.f32 %v12712, %v12713
    %v12715 = vsel %vm12661, %v12560, 0.0
    %v12716 = vadd.f32 %v12714, %v12715
    %v12717 = vsel %vm12661, %v12561, 0.0
    %v12718 = vadd.f32 %v12716, %v12717
    %v12719 = vsel %vm12661, %v12562, 0.0
    %v12720 = vadd.f32 %v12718, %v12719
    %v12721 = vsel %vm12661, %v12563, 0.0
    %v12722 = vadd.f32 %v12720, %v12721
    %v12723 = vsel %vm12661, %v12564, 0.0
    %v12724 = vadd.f32 %v12722, %v12723
    %v12725 = vrot.slane %v12724, 4
    %v12726 = vadd.f32 %v12724, %v12725
    %v12727 = vrot.slane %v12726, 2
    %v12728 = vadd.f32 %v12726, %v12727
    %v12729 = vrot.slane %v12728, 1
    %v12730 = vadd.f32 %v12728, %v12729
    %v12731 = vsel %vm12661, %v12565, 0.0
    %v12732 = vsel %vm12661, %v12566, 0.0
    %v12733 = vadd.f32 %v12731, %v12732
    %v12734 = vsel %vm12661, %v12567, 0.0
    %v12735 = vadd.f32 %v12733, %v12734
    %v12736 = vsel %vm12661, %v12568, 0.0
    %v12737 = vadd.f32 %v12735, %v12736
    %v12738 = vsel %vm12661, %v12569, 0.0
    %v12739 = vadd.f32 %v12737, %v12738
    %v12740 = vsel %vm12661, %v12570, 0.0
    %v12741 = vadd.f32 %v12739, %v12740
    %v12742 = vsel %vm12661, %v12571, 0.0
    %v12743 = vadd.f32 %v12741, %v12742
    %v12744 = vsel %vm12661, %v12572, 0.0
    %v12745 = vadd.f32 %v12743, %v12744
    %v12746 = vsel %vm12661, %v12573, 0.0
    %v12747 = vadd.f32 %v12745, %v12746
    %v12748 = vsel %vm12661, %v12574, 0.0
    %v12749 = vadd.f32 %v12747, %v12748
    %v12750 = vsel %vm12661, %v12575, 0.0
    %v12751 = vadd.f32 %v12749, %v12750
    %v12752 = vsel %vm12661, %v12576, 0.0
    %v12753 = vadd.f32 %v12751, %v12752
    %v12754 = vsel %vm12661, %v12577, 0.0
    %v12755 = vadd.f32 %v12753, %v12754
    %v12756 = vsel %vm12661, %v12578, 0.0
    %v12757 = vadd.f32 %v12755, %v12756
    %v12758 = vsel %vm12661, %v12579, 0.0
    %v12759 = vadd.f32 %v12757, %v12758
    %v12760 = vsel %vm12661, %v12580, 0.0
    %v12761 = vadd.f32 %v12759, %v12760
    %v12762 = vsel %vm12661, %v12581, 0.0
    %v12763 = vadd.f32 %v12761, %v12762
    %v12764 = vsel %vm12661, %v12582, 0.0
    %v12765 = vadd.f32 %v12763, %v12764
    %v12766 = vsel %vm12661, %v12583, 0.0
    %v12767 = vadd.f32 %v12765, %v12766
    %v12768 = vsel %vm12661, %v12584, 0.0
    %v12769 = vadd.f32 %v12767, %v12768
    %v12770 = vsel %vm12661, %v12585, 0.0
    %v12771 = vadd.f32 %v12769, %v12770
    %v12772 = vsel %vm12661, %v12586, 0.0
    %v12773 = vadd.f32 %v12771, %v12772
    %v12774 = vsel %vm12661, %v12587, 0.0
    %v12775 = vadd.f32 %v12773, %v12774
    %v12776 = vsel %vm12661, %v12588, 0.0
    %v12777 = vadd.f32 %v12775, %v12776
    %v12778 = vsel %vm12661, %v12589, 0.0
    %v12779 = vadd.f32 %v12777, %v12778
    %v12780 = vsel %vm12661, %v12590, 0.0
    %v12781 = vadd.f32 %v12779, %v12780
    %v12782 = vsel %vm12661, %v12591, 0.0
    %v12783 = vadd.f32 %v12781, %v12782
    %v12784 = vsel %vm12661, %v12592, 0.0
    %v12785 = vadd.f32 %v12783, %v12784
    %v12786 = vsel %vm12661, %v12593, 0.0
    %v12787 = vadd.f32 %v12785, %v12786
    %v12788 = vsel %vm12661, %v12594, 0.0
    %v12789 = vadd.f32 %v12787, %v12788
    %v12790 = vsel %vm12661, %v12595, 0.0
    %v12791 = vadd.f32 %v12789, %v12790
    %v12792 = vsel %vm12661, %v12596, 0.0
    %v12793 = vadd.f32 %v12791, %v12792
    %v12794 = vrot.slane %v12793, 4
    %v12795 = vadd.f32 %v12793, %v12794
    %v12796 = vrot.slane %v12795, 2
    %v12797 = vadd.f32 %v12795, %v12796
    %v12798 = vrot.slane %v12797, 1
    %v12799 = vadd.f32 %v12797, %v12798
    %v12800 = vsel %vm12661, %v12597, 0.0
    %v12801 = vsel %vm12661, %v12598, 0.0
    %v12802 = vadd.f32 %v12800, %v12801
    %v12803 = vsel %vm12661, %v12599, 0.0
    %v12804 = vadd.f32 %v12802, %v12803
    %v12805 = vsel %vm12661, %v12600, 0.0
    %v12806 = vadd.f32 %v12804, %v12805
    %v12807 = vsel %vm12661, %v12601, 0.0
    %v12808 = vadd.f32 %v12806, %v12807
    %v12809 = vsel %vm12661, %v12602, 0.0
    %v12810 = vadd.f32 %v12808, %v12809
    %v12811 = vsel %vm12661, %v12603, 0.0
    %v12812 = vadd.f32 %v12810, %v12811
    %v12813 = vsel %vm12661, %v12604, 0.0
    %v12814 = vadd.f32 %v12812, %v12813
    %v12815 = vsel %vm12661, %v12605, 0.0
    %v12816 = vadd.f32 %v12814, %v12815
    %v12817 = vsel %vm12661, %v12606, 0.0
    %v12818 = vadd.f32 %v12816, %v12817
    %v12819 = vsel %vm12661, %v12607, 0.0
    %v12820 = vadd.f32 %v12818, %v12819
    %v12821 = vsel %vm12661, %v12608, 0.0
    %v12822 = vadd.f32 %v12820, %v12821
    %v12823 = vsel %vm12661, %v12609, 0.0
    %v12824 = vadd.f32 %v12822, %v12823
    %v12825 = vsel %vm12661, %v12610, 0.0
    %v12826 = vadd.f32 %v12824, %v12825
    %v12827 = vsel %vm12661, %v12611, 0.0
    %v12828 = vadd.f32 %v12826, %v12827
    %v12829 = vsel %vm12661, %v12612, 0.0
    %v12830 = vadd.f32 %v12828, %v12829
    %v12831 = vsel %vm12661, %v12613, 0.0
    %v12832 = vadd.f32 %v12830, %v12831
    %v12833 = vsel %vm12661, %v12614, 0.0
    %v12834 = vadd.f32 %v12832, %v12833
    %v12835 = vsel %vm12661, %v12615, 0.0
    %v12836 = vadd.f32 %v12834, %v12835
    %v12837 = vsel %vm12661, %v12616, 0.0
    %v12838 = vadd.f32 %v12836, %v12837
    %v12839 = vsel %vm12661, %v12617, 0.0
    %v12840 = vadd.f32 %v12838, %v12839
    %v12841 = vsel %vm12661, %v12618, 0.0
    %v12842 = vadd.f32 %v12840, %v12841
    %v12843 = vsel %vm12661, %v12619, 0.0
    %v12844 = vadd.f32 %v12842, %v12843
    %v12845 = vsel %vm12661, %v12620, 0.0
    %v12846 = vadd.f32 %v12844, %v12845
    %v12847 = vsel %vm12661, %v12621, 0.0
    %v12848 = vadd.f32 %v12846, %v12847
    %v12849 = vsel %vm12661, %v12622, 0.0
    %v12850 = vadd.f32 %v12848, %v12849
    %v12851 = vsel %vm12661, %v12623, 0.0
    %v12852 = vadd.f32 %v12850, %v12851
    %v12853 = vsel %vm12661, %v12624, 0.0
    %v12854 = vadd.f32 %v12852, %v12853
    %v12855 = vsel %vm12661, %v12625, 0.0
    %v12856 = vadd.f32 %v12854, %v12855
    %v12857 = vsel %vm12661, %v12626, 0.0
    %v12858 = vadd.f32 %v12856, %v12857
    %v12859 = vsel %vm12661, %v12627, 0.0
    %v12860 = vadd.f32 %v12858, %v12859
    %v12861 = vsel %vm12661, %v12628, 0.0
    %v12862 = vadd.f32 %v12860, %v12861
    %v12863 = vrot.slane %v12862, 4
    %v12864 = vadd.f32 %v12862, %v12863
    %v12865 = vrot.slane %v12864, 2
    %v12866 = vadd.f32 %v12864, %v12865
    %v12867 = vrot.slane %v12866, 1
    %v12868 = vadd.f32 %v12866, %v12867
    %v12869 = vsel %vm12661, %v12629, 0.0
    %v12870 = vsel %vm12661, %v12630, 0.0
    %v12871 = vadd.f32 %v12869, %v12870
    %v12872 = vsel %vm12661, %v12631, 0.0
    %v12873 = vadd.f32 %v12871, %v12872
    %v12874 = vsel %vm12661, %v12632, 0.0
    %v12875 = vadd.f32 %v12873, %v12874
    %v12876 = vsel %vm12661, %v12633, 0.0
    %v12877 = vadd.f32 %v12875, %v12876
    %v12878 = vsel %vm12661, %v12634, 0.0
    %v12879 = vadd.f32 %v12877, %v12878
    %v12880 = vsel %vm12661, %v12635, 0.0
    %v12881 = vadd.f32 %v12879, %v12880
    %v12882 = vsel %vm12661, %v12636, 0.0
    %v12883 = vadd.f32 %v12881, %v12882
    %v12884 = vsel %vm12661, %v12637, 0.0
    %v12885 = vadd.f32 %v12883, %v12884
    %v12886 = vsel %vm12661, %v12638, 0.0
    %v12887 = vadd.f32 %v12885, %v12886
    %v12888 = vsel %vm12661, %v12639, 0.0
    %v12889 = vadd.f32 %v12887, %v12888
    %v12890 = vsel %vm12661, %v12640, 0.0
    %v12891 = vadd.f32 %v12889, %v12890
    %v12892 = vsel %vm12661, %v12641, 0.0
    %v12893 = vadd.f32 %v12891, %v12892
    %v12894 = vsel %vm12661, %v12642, 0.0
    %v12895 = vadd.f32 %v12893, %v12894
    %v12896 = vsel %vm12661, %v12643, 0.0
    %v12897 = vadd.f32 %v12895, %v12896
    %v12898 = vsel %vm12661, %v12644, 0.0
    %v12899 = vadd.f32 %v12897, %v12898
    %v12900 = vsel %vm12661, %v12645, 0.0
    %v12901 = vadd.f32 %v12899, %v12900
    %v12902 = vsel %vm12661, %v12646, 0.0
    %v12903 = vadd.f32 %v12901, %v12902
    %v12904 = vsel %vm12661, %v12647, 0.0
    %v12905 = vadd.f32 %v12903, %v12904
    %v12906 = vsel %vm12661, %v12648, 0.0
    %v12907 = vadd.f32 %v12905, %v12906
    %v12908 = vsel %vm12661, %v12649, 0.0
    %v12909 = vadd.f32 %v12907, %v12908
    %v12910 = vsel %vm12661, %v12650, 0.0
    %v12911 = vadd.f32 %v12909, %v12910
    %v12912 = vsel %vm12661, %v12651, 0.0
    %v12913 = vadd.f32 %v12911, %v12912
    %v12914 = vsel %vm12661, %v12652, 0.0
    %v12915 = vadd.f32 %v12913, %v12914
    %v12916 = vsel %vm12661, %v12653, 0.0
    %v12917 = vadd.f32 %v12915, %v12916
    %v12918 = vsel %vm12661, %v12654, 0.0
    %v12919 = vadd.f32 %v12917, %v12918
    %v12920 = vsel %vm12661, %v12655, 0.0
    %v12921 = vadd.f32 %v12919, %v12920
    %v12922 = vsel %vm12661, %v12656, 0.0
    %v12923 = vadd.f32 %v12921, %v12922
    %v12924 = vsel %vm12661, %v12657, 0.0
    %v12925 = vadd.f32 %v12923, %v12924
    %v12926 = vsel %vm12661, %v12658, 0.0
    %v12927 = vadd.f32 %v12925, %v12926
    %v12928 = vsel %vm12661, %v12659, 0.0
    %v12929 = vadd.f32 %v12927, %v12928
    %v12930 = vsel %vm12661, %v12660, 0.0
    %v12931 = vadd.f32 %v12929, %v12930
    %v12932 = vrot.slane %v12931, 4
    %v12933 = vadd.f32 %v12931, %v12932
    %v12934 = vrot.slane %v12933, 2
    %v12935 = vadd.f32 %v12933, %v12934
    %v12936 = vrot.slane %v12935, 1
    %v12937 = vadd.f32 %v12935, %v12936
    %v12938 = vmul.f32 %v12730, 0.00390625
    %v12939 = vmul.f32 %v12799, 0.00390625
    %v12940 = vmul.f32 %v12868, 0.00390625
    %v12941 = vmul.f32 %v12937, 0.00390625
    %v12942 = vld [vmem:[%s4] sm:$0xff]
    %v12943 = vld [vmem:[%s5] sm:$0x1]
    %v12945 = vlaneseq
    %v12946 = vshrl.u32 %v12945, 7
    %v12947 = vsub.s32 0, %v12946
    %v12948 = vrot.slane %v12943, %v12947
    %vm12954 = vcmask 1041409
    %v12955 = vsel %vm12954, %v12939, %v12938
    %vm12956 = vcmask 1042434
    %v12957 = vsel %vm12956, %v12940, %v12955
    %vm12958 = vcmask 1043459
    %v12959 = vsel %vm12958, %v12941, %v12957
    %v12960 = vsel %vm12661, %v12959, 0
    %12962 = vmatprep.subr.mxu0 0.0
    %12963 = vmatpush1.msra.mxu0 0.0
    %12964 = vmatprep.subr.mxu0 0.0
    %12965 = vmatpush1.msra.mxu0 0.0
    %12966 = vmatprep.subr.mxu0 0.0
    %12967 = vmatpush1.msra.mxu0 0.0
    %12968 = vmatprep.subr.mxu0 0.0
    %12969 = vmatpush1.msra.mxu0 0.0
    %12970 = vmatprep.subr.mxu0 0.0
    %12971 = vmatpush1.msra.mxu0 0.0
    %12972 = vmatprep.subr.mxu0 0.0
    %12973 = vmatpush1.msra.mxu0 0.0
    %12974 = vmatprep.subr.mxu0 0.0
    %12975 = vmatpush1.msra.mxu0 0.0
    %12976 = vmatprep.subr.mxu0 0.0
    %12977 = vmatpush1.msra.mxu0 0.0
    %12978 = vmatprep.subr.mxu0 0.0
    %12979 = vmatpush1.msra.mxu0 0.0
    %12980 = vmatprep.subr.mxu0 0.0
    %12981 = vmatpush1.msra.mxu0 0.0
    %12982 = vmatprep.subr.mxu0 0.0
    %12983 = vmatpush1.msra.mxu0 0.0
    %12984 = vmatprep.subr.mxu0 0.0
    %12985 = vmatpush1.msra.mxu0 0.0
    %12986 = vmatprep.subr.mxu0 0.0
    %12987 = vmatpush1.msra.mxu0 0.0
    %12988 = vmatprep.subr.mxu0 0.0
    %12989 = vmatpush1.msra.mxu0 0.0
    %12990 = vmatprep.subr.mxu0 0.0
    %12991 = vmatpush1.msra.mxu0 0.0
    %12992 = vmatprep.subr.mxu0 0.0
    %12993 = vmatpush1.msra.mxu0 %v12942
    %12994 = vmatprep.subr.mxu0 0.0
    %12995 = vmatpush2.msra.mxu0 0.0
    %12996 = vmatprep.subr.mxu0 0.0
    %12997 = vmatpush2.msra.mxu0 0.0
    %12998 = vmatprep.subr.mxu0 0.0
    %12999 = vmatpush2.msra.mxu0 0.0
    %13000 = vmatprep.subr.mxu0 0.0
    %13001 = vmatpush2.msra.mxu0 0.0
    %13002 = vmatprep.subr.mxu0 0.0
    %13003 = vmatpush2.msra.mxu0 0.0
    %13004 = vmatprep.subr.mxu0 0.0
    %13005 = vmatpush2.msra.mxu0 0.0
    %13006 = vmatprep.subr.mxu0 0.0
    %13007 = vmatpush2.msra.mxu0 0.0
    %13008 = vmatprep.subr.mxu0 0.0
    %13009 = vmatpush2.msra.mxu0 0.0
    %13010 = vmatprep.subr.mxu0 0.0
    %13011 = vmatpush2.msra.mxu0 0.0
    %13012 = vmatprep.subr.mxu0 0.0
    %13013 = vmatpush2.msra.mxu0 0.0
    %13014 = vmatprep.subr.mxu0 0.0
    %13015 = vmatpush2.msra.mxu0 0.0
    %13016 = vmatprep.subr.mxu0 0.0
    %13017 = vmatpush2.msra.mxu0 0.0
    %13018 = vmatprep.subr.mxu0 0.0
    %13019 = vmatpush2.msra.mxu0 0.0
    %13020 = vmatprep.subr.mxu0 0.0
    %13021 = vmatpush2.msra.mxu0 0.0
    %13022 = vmatprep.subr.mxu0 0.0
    %13023 = vmatpush2.msra.mxu0 0.0
    %13024 = vmatprep.subr.mxu0 0.0
    %13025 = vmatpush2.msra.mxu0 0.0
    %13026 = vmatprep.mubr.f32.mxu0 0.0
    %13027 = vmatmul.mubr.f32.gmra.mxu0 %v12960
    %v13028 = vpop.f32.mrf.mxu0
    %v13029 = vadd.f32 %v12948, %v13028
    %v13030 = vpop.f32.mrf.mxu0
    %13031 = vdwg.mxu0
    %vm13032 = vcmask 254976
    %13033 = vst.msk [vmem:[#allocation3] sm:$0x3] %vm13032, %v13029
    %vm13034 = vcmask 257026
    %13035 = vst.msk [vmem:[#allocation5 - $0x2] sm:$0xc] %vm13034, %v13029
    // Predicated region
    $region26: #{siamese_forward.1} parent=1 // pred_check
      _
    $region27: #{siamese_forward.1} parent=1 // pred_check_branch
      %13037 = sbr.rel (0) target = $region29
    $region28: #{siamese_forward.1} parent=1 // pred_region
      %s13039 = ssub.s32 32, 32
      %13040 = vsyncadd [#allocation4], %s13039
      %s13042 = sshll.u32 [#allocation3], 4
      %s13043 = int_to_ptr.vmem [resolvable:$true] %s13042
      %13045 = dma.vmem_to_hbm [thread:$0]  %s13043, 32, %s6, [#allocation4]
    $region29: #{siamese_forward.1} parent=1 // pred_fallthru
      _
    // Predicated region
    $region30: #{siamese_forward.1} parent=1 // pred_check
      _
    $region31: #{siamese_forward.1} parent=1 // pred_check_branch
      %13047 = sbr.rel (0) target = $region33
    $region32: #{siamese_forward.1} parent=1 // pred_region
      %s13049 = ssub.s32 32, 32
      %13050 = vsyncadd [#allocation6], %s13049
      %s13052 = sshll.u32 [#allocation5], 4
      %s13053 = int_to_ptr.vmem [resolvable:$true] %s13052
      %13055 = dma.vmem_to_hbm [thread:$0]  %s13053, 32, %s7, [#allocation6]
    $region33: #{siamese_forward.1} parent=1 // pred_fallthru
      _
    // Predicated region
    $region34: #{siamese_forward.1} parent=1 // pred_check
      _
    $region35: #{siamese_forward.1} parent=1 // pred_check_branch
      %13057 = sbr.rel (0) target = $region37
    $region36: #{siamese_forward.1} parent=1 // pred_region
      %13058 = dma.done [#allocation4], 32
    $region37: #{siamese_forward.1} parent=1 // pred_fallthru
      _
    // Predicated region
    $region38: #{siamese_forward.1} parent=1 // pred_check
      _
    $region39: #{siamese_forward.1} parent=1 // pred_check_branch
      %13060 = sbr.rel (0) target = $region41
    $region40: #{siamese_forward.1} parent=1 // pred_region
      %13061 = dma.done [#allocation6], 32
    $region41: #{siamese_forward.1} parent=1 // pred_fallthru
      _
    %13062 = vsyncpa [#allocation4], 1
    %13063 = vsyncpa [#allocation6], 1

</llo_original>
